<compile_context>
chip_gen: v6e
topology: v6e:2x2x1
jax: 0.10.0
libtpu: 0.0.40
codegen_flags: <defaults>
</compile_context>

<pallas_src>
import math

import jax
import jax.numpy as jnp
from jax import lax
from jax.experimental import pallas as pl
from jax.experimental.pallas import tpu as pltpu

_SQRT2_INV = 0.7071067811865476
_CHUNK = 8  # scan chunk length (sublane tile)

_CPARAMS = pltpu.CompilerParams(
    dimension_semantics=("parallel",),
    vmem_limit_bytes=32 * 1024 * 1024,
)


def _gelu(x):
    # exact GELU (matches torch.nn.GELU default)
    return 0.5 * x * (1.0 + lax.erf(x * _SQRT2_INV))


def _silu(x):
    return x * jax.nn.sigmoid(x)


def _softplus(x):
    # matches torch.nn.functional.softplus (beta=1, threshold=20)
    return jnp.where(x > 20.0, x, jnp.log(1.0 + jnp.exp(jnp.minimum(x, 20.0))))


# ---------------------------------------------------------------------------
# Row-tiled linear (+ exact GELU, optional fused skip-add) kernels
# ---------------------------------------------------------------------------
def _linear_gelu_kernel(x_ref, w_ref, b_ref, o_ref):
    o_ref[...] = _gelu(
        jnp.dot(x_ref[...], w_ref[...], preferred_element_type=jnp.float32)
        + b_ref[...])


def _linear_gelu_add_kernel(x_ref, s_ref, w_ref, b_ref, o_ref):
    o_ref[...] = _gelu(
        jnp.dot(x_ref[...], w_ref[...], preferred_element_type=jnp.float32)
        + b_ref[...]) + s_ref[...]


def _row_tiled_linear(kernel, x2d, skip2d, w, b, row_block=512):
    R, cin = x2d.shape
    cout = w.shape[1]
    rb = min(row_block, R)

    args = [x2d]
    in_specs = [pl.BlockSpec((rb, cin), lambda i: (i, 0))]
    if skip2d is not None:
        args.append(skip2d)
        in_specs.append(pl.BlockSpec((rb, cout), lambda i: (i, 0)))
    args += [w, b]
    in_specs += [pl.BlockSpec(w.shape, lambda i: (0, 0)),
                 pl.BlockSpec(b.shape, lambda i: (0, 0))]

    return pl.pallas_call(
        kernel,
        out_shape=jax.ShapeDtypeStruct((R, cout), jnp.float32),
        grid_spec=pltpu.PrefetchScalarGridSpec(
            num_scalar_prefetch=0,
            grid=(pl.cdiv(R, rb),),
            in_specs=in_specs,
            out_specs=pl.BlockSpec((rb, cout), lambda i: (i, 0))),
        compiler_params=_CPARAMS,
    )(*args)


def linear_gelu(x, w, b):
    """x: (B, L, Cin) -> gelu(x @ w + b): (B, L, Cout)."""
    B, L, cin = x.shape
    out = _row_tiled_linear(_linear_gelu_kernel, x.reshape(B * L, cin), None, w, b)
    return out.reshape(B, L, w.shape[1])


def linear_gelu_add(x, skip, w, b):
    """gelu(x @ w + b) + skip, all (B, L, Cout)-shaped outputs."""
    B, L, cin = x.shape
    cout = w.shape[1]
    out = _row_tiled_linear(_linear_gelu_add_kernel, x.reshape(B * L, cin),
                            skip.reshape(B * L, cout), w, b)
    return out.reshape(B, L, cout)


# ---------------------------------------------------------------------------
# Mamba core (shared by the three mamba-containing kernels)
# ---------------------------------------------------------------------------
def _mamba_core(u, w_in, conv_w, conv_b, w_dbc, dt_b, A, d_par,
                xpad_s, delta_s, dx_s, b_s, c_s, y_s):
    """Mamba block up to (and including) the SiLU gate; returns (L, d_inner)."""
    L = u.shape[0]
    Di, n = A.shape
    K = conv_w.shape[0]
    T = _CHUNK

    # fused in_proj -> [x | z]
    if u.shape[1] == 1:
        xz = u * w_in                       # (L,1)*(1,2Di): VPU broadcast, no K=1 matmul
    else:
        xz = jnp.dot(u, w_in, preferred_element_type=jnp.float32)
    x = xz[:, :Di]
    z = xz[:, Di:]

    # causal depthwise conv1d (kernel K) using an aligned 8-row zero pad
    xpad_s[0:8, :] = jnp.zeros((8, Di), jnp.float32)
    xpad_s[8:8 + L, :] = x
    acc = x * conv_w[K - 1:K, :]                                   # lag-0 tap
    for s in range(1, K):                                          # lags 1..K-1
        acc = acc + xpad_s[8 - s:8 - s + L, :] * conv_w[K - 1 - s:K - s, :]
    xc = _silu(acc + conv_b)                                       # (L, Di)

    # fused (delta | B | C) projection; the low-rank dt projection is already
    # composed into the first Di columns of w_dbc (done in the wrapper).
    dbc = jnp.dot(xc, w_dbc, preferred_element_type=jnp.float32)   # (L, Di + 2n)
    delta = _softplus(dbc[:, :Di] + dt_b)                          # (L, Di)
    delta_s[...] = delta
    dx_s[...] = delta * xc
    b_s[...] = dbc[:, Di:Di + n]
    c_s[...] = dbc[:, Di + n:Di + 2 * n]

    # chunked selective scan: aligned 8-row chunks, unrolled inner recurrence,
    # y accumulated in-loop (no hidden-state history kept in VMEM).
    def chunk_body(c, h):
        off = pl.multiple_of(c * T, T)
        d_c = delta_s[pl.ds(off, T), :]                            # (T, Di)
        dx_c = dx_s[pl.ds(off, T), :]                              # (T, Di)
        bm_c = b_s[pl.ds(off, T), :]                               # (T, n)
        cm_c = c_s[pl.ds(off, T), :]                               # (T, n)
        dA = jnp.exp(d_c[:, :, None] * A[None, :, :])              # (T, Di, n)
        dBx = dx_c[:, :, None] * bm_c[:, None, :]                  # (T, Di, n)
        hs = []
        for t in range(T):                                         # serial scan, unrolled
            h = dA[t] * h + dBx[t]
            hs.append(h)
        hst = jnp.stack(hs, axis=0)                                # (T, Di, n)
        y_s[pl.ds(off, T), :] = jnp.sum(hst * cm_c[:, None, :], axis=-1)
        return h

    lax.fori_loop(0, L // T, chunk_body, jnp.zeros((Di, n), jnp.float32))

    y = y_s[...] + xc * d_par                                      # D skip
    return y * _silu(z)                                            # SiLU gate


# ---------------------------------------------------------------------------
# Fused kernels (one grid step per batch element)
# ---------------------------------------------------------------------------
def _enc_mamba1_kernel(x22_ref, w2_ref, b2_ref,
                       win_ref, cw_ref, cb_ref, wdbc_ref, dtb_ref, a_ref, dp_ref, wout_ref,
                       o_ref, xpad_s, delta_s, dx_s, b_s, c_s, y_s):
    # x3 = gelu(l2(x22)); out = x3 + gelu(mamba1(x3))
    x3 = _gelu(jnp.dot(x22_ref[0], w2_ref[...], preferred_element_type=jnp.float32)
               + b2_ref[...])
    y = _mamba_core(x3, win_ref[...], cw_ref[...], cb_ref[...], wdbc_ref[...],
                    dtb_ref[...], a_ref[...], dp_ref[...],
                    xpad_s, delta_s, dx_s, b_s, c_s, y_s)
    m_out = jnp.dot(y, wout_ref[...], preferred_element_type=jnp.float32)
    o_ref[0] = x3 + _gelu(m_out)


def _mamba2_dec_kernel(u_ref, skip_ref,
                       win_ref, cw_ref, cb_ref, wdbc_ref, dtb_ref, a_ref, dp_ref, wout_ref,
                       w4_ref, b4_ref,
                       o_ref, xpad_s, delta_s, dx_s, b_s, c_s, y_s):
    # x6 = gelu(mamba2(u)); x7 = gelu(l4(x6)); out = x7 + skip
    y = _mamba_core(u_ref[0], win_ref[...], cw_ref[...], cb_ref[...], wdbc_ref[...],
                    dtb_ref[...], a_ref[...], dp_ref[...],
                    xpad_s, delta_s, dx_s, b_s, c_s, y_s)
    x6 = _gelu(jnp.dot(y, wout_ref[...], preferred_element_type=jnp.float32))
    x7 = _gelu(jnp.dot(x6, w4_ref[...], preferred_element_type=jnp.float32) + b4_ref[...])
    o_ref[0] = x7 + skip_ref[0]


def _mamba3_kernel(u_ref,
                   win_ref, cw_ref, cb_ref, wdbc_ref, dtb_ref, a_ref, dp_ref, wout_ref,
                   o_ref, xpad_s, delta_s, dx_s, b_s, c_s, y_s):
    # out = gelu(mamba3(u))
    y = _mamba_core(u_ref[0], win_ref[...], cw_ref[...], cb_ref[...], wdbc_ref[...],
                    dtb_ref[...], a_ref[...], dp_ref[...],
                    xpad_s, delta_s, dx_s, b_s, c_s, y_s)
    m_out = jnp.dot(y, wout_ref[...], preferred_element_type=jnp.float32)
    o_ref[0] = _gelu(m_out)
    # TODO(synk): a lane-dense (1, L) transposed store would avoid 1-lane masked stores
    # on v5e, but requires an in-kernel (L, Di) transpose / NT matmul; skipped for safety.


def _full_spec(a):
    return pl.BlockSpec(a.shape, lambda b, nd=a.ndim: (0,) * nd)


def _scan_scratch(L, Di, n):
    f32 = jnp.float32
    return [
        pltpu.VMEM((L + 8, Di), f32),   # conv input with aligned 8-row zero prefix
        pltpu.VMEM((L, Di), f32),       # delta
        pltpu.VMEM((L, Di), f32),       # delta * x
        pltpu.VMEM((L, n), f32),        # B(t)
        pltpu.VMEM((L, n), f32),        # C(t)
        pltpu.VMEM((L, Di), f32),       # scan output y
    ]


def _mamba_call(kernel, acts, weights, L, Di, n, out_feat):
    B = acts[0].shape[0]
    in_specs = [pl.BlockSpec((1, a.shape[1], a.shape[2]), lambda b: (b, 0, 0))
                for a in acts]
    in_specs += [_full_spec(w) for w in weights]
    grid_spec = pltpu.PrefetchScalarGridSpec(
        num_scalar_prefetch=0,
        grid=(B,),
        in_specs=in_specs,
        out_specs=pl.BlockSpec((1, L, out_feat), lambda b: (b, 0, 0)),
        scratch_shapes=_scan_scratch(L, Di, n),
    )
    return pl.pallas_call(
        kernel,
        out_shape=jax.ShapeDtypeStruct((B, L, out_feat), jnp.float32),
        grid_spec=grid_spec,
        compiler_params=_CPARAMS,
    )(*acts, *weights)


def enc_mamba1(x22, l2_w, l2_b, m):
    w_in, conv_w, conv_b, w_dbc, dt_b, A, Dp, w_out = m
    _, L, _ = x22.shape
    Di, n = A.shape
    assert L % _CHUNK == 0, "sequence length must be a multiple of 8"
    return _mamba_call(_enc_mamba1_kernel, [x22],
                       [l2_w, l2_b, w_in, conv_w, conv_b, w_dbc, dt_b, A, Dp, w_out],
                       L, Di, n, w_out.shape[1])


def mamba2_dec(u, skip, m, l4_w, l4_b):
    w_in, conv_w, conv_b, w_dbc, dt_b, A, Dp, w_out = m
    _, L, _ = u.shape
    Di, n = A.shape
    assert L % _CHUNK == 0, "sequence length must be a multiple of 8"
    return _mamba_call(_mamba2_dec_kernel, [u, skip],
                       [w_in, conv_w, conv_b, w_dbc, dt_b, A, Dp, w_out, l4_w, l4_b],
                       L, Di, n, l4_w.shape[1])


def mamba3_gelu(u, m):
    w_in, conv_w, conv_b, w_dbc, dt_b, A, Dp, w_out = m
    _, L, _ = u.shape
    Di, n = A.shape
    assert L % _CHUNK == 0, "sequence length must be a multiple of 8"
    return _mamba_call(_mamba3_kernel, [u],
                       [w_in, conv_w, conv_b, w_dbc, dt_b, A, Dp, w_out],
                       L, Di, n, w_out.shape[1])


# ---------------------------------------------------------------------------
# Parameter init (deterministic, synthetic) and trace-time weight fusion
# ---------------------------------------------------------------------------
def init_mamba(key, d_model, d_state=16, d_conv=4, expand=2):
    di = expand * d_model
    R = max(1, math.ceil(d_model / 16))   # dt_rank
    ks = jax.random.split(key, 9)
    s = 0.3
    nrm = lambda k, shape: jax.random.normal(k, shape, jnp.float32) * s
    return {
        "in_w_x": nrm(ks[0], (d_model, di)),
        "in_w_z": nrm(ks[1], (d_model, di)),
        "conv_w": nrm(ks[2], (d_conv, di)),
        "conv_b": nrm(ks[3], (1, di)),
        "x_w_dt": nrm(ks[4], (di, R)),
        "x_w_B": nrm(ks[5], (di, d_state)),
        "x_w_C": nrm(ks[6], (di, d_state)),
        "dt_w": nrm(ks[7], (R, di)),
        "dt_b": jnp.full((1, di), 0.05, jnp.float32),
        "A_log": jnp.log(jnp.broadcast_to(
            jnp.arange(1, d_state + 1, dtype=jnp.float32), (di, d_state))),
        "D": jnp.ones((1, di), jnp.float32),
        "out_w": nrm(ks[8], (di, d_model)),
    }


def init_params(key, H=1):
    keys = jax.random.split(key, 7)
    s = 0.3

    def lin(k, cin, cout):
        k1, k2 = jax.random.split(k)
        return (jax.random.normal(k1, (cin, cout), jnp.float32) * s,
                jax.random.normal(k2, (1, cout), jnp.float32) * 0.05)

    p = {}
    p["l1_w"], p["l1_b"] = lin(keys[0], 4 * H, 2 * H)
    p["l2_w"], p["l2_b"] = lin(keys[1], 8 * H, 4 * H)
    p["l3_w"], p["l3_b"] = lin(keys[2], 4 * H, 8 * H)
    p["l4_w"], p["l4_b"] = lin(keys[3], 2 * H, 4 * H)
    p["m1"] = init_mamba(keys[4], 4 * H)
    p["m2"] = init_mamba(keys[5], 2 * H)
    p["m3"] = init_mamba(keys[6], 1 * H)
    return p


def _prep_mamba(mp):
    """Fuse / precompose Mamba weights (exact linear-algebra identities, trace-time)."""
    w_in = jnp.concatenate([mp["in_w_x"], mp["in_w_z"]], axis=1)            # (D, 2Di)
    w_delta = jnp.dot(mp["x_w_dt"], mp["dt_w"])                             # (Di, Di)
    w_dbc = jnp.concatenate([w_delta, mp["x_w_B"], mp["x_w_C"]], axis=1)    # (Di, Di+2n)
    A = -jnp.exp(mp["A_log"])                                               # (Di, n)
    return (w_in, mp["conv_w"], mp["conv_b"], w_dbc, mp["dt_b"], A,
            mp["D"], mp["out_w"])


# ---------------------------------------------------------------------------
# SeSaMe forward (reshapes + weight fusion in plain JAX, hot paths in Pallas)
# ---------------------------------------------------------------------------
def sesame_forward(x, p):
    B, N = x.shape
    m1 = _prep_mamba(p["m1"])
    m2 = _prep_mamba(p["m2"])
    m3 = _prep_mamba(p["m3"])

    x11 = x.reshape(B, N // 4, 4)                                  # x1 grouped by 4
    x2 = linear_gelu(x11, p["l1_w"], p["l1_b"])                    # (B, N/4, 2)
    x22 = x2.reshape(B, N // 16, 8)

    x4 = enc_mamba1(x22, p["l2_w"], p["l2_b"], m1)                 # x3 + gelu(mamba1(x3))

    # x5 + x2  (the add commutes with the reshape to (B, N/4, 2))
    s5 = linear_gelu_add(x4, x22, p["l3_w"], p["l3_b"])            # (B, N/16, 8)
    u2 = s5.reshape(B, N // 4, 2)                                  # == x55 + x2

    # gelu(mamba2(u2)) -> gelu(l4(.)) -> + x1 (x1 reshaped to (B, N/4, 4) == x11)
    s7 = mamba2_dec(u2, x11, m2, p["l4_w"], p["l4_b"])             # (B, N/4, 4)
    u3 = s7.reshape(B, N, 1)                                       # == x77 + x1

    y = mamba3_gelu(u3, m3)                                        # (B, N, 1)
    return y.reshape(B, N)


if __name__ == "__main__":
    H = 1
    B = 2
    N = 128   # N % 128 == 0 so every mamba sequence length is a multiple of 8

    key = jax.random.PRNGKey(0)
    kx, kp = jax.random.split(key)
    x = jax.random.normal(kx, (B, N), jnp.float32)
    params = init_params(kp, H=H)

    fwd = jax.jit(sesame_forward)
    y = jax.block_until_ready(fwd(x, params))

    assert y.shape == (B, N), y.shape
    assert bool(jnp.all(jnp.isfinite(y)))
    print("KERNEL_OK")
</pallas_src>

<mosaic_0001>
module attributes {stable_mosaic.version = 11 : i64} {
  func.func @_linear_gelu_kernel(%arg0: i32, %arg1: memref<64x4xf32, #tpu.memory_space<vmem>>, %arg2: memref<4x2xf32, #tpu.memory_space<vmem>>, %arg3: memref<1x2xf32, #tpu.memory_space<vmem>>, %arg4: memref<64x2xf32, #tpu.memory_space<vmem>>) attributes {dimension_semantics = [#tpu.dimension_semantics<parallel>], iteration_bounds = array<i64: 1>, scalar_prefetch = 0 : i64, scratch_operands = 0 : i64, tpu.core_type = #tpu.core_type<tc>, window_params = [{transform_indices = @transform_0, window_bounds = array<i64: 64, 4>}, {pipeline_mode = #tpu.pipeline_mode<synchronous>, transform_indices = @transform_1, window_bounds = array<i64: 4, 2>}, {pipeline_mode = #tpu.pipeline_mode<synchronous>, transform_indices = @transform_2, window_bounds = array<i64: 1, 2>}, {transform_indices = @transform_3, window_bounds = array<i64: 64, 2>}]} {
    %c0 = arith.constant 0 : index
    %c0_0 = arith.constant 0 : index
    %0 = vector.load %arg1[%c0, %c0_0] : memref<64x4xf32, #tpu.memory_space<vmem>>, vector<64x4xf32>
    %c0_1 = arith.constant 0 : index
    %c0_2 = arith.constant 0 : index
    %1 = vector.load %arg2[%c0_1, %c0_2] : memref<4x2xf32, #tpu.memory_space<vmem>>, vector<4x2xf32>
    %cst = arith.constant dense<0.000000e+00> : vector<64x2xf32>
    %2 = tpu.matmul %0, %1, %cst {dimension_numbers = #tpu.dot_dimension_numbers<[1], [0], [0], [1], [0, 0, 1, 1], [], []>} : vector<64x4xf32>, vector<4x2xf32>, vector<64x2xf32> -> vector<64x2xf32>
    %c0_3 = arith.constant 0 : index
    %c0_4 = arith.constant 0 : index
    %3 = vector.load %arg3[%c0_3, %c0_4] : memref<1x2xf32, #tpu.memory_space<vmem>>, vector<1x2xf32>
    %4 = vector.broadcast %3 : vector<1x2xf32> to vector<64x2xf32>
    %5 = arith.addf %2, %4 : vector<64x2xf32>
    %cst_5 = arith.constant 5.000000e-01 : f32
    %6 = vector.broadcast %cst_5 : f32 to vector<64x2xf32>
    %7 = arith.mulf %6, %5 : vector<64x2xf32>
    %cst_6 = arith.constant 0.707106769 : f32
    %8 = vector.broadcast %cst_6 : f32 to vector<64x2xf32>
    %9 = arith.mulf %5, %8 : vector<64x2xf32>
    %10 = math.erf %9 : vector<64x2xf32>
    %cst_7 = arith.constant 1.000000e+00 : f32
    %11 = vector.broadcast %cst_7 : f32 to vector<64x2xf32>
    %12 = arith.addf %11, %10 : vector<64x2xf32>
    %13 = arith.mulf %7, %12 : vector<64x2xf32>
    %c0_8 = arith.constant 0 : index
    %c0_9 = arith.constant 0 : index
    %14 = vector.load %arg4[%c0_8, %c0_9] : memref<64x2xf32, #tpu.memory_space<vmem>>, vector<64x2xf32>
    tpu.vector_store %arg4[%c0_8, %c0_9], %13 {strides = array<i32>} : memref<64x2xf32, #tpu.memory_space<vmem>>, vector<64x2xf32>,
    return
  }
  func.func @transform_0(%arg0: i32) -> (i32, i32) {
    %c0_i32 = arith.constant 0 : i32
    %c0_i32_0 = arith.constant 0 : i32
    return %arg0, %c0_i32 : i32, i32
  }
  func.func @transform_1(%arg0: i32) -> (i32, i32) {
    %c0_i32 = arith.constant 0 : i32
    %c0_i32_0 = arith.constant 0 : i32
    %c0_i32_1 = arith.constant 0 : i32
    return %c0_i32, %c0_i32_0 : i32, i32
  }
  func.func @transform_2(%arg0: i32) -> (i32, i32) {
    %c0_i32 = arith.constant 0 : i32
    %c0_i32_0 = arith.constant 0 : i32
    %c0_i32_1 = arith.constant 0 : i32
    return %c0_i32, %c0_i32_0 : i32, i32
  }
  func.func @transform_3(%arg0: i32) -> (i32, i32) {
    %c0_i32 = arith.constant 0 : i32
    %c0_i32_0 = arith.constant 0 : i32
    return %arg0, %c0_i32 : i32, i32
  }
}

module attributes {stable_mosaic.version = 11 : i64} {
  func.func @_linear_gelu_add_kernel(%arg0: i32, %arg1: memref<16x4xf32, #tpu.memory_space<vmem>>, %arg2: memref<16x8xf32, #tpu.memory_space<vmem>>, %arg3: memref<4x8xf32, #tpu.memory_space<vmem>>, %arg4: memref<1x8xf32, #tpu.memory_space<vmem>>, %arg5: memref<16x8xf32, #tpu.memory_space<vmem>>) attributes {dimension_semantics = [#tpu.dimension_semantics<parallel>], iteration_bounds = array<i64: 1>, scalar_prefetch = 0 : i64, scratch_operands = 0 : i64, tpu.core_type = #tpu.core_type<tc>, window_params = [{transform_indices = @transform_0, window_bounds = array<i64: 16, 4>}, {transform_indices = @transform_1, window_bounds = array<i64: 16, 8>}, {pipeline_mode = #tpu.pipeline_mode<synchronous>, transform_indices = @transform_2, window_bounds = array<i64: 4, 8>}, {pipeline_mode = #tpu.pipeline_mode<synchronous>, transform_indices = @transform_3, window_bounds = array<i64: 1, 8>}, {transform_indices = @transform_4, window_bounds = array<i64: 16, 8>}]} {
    %c0 = arith.constant 0 : index
    %c0_0 = arith.constant 0 : index
    %0 = vector.load %arg1[%c0, %c0_0] : memref<16x4xf32, #tpu.memory_space<vmem>>, vector<16x4xf32>
    %c0_1 = arith.constant 0 : index
    %c0_2 = arith.constant 0 : index
    %1 = vector.load %arg3[%c0_1, %c0_2] : memref<4x8xf32, #tpu.memory_space<vmem>>, vector<4x8xf32>
    %cst = arith.constant dense<0.000000e+00> : vector<16x8xf32>
    %2 = tpu.matmul %0, %1, %cst {dimension_numbers = #tpu.dot_dimension_numbers<[1], [0], [0], [1], [0, 0, 1, 1], [], []>} : vector<16x4xf32>, vector<4x8xf32>, vector<16x8xf32> -> vector<16x8xf32>
    %c0_3 = arith.constant 0 : index
    %c0_4 = arith.constant 0 : index
    %3 = vector.load %arg4[%c0_3, %c0_4] : memref<1x8xf32, #tpu.memory_space<vmem>>, vector<1x8xf32>
    %4 = vector.broadcast %3 : vector<1x8xf32> to vector<16x8xf32>
    %5 = arith.addf %2, %4 : vector<16x8xf32>
    %cst_5 = arith.constant 5.000000e-01 : f32
    %6 = vector.broadcast %cst_5 : f32 to vector<16x8xf32>
    %7 = arith.mulf %6, %5 : vector<16x8xf32>
    %cst_6 = arith.constant 0.707106769 : f32
    %8 = vector.broadcast %cst_6 : f32 to vector<16x8xf32>
    %9 = arith.mulf %5, %8 : vector<16x8xf32>
    %10 = math.erf %9 : vector<16x8xf32>
    %cst_7 = arith.constant 1.000000e+00 : f32
    %11 = vector.broadcast %cst_7 : f32 to vector<16x8xf32>
    %12 = arith.addf %11, %10 : vector<16x8xf32>
    %13 = arith.mulf %7, %12 : vector<16x8xf32>
    %c0_8 = arith.constant 0 : index
    %c0_9 = arith.constant 0 : index
    %14 = vector.load %arg2[%c0_8, %c0_9] : memref<16x8xf32, #tpu.memory_space<vmem>>, vector<16x8xf32>
    %15 = arith.addf %13, %14 : vector<16x8xf32>
    %c0_10 = arith.constant 0 : index
    %c0_11 = arith.constant 0 : index
    %16 = vector.load %arg5[%c0_10, %c0_11] : memref<16x8xf32, #tpu.memory_space<vmem>>, vector<16x8xf32>
    tpu.vector_store %arg5[%c0_10, %c0_11], %15 {strides = array<i32>} : memref<16x8xf32, #tpu.memory_space<vmem>>, vector<16x8xf32>,
    return
  }
  func.func @transform_0(%arg0: i32) -> (i32, i32) {
    %c0_i32 = arith.constant 0 : i32
    %c0_i32_0 = arith.constant 0 : i32
    return %arg0, %c0_i32 : i32, i32
  }
  func.func @transform_1(%arg0: i32) -> (i32, i32) {
    %c0_i32 = arith.constant 0 : i32
    %c0_i32_0 = arith.constant 0 : i32
    return %arg0, %c0_i32 : i32, i32
  }
  func.func @transform_2(%arg0: i32) -> (i32, i32) {
    %c0_i32 = arith.constant 0 : i32
    %c0_i32_0 = arith.constant 0 : i32
    %c0_i32_1 = arith.constant 0 : i32
    return %c0_i32, %c0_i32_0 : i32, i32
  }
  func.func @transform_3(%arg0: i32) -> (i32, i32) {
    %c0_i32 = arith.constant 0 : i32
    %c0_i32_0 = arith.constant 0 : i32
    %c0_i32_1 = arith.constant 0 : i32
    return %c0_i32, %c0_i32_0 : i32, i32
  }
  func.func @transform_4(%arg0: i32) -> (i32, i32) {
    %c0_i32 = arith.constant 0 : i32
    %c0_i32_0 = arith.constant 0 : i32
    return %arg0, %c0_i32 : i32, i32
  }
}

module attributes {stable_mosaic.version = 11 : i64} {
  func.func @_enc_mamba1_kernel(%arg0: i32, %arg1: memref<1x8x8xf32, #tpu.memory_space<vmem>>, %arg2: memref<8x4xf32, #tpu.memory_space<vmem>>, %arg3: memref<1x4xf32, #tpu.memory_space<vmem>>, %arg4: memref<4x16xf32, #tpu.memory_space<vmem>>, %arg5: memref<4x8xf32, #tpu.memory_space<vmem>>, %arg6: memref<1x8xf32, #tpu.memory_space<vmem>>, %arg7: memref<8x40xf32, #tpu.memory_space<vmem>>, %arg8: memref<1x8xf32, #tpu.memory_space<vmem>>, %arg9: memref<8x16xf32, #tpu.memory_space<vmem>>, %arg10: memref<1x8xf32, #tpu.memory_space<vmem>>, %arg11: memref<8x4xf32, #tpu.memory_space<vmem>>, %arg12: memref<1x8x4xf32, #tpu.memory_space<vmem>>, %arg13: memref<16x8xf32, #tpu.memory_space<vmem>>, %arg14: memref<8x8xf32, #tpu.memory_space<vmem>>, %arg15: memref<8x8xf32, #tpu.memory_space<vmem>>, %arg16: memref<8x16xf32, #tpu.memory_space<vmem>>, %arg17: memref<8x16xf32, #tpu.memory_space<vmem>>, %arg18: memref<8x8xf32, #tpu.memory_space<vmem>>) attributes {dimension_semantics = [#tpu.dimension_semantics<parallel>], iteration_bounds = array<i64: 2>, scalar_prefetch = 0 : i64, scratch_operands = 6 : i64, tpu.core_type = #tpu.core_type<tc>, window_params = [{transform_indices = @transform_0, window_bounds = array<i64: 1, 8, 8>}, {pipeline_mode = #tpu.pipeline_mode<synchronous>, transform_indices = @transform_1, window_bounds = array<i64: 8, 4>}, {pipeline_mode = #tpu.pipeline_mode<synchronous>, transform_indices = @transform_2, window_bounds = array<i64: 1, 4>}, {pipeline_mode = #tpu.pipeline_mode<synchronous>, transform_indices = @transform_3, window_bounds = array<i64: 4, 16>}, {pipeline_mode = #tpu.pipeline_mode<synchronous>, transform_indices = @transform_4, window_bounds = array<i64: 4, 8>}, {pipeline_mode = #tpu.pipeline_mode<synchronous>, transform_indices = @transform_5, window_bounds = array<i64: 1, 8>}, {pipeline_mode = #tpu.pipeline_mode<synchronous>, transform_indices = @transform_6, window_bounds = array<i64: 8, 40>}, {pipeline_mode = #tpu.pipeline_mode<synchronous>, transform_indices = @transform_7, window_bounds = array<i64: 1, 8>}, {pipeline_mode = #tpu.pipeline_mode<synchronous>, transform_indices = @transform_8, window_bounds = array<i64: 8, 16>}, {pipeline_mode = #tpu.pipeline_mode<synchronous>, transform_indices = @transform_9, window_bounds = array<i64: 1, 8>}, {pipeline_mode = #tpu.pipeline_mode<synchronous>, transform_indices = @transform_10, window_bounds = array<i64: 8, 4>}, {transform_indices = @transform_11, window_bounds = array<i64: 1, 8, 4>}]} {
    %c0 = arith.constant 0 : index
    %c0_0 = arith.constant 0 : index
    %c0_1 = arith.constant 0 : index
    %0 = vector.load %arg1[%c0, %c0_0, %c0_1] : memref<1x8x8xf32, #tpu.memory_space<vmem>>, vector<1x8x8xf32>
    %1 = vector.shape_cast %0 : vector<1x8x8xf32> to vector<8x8xf32>
    %c0_2 = arith.constant 0 : index
    %c0_3 = arith.constant 0 : index
    %2 = vector.load %arg2[%c0_2, %c0_3] : memref<8x4xf32, #tpu.memory_space<vmem>>, vector<8x4xf32>
    %cst = arith.constant dense<0.000000e+00> : vector<8x4xf32>
    %3 = tpu.matmul %1, %2, %cst {dimension_numbers = #tpu.dot_dimension_numbers<[1], [0], [0], [1], [0, 0, 1, 1], [], []>} : vector<8x8xf32>, vector<8x4xf32>, vector<8x4xf32> -> vector<8x4xf32>
    %c0_4 = arith.constant 0 : index
    %c0_5 = arith.constant 0 : index
    %4 = vector.load %arg3[%c0_4, %c0_5] : memref<1x4xf32, #tpu.memory_space<vmem>>, vector<1x4xf32>
    %5 = vector.broadcast %4 : vector<1x4xf32> to vector<8x4xf32>
    %6 = arith.addf %3, %5 : vector<8x4xf32>
    %cst_6 = arith.constant 5.000000e-01 : f32
    %7 = vector.broadcast %cst_6 : f32 to vector<8x4xf32>
    %8 = arith.mulf %7, %6 : vector<8x4xf32>
    %cst_7 = arith.constant 0.707106769 : f32
    %9 = vector.broadcast %cst_7 : f32 to vector<8x4xf32>
    %10 = arith.mulf %6, %9 : vector<8x4xf32>
    %11 = math.erf %10 : vector<8x4xf32>
    %cst_8 = arith.constant 1.000000e+00 : f32
    %12 = vector.broadcast %cst_8 : f32 to vector<8x4xf32>
    %13 = arith.addf %12, %11 : vector<8x4xf32>
    %14 = arith.mulf %8, %13 : vector<8x4xf32>
    %c0_9 = arith.constant 0 : index
    %c0_10 = arith.constant 0 : index
    %15 = vector.load %arg4[%c0_9, %c0_10] : memref<4x16xf32, #tpu.memory_space<vmem>>, vector<4x16xf32>
    %c0_11 = arith.constant 0 : index
    %c0_12 = arith.constant 0 : index
    %16 = vector.load %arg5[%c0_11, %c0_12] : memref<4x8xf32, #tpu.memory_space<vmem>>, vector<4x8xf32>
    %c0_13 = arith.constant 0 : index
    %c0_14 = arith.constant 0 : index
    %17 = vector.load %arg6[%c0_13, %c0_14] : memref<1x8xf32, #tpu.memory_space<vmem>>, vector<1x8xf32>
    %c0_15 = arith.constant 0 : index
    %c0_16 = arith.constant 0 : index
    %18 = vector.load %arg7[%c0_15, %c0_16] : memref<8x40xf32, #tpu.memory_space<vmem>>, vector<8x40xf32>
    %c0_17 = arith.constant 0 : index
    %c0_18 = arith.constant 0 : index
    %19 = vector.load %arg8[%c0_17, %c0_18] : memref<1x8xf32, #tpu.memory_space<vmem>>, vector<1x8xf32>
    %c0_19 = arith.constant 0 : index
    %c0_20 = arith.constant 0 : index
    %20 = vector.load %arg9[%c0_19, %c0_20] : memref<8x16xf32, #tpu.memory_space<vmem>>, vector<8x16xf32>
    %c0_21 = arith.constant 0 : index
    %c0_22 = arith.constant 0 : index
    %21 = vector.load %arg10[%c0_21, %c0_22] : memref<1x8xf32, #tpu.memory_space<vmem>>, vector<1x8xf32>
    %cst_23 = arith.constant dense<0.000000e+00> : vector<8x16xf32>
    %22 = tpu.matmul %14, %15, %cst_23 {dimension_numbers = #tpu.dot_dimension_numbers<[1], [0], [0], [1], [0, 0, 1, 1], [], []>} : vector<8x4xf32>, vector<4x16xf32>, vector<8x16xf32> -> vector<8x16xf32>
    %23 = vector.extract_strided_slice %22 {offsets = [0, 0], sizes = [8, 8], strides = [1, 1]} : vector<8x16xf32> to vector<8x8xf32>
    %24 = vector.extract_strided_slice %22 {offsets = [0, 8], sizes = [8, 8], strides = [1, 1]} : vector<8x16xf32> to vector<8x8xf32>
    %cst_24 = arith.constant 0.000000e+00 : f32
    %25 = vector.broadcast %cst_24 : f32 to vector<8x8xf32>
    %c0_25 = arith.constant 0 : index
    %c0_26 = arith.constant 0 : index
    %26 = vector.load %arg13[%c0_25, %c0_26] : memref<16x8xf32, #tpu.memory_space<vmem>>, vector<8x8xf32>
    tpu.vector_store %arg13[%c0_25, %c0_26], %25 {strides = array<i32>} : memref<16x8xf32, #tpu.memory_space<vmem>>, vector<8x8xf32>,
    %c8 = arith.constant 8 : index
    %c0_27 = arith.constant 0 : index
    %27 = vector.load %arg13[%c8, %c0_27] : memref<16x8xf32, #tpu.memory_space<vmem>>, vector<8x8xf32>
    tpu.vector_store %arg13[%c8, %c0_27], %23 {strides = array<i32>} : memref<16x8xf32, #tpu.memory_space<vmem>>, vector<8x8xf32>,
    %28 = vector.extract_strided_slice %16 {offsets = [3, 0], sizes = [1, 8], strides = [1, 1]} : vector<4x8xf32> to vector<1x8xf32>
    %29 = vector.broadcast %28 : vector<1x8xf32> to vector<8x8xf32>
    %30 = arith.mulf %23, %29 : vector<8x8xf32>
    %c7 = arith.constant 7 : index
    %c0_28 = arith.constant 0 : index
    %31 = vector.load %arg13[%c7, %c0_28] : memref<16x8xf32, #tpu.memory_space<vmem>>, vector<8x8xf32>
    %32 = vector.extract_strided_slice %16 {offsets = [2, 0], sizes = [1, 8], strides = [1, 1]} : vector<4x8xf32> to vector<1x8xf32>
    %33 = vector.broadcast %32 : vector<1x8xf32> to vector<8x8xf32>
    %34 = arith.mulf %31, %33 : vector<8x8xf32>
    %35 = arith.addf %30, %34 : vector<8x8xf32>
    %c6 = arith.constant 6 : index
    %c0_29 = arith.constant 0 : index
    %36 = vector.load %arg13[%c6, %c0_29] : memref<16x8xf32, #tpu.memory_space<vmem>>, vector<8x8xf32>
    %37 = vector.extract_strided_slice %16 {offsets = [1, 0], sizes = [1, 8], strides = [1, 1]} : vector<4x8xf32> to vector<1x8xf32>
    %38 = vector.broadcast %37 : vector<1x8xf32> to vector<8x8xf32>
    %39 = arith.mulf %36, %38 : vector<8x8xf32>
    %40 = arith.addf %35, %39 : vector<8x8xf32>
    %c5 = arith.constant 5 : index
    %c0_30 = arith.constant 0 : index
    %41 = vector.load %arg13[%c5, %c0_30] : memref<16x8xf32, #tpu.memory_space<vmem>>, vector<8x8xf32>
    %42 = vector.extract_strided_slice %16 {offsets = [0, 0], sizes = [1, 8], strides = [1, 1]} : vector<4x8xf32> to vector<1x8xf32>
    %43 = vector.broadcast %42 : vector<1x8xf32> to vector<8x8xf32>
    %44 = arith.mulf %41, %43 : vector<8x8xf32>
    %45 = arith.addf %40, %44 : vector<8x8xf32>
    %46 = vector.broadcast %17 : vector<1x8xf32> to vector<8x8xf32>
    %47 = arith.addf %45, %46 : vector<8x8xf32>
    %48 = arith.negf %47 : vector<8x8xf32>
    %49 = math.exp %48 : vector<8x8xf32>
    %cst_31 = arith.constant 1.000000e+00 : f32
    %50 = vector.broadcast %cst_31 : f32 to vector<8x8xf32>
    %51 = arith.addf %50, %49 : vector<8x8xf32>
    %52 = arith.divf %50, %51 : vector<8x8xf32>
    %53 = arith.mulf %47, %52 : vector<8x8xf32>
    %cst_32 = arith.constant dense<0.000000e+00> : vector<8x40xf32>
    %54 = tpu.matmul %53, %18, %cst_32 {dimension_numbers = #tpu.dot_dimension_numbers<[1], [0], [0], [1], [0, 0, 1, 1], [], []>} : vector<8x8xf32>, vector<8x40xf32>, vector<8x40xf32> -> vector<8x40xf32>
    %55 = vector.extract_strided_slice %54 {offsets = [0, 0], sizes = [8, 8], strides = [1, 1]} : vector<8x40xf32> to vector<8x8xf32>
    %56 = vector.broadcast %19 : vector<1x8xf32> to vector<8x8xf32>
    %57 = arith.addf %55, %56 : vector<8x8xf32>
    %cst_33 = arith.constant 2.000000e+01 : f32
    %58 = vector.broadcast %cst_33 : f32 to vector<8x8xf32>
    %59 = arith.cmpf ogt, %57, %58 : vector<8x8xf32>
    %cst_34 = arith.constant 2.000000e+01 : f32
    %60 = vector.broadcast %cst_34 : f32 to vector<8x8xf32>
    %61 = arith.minimumf %57, %60 : vector<8x8xf32>
    %62 = math.exp %61 : vector<8x8xf32>
    %cst_35 = arith.constant 1.000000e+00 : f32
    %63 = vector.broadcast %cst_35 : f32 to vector<8x8xf32>
    %64 = arith.addf %63, %62 : vector<8x8xf32>
    %65 = math.log %64 : vector<8x8xf32>
    %66 = arith.select %59, %57, %65 : vector<8x8xi1>, vector<8x8xf32>
    %c0_36 = arith.constant 0 : index
    %c0_37 = arith.constant 0 : index
    %67 = vector.load %arg14[%c0_36, %c0_37] : memref<8x8xf32, #tpu.memory_space<vmem>>, vector<8x8xf32>
    tpu.vector_store %arg14[%c0_36, %c0_37], %66 {strides = array<i32>} : memref<8x8xf32, #tpu.memory_space<vmem>>, vector<8x8xf32>,
    %68 = arith.mulf %66, %53 : vector<8x8xf32>
    %c0_38 = arith.constant 0 : index
    %c0_39 = arith.constant 0 : index
    %69 = vector.load %arg15[%c0_38, %c0_39] : memref<8x8xf32, #tpu.memory_space<vmem>>, vector<8x8xf32>
    tpu.vector_store %arg15[%c0_38, %c0_39], %68 {strides = array<i32>} : memref<8x8xf32, #tpu.memory_space<vmem>>, vector<8x8xf32>,
    %70 = vector.extract_strided_slice %54 {offsets = [0, 8], sizes = [8, 16], strides = [1, 1]} : vector<8x40xf32> to vector<8x16xf32>
    %c0_40 = arith.constant 0 : index
    %c0_41 = arith.constant 0 : index
    %71 = vector.load %arg16[%c0_40, %c0_41] : memref<8x16xf32, #tpu.memory_space<vmem>>, vector<8x16xf32>
    tpu.vector_store %arg16[%c0_40, %c0_41], %70 {strides = array<i32>} : memref<8x16xf32, #tpu.memory_space<vmem>>, vector<8x16xf32>,
    %72 = vector.extract_strided_slice %54 {offsets = [0, 24], sizes = [8, 16], strides = [1, 1]} : vector<8x40xf32> to vector<8x16xf32>
    %c0_42 = arith.constant 0 : index
    %c0_43 = arith.constant 0 : index
    %73 = vector.load %arg17[%c0_42, %c0_43] : memref<8x16xf32, #tpu.memory_space<vmem>>, vector<8x16xf32>
    tpu.vector_store %arg17[%c0_42, %c0_43], %72 {strides = array<i32>} : memref<8x16xf32, #tpu.memory_space<vmem>>, vector<8x16xf32>,
    %cst_44 = arith.constant 0.000000e+00 : f32
    %74 = vector.broadcast %cst_44 : f32 to vector<8x16xf32>
    %c0_i32 = arith.constant 0 : i32
    %c8_i32 = arith.constant 8 : i32
    %75 = arith.muli %c0_i32, %c8_i32 : i32
    %76 = tpu.assume_multiple %75, 8 : i32
    %77 = arith.index_cast %76 : i32 to index
    %c0_45 = arith.constant 0 : index
    %78 = vector.load %arg14[%77, %c0_45] : memref<8x8xf32, #tpu.memory_space<vmem>>, vector<8x8xf32>
    %79 = arith.index_cast %76 : i32 to index
    %c0_46 = arith.constant 0 : index
    %80 = vector.load %arg15[%79, %c0_46] : memref<8x8xf32, #tpu.memory_space<vmem>>, vector<8x8xf32>
    %81 = arith.index_cast %76 : i32 to index
    %c0_47 = arith.constant 0 : index
    %82 = vector.load %arg16[%81, %c0_47] : memref<8x16xf32, #tpu.memory_space<vmem>>, vector<8x16xf32>
    %83 = arith.index_cast %76 : i32 to index
    %c0_48 = arith.constant 0 : index
    %84 = vector.load %arg17[%83, %c0_48] : memref<8x16xf32, #tpu.memory_space<vmem>>, vector<8x16xf32>
    %85 = vector.shape_cast %78 : vector<8x8xf32> to vector<8x8x1xf32>
    %86 = vector.shape_cast %20 : vector<8x16xf32> to vector<1x8x16xf32>
    %87 = vector.broadcast %85 : vector<8x8x1xf32> to vector<8x8x16xf32>
    %88 = vector.broadcast %86 : vector<1x8x16xf32> to vector<8x8x16xf32>
    %89 = arith.mulf %87, %88 : vector<8x8x16xf32>
    %90 = math.exp %89 : vector<8x8x16xf32>
    %91 = vector.shape_cast %80 : vector<8x8xf32> to vector<8x8x1xf32>
    %92 = vector.shape_cast %82 : vector<8x16xf32> to vector<8x1x16xf32>
    %93 = vector.broadcast %91 : vector<8x8x1xf32> to vector<8x8x16xf32>
    %94 = vector.broadcast %92 : vector<8x1x16xf32> to vector<8x8x16xf32>
    %95 = arith.mulf %93, %94 : vector<8x8x16xf32>
    %96 = vector.extract_strided_slice %90 {offsets = [0, 0, 0], sizes = [1, 8, 16], strides = [1, 1, 1]} : vector<8x8x16xf32> to vector<1x8x16xf32>
    %97 = vector.shape_cast %96 : vector<1x8x16xf32> to vector<8x16xf32>
    %98 = arith.mulf %97, %74 : vector<8x16xf32>
    %99 = vector.extract_strided_slice %95 {offsets = [0, 0, 0], sizes = [1, 8, 16], strides = [1, 1, 1]} : vector<8x8x16xf32> to vector<1x8x16xf32>
    %100 = vector.shape_cast %99 : vector<1x8x16xf32> to vector<8x16xf32>
    %101 = arith.addf %98, %100 : vector<8x16xf32>
    %102 = vector.extract_strided_slice %90 {offsets = [1, 0, 0], sizes = [1, 8, 16], strides = [1, 1, 1]} : vector<8x8x16xf32> to vector<1x8x16xf32>
    %103 = vector.shape_cast %102 : vector<1x8x16xf32> to vector<8x16xf32>
    %104 = arith.mulf %103, %101 : vector<8x16xf32>
    %105 = vector.extract_strided_slice %95 {offsets = [1, 0, 0], sizes = [1, 8, 16], strides = [1, 1, 1]} : vector<8x8x16xf32> to vector<1x8x16xf32>
    %106 = vector.shape_cast %105 : vector<1x8x16xf32> to vector<8x16xf32>
    %107 = arith.addf %104, %106 : vector<8x16xf32>
    %108 = vector.extract_strided_slice %90 {offsets = [2, 0, 0], sizes = [1, 8, 16], strides = [1, 1, 1]} : vector<8x8x16xf32> to vector<1x8x16xf32>
    %109 = vector.shape_cast %108 : vector<1x8x16xf32> to vector<8x16xf32>
    %110 = arith.mulf %109, %107 : vector<8x16xf32>
    %111 = vector.extract_strided_slice %95 {offsets = [2, 0, 0], sizes = [1, 8, 16], strides = [1, 1, 1]} : vector<8x8x16xf32> to vector<1x8x16xf32>
    %112 = vector.shape_cast %111 : vector<1x8x16xf32> to vector<8x16xf32>
    %113 = arith.addf %110, %112 : vector<8x16xf32>
    %114 = vector.extract_strided_slice %90 {offsets = [3, 0, 0], sizes = [1, 8, 16], strides = [1, 1, 1]} : vector<8x8x16xf32> to vector<1x8x16xf32>
    %115 = vector.shape_cast %114 : vector<1x8x16xf32> to vector<8x16xf32>
    %116 = arith.mulf %115, %113 : vector<8x16xf32>
    %117 = vector.extract_strided_slice %95 {offsets = [3, 0, 0], sizes = [1, 8, 16], strides = [1, 1, 1]} : vector<8x8x16xf32> to vector<1x8x16xf32>
    %118 = vector.shape_cast %117 : vector<1x8x16xf32> to vector<8x16xf32>
    %119 = arith.addf %116, %118 : vector<8x16xf32>
    %120 = vector.extract_strided_slice %90 {offsets = [4, 0, 0], sizes = [1, 8, 16], strides = [1, 1, 1]} : vector<8x8x16xf32> to vector<1x8x16xf32>
    %121 = vector.shape_cast %120 : vector<1x8x16xf32> to vector<8x16xf32>
    %122 = arith.mulf %121, %119 : vector<8x16xf32>
    %123 = vector.extract_strided_slice %95 {offsets = [4, 0, 0], sizes = [1, 8, 16], strides = [1, 1, 1]} : vector<8x8x16xf32> to vector<1x8x16xf32>
    %124 = vector.shape_cast %123 : vector<1x8x16xf32> to vector<8x16xf32>
    %125 = arith.addf %122, %124 : vector<8x16xf32>
    %126 = vector.extract_strided_slice %90 {offsets = [5, 0, 0], sizes = [1, 8, 16], strides = [1, 1, 1]} : vector<8x8x16xf32> to vector<1x8x16xf32>
    %127 = vector.shape_cast %126 : vector<1x8x16xf32> to vector<8x16xf32>
    %128 = arith.mulf %127, %125 : vector<8x16xf32>
    %129 = vector.extract_strided_slice %95 {offsets = [5, 0, 0], sizes = [1, 8, 16], strides = [1, 1, 1]} : vector<8x8x16xf32> to vector<1x8x16xf32>
    %130 = vector.shape_cast %129 : vector<1x8x16xf32> to vector<8x16xf32>
    %131 = arith.addf %128, %130 : vector<8x16xf32>
    %132 = vector.extract_strided_slice %90 {offsets = [6, 0, 0], sizes = [1, 8, 16], strides = [1, 1, 1]} : vector<8x8x16xf32> to vector<1x8x16xf32>
    %133 = vector.shape_cast %132 : vector<1x8x16xf32> to vector<8x16xf32>
    %134 = arith.mulf %133, %131 : vector<8x16xf32>
    %135 = vector.extract_strided_slice %95 {offsets = [6, 0, 0], sizes = [1, 8, 16], strides = [1, 1, 1]} : vector<8x8x16xf32> to vector<1x8x16xf32>
    %136 = vector.shape_cast %135 : vector<1x8x16xf32> to vector<8x16xf32>
    %137 = arith.addf %134, %136 : vector<8x16xf32>
    %138 = vector.extract_strided_slice %90 {offsets = [7, 0, 0], sizes = [1, 8, 16], strides = [1, 1, 1]} : vector<8x8x16xf32> to vector<1x8x16xf32>
    %139 = vector.shape_cast %138 : vector<1x8x16xf32> to vector<8x16xf32>
    %140 = arith.mulf %139, %137 : vector<8x16xf32>
    %141 = vector.extract_strided_slice %95 {offsets = [7, 0, 0], sizes = [1, 8, 16], strides = [1, 1, 1]} : vector<8x8x16xf32> to vector<1x8x16xf32>
    %142 = vector.shape_cast %141 : vector<1x8x16xf32> to vector<8x16xf32>
    %143 = arith.addf %140, %142 : vector<8x16xf32>
    %144 = vector.shape_cast %101 : vector<8x16xf32> to vector<1x8x16xf32>
    %145 = vector.shape_cast %107 : vector<8x16xf32> to vector<1x8x16xf32>
    %146 = vector.shape_cast %113 : vector<8x16xf32> to vector<1x8x16xf32>
    %147 = vector.shape_cast %119 : vector<8x16xf32> to vector<1x8x16xf32>
    %148 = vector.shape_cast %125 : vector<8x16xf32> to vector<1x8x16xf32>
    %149 = vector.shape_cast %131 : vector<8x16xf32> to vector<1x8x16xf32>
    %150 = vector.shape_cast %137 : vector<8x16xf32> to vector<1x8x16xf32>
    %151 = vector.shape_cast %143 : vector<8x16xf32> to vector<1x8x16xf32>
    %152 = tpu.concatenate %144, %145, %146, %147, %148, %149, %150, %151 in 0 : vector<1x8x16xf32>, vector<1x8x16xf32>, vector<1x8x16xf32>, vector<1x8x16xf32>, vector<1x8x16xf32>, vector<1x8x16xf32>, vector<1x8x16xf32>, vector<1x8x16xf32> -> vector<8x8x16xf32>
    %153 = vector.shape_cast %84 : vector<8x16xf32> to vector<8x1x16xf32>
    %154 = vector.broadcast %153 : vector<8x1x16xf32> to vector<8x8x16xf32>
    %155 = arith.mulf %152, %154 : vector<8x8x16xf32>
    %cst_49 = arith.constant dense<0.000000e+00> : vector<8x8xf32>
    %156 = vector.multi_reduction <add>, %155, %cst_49 [2] : vector<8x8x16xf32> to vector<8x8xf32>
    %157 = arith.index_cast %76 : i32 to index
    %c0_50 = arith.constant 0 : index
    %158 = vector.load %arg18[%157, %c0_50] : memref<8x8xf32, #tpu.memory_space<vmem>>, vector<8x8xf32>
    tpu.vector_store %arg18[%157, %c0_50], %156 {strides = array<i32>} : memref<8x8xf32, #tpu.memory_space<vmem>>, vector<8x8xf32>,
    %c1_i32 = arith.constant 1 : i32
    %c0_51 = arith.constant 0 : index
    %c0_52 = arith.constant 0 : index
    %159 = vector.load %arg18[%c0_51, %c0_52] : memref<8x8xf32, #tpu.memory_space<vmem>>, vector<8x8xf32>
    %160 = vector.broadcast %21 : vector<1x8xf32> to vector<8x8xf32>
    %161 = arith.mulf %53, %160 : vector<8x8xf32>
    %162 = arith.addf %159, %161 : vector<8x8xf32>
    %163 = arith.negf %24 : vector<8x8xf32>
    %164 = math.exp %163 : vector<8x8xf32>
    %cst_53 = arith.constant 1.000000e+00 : f32
    %165 = vector.broadcast %cst_53 : f32 to vector<8x8xf32>
    %166 = arith.addf %165, %164 : vector<8x8xf32>
    %167 = arith.divf %165, %166 : vector<8x8xf32>
    %168 = arith.mulf %24, %167 : vector<8x8xf32>
    %169 = arith.mulf %162, %168 : vector<8x8xf32>
    %c0_54 = arith.constant 0 : index
    %c0_55 = arith.constant 0 : index
    %170 = vector.load %arg11[%c0_54, %c0_55] : memref<8x4xf32, #tpu.memory_space<vmem>>, vector<8x4xf32>
    %cst_56 = arith.constant dense<0.000000e+00> : vector<8x4xf32>
    %171 = tpu.matmul %169, %170, %cst_56 {dimension_numbers = #tpu.dot_dimension_numbers<[1], [0], [0], [1], [0, 0, 1, 1], [], []>} : vector<8x8xf32>, vector<8x4xf32>, vector<8x4xf32> -> vector<8x4xf32>
    %cst_57 = arith.constant 5.000000e-01 : f32
    %172 = vector.broadcast %cst_57 : f32 to vector<8x4xf32>
    %173 = arith.mulf %172, %171 : vector<8x4xf32>
    %cst_58 = arith.constant 0.707106769 : f32
    %174 = vector.broadcast %cst_58 : f32 to vector<8x4xf32>
    %175 = arith.mulf %171, %174 : vector<8x4xf32>
    %176 = math.erf %175 : vector<8x4xf32>
    %cst_59 = arith.constant 1.000000e+00 : f32
    %177 = vector.broadcast %cst_59 : f32 to vector<8x4xf32>
    %178 = arith.addf %177, %176 : vector<8x4xf32>
    %179 = arith.mulf %173, %178 : vector<8x4xf32>
    %180 = arith.addf %14, %179 : vector<8x4xf32>
    %c0_60 = arith.constant 0 : index
    %c0_61 = arith.constant 0 : index
    %c0_62 = arith.constant 0 : index
    %181 = vector.load %arg12[%c0_60, %c0_61, %c0_62] : memref<1x8x4xf32, #tpu.memory_space<vmem>>, vector<1x8x4xf32>
    %182 = vector.shape_cast %181 : vector<1x8x4xf32> to vector<8x4xf32>
    %183 = vector.shape_cast %180 : vector<8x4xf32> to vector<1x8x4xf32>
    tpu.vector_store %arg12[%c0_60, %c0_61, %c0_62], %183 {strides = array<i32>} : memref<1x8x4xf32, #tpu.memory_space<vmem>>, vector<1x8x4xf32>,
    return
  }
  func.func @transform_0(%arg0: i32) -> (i32, i32, i32) {
    %c0_i32 = arith.constant 0 : i32
    %c0_i32_0 = arith.constant 0 : i32
    %c0_i32_1 = arith.constant 0 : i32
    return %arg0, %c0_i32, %c0_i32_0 : i32, i32, i32
  }
  func.func @transform_1(%arg0: i32) -> (i32, i32) {
    %c0_i32 = arith.constant 0 : i32
    %c0_i32_0 = arith.constant 0 : i32
    %c0_i32_1 = arith.constant 0 : i32
    return %c0_i32, %c0_i32_0 : i32, i32
  }
  func.func @transform_2(%arg0: i32) -> (i32, i32) {
    %c0_i32 = arith.constant 0 : i32
    %c0_i32_0 = arith.constant 0 : i32
    %c0_i32_1 = arith.constant 0 : i32
    return %c0_i32, %c0_i32_0 : i32, i32
  }
  func.func @transform_3(%arg0: i32) -> (i32, i32) {
    %c0_i32 = arith.constant 0 : i32
    %c0_i32_0 = arith.constant 0 : i32
    %c0_i32_1 = arith.constant 0 : i32
    return %c0_i32, %c0_i32_0 : i32, i32
  }
  func.func @transform_4(%arg0: i32) -> (i32, i32) {
    %c0_i32 = arith.constant 0 : i32
    %c0_i32_0 = arith.constant 0 : i32
    %c0_i32_1 = arith.constant 0 : i32
    return %c0_i32, %c0_i32_0 : i32, i32
  }
  func.func @transform_5(%arg0: i32) -> (i32, i32) {
    %c0_i32 = arith.constant 0 : i32
    %c0_i32_0 = arith.constant 0 : i32
    %c0_i32_1 = arith.constant 0 : i32
    return %c0_i32, %c0_i32_0 : i32, i32
  }
  func.func @transform_6(%arg0: i32) -> (i32, i32) {
    %c0_i32 = arith.constant 0 : i32
    %c0_i32_0 = arith.constant 0 : i32
    %c0_i32_1 = arith.constant 0 : i32
    return %c0_i32, %c0_i32_0 : i32, i32
  }
  func.func @transform_7(%arg0: i32) -> (i32, i32) {
    %c0_i32 = arith.constant 0 : i32
    %c0_i32_0 = arith.constant 0 : i32
    %c0_i32_1 = arith.constant 0 : i32
    return %c0_i32, %c0_i32_0 : i32, i32
  }
  func.func @transform_8(%arg0: i32) -> (i32, i32) {
    %c0_i32 = arith.constant 0 : i32
    %c0_i32_0 = arith.constant 0 : i32
    %c0_i32_1 = arith.constant 0 : i32
    return %c0_i32, %c0_i32_0 : i32, i32
  }
  func.func @transform_9(%arg0: i32) -> (i32, i32) {
    %c0_i32 = arith.constant 0 : i32
    %c0_i32_0 = arith.constant 0 : i32
    %c0_i32_1 = arith.constant 0 : i32
    return %c0_i32, %c0_i32_0 : i32, i32
  }
  func.func @transform_10(%arg0: i32) -> (i32, i32) {
    %c0_i32 = arith.constant 0 : i32
    %c0_i32_0 = arith.constant 0 : i32
    %c0_i32_1 = arith.constant 0 : i32
    return %c0_i32, %c0_i32_0 : i32, i32
  }
  func.func @transform_11(%arg0: i32) -> (i32, i32, i32) {
    %c0_i32 = arith.constant 0 : i32
    %c0_i32_0 = arith.constant 0 : i32
    %c0_i32_1 = arith.constant 0 : i32
    return %arg0, %c0_i32, %c0_i32_0 : i32, i32, i32
  }
}

module attributes {stable_mosaic.version = 11 : i64} {
  func.func @_mamba2_dec_kernel(%arg0: i32, %arg1: memref<1x32x2xf32, #tpu.memory_space<vmem>>, %arg2: memref<1x32x4xf32, #tpu.memory_space<vmem>>, %arg3: memref<2x8xf32, #tpu.memory_space<vmem>>, %arg4: memref<4x4xf32, #tpu.memory_space<vmem>>, %arg5: memref<1x4xf32, #tpu.memory_space<vmem>>, %arg6: memref<4x36xf32, #tpu.memory_space<vmem>>, %arg7: memref<1x4xf32, #tpu.memory_space<vmem>>, %arg8: memref<4x16xf32, #tpu.memory_space<vmem>>, %arg9: memref<1x4xf32, #tpu.memory_space<vmem>>, %arg10: memref<4x2xf32, #tpu.memory_space<vmem>>, %arg11: memref<2x4xf32, #tpu.memory_space<vmem>>, %arg12: memref<1x4xf32, #tpu.memory_space<vmem>>, %arg13: memref<1x32x4xf32, #tpu.memory_space<vmem>>, %arg14: memref<40x4xf32, #tpu.memory_space<vmem>>, %arg15: memref<32x4xf32, #tpu.memory_space<vmem>>, %arg16: memref<32x4xf32, #tpu.memory_space<vmem>>, %arg17: memref<32x16xf32, #tpu.memory_space<vmem>>, %arg18: memref<32x16xf32, #tpu.memory_space<vmem>>, %arg19: memref<32x4xf32, #tpu.memory_space<vmem>>) attributes {dimension_semantics = [#tpu.dimension_semantics<parallel>], iteration_bounds = array<i64: 2>, scalar_prefetch = 0 : i64, scratch_operands = 6 : i64, tpu.core_type = #tpu.core_type<tc>, window_params = [{transform_indices = @transform_0, window_bounds = array<i64: 1, 32, 2>}, {transform_indices = @transform_1, window_bounds = array<i64: 1, 32, 4>}, {pipeline_mode = #tpu.pipeline_mode<synchronous>, transform_indices = @transform_2, window_bounds = array<i64: 2, 8>}, {pipeline_mode = #tpu.pipeline_mode<synchronous>, transform_indices = @transform_3, window_bounds = array<i64: 4, 4>}, {pipeline_mode = #tpu.pipeline_mode<synchronous>, transform_indices = @transform_4, window_bounds = array<i64: 1, 4>}, {pipeline_mode = #tpu.pipeline_mode<synchronous>, transform_indices = @transform_5, window_bounds = array<i64: 4, 36>}, {pipeline_mode = #tpu.pipeline_mode<synchronous>, transform_indices = @transform_6, window_bounds = array<i64: 1, 4>}, {pipeline_mode = #tpu.pipeline_mode<synchronous>, transform_indices = @transform_7, window_bounds = array<i64: 4, 16>}, {pipeline_mode = #tpu.pipeline_mode<synchronous>, transform_indices = @transform_8, window_bounds = array<i64: 1, 4>}, {pipeline_mode = #tpu.pipeline_mode<synchronous>, transform_indices = @transform_9, window_bounds = array<i64: 4, 2>}, {pipeline_mode = #tpu.pipeline_mode<synchronous>, transform_indices = @transform_10, window_bounds = array<i64: 2, 4>}, {pipeline_mode = #tpu.pipeline_mode<synchronous>, transform_indices = @transform_11, window_bounds = array<i64: 1, 4>}, {transform_indices = @transform_12, window_bounds = array<i64: 1, 32, 4>}]} {
    %c0 = arith.constant 0 : index
    %c0_0 = arith.constant 0 : index
    %c0_1 = arith.constant 0 : index
    %0 = vector.load %arg1[%c0, %c0_0, %c0_1] : memref<1x32x2xf32, #tpu.memory_space<vmem>>, vector<1x32x2xf32>
    %1 = vector.shape_cast %0 : vector<1x32x2xf32> to vector<32x2xf32>
    %c0_2 = arith.constant 0 : index
    %c0_3 = arith.constant 0 : index
    %2 = vector.load %arg3[%c0_2, %c0_3] : memref<2x8xf32, #tpu.memory_space<vmem>>, vector<2x8xf32>
    %c0_4 = arith.constant 0 : index
    %c0_5 = arith.constant 0 : index
    %3 = vector.load %arg4[%c0_4, %c0_5] : memref<4x4xf32, #tpu.memory_space<vmem>>, vector<4x4xf32>
    %c0_6 = arith.constant 0 : index
    %c0_7 = arith.constant 0 : index
    %4 = vector.load %arg5[%c0_6, %c0_7] : memref<1x4xf32, #tpu.memory_space<vmem>>, vector<1x4xf32>
    %c0_8 = arith.constant 0 : index
    %c0_9 = arith.constant 0 : index
    %5 = vector.load %arg6[%c0_8, %c0_9] : memref<4x36xf32, #tpu.memory_space<vmem>>, vector<4x36xf32>
    %c0_10 = arith.constant 0 : index
    %c0_11 = arith.constant 0 : index
    %6 = vector.load %arg7[%c0_10, %c0_11] : memref<1x4xf32, #tpu.memory_space<vmem>>, vector<1x4xf32>
    %c0_12 = arith.constant 0 : index
    %c0_13 = arith.constant 0 : index
    %7 = vector.load %arg8[%c0_12, %c0_13] : memref<4x16xf32, #tpu.memory_space<vmem>>, vector<4x16xf32>
    %c0_14 = arith.constant 0 : index
    %c0_15 = arith.constant 0 : index
    %8 = vector.load %arg9[%c0_14, %c0_15] : memref<1x4xf32, #tpu.memory_space<vmem>>, vector<1x4xf32>
    %cst = arith.constant dense<0.000000e+00> : vector<32x8xf32>
    %9 = tpu.matmul %1, %2, %cst {dimension_numbers = #tpu.dot_dimension_numbers<[1], [0], [0], [1], [0, 0, 1, 1], [], []>} : vector<32x2xf32>, vector<2x8xf32>, vector<32x8xf32> -> vector<32x8xf32>
    %10 = vector.extract_strided_slice %9 {offsets = [0, 0], sizes = [32, 4], strides = [1, 1]} : vector<32x8xf32> to vector<32x4xf32>
    %11 = vector.extract_strided_slice %9 {offsets = [0, 4], sizes = [32, 4], strides = [1, 1]} : vector<32x8xf32> to vector<32x4xf32>
    %cst_16 = arith.constant 0.000000e+00 : f32
    %12 = vector.broadcast %cst_16 : f32 to vector<8x4xf32>
    %c0_17 = arith.constant 0 : index
    %c0_18 = arith.constant 0 : index
    %13 = vector.load %arg14[%c0_17, %c0_18] : memref<40x4xf32, #tpu.memory_space<vmem>>, vector<8x4xf32>
    tpu.vector_store %arg14[%c0_17, %c0_18], %12 {strides = array<i32>} : memref<40x4xf32, #tpu.memory_space<vmem>>, vector<8x4xf32>,
    %c8 = arith.constant 8 : index
    %c0_19 = arith.constant 0 : index
    %14 = vector.load %arg14[%c8, %c0_19] : memref<40x4xf32, #tpu.memory_space<vmem>>, vector<32x4xf32>
    tpu.vector_store %arg14[%c8, %c0_19], %10 {strides = array<i32>} : memref<40x4xf32, #tpu.memory_space<vmem>>, vector<32x4xf32>,
    %15 = vector.extract_strided_slice %3 {offsets = [3, 0], sizes = [1, 4], strides = [1, 1]} : vector<4x4xf32> to vector<1x4xf32>
    %16 = vector.broadcast %15 : vector<1x4xf32> to vector<32x4xf32>
    %17 = arith.mulf %10, %16 : vector<32x4xf32>
    %c7 = arith.constant 7 : index
    %c0_20 = arith.constant 0 : index
    %18 = vector.load %arg14[%c7, %c0_20] : memref<40x4xf32, #tpu.memory_space<vmem>>, vector<32x4xf32>
    %19 = vector.extract_strided_slice %3 {offsets = [2, 0], sizes = [1, 4], strides = [1, 1]} : vector<4x4xf32> to vector<1x4xf32>
    %20 = vector.broadcast %19 : vector<1x4xf32> to vector<32x4xf32>
    %21 = arith.mulf %18, %20 : vector<32x4xf32>
    %22 = arith.addf %17, %21 : vector<32x4xf32>
    %c6 = arith.constant 6 : index
    %c0_21 = arith.constant 0 : index
    %23 = vector.load %arg14[%c6, %c0_21] : memref<40x4xf32, #tpu.memory_space<vmem>>, vector<32x4xf32>
    %24 = vector.extract_strided_slice %3 {offsets = [1, 0], sizes = [1, 4], strides = [1, 1]} : vector<4x4xf32> to vector<1x4xf32>
    %25 = vector.broadcast %24 : vector<1x4xf32> to vector<32x4xf32>
    %26 = arith.mulf %23, %25 : vector<32x4xf32>
    %27 = arith.addf %22, %26 : vector<32x4xf32>
    %c5 = arith.constant 5 : index
    %c0_22 = arith.constant 0 : index
    %28 = vector.load %arg14[%c5, %c0_22] : memref<40x4xf32, #tpu.memory_space<vmem>>, vector<32x4xf32>
    %29 = vector.extract_strided_slice %3 {offsets = [0, 0], sizes = [1, 4], strides = [1, 1]} : vector<4x4xf32> to vector<1x4xf32>
    %30 = vector.broadcast %29 : vector<1x4xf32> to vector<32x4xf32>
    %31 = arith.mulf %28, %30 : vector<32x4xf32>
    %32 = arith.addf %27, %31 : vector<32x4xf32>
    %33 = vector.broadcast %4 : vector<1x4xf32> to vector<32x4xf32>
    %34 = arith.addf %32, %33 : vector<32x4xf32>
    %35 = arith.negf %34 : vector<32x4xf32>
    %36 = math.exp %35 : vector<32x4xf32>
    %cst_23 = arith.constant 1.000000e+00 : f32
    %37 = vector.broadcast %cst_23 : f32 to vector<32x4xf32>
    %38 = arith.addf %37, %36 : vector<32x4xf32>
    %39 = arith.divf %37, %38 : vector<32x4xf32>
    %40 = arith.mulf %34, %39 : vector<32x4xf32>
    %cst_24 = arith.constant dense<0.000000e+00> : vector<32x36xf32>
    %41 = tpu.matmul %40, %5, %cst_24 {dimension_numbers = #tpu.dot_dimension_numbers<[1], [0], [0], [1], [0, 0, 1, 1], [], []>} : vector<32x4xf32>, vector<4x36xf32>, vector<32x36xf32> -> vector<32x36xf32>
    %42 = vector.extract_strided_slice %41 {offsets = [0, 0], sizes = [32, 4], strides = [1, 1]} : vector<32x36xf32> to vector<32x4xf32>
    %43 = vector.broadcast %6 : vector<1x4xf32> to vector<32x4xf32>
    %44 = arith.addf %42, %43 : vector<32x4xf32>
    %cst_25 = arith.constant 2.000000e+01 : f32
    %45 = vector.broadcast %cst_25 : f32 to vector<32x4xf32>
    %46 = arith.cmpf ogt, %44, %45 : vector<32x4xf32>
    %cst_26 = arith.constant 2.000000e+01 : f32
    %47 = vector.broadcast %cst_26 : f32 to vector<32x4xf32>
    %48 = arith.minimumf %44, %47 : vector<32x4xf32>
    %49 = math.exp %48 : vector<32x4xf32>
    %cst_27 = arith.constant 1.000000e+00 : f32
    %50 = vector.broadcast %cst_27 : f32 to vector<32x4xf32>
    %51 = arith.addf %50, %49 : vector<32x4xf32>
    %52 = math.log %51 : vector<32x4xf32>
    %53 = arith.select %46, %44, %52 : vector<32x4xi1>, vector<32x4xf32>
    %c0_28 = arith.constant 0 : index
    %c0_29 = arith.constant 0 : index
    %54 = vector.load %arg15[%c0_28, %c0_29] : memref<32x4xf32, #tpu.memory_space<vmem>>, vector<32x4xf32>
    tpu.vector_store %arg15[%c0_28, %c0_29], %53 {strides = array<i32>} : memref<32x4xf32, #tpu.memory_space<vmem>>, vector<32x4xf32>,
    %55 = arith.mulf %53, %40 : vector<32x4xf32>
    %c0_30 = arith.constant 0 : index
    %c0_31 = arith.constant 0 : index
    %56 = vector.load %arg16[%c0_30, %c0_31] : memref<32x4xf32, #tpu.memory_space<vmem>>, vector<32x4xf32>
    tpu.vector_store %arg16[%c0_30, %c0_31], %55 {strides = array<i32>} : memref<32x4xf32, #tpu.memory_space<vmem>>, vector<32x4xf32>,
    %57 = vector.extract_strided_slice %41 {offsets = [0, 4], sizes = [32, 16], strides = [1, 1]} : vector<32x36xf32> to vector<32x16xf32>
    %c0_32 = arith.constant 0 : index
    %c0_33 = arith.constant 0 : index
    %58 = vector.load %arg17[%c0_32, %c0_33] : memref<32x16xf32, #tpu.memory_space<vmem>>, vector<32x16xf32>
    tpu.vector_store %arg17[%c0_32, %c0_33], %57 {strides = array<i32>} : memref<32x16xf32, #tpu.memory_space<vmem>>, vector<32x16xf32>,
    %59 = vector.extract_strided_slice %41 {offsets = [0, 20], sizes = [32, 16], strides = [1, 1]} : vector<32x36xf32> to vector<32x16xf32>
    %c0_34 = arith.constant 0 : index
    %c0_35 = arith.constant 0 : index
    %60 = vector.load %arg18[%c0_34, %c0_35] : memref<32x16xf32, #tpu.memory_space<vmem>>, vector<32x16xf32>
    tpu.vector_store %arg18[%c0_34, %c0_35], %59 {strides = array<i32>} : memref<32x16xf32, #tpu.memory_space<vmem>>, vector<32x16xf32>,
    %cst_36 = arith.constant 0.000000e+00 : f32
    %61 = vector.broadcast %cst_36 : f32 to vector<4x16xf32>
    %c0_i32 = arith.constant 0 : i32
    %c4_i32 = arith.constant 4 : i32
    %62 = arith.addi %c0_i32, %c4_i32 : i32
    %c1_i32 = arith.constant 1 : i32
    %63 = scf.for %arg20 = %c0_i32 to %62 step %c1_i32 iter_args(%arg21 = %61) -> (vector<4x16xf32>)  : i32 {
      %c8_i32 = arith.constant 8 : i32
      %104 = arith.muli %arg20, %c8_i32 : i32
      %105 = tpu.assume_multiple %104, 8 : i32
      %106 = arith.index_cast %105 : i32 to index
      %c0_61 = arith.constant 0 : index
      %107 = vector.load %arg15[%106, %c0_61] : memref<32x4xf32, #tpu.memory_space<vmem>>, vector<8x4xf32>
      %108 = arith.index_cast %105 : i32 to index
      %c0_62 = arith.constant 0 : index
      %109 = vector.load %arg16[%108, %c0_62] : memref<32x4xf32, #tpu.memory_space<vmem>>, vector<8x4xf32>
      %110 = arith.index_cast %105 : i32 to index
      %c0_63 = arith.constant 0 : index
      %111 = vector.load %arg17[%110, %c0_63] : memref<32x16xf32, #tpu.memory_space<vmem>>, vector<8x16xf32>
      %112 = arith.index_cast %105 : i32 to index
      %c0_64 = arith.constant 0 : index
      %113 = vector.load %arg18[%112, %c0_64] : memref<32x16xf32, #tpu.memory_space<vmem>>, vector<8x16xf32>
      %114 = vector.shape_cast %107 : vector<8x4xf32> to vector<8x4x1xf32>
      %115 = vector.shape_cast %7 : vector<4x16xf32> to vector<1x4x16xf32>
      %116 = vector.broadcast %114 : vector<8x4x1xf32> to vector<8x4x16xf32>
      %117 = vector.broadcast %115 : vector<1x4x16xf32> to vector<8x4x16xf32>
      %118 = arith.mulf %116, %117 : vector<8x4x16xf32>
      %119 = math.exp %118 : vector<8x4x16xf32>
      %120 = vector.shape_cast %109 : vector<8x4xf32> to vector<8x4x1xf32>
      %121 = vector.shape_cast %111 : vector<8x16xf32> to vector<8x1x16xf32>
      %122 = vector.broadcast %120 : vector<8x4x1xf32> to vector<8x4x16xf32>
      %123 = vector.broadcast %121 : vector<8x1x16xf32> to vector<8x4x16xf32>
      %124 = arith.mulf %122, %123 : vector<8x4x16xf32>
      %125 = vector.extract_strided_slice %119 {offsets = [0, 0, 0], sizes = [1, 4, 16], strides = [1, 1, 1]} : vector<8x4x16xf32> to vector<1x4x16xf32>
      %126 = vector.shape_cast %125 : vector<1x4x16xf32> to vector<4x16xf32>
      %127 = arith.mulf %126, %arg21 : vector<4x16xf32>
      %128 = vector.extract_strided_slice %124 {offsets = [0, 0, 0], sizes = [1, 4, 16], strides = [1, 1, 1]} : vector<8x4x16xf32> to vector<1x4x16xf32>
      %129 = vector.shape_cast %128 : vector<1x4x16xf32> to vector<4x16xf32>
      %130 = arith.addf %127, %129 : vector<4x16xf32>
      %131 = vector.extract_strided_slice %119 {offsets = [1, 0, 0], sizes = [1, 4, 16], strides = [1, 1, 1]} : vector<8x4x16xf32> to vector<1x4x16xf32>
      %132 = vector.shape_cast %131 : vector<1x4x16xf32> to vector<4x16xf32>
      %133 = arith.mulf %132, %130 : vector<4x16xf32>
      %134 = vector.extract_strided_slice %124 {offsets = [1, 0, 0], sizes = [1, 4, 16], strides = [1, 1, 1]} : vector<8x4x16xf32> to vector<1x4x16xf32>
      %135 = vector.shape_cast %134 : vector<1x4x16xf32> to vector<4x16xf32>
      %136 = arith.addf %133, %135 : vector<4x16xf32>
      %137 = vector.extract_strided_slice %119 {offsets = [2, 0, 0], sizes = [1, 4, 16], strides = [1, 1, 1]} : vector<8x4x16xf32> to vector<1x4x16xf32>
      %138 = vector.shape_cast %137 : vector<1x4x16xf32> to vector<4x16xf32>
      %139 = arith.mulf %138, %136 : vector<4x16xf32>
      %140 = vector.extract_strided_slice %124 {offsets = [2, 0, 0], sizes = [1, 4, 16], strides = [1, 1, 1]} : vector<8x4x16xf32> to vector<1x4x16xf32>
      %141 = vector.shape_cast %140 : vector<1x4x16xf32> to vector<4x16xf32>
      %142 = arith.addf %139, %141 : vector<4x16xf32>
      %143 = vector.extract_strided_slice %119 {offsets = [3, 0, 0], sizes = [1, 4, 16], strides = [1, 1, 1]} : vector<8x4x16xf32> to vector<1x4x16xf32>
      %144 = vector.shape_cast %143 : vector<1x4x16xf32> to vector<4x16xf32>
      %145 = arith.mulf %144, %142 : vector<4x16xf32>
      %146 = vector.extract_strided_slice %124 {offsets = [3, 0, 0], sizes = [1, 4, 16], strides = [1, 1, 1]} : vector<8x4x16xf32> to vector<1x4x16xf32>
      %147 = vector.shape_cast %146 : vector<1x4x16xf32> to vector<4x16xf32>
      %148 = arith.addf %145, %147 : vector<4x16xf32>
      %149 = vector.extract_strided_slice %119 {offsets = [4, 0, 0], sizes = [1, 4, 16], strides = [1, 1, 1]} : vector<8x4x16xf32> to vector<1x4x16xf32>
      %150 = vector.shape_cast %149 : vector<1x4x16xf32> to vector<4x16xf32>
      %151 = arith.mulf %150, %148 : vector<4x16xf32>
      %152 = vector.extract_strided_slice %124 {offsets = [4, 0, 0], sizes = [1, 4, 16], strides = [1, 1, 1]} : vector<8x4x16xf32> to vector<1x4x16xf32>
      %153 = vector.shape_cast %152 : vector<1x4x16xf32> to vector<4x16xf32>
      %154 = arith.addf %151, %153 : vector<4x16xf32>
      %155 = vector.extract_strided_slice %119 {offsets = [5, 0, 0], sizes = [1, 4, 16], strides = [1, 1, 1]} : vector<8x4x16xf32> to vector<1x4x16xf32>
      %156 = vector.shape_cast %155 : vector<1x4x16xf32> to vector<4x16xf32>
      %157 = arith.mulf %156, %154 : vector<4x16xf32>
      %158 = vector.extract_strided_slice %124 {offsets = [5, 0, 0], sizes = [1, 4, 16], strides = [1, 1, 1]} : vector<8x4x16xf32> to vector<1x4x16xf32>
      %159 = vector.shape_cast %158 : vector<1x4x16xf32> to vector<4x16xf32>
      %160 = arith.addf %157, %159 : vector<4x16xf32>
      %161 = vector.extract_strided_slice %119 {offsets = [6, 0, 0], sizes = [1, 4, 16], strides = [1, 1, 1]} : vector<8x4x16xf32> to vector<1x4x16xf32>
      %162 = vector.shape_cast %161 : vector<1x4x16xf32> to vector<4x16xf32>
      %163 = arith.mulf %162, %160 : vector<4x16xf32>
      %164 = vector.extract_strided_slice %124 {offsets = [6, 0, 0], sizes = [1, 4, 16], strides = [1, 1, 1]} : vector<8x4x16xf32> to vector<1x4x16xf32>
      %165 = vector.shape_cast %164 : vector<1x4x16xf32> to vector<4x16xf32>
      %166 = arith.addf %163, %165 : vector<4x16xf32>
      %167 = vector.extract_strided_slice %119 {offsets = [7, 0, 0], sizes = [1, 4, 16], strides = [1, 1, 1]} : vector<8x4x16xf32> to vector<1x4x16xf32>
      %168 = vector.shape_cast %167 : vector<1x4x16xf32> to vector<4x16xf32>
      %169 = arith.mulf %168, %166 : vector<4x16xf32>
      %170 = vector.extract_strided_slice %124 {offsets = [7, 0, 0], sizes = [1, 4, 16], strides = [1, 1, 1]} : vector<8x4x16xf32> to vector<1x4x16xf32>
      %171 = vector.shape_cast %170 : vector<1x4x16xf32> to vector<4x16xf32>
      %172 = arith.addf %169, %171 : vector<4x16xf32>
      %173 = vector.shape_cast %130 : vector<4x16xf32> to vector<1x4x16xf32>
      %174 = vector.shape_cast %136 : vector<4x16xf32> to vector<1x4x16xf32>
      %175 = vector.shape_cast %142 : vector<4x16xf32> to vector<1x4x16xf32>
      %176 = vector.shape_cast %148 : vector<4x16xf32> to vector<1x4x16xf32>
      %177 = vector.shape_cast %154 : vector<4x16xf32> to vector<1x4x16xf32>
      %178 = vector.shape_cast %160 : vector<4x16xf32> to vector<1x4x16xf32>
      %179 = vector.shape_cast %166 : vector<4x16xf32> to vector<1x4x16xf32>
      %180 = vector.shape_cast %172 : vector<4x16xf32> to vector<1x4x16xf32>
      %181 = tpu.concatenate %173, %174, %175, %176, %177, %178, %179, %180 in 0 : vector<1x4x16xf32>, vector<1x4x16xf32>, vector<1x4x16xf32>, vector<1x4x16xf32>, vector<1x4x16xf32>, vector<1x4x16xf32>, vector<1x4x16xf32>, vector<1x4x16xf32> -> vector<8x4x16xf32>
      %182 = vector.shape_cast %113 : vector<8x16xf32> to vector<8x1x16xf32>
      %183 = vector.broadcast %182 : vector<8x1x16xf32> to vector<8x4x16xf32>
      %184 = arith.mulf %181, %183 : vector<8x4x16xf32>
      %cst_65 = arith.constant dense<0.000000e+00> : vector<8x4xf32>
      %185 = vector.multi_reduction <add>, %184, %cst_65 [2] : vector<8x4x16xf32> to vector<8x4xf32>
      %186 = arith.index_cast %105 : i32 to index
      %c0_66 = arith.constant 0 : index
      %187 = vector.load %arg19[%186, %c0_66] : memref<32x4xf32, #tpu.memory_space<vmem>>, vector<8x4xf32>
      tpu.vector_store %arg19[%186, %c0_66], %185 {strides = array<i32>} : memref<32x4xf32, #tpu.memory_space<vmem>>, vector<8x4xf32>,
      scf.yield %172 : vector<4x16xf32>
    }
    %c4_i32_37 = arith.constant 4 : i32
    %c0_38 = arith.constant 0 : index
    %c0_39 = arith.constant 0 : index
    %64 = vector.load %arg19[%c0_38, %c0_39] : memref<32x4xf32, #tpu.memory_space<vmem>>, vector<32x4xf32>
    %65 = vector.broadcast %8 : vector<1x4xf32> to vector<32x4xf32>
    %66 = arith.mulf %40, %65 : vector<32x4xf32>
    %67 = arith.addf %64, %66 : vector<32x4xf32>
    %68 = arith.negf %11 : vector<32x4xf32>
    %69 = math.exp %68 : vector<32x4xf32>
    %cst_40 = arith.constant 1.000000e+00 : f32
    %70 = vector.broadcast %cst_40 : f32 to vector<32x4xf32>
    %71 = arith.addf %70, %69 : vector<32x4xf32>
    %72 = arith.divf %70, %71 : vector<32x4xf32>
    %73 = arith.mulf %11, %72 : vector<32x4xf32>
    %74 = arith.mulf %67, %73 : vector<32x4xf32>
    %c0_41 = arith.constant 0 : index
    %c0_42 = arith.constant 0 : index
    %75 = vector.load %arg10[%c0_41, %c0_42] : memref<4x2xf32, #tpu.memory_space<vmem>>, vector<4x2xf32>
    %cst_43 = arith.constant dense<0.000000e+00> : vector<32x2xf32>
    %76 = tpu.matmul %74, %75, %cst_43 {dimension_numbers = #tpu.dot_dimension_numbers<[1], [0], [0], [1], [0, 0, 1, 1], [], []>} : vector<32x4xf32>, vector<4x2xf32>, vector<32x2xf32> -> vector<32x2xf32>
    %cst_44 = arith.constant 5.000000e-01 : f32
    %77 = vector.broadcast %cst_44 : f32 to vector<32x2xf32>
    %78 = arith.mulf %77, %76 : vector<32x2xf32>
    %cst_45 = arith.constant 0.707106769 : f32
    %79 = vector.broadcast %cst_45 : f32 to vector<32x2xf32>
    %80 = arith.mulf %76, %79 : vector<32x2xf32>
    %81 = math.erf %80 : vector<32x2xf32>
    %cst_46 = arith.constant 1.000000e+00 : f32
    %82 = vector.broadcast %cst_46 : f32 to vector<32x2xf32>
    %83 = arith.addf %82, %81 : vector<32x2xf32>
    %84 = arith.mulf %78, %83 : vector<32x2xf32>
    %c0_47 = arith.constant 0 : index
    %c0_48 = arith.constant 0 : index
    %85 = vector.load %arg11[%c0_47, %c0_48] : memref<2x4xf32, #tpu.memory_space<vmem>>, vector<2x4xf32>
    %cst_49 = arith.constant dense<0.000000e+00> : vector<32x4xf32>
    %86 = tpu.matmul %84, %85, %cst_49 {dimension_numbers = #tpu.dot_dimension_numbers<[1], [0], [0], [1], [0, 0, 1, 1], [], []>} : vector<32x2xf32>, vector<2x4xf32>, vector<32x4xf32> -> vector<32x4xf32>
    %c0_50 = arith.constant 0 : index
    %c0_51 = arith.constant 0 : index
    %87 = vector.load %arg12[%c0_50, %c0_51] : memref<1x4xf32, #tpu.memory_space<vmem>>, vector<1x4xf32>
    %88 = vector.broadcast %87 : vector<1x4xf32> to vector<32x4xf32>
    %89 = arith.addf %86, %88 : vector<32x4xf32>
    %cst_52 = arith.constant 5.000000e-01 : f32
    %90 = vector.broadcast %cst_52 : f32 to vector<32x4xf32>
    %91 = arith.mulf %90, %89 : vector<32x4xf32>
    %cst_53 = arith.constant 0.707106769 : f32
    %92 = vector.broadcast %cst_53 : f32 to vector<32x4xf32>
    %93 = arith.mulf %89, %92 : vector<32x4xf32>
    %94 = math.erf %93 : vector<32x4xf32>
    %cst_54 = arith.constant 1.000000e+00 : f32
    %95 = vector.broadcast %cst_54 : f32 to vector<32x4xf32>
    %96 = arith.addf %95, %94 : vector<32x4xf32>
    %97 = arith.mulf %91, %96 : vector<32x4xf32>
    %c0_55 = arith.constant 0 : index
    %c0_56 = arith.constant 0 : index
    %c0_57 = arith.constant 0 : index
    %98 = vector.load %arg2[%c0_55, %c0_56, %c0_57] : memref<1x32x4xf32, #tpu.memory_space<vmem>>, vector<1x32x4xf32>
    %99 = vector.shape_cast %98 : vector<1x32x4xf32> to vector<32x4xf32>
    %100 = arith.addf %97, %99 : vector<32x4xf32>
    %c0_58 = arith.constant 0 : index
    %c0_59 = arith.constant 0 : index
    %c0_60 = arith.constant 0 : index
    %101 = vector.load %arg13[%c0_58, %c0_59, %c0_60] : memref<1x32x4xf32, #tpu.memory_space<vmem>>, vector<1x32x4xf32>
    %102 = vector.shape_cast %101 : vector<1x32x4xf32> to vector<32x4xf32>
    %103 = vector.shape_cast %100 : vector<32x4xf32> to vector<1x32x4xf32>
    tpu.vector_store %arg13[%c0_58, %c0_59, %c0_60], %103 {strides = array<i32>} : memref<1x32x4xf32, #tpu.memory_space<vmem>>, vector<1x32x4xf32>,
    return
  }
  func.func @transform_0(%arg0: i32) -> (i32, i32, i32) {
    %c0_i32 = arith.constant 0 : i32
    %c0_i32_0 = arith.constant 0 : i32
    %c0_i32_1 = arith.constant 0 : i32
    return %arg0, %c0_i32, %c0_i32_0 : i32, i32, i32
  }
  func.func @transform_1(%arg0: i32) -> (i32, i32, i32) {
    %c0_i32 = arith.constant 0 : i32
    %c0_i32_0 = arith.constant 0 : i32
    %c0_i32_1 = arith.constant 0 : i32
    return %arg0, %c0_i32, %c0_i32_0 : i32, i32, i32
  }
  func.func @transform_2(%arg0: i32) -> (i32, i32) {
    %c0_i32 = arith.constant 0 : i32
    %c0_i32_0 = arith.constant 0 : i32
    %c0_i32_1 = arith.constant 0 : i32
    return %c0_i32, %c0_i32_0 : i32, i32
  }
  func.func @transform_3(%arg0: i32) -> (i32, i32) {
    %c0_i32 = arith.constant 0 : i32
    %c0_i32_0 = arith.constant 0 : i32
    %c0_i32_1 = arith.constant 0 : i32
    return %c0_i32, %c0_i32_0 : i32, i32
  }
  func.func @transform_4(%arg0: i32) -> (i32, i32) {
    %c0_i32 = arith.constant 0 : i32
    %c0_i32_0 = arith.constant 0 : i32
    %c0_i32_1 = arith.constant 0 : i32
    return %c0_i32, %c0_i32_0 : i32, i32
  }
  func.func @transform_5(%arg0: i32) -> (i32, i32) {
    %c0_i32 = arith.constant 0 : i32
    %c0_i32_0 = arith.constant 0 : i32
    %c0_i32_1 = arith.constant 0 : i32
    return %c0_i32, %c0_i32_0 : i32, i32
  }
  func.func @transform_6(%arg0: i32) -> (i32, i32) {
    %c0_i32 = arith.constant 0 : i32
    %c0_i32_0 = arith.constant 0 : i32
    %c0_i32_1 = arith.constant 0 : i32
    return %c0_i32, %c0_i32_0 : i32, i32
  }
  func.func @transform_7(%arg0: i32) -> (i32, i32) {
    %c0_i32 = arith.constant 0 : i32
    %c0_i32_0 = arith.constant 0 : i32
    %c0_i32_1 = arith.constant 0 : i32
    return %c0_i32, %c0_i32_0 : i32, i32
  }
  func.func @transform_8(%arg0: i32) -> (i32, i32) {
    %c0_i32 = arith.constant 0 : i32
    %c0_i32_0 = arith.constant 0 : i32
    %c0_i32_1 = arith.constant 0 : i32
    return %c0_i32, %c0_i32_0 : i32, i32
  }
  func.func @transform_9(%arg0: i32) -> (i32, i32) {
    %c0_i32 = arith.constant 0 : i32
    %c0_i32_0 = arith.constant 0 : i32
    %c0_i32_1 = arith.constant 0 : i32
    return %c0_i32, %c0_i32_0 : i32, i32
  }
  func.func @transform_10(%arg0: i32) -> (i32, i32) {
    %c0_i32 = arith.constant 0 : i32
    %c0_i32_0 = arith.constant 0 : i32
    %c0_i32_1 = arith.constant 0 : i32
    return %c0_i32, %c0_i32_0 : i32, i32
  }
  func.func @transform_11(%arg0: i32) -> (i32, i32) {
    %c0_i32 = arith.constant 0 : i32
    %c0_i32_0 = arith.constant 0 : i32
    %c0_i32_1 = arith.constant 0 : i32
    return %c0_i32, %c0_i32_0 : i32, i32
  }
  func.func @transform_12(%arg0: i32) -> (i32, i32, i32) {
    %c0_i32 = arith.constant 0 : i32
    %c0_i32_0 = arith.constant 0 : i32
    %c0_i32_1 = arith.constant 0 : i32
    return %arg0, %c0_i32, %c0_i32_0 : i32, i32, i32
  }
}

module attributes {stable_mosaic.version = 11 : i64} {
  func.func @_mamba3_kernel(%arg0: i32, %arg1: memref<1x128x1xf32, #tpu.memory_space<vmem>>, %arg2: memref<1x4xf32, #tpu.memory_space<vmem>>, %arg3: memref<4x2xf32, #tpu.memory_space<vmem>>, %arg4: memref<1x2xf32, #tpu.memory_space<vmem>>, %arg5: memref<2x34xf32, #tpu.memory_space<vmem>>, %arg6: memref<1x2xf32, #tpu.memory_space<vmem>>, %arg7: memref<2x16xf32, #tpu.memory_space<vmem>>, %arg8: memref<1x2xf32, #tpu.memory_space<vmem>>, %arg9: memref<2x1xf32, #tpu.memory_space<vmem>>, %arg10: memref<1x128x1xf32, #tpu.memory_space<vmem>>, %arg11: memref<136x2xf32, #tpu.memory_space<vmem>>, %arg12: memref<128x2xf32, #tpu.memory_space<vmem>>, %arg13: memref<128x2xf32, #tpu.memory_space<vmem>>, %arg14: memref<128x16xf32, #tpu.memory_space<vmem>>, %arg15: memref<128x16xf32, #tpu.memory_space<vmem>>, %arg16: memref<128x2xf32, #tpu.memory_space<vmem>>) attributes {dimension_semantics = [#tpu.dimension_semantics<parallel>], iteration_bounds = array<i64: 2>, scalar_prefetch = 0 : i64, scratch_operands = 6 : i64, tpu.core_type = #tpu.core_type<tc>, window_params = [{transform_indices = @transform_0, window_bounds = array<i64: 1, 128, 1>}, {pipeline_mode = #tpu.pipeline_mode<synchronous>, transform_indices = @transform_1, window_bounds = array<i64: 1, 4>}, {pipeline_mode = #tpu.pipeline_mode<synchronous>, transform_indices = @transform_2, window_bounds = array<i64: 4, 2>}, {pipeline_mode = #tpu.pipeline_mode<synchronous>, transform_indices = @transform_3, window_bounds = array<i64: 1, 2>}, {pipeline_mode = #tpu.pipeline_mode<synchronous>, transform_indices = @transform_4, window_bounds = array<i64: 2, 34>}, {pipeline_mode = #tpu.pipeline_mode<synchronous>, transform_indices = @transform_5, window_bounds = array<i64: 1, 2>}, {pipeline_mode = #tpu.pipeline_mode<synchronous>, transform_indices = @transform_6, window_bounds = array<i64: 2, 16>}, {pipeline_mode = #tpu.pipeline_mode<synchronous>, transform_indices = @transform_7, window_bounds = array<i64: 1, 2>}, {pipeline_mode = #tpu.pipeline_mode<synchronous>, transform_indices = @transform_8, window_bounds = array<i64: 2, 1>}, {transform_indices = @transform_9, window_bounds = array<i64: 1, 128, 1>}]} {
    %c0 = arith.constant 0 : index
    %c0_0 = arith.constant 0 : index
    %c0_1 = arith.constant 0 : index
    %0 = vector.load %arg1[%c0, %c0_0, %c0_1] : memref<1x128x1xf32, #tpu.memory_space<vmem>>, vector<1x128x1xf32>
    %1 = vector.shape_cast %0 : vector<1x128x1xf32> to vector<128x1xf32>
    %c0_2 = arith.constant 0 : index
    %c0_3 = arith.constant 0 : index
    %2 = vector.load %arg2[%c0_2, %c0_3] : memref<1x4xf32, #tpu.memory_space<vmem>>, vector<1x4xf32>
    %c0_4 = arith.constant 0 : index
    %c0_5 = arith.constant 0 : index
    %3 = vector.load %arg3[%c0_4, %c0_5] : memref<4x2xf32, #tpu.memory_space<vmem>>, vector<4x2xf32>
    %c0_6 = arith.constant 0 : index
    %c0_7 = arith.constant 0 : index
    %4 = vector.load %arg4[%c0_6, %c0_7] : memref<1x2xf32, #tpu.memory_space<vmem>>, vector<1x2xf32>
    %c0_8 = arith.constant 0 : index
    %c0_9 = arith.constant 0 : index
    %5 = vector.load %arg5[%c0_8, %c0_9] : memref<2x34xf32, #tpu.memory_space<vmem>>, vector<2x34xf32>
    %c0_10 = arith.constant 0 : index
    %c0_11 = arith.constant 0 : index
    %6 = vector.load %arg6[%c0_10, %c0_11] : memref<1x2xf32, #tpu.memory_space<vmem>>, vector<1x2xf32>
    %c0_12 = arith.constant 0 : index
    %c0_13 = arith.constant 0 : index
    %7 = vector.load %arg7[%c0_12, %c0_13] : memref<2x16xf32, #tpu.memory_space<vmem>>, vector<2x16xf32>
    %c0_14 = arith.constant 0 : index
    %c0_15 = arith.constant 0 : index
    %8 = vector.load %arg8[%c0_14, %c0_15] : memref<1x2xf32, #tpu.memory_space<vmem>>, vector<1x2xf32>
    %9 = vector.broadcast %1 : vector<128x1xf32> to vector<128x4xf32>
    %10 = vector.broadcast %2 : vector<1x4xf32> to vector<128x4xf32>
    %11 = arith.mulf %9, %10 : vector<128x4xf32>
    %12 = vector.extract_strided_slice %11 {offsets = [0, 0], sizes = [128, 2], strides = [1, 1]} : vector<128x4xf32> to vector<128x2xf32>
    %13 = vector.extract_strided_slice %11 {offsets = [0, 2], sizes = [128, 2], strides = [1, 1]} : vector<128x4xf32> to vector<128x2xf32>
    %cst = arith.constant 0.000000e+00 : f32
    %14 = vector.broadcast %cst : f32 to vector<8x2xf32>
    %c0_16 = arith.constant 0 : index
    %c0_17 = arith.constant 0 : index
    %15 = vector.load %arg11[%c0_16, %c0_17] : memref<136x2xf32, #tpu.memory_space<vmem>>, vector<8x2xf32>
    tpu.vector_store %arg11[%c0_16, %c0_17], %14 {strides = array<i32>} : memref<136x2xf32, #tpu.memory_space<vmem>>, vector<8x2xf32>,
    %c8 = arith.constant 8 : index
    %c0_18 = arith.constant 0 : index
    %16 = vector.load %arg11[%c8, %c0_18] : memref<136x2xf32, #tpu.memory_space<vmem>>, vector<128x2xf32>
    tpu.vector_store %arg11[%c8, %c0_18], %12 {strides = array<i32>} : memref<136x2xf32, #tpu.memory_space<vmem>>, vector<128x2xf32>,
    %17 = vector.extract_strided_slice %3 {offsets = [3, 0], sizes = [1, 2], strides = [1, 1]} : vector<4x2xf32> to vector<1x2xf32>
    %18 = vector.broadcast %17 : vector<1x2xf32> to vector<128x2xf32>
    %19 = arith.mulf %12, %18 : vector<128x2xf32>
    %c7 = arith.constant 7 : index
    %c0_19 = arith.constant 0 : index
    %20 = vector.load %arg11[%c7, %c0_19] : memref<136x2xf32, #tpu.memory_space<vmem>>, vector<128x2xf32>
    %21 = vector.extract_strided_slice %3 {offsets = [2, 0], sizes = [1, 2], strides = [1, 1]} : vector<4x2xf32> to vector<1x2xf32>
    %22 = vector.broadcast %21 : vector<1x2xf32> to vector<128x2xf32>
    %23 = arith.mulf %20, %22 : vector<128x2xf32>
    %24 = arith.addf %19, %23 : vector<128x2xf32>
    %c6 = arith.constant 6 : index
    %c0_20 = arith.constant 0 : index
    %25 = vector.load %arg11[%c6, %c0_20] : memref<136x2xf32, #tpu.memory_space<vmem>>, vector<128x2xf32>
    %26 = vector.extract_strided_slice %3 {offsets = [1, 0], sizes = [1, 2], strides = [1, 1]} : vector<4x2xf32> to vector<1x2xf32>
    %27 = vector.broadcast %26 : vector<1x2xf32> to vector<128x2xf32>
    %28 = arith.mulf %25, %27 : vector<128x2xf32>
    %29 = arith.addf %24, %28 : vector<128x2xf32>
    %c5 = arith.constant 5 : index
    %c0_21 = arith.constant 0 : index
    %30 = vector.load %arg11[%c5, %c0_21] : memref<136x2xf32, #tpu.memory_space<vmem>>, vector<128x2xf32>
    %31 = vector.extract_strided_slice %3 {offsets = [0, 0], sizes = [1, 2], strides = [1, 1]} : vector<4x2xf32> to vector<1x2xf32>
    %32 = vector.broadcast %31 : vector<1x2xf32> to vector<128x2xf32>
    %33 = arith.mulf %30, %32 : vector<128x2xf32>
    %34 = arith.addf %29, %33 : vector<128x2xf32>
    %35 = vector.broadcast %4 : vector<1x2xf32> to vector<128x2xf32>
    %36 = arith.addf %34, %35 : vector<128x2xf32>
    %37 = arith.negf %36 : vector<128x2xf32>
    %38 = math.exp %37 : vector<128x2xf32>
    %cst_22 = arith.constant 1.000000e+00 : f32
    %39 = vector.broadcast %cst_22 : f32 to vector<128x2xf32>
    %40 = arith.addf %39, %38 : vector<128x2xf32>
    %41 = arith.divf %39, %40 : vector<128x2xf32>
    %42 = arith.mulf %36, %41 : vector<128x2xf32>
    %cst_23 = arith.constant dense<0.000000e+00> : vector<128x34xf32>
    %43 = tpu.matmul %42, %5, %cst_23 {dimension_numbers = #tpu.dot_dimension_numbers<[1], [0], [0], [1], [0, 0, 1, 1], [], []>} : vector<128x2xf32>, vector<2x34xf32>, vector<128x34xf32> -> vector<128x34xf32>
    %44 = vector.extract_strided_slice %43 {offsets = [0, 0], sizes = [128, 2], strides = [1, 1]} : vector<128x34xf32> to vector<128x2xf32>
    %45 = vector.broadcast %6 : vector<1x2xf32> to vector<128x2xf32>
    %46 = arith.addf %44, %45 : vector<128x2xf32>
    %cst_24 = arith.constant 2.000000e+01 : f32
    %47 = vector.broadcast %cst_24 : f32 to vector<128x2xf32>
    %48 = arith.cmpf ogt, %46, %47 : vector<128x2xf32>
    %cst_25 = arith.constant 2.000000e+01 : f32
    %49 = vector.broadcast %cst_25 : f32 to vector<128x2xf32>
    %50 = arith.minimumf %46, %49 : vector<128x2xf32>
    %51 = math.exp %50 : vector<128x2xf32>
    %cst_26 = arith.constant 1.000000e+00 : f32
    %52 = vector.broadcast %cst_26 : f32 to vector<128x2xf32>
    %53 = arith.addf %52, %51 : vector<128x2xf32>
    %54 = math.log %53 : vector<128x2xf32>
    %55 = arith.select %48, %46, %54 : vector<128x2xi1>, vector<128x2xf32>
    %c0_27 = arith.constant 0 : index
    %c0_28 = arith.constant 0 : index
    %56 = vector.load %arg12[%c0_27, %c0_28] : memref<128x2xf32, #tpu.memory_space<vmem>>, vector<128x2xf32>
    tpu.vector_store %arg12[%c0_27, %c0_28], %55 {strides = array<i32>} : memref<128x2xf32, #tpu.memory_space<vmem>>, vector<128x2xf32>,
    %57 = arith.mulf %55, %42 : vector<128x2xf32>
    %c0_29 = arith.constant 0 : index
    %c0_30 = arith.constant 0 : index
    %58 = vector.load %arg13[%c0_29, %c0_30] : memref<128x2xf32, #tpu.memory_space<vmem>>, vector<128x2xf32>
    tpu.vector_store %arg13[%c0_29, %c0_30], %57 {strides = array<i32>} : memref<128x2xf32, #tpu.memory_space<vmem>>, vector<128x2xf32>,
    %59 = vector.extract_strided_slice %43 {offsets = [0, 2], sizes = [128, 16], strides = [1, 1]} : vector<128x34xf32> to vector<128x16xf32>
    %c0_31 = arith.constant 0 : index
    %c0_32 = arith.constant 0 : index
    %60 = vector.load %arg14[%c0_31, %c0_32] : memref<128x16xf32, #tpu.memory_space<vmem>>, vector<128x16xf32>
    tpu.vector_store %arg14[%c0_31, %c0_32], %59 {strides = array<i32>} : memref<128x16xf32, #tpu.memory_space<vmem>>, vector<128x16xf32>,
    %61 = vector.extract_strided_slice %43 {offsets = [0, 18], sizes = [128, 16], strides = [1, 1]} : vector<128x34xf32> to vector<128x16xf32>
    %c0_33 = arith.constant 0 : index
    %c0_34 = arith.constant 0 : index
    %62 = vector.load %arg15[%c0_33, %c0_34] : memref<128x16xf32, #tpu.memory_space<vmem>>, vector<128x16xf32>
    tpu.vector_store %arg15[%c0_33, %c0_34], %61 {strides = array<i32>} : memref<128x16xf32, #tpu.memory_space<vmem>>, vector<128x16xf32>,
    %cst_35 = arith.constant 0.000000e+00 : f32
    %63 = vector.broadcast %cst_35 : f32 to vector<2x16xf32>
    %c0_i32 = arith.constant 0 : i32
    %c16_i32 = arith.constant 16 : i32
    %64 = arith.addi %c0_i32, %c16_i32 : i32
    %c1_i32 = arith.constant 1 : i32
    %65 = scf.for %arg17 = %c0_i32 to %64 step %c1_i32 iter_args(%arg18 = %63) -> (vector<2x16xf32>)  : i32 {
      %c8_i32 = arith.constant 8 : i32
      %90 = arith.muli %arg17, %c8_i32 : i32
      %91 = tpu.assume_multiple %90, 8 : i32
      %92 = arith.index_cast %91 : i32 to index
      %c0_49 = arith.constant 0 : index
      %93 = vector.load %arg12[%92, %c0_49] : memref<128x2xf32, #tpu.memory_space<vmem>>, vector<8x2xf32>
      %94 = arith.index_cast %91 : i32 to index
      %c0_50 = arith.constant 0 : index
      %95 = vector.load %arg13[%94, %c0_50] : memref<128x2xf32, #tpu.memory_space<vmem>>, vector<8x2xf32>
      %96 = arith.index_cast %91 : i32 to index
      %c0_51 = arith.constant 0 : index
      %97 = vector.load %arg14[%96, %c0_51] : memref<128x16xf32, #tpu.memory_space<vmem>>, vector<8x16xf32>
      %98 = arith.index_cast %91 : i32 to index
      %c0_52 = arith.constant 0 : index
      %99 = vector.load %arg15[%98, %c0_52] : memref<128x16xf32, #tpu.memory_space<vmem>>, vector<8x16xf32>
      %100 = vector.shape_cast %93 : vector<8x2xf32> to vector<8x2x1xf32>
      %101 = vector.shape_cast %7 : vector<2x16xf32> to vector<1x2x16xf32>
      %102 = vector.broadcast %100 : vector<8x2x1xf32> to vector<8x2x16xf32>
      %103 = vector.broadcast %101 : vector<1x2x16xf32> to vector<8x2x16xf32>
      %104 = arith.mulf %102, %103 : vector<8x2x16xf32>
      %105 = math.exp %104 : vector<8x2x16xf32>
      %106 = vector.shape_cast %95 : vector<8x2xf32> to vector<8x2x1xf32>
      %107 = vector.shape_cast %97 : vector<8x16xf32> to vector<8x1x16xf32>
      %108 = vector.broadcast %106 : vector<8x2x1xf32> to vector<8x2x16xf32>
      %109 = vector.broadcast %107 : vector<8x1x16xf32> to vector<8x2x16xf32>
      %110 = arith.mulf %108, %109 : vector<8x2x16xf32>
      %111 = vector.extract_strided_slice %105 {offsets = [0, 0, 0], sizes = [1, 2, 16], strides = [1, 1, 1]} : vector<8x2x16xf32> to vector<1x2x16xf32>
      %112 = vector.shape_cast %111 : vector<1x2x16xf32> to vector<2x16xf32>
      %113 = arith.mulf %112, %arg18 : vector<2x16xf32>
      %114 = vector.extract_strided_slice %110 {offsets = [0, 0, 0], sizes = [1, 2, 16], strides = [1, 1, 1]} : vector<8x2x16xf32> to vector<1x2x16xf32>
      %115 = vector.shape_cast %114 : vector<1x2x16xf32> to vector<2x16xf32>
      %116 = arith.addf %113, %115 : vector<2x16xf32>
      %117 = vector.extract_strided_slice %105 {offsets = [1, 0, 0], sizes = [1, 2, 16], strides = [1, 1, 1]} : vector<8x2x16xf32> to vector<1x2x16xf32>
      %118 = vector.shape_cast %117 : vector<1x2x16xf32> to vector<2x16xf32>
      %119 = arith.mulf %118, %116 : vector<2x16xf32>
      %120 = vector.extract_strided_slice %110 {offsets = [1, 0, 0], sizes = [1, 2, 16], strides = [1, 1, 1]} : vector<8x2x16xf32> to vector<1x2x16xf32>
      %121 = vector.shape_cast %120 : vector<1x2x16xf32> to vector<2x16xf32>
      %122 = arith.addf %119, %121 : vector<2x16xf32>
      %123 = vector.extract_strided_slice %105 {offsets = [2, 0, 0], sizes = [1, 2, 16], strides = [1, 1, 1]} : vector<8x2x16xf32> to vector<1x2x16xf32>
      %124 = vector.shape_cast %123 : vector<1x2x16xf32> to vector<2x16xf32>
      %125 = arith.mulf %124, %122 : vector<2x16xf32>
      %126 = vector.extract_strided_slice %110 {offsets = [2, 0, 0], sizes = [1, 2, 16], strides = [1, 1, 1]} : vector<8x2x16xf32> to vector<1x2x16xf32>
      %127 = vector.shape_cast %126 : vector<1x2x16xf32> to vector<2x16xf32>
      %128 = arith.addf %125, %127 : vector<2x16xf32>
      %129 = vector.extract_strided_slice %105 {offsets = [3, 0, 0], sizes = [1, 2, 16], strides = [1, 1, 1]} : vector<8x2x16xf32> to vector<1x2x16xf32>
      %130 = vector.shape_cast %129 : vector<1x2x16xf32> to vector<2x16xf32>
      %131 = arith.mulf %130, %128 : vector<2x16xf32>
      %132 = vector.extract_strided_slice %110 {offsets = [3, 0, 0], sizes = [1, 2, 16], strides = [1, 1, 1]} : vector<8x2x16xf32> to vector<1x2x16xf32>
      %133 = vector.shape_cast %132 : vector<1x2x16xf32> to vector<2x16xf32>
      %134 = arith.addf %131, %133 : vector<2x16xf32>
      %135 = vector.extract_strided_slice %105 {offsets = [4, 0, 0], sizes = [1, 2, 16], strides = [1, 1, 1]} : vector<8x2x16xf32> to vector<1x2x16xf32>
      %136 = vector.shape_cast %135 : vector<1x2x16xf32> to vector<2x16xf32>
      %137 = arith.mulf %136, %134 : vector<2x16xf32>
      %138 = vector.extract_strided_slice %110 {offsets = [4, 0, 0], sizes = [1, 2, 16], strides = [1, 1, 1]} : vector<8x2x16xf32> to vector<1x2x16xf32>
      %139 = vector.shape_cast %138 : vector<1x2x16xf32> to vector<2x16xf32>
      %140 = arith.addf %137, %139 : vector<2x16xf32>
      %141 = vector.extract_strided_slice %105 {offsets = [5, 0, 0], sizes = [1, 2, 16], strides = [1, 1, 1]} : vector<8x2x16xf32> to vector<1x2x16xf32>
      %142 = vector.shape_cast %141 : vector<1x2x16xf32> to vector<2x16xf32>
      %143 = arith.mulf %142, %140 : vector<2x16xf32>
      %144 = vector.extract_strided_slice %110 {offsets = [5, 0, 0], sizes = [1, 2, 16], strides = [1, 1, 1]} : vector<8x2x16xf32> to vector<1x2x16xf32>
      %145 = vector.shape_cast %144 : vector<1x2x16xf32> to vector<2x16xf32>
      %146 = arith.addf %143, %145 : vector<2x16xf32>
      %147 = vector.extract_strided_slice %105 {offsets = [6, 0, 0], sizes = [1, 2, 16], strides = [1, 1, 1]} : vector<8x2x16xf32> to vector<1x2x16xf32>
      %148 = vector.shape_cast %147 : vector<1x2x16xf32> to vector<2x16xf32>
      %149 = arith.mulf %148, %146 : vector<2x16xf32>
      %150 = vector.extract_strided_slice %110 {offsets = [6, 0, 0], sizes = [1, 2, 16], strides = [1, 1, 1]} : vector<8x2x16xf32> to vector<1x2x16xf32>
      %151 = vector.shape_cast %150 : vector<1x2x16xf32> to vector<2x16xf32>
      %152 = arith.addf %149, %151 : vector<2x16xf32>
      %153 = vector.extract_strided_slice %105 {offsets = [7, 0, 0], sizes = [1, 2, 16], strides = [1, 1, 1]} : vector<8x2x16xf32> to vector<1x2x16xf32>
      %154 = vector.shape_cast %153 : vector<1x2x16xf32> to vector<2x16xf32>
      %155 = arith.mulf %154, %152 : vector<2x16xf32>
      %156 = vector.extract_strided_slice %110 {offsets = [7, 0, 0], sizes = [1, 2, 16], strides = [1, 1, 1]} : vector<8x2x16xf32> to vector<1x2x16xf32>
      %157 = vector.shape_cast %156 : vector<1x2x16xf32> to vector<2x16xf32>
      %158 = arith.addf %155, %157 : vector<2x16xf32>
      %159 = vector.shape_cast %116 : vector<2x16xf32> to vector<1x2x16xf32>
      %160 = vector.shape_cast %122 : vector<2x16xf32> to vector<1x2x16xf32>
      %161 = vector.shape_cast %128 : vector<2x16xf32> to vector<1x2x16xf32>
      %162 = vector.shape_cast %134 : vector<2x16xf32> to vector<1x2x16xf32>
      %163 = vector.shape_cast %140 : vector<2x16xf32> to vector<1x2x16xf32>
      %164 = vector.shape_cast %146 : vector<2x16xf32> to vector<1x2x16xf32>
      %165 = vector.shape_cast %152 : vector<2x16xf32> to vector<1x2x16xf32>
      %166 = vector.shape_cast %158 : vector<2x16xf32> to vector<1x2x16xf32>
      %167 = tpu.concatenate %159, %160, %161, %162, %163, %164, %165, %166 in 0 : vector<1x2x16xf32>, vector<1x2x16xf32>, vector<1x2x16xf32>, vector<1x2x16xf32>, vector<1x2x16xf32>, vector<1x2x16xf32>, vector<1x2x16xf32>, vector<1x2x16xf32> -> vector<8x2x16xf32>
      %168 = vector.shape_cast %99 : vector<8x16xf32> to vector<8x1x16xf32>
      %169 = vector.broadcast %168 : vector<8x1x16xf32> to vector<8x2x16xf32>
      %170 = arith.mulf %167, %169 : vector<8x2x16xf32>
      %cst_53 = arith.constant dense<0.000000e+00> : vector<8x2xf32>
      %171 = vector.multi_reduction <add>, %170, %cst_53 [2] : vector<8x2x16xf32> to vector<8x2xf32>
      %172 = arith.index_cast %91 : i32 to index
      %c0_54 = arith.constant 0 : index
      %173 = vector.load %arg16[%172, %c0_54] : memref<128x2xf32, #tpu.memory_space<vmem>>, vector<8x2xf32>
      tpu.vector_store %arg16[%172, %c0_54], %171 {strides = array<i32>} : memref<128x2xf32, #tpu.memory_space<vmem>>, vector<8x2xf32>,
      scf.yield %158 : vector<2x16xf32>
    }
    %c16_i32_36 = arith.constant 16 : i32
    %c0_37 = arith.constant 0 : index
    %c0_38 = arith.constant 0 : index
    %66 = vector.load %arg16[%c0_37, %c0_38] : memref<128x2xf32, #tpu.memory_space<vmem>>, vector<128x2xf32>
    %67 = vector.broadcast %8 : vector<1x2xf32> to vector<128x2xf32>
    %68 = arith.mulf %42, %67 : vector<128x2xf32>
    %69 = arith.addf %66, %68 : vector<128x2xf32>
    %70 = arith.negf %13 : vector<128x2xf32>
    %71 = math.exp %70 : vector<128x2xf32>
    %cst_39 = arith.constant 1.000000e+00 : f32
    %72 = vector.broadcast %cst_39 : f32 to vector<128x2xf32>
    %73 = arith.addf %72, %71 : vector<128x2xf32>
    %74 = arith.divf %72, %73 : vector<128x2xf32>
    %75 = arith.mulf %13, %74 : vector<128x2xf32>
    %76 = arith.mulf %69, %75 : vector<128x2xf32>
    %c0_40 = arith.constant 0 : index
    %c0_41 = arith.constant 0 : index
    %77 = vector.load %arg9[%c0_40, %c0_41] : memref<2x1xf32, #tpu.memory_space<vmem>>, vector<2x1xf32>
    %cst_42 = arith.constant dense<0.000000e+00> : vector<128x1xf32>
    %78 = tpu.matmul %76, %77, %cst_42 {dimension_numbers = #tpu.dot_dimension_numbers<[1], [0], [0], [1], [0, 0, 1, 1], [], []>} : vector<128x2xf32>, vector<2x1xf32>, vector<128x1xf32> -> vector<128x1xf32>
    %cst_43 = arith.constant 5.000000e-01 : f32
    %79 = vector.broadcast %cst_43 : f32 to vector<128x1xf32>
    %80 = arith.mulf %79, %78 : vector<128x1xf32>
    %cst_44 = arith.constant 0.707106769 : f32
    %81 = vector.broadcast %cst_44 : f32 to vector<128x1xf32>
    %82 = arith.mulf %78, %81 : vector<128x1xf32>
    %83 = math.erf %82 : vector<128x1xf32>
    %cst_45 = arith.constant 1.000000e+00 : f32
    %84 = vector.broadcast %cst_45 : f32 to vector<128x1xf32>
    %85 = arith.addf %84, %83 : vector<128x1xf32>
    %86 = arith.mulf %80, %85 : vector<128x1xf32>
    %c0_46 = arith.constant 0 : index
    %c0_47 = arith.constant 0 : index
    %c0_48 = arith.constant 0 : index
    %87 = vector.load %arg10[%c0_46, %c0_47, %c0_48] : memref<1x128x1xf32, #tpu.memory_space<vmem>>, vector<1x128x1xf32>
    %88 = vector.shape_cast %87 : vector<1x128x1xf32> to vector<128x1xf32>
    %89 = vector.shape_cast %86 : vector<128x1xf32> to vector<1x128x1xf32>
    tpu.vector_store %arg10[%c0_46, %c0_47, %c0_48], %89 {strides = array<i32>} : memref<1x128x1xf32, #tpu.memory_space<vmem>>, vector<1x128x1xf32>,
    return
  }
  func.func @transform_0(%arg0: i32) -> (i32, i32, i32) {
    %c0_i32 = arith.constant 0 : i32
    %c0_i32_0 = arith.constant 0 : i32
    %c0_i32_1 = arith.constant 0 : i32
    return %arg0, %c0_i32, %c0_i32_0 : i32, i32, i32
  }
  func.func @transform_1(%arg0: i32) -> (i32, i32) {
    %c0_i32 = arith.constant 0 : i32
    %c0_i32_0 = arith.constant 0 : i32
    %c0_i32_1 = arith.constant 0 : i32
    return %c0_i32, %c0_i32_0 : i32, i32
  }
  func.func @transform_2(%arg0: i32) -> (i32, i32) {
    %c0_i32 = arith.constant 0 : i32
    %c0_i32_0 = arith.constant 0 : i32
    %c0_i32_1 = arith.constant 0 : i32
    return %c0_i32, %c0_i32_0 : i32, i32
  }
  func.func @transform_3(%arg0: i32) -> (i32, i32) {
    %c0_i32 = arith.constant 0 : i32
    %c0_i32_0 = arith.constant 0 : i32
    %c0_i32_1 = arith.constant 0 : i32
    return %c0_i32, %c0_i32_0 : i32, i32
  }
  func.func @transform_4(%arg0: i32) -> (i32, i32) {
    %c0_i32 = arith.constant 0 : i32
    %c0_i32_0 = arith.constant 0 : i32
    %c0_i32_1 = arith.constant 0 : i32
    return %c0_i32, %c0_i32_0 : i32, i32
  }
  func.func @transform_5(%arg0: i32) -> (i32, i32) {
    %c0_i32 = arith.constant 0 : i32
    %c0_i32_0 = arith.constant 0 : i32
    %c0_i32_1 = arith.constant 0 : i32
    return %c0_i32, %c0_i32_0 : i32, i32
  }
  func.func @transform_6(%arg0: i32) -> (i32, i32) {
    %c0_i32 = arith.constant 0 : i32
    %c0_i32_0 = arith.constant 0 : i32
    %c0_i32_1 = arith.constant 0 : i32
    return %c0_i32, %c0_i32_0 : i32, i32
  }
  func.func @transform_7(%arg0: i32) -> (i32, i32) {
    %c0_i32 = arith.constant 0 : i32
    %c0_i32_0 = arith.constant 0 : i32
    %c0_i32_1 = arith.constant 0 : i32
    return %c0_i32, %c0_i32_0 : i32, i32
  }
  func.func @transform_8(%arg0: i32) -> (i32, i32) {
    %c0_i32 = arith.constant 0 : i32
    %c0_i32_0 = arith.constant 0 : i32
    %c0_i32_1 = arith.constant 0 : i32
    return %c0_i32, %c0_i32_0 : i32, i32
  }
  func.func @transform_9(%arg0: i32) -> (i32, i32, i32) {
    %c0_i32 = arith.constant 0 : i32
    %c0_i32_0 = arith.constant 0 : i32
    %c0_i32_1 = arith.constant 0 : i32
    return %arg0, %c0_i32, %c0_i32_0 : i32, i32, i32
  }
}

</mosaic_0001>

<llo_original>
// kernel: sesame_forward.5
$region0: #{sesame_forward.5}
  #allocation0 [shape = 'u32[]', space=smem, size = 0x4, offset = 0x4, fixed_abs, tag = 'smem constant byte address 0x4 - core index']
  #allocation1 [shape = 'u32[144,128]{1,0:T(1,128)}', space=vmem, size = 0x12000, scoped, tag = 'internal scratch']
  %s0 = inlined_call_operand.vmem [shape: f32[64,4], index: 0, kind: input, shape index: {}]
  %s1 = inlined_call_operand.vmem [shape: f32[4,2], index: 1, kind: input, shape index: {}]
  %s2 = inlined_call_operand.vmem [shape: f32[1,2], index: 2, kind: input, shape index: {}]
  %s3 = inlined_call_operand.vmem [shape: f32[64,2], index: 3, kind: output, shape index: {}]
  %s4 = sld [smem:[#allocation0]]
  $region22: #{sesame_forward.5} parent=0
    _
  %s6 = ssub.s32 1, %s4
  %s7 = scalar_select 0, %s6, %s4
  // Predicated region
  $region2: #{sesame_forward.5} parent=0 // pred_check
    _
  $region3: #{sesame_forward.5} parent=0 // pred_check_branch
    %9 = sbr.rel (0) target = $region5
  $region4: #{sesame_forward.5} parent=0 // pred_region
    _
  $region5: #{sesame_forward.5} parent=0 // pred_fallthru
    _
  // Predicated region
  $region6: #{sesame_forward.5} parent=0 // pred_check
    _
  $region7: #{sesame_forward.5} parent=0 // pred_check_branch
    %11 = sbr.rel (0) target = $region9
  $region8: #{sesame_forward.5} parent=0 // pred_region
    _
  $region9: #{sesame_forward.5} parent=0 // pred_fallthru
    _
  // Predicated region
  $region10: #{sesame_forward.5} parent=0 // pred_check
    _
  $region11: #{sesame_forward.5} parent=0 // pred_check_branch
    %13 = sbr.rel (0) target = $region13
  $region12: #{sesame_forward.5} parent=0 // pred_region
    _
  $region13: #{sesame_forward.5} parent=0 // pred_fallthru
    _
  %v14 = vld [vmem:[%s0] sm:$0xff]
  %v15 = vld [vmem:[%s0 + $0x8] sm:$0xff]
  %v16 = vld [vmem:[%s0 + $0x10] sm:$0xff]
  %v17 = vld [vmem:[%s0 + $0x18] sm:$0xff]
  %v18 = vld [vmem:[%s0 + $0x20] sm:$0xff]
  %v19 = vld [vmem:[%s0 + $0x28] sm:$0xff]
  %v20 = vld [vmem:[%s0 + $0x30] sm:$0xff]
  %v21 = vld [vmem:[%s0 + $0x38] sm:$0xff]
  %v22 = vld [vmem:[%s1] sm:$0xf]
  %v23 = vld [vmem:[%s2] sm:$0x1]
  %v25 = vlaneseq
  %v26 = vshrl.u32 %v25, 7
  %v27 = vsub.s32 0, %v26
  %v28 = vrot.slane %v23, %v27
  %vm30 = vcmask 31744
  %v32 = vsel %vm30, %v14, 0
  %v35 = vsel %vm30, %v15, 0
  %v38 = vsel %vm30, %v16, 0
  %v41 = vsel %vm30, %v17, 0
  %v44 = vsel %vm30, %v18, 0
  %v47 = vsel %vm30, %v19, 0
  %v50 = vsel %vm30, %v20, 0
  %v53 = vsel %vm30, %v21, 0
  %vm55 = vcmask 1043456
  %v57 = vsel %vm55, %v22, 0
  %59 = vmatprep.subr.mxu0 0.0
  %60 = vmatpush1.msra.mxu0 0.0
  %61 = vmatprep.subr.mxu0 0.0
  %62 = vmatpush1.msra.mxu0 0.0
  %63 = vmatprep.subr.mxu0 0.0
  %64 = vmatpush1.msra.mxu0 0.0
  %65 = vmatprep.subr.mxu0 0.0
  %66 = vmatpush1.msra.mxu0 0.0
  %67 = vmatprep.subr.mxu0 0.0
  %68 = vmatpush1.msra.mxu0 0.0
  %69 = vmatprep.subr.mxu0 0.0
  %70 = vmatpush1.msra.mxu0 0.0
  %71 = vmatprep.subr.mxu0 0.0
  %72 = vmatpush1.msra.mxu0 0.0
  %73 = vmatprep.subr.mxu0 0.0
  %74 = vmatpush1.msra.mxu0 0.0
  %75 = vmatprep.subr.mxu0 0.0
  %76 = vmatpush1.msra.mxu0 0.0
  %77 = vmatprep.subr.mxu0 0.0
  %78 = vmatpush1.msra.mxu0 0.0
  %79 = vmatprep.subr.mxu0 0.0
  %80 = vmatpush1.msra.mxu0 0.0
  %81 = vmatprep.subr.mxu0 0.0
  %82 = vmatpush1.msra.mxu0 0.0
  %83 = vmatprep.subr.mxu0 0.0
  %84 = vmatpush1.msra.mxu0 0.0
  %85 = vmatprep.subr.mxu0 0.0
  %86 = vmatpush1.msra.mxu0 0.0
  %87 = vmatprep.subr.mxu0 0.0
  %88 = vmatpush1.msra.mxu0 0.0
  %89 = vmatprep.subr.mxu0 0.0
  %90 = vmatpush1.msra.mxu0 %v57
  %91 = vmatprep.subr.mxu0 0.0
  %92 = vmatpush2.msra.mxu0 0.0
  %93 = vmatprep.subr.mxu0 0.0
  %94 = vmatpush2.msra.mxu0 0.0
  %95 = vmatprep.subr.mxu0 0.0
  %96 = vmatpush2.msra.mxu0 0.0
  %97 = vmatprep.subr.mxu0 0.0
  %98 = vmatpush2.msra.mxu0 0.0
  %99 = vmatprep.subr.mxu0 0.0
  %100 = vmatpush2.msra.mxu0 0.0
  %101 = vmatprep.subr.mxu0 0.0
  %102 = vmatpush2.msra.mxu0 0.0
  %103 = vmatprep.subr.mxu0 0.0
  %104 = vmatpush2.msra.mxu0 0.0
  %105 = vmatprep.subr.mxu0 0.0
  %106 = vmatpush2.msra.mxu0 0.0
  %107 = vmatprep.subr.mxu0 0.0
  %108 = vmatpush2.msra.mxu0 0.0
  %109 = vmatprep.subr.mxu0 0.0
  %110 = vmatpush2.msra.mxu0 0.0
  %111 = vmatprep.subr.mxu0 0.0
  %112 = vmatpush2.msra.mxu0 0.0
  %113 = vmatprep.subr.mxu0 0.0
  %114 = vmatpush2.msra.mxu0 0.0
  %115 = vmatprep.subr.mxu0 0.0
  %116 = vmatpush2.msra.mxu0 0.0
  %117 = vmatprep.subr.mxu0 0.0
  %118 = vmatpush2.msra.mxu0 0.0
  %119 = vmatprep.subr.mxu0 0.0
  %120 = vmatpush2.msra.mxu0 0.0
  %121 = vmatprep.subr.mxu0 0.0
  %122 = vmatpush2.msra.mxu0 0.0
  %123 = vmatprep.mubr.f32.mxu0 0.0
  %124 = vmatmul.mubr.f32.gmra.mxu0 %v32
  %v125 = vpop.f32.mrf.mxu0
  %v126 = vadd.f32 %v28, %v125
  %v127 = vpop.f32.mrf.mxu0
  %128 = vmatprep.mubr.f32.mxu0 0.0
  %129 = vmatmul.mubr.f32.gmra.mxu0 %v35
  %v130 = vpop.f32.mrf.mxu0
  %v131 = vadd.f32 %v28, %v130
  %v132 = vpop.f32.mrf.mxu0
  %133 = vmatprep.mubr.f32.mxu0 0.0
  %134 = vmatmul.mubr.f32.gmra.mxu0 %v38
  %v135 = vpop.f32.mrf.mxu0
  %v136 = vadd.f32 %v28, %v135
  %v137 = vpop.f32.mrf.mxu0
  %138 = vmatprep.mubr.f32.mxu0 0.0
  %139 = vmatmul.mubr.f32.gmra.mxu0 %v41
  %v140 = vpop.f32.mrf.mxu0
  %v141 = vadd.f32 %v28, %v140
  %v142 = vpop.f32.mrf.mxu0
  %143 = vmatprep.mubr.f32.mxu0 0.0
  %144 = vmatmul.mubr.f32.gmra.mxu0 %v44
  %v145 = vpop.f32.mrf.mxu0
  %v146 = vadd.f32 %v28, %v145
  %v147 = vpop.f32.mrf.mxu0
  %148 = vmatprep.mubr.f32.mxu0 0.0
  %149 = vmatmul.mubr.f32.gmra.mxu0 %v47
  %v150 = vpop.f32.mrf.mxu0
  %v151 = vadd.f32 %v28, %v150
  %v152 = vpop.f32.mrf.mxu0
  %153 = vmatprep.mubr.f32.mxu0 0.0
  %154 = vmatmul.mubr.f32.gmra.mxu0 %v50
  %v155 = vpop.f32.mrf.mxu0
  %v156 = vadd.f32 %v28, %v155
  %v157 = vpop.f32.mrf.mxu0
  %158 = vmatprep.mubr.f32.mxu0 0.0
  %159 = vmatmul.mubr.f32.gmra.mxu0 %v53
  %v160 = vpop.f32.mrf.mxu0
  %v161 = vadd.f32 %v28, %v160
  %v162 = vpop.f32.mrf.mxu0
  %163 = vdwg.mxu0
  %v164 = vmul.f32 %v126, 0.5
  %v165 = vmul.f32 %v131, 0.5
  %v166 = vmul.f32 %v136, 0.5
  %v167 = vmul.f32 %v141, 0.5
  %v168 = vmul.f32 %v146, 0.5
  %v169 = vmul.f32 %v151, 0.5
  %v170 = vmul.f32 %v156, 0.5
  %v171 = vmul.f32 %v161, 0.5
  %v172 = vmul.f32 %v126, 0.70710677
  %v173 = vmul.f32 %v131, 0.70710677
  %v174 = vmul.f32 %v136, 0.70710677
  %v175 = vmul.f32 %v141, 0.70710677
  %v176 = vmul.f32 %v146, 0.70710677
  %v177 = vmul.f32 %v151, 0.70710677
  %v178 = vmul.f32 %v156, 0.70710677
  %v179 = vmul.f32 %v161, 0.70710677
  %v180 = verf.f32.pop %v172
  %v181 = verf.f32.pop %v173
  %v182 = verf.f32.pop %v174
  %v183 = verf.f32.pop %v175
  %v184 = verf.f32.pop %v176
  %v185 = verf.f32.pop %v177
  %v186 = verf.f32.pop %v178
  %v187 = verf.f32.pop %v179
  %v188 = vadd.f32 %v180, 1.0
  %v189 = vadd.f32 %v181, 1.0
  %v190 = vadd.f32 %v182, 1.0
  %v191 = vadd.f32 %v183, 1.0
  %v192 = vadd.f32 %v184, 1.0
  %v193 = vadd.f32 %v185, 1.0
  %v194 = vadd.f32 %v186, 1.0
  %v195 = vadd.f32 %v187, 1.0
  %v196 = vmul.f32 %v164, %v188
  %v197 = vmul.f32 %v165, %v189
  %v198 = vmul.f32 %v166, %v190
  %v199 = vmul.f32 %v167, %v191
  %v200 = vmul.f32 %v168, %v192
  %v201 = vmul.f32 %v169, %v193
  %v202 = vmul.f32 %v170, %v194
  %v203 = vmul.f32 %v171, %v195
  %vm204 = vcmask 15360
  %205 = vst.msk [vmem:[%s3] sm:$0xff] %vm204, %v196
  %206 = vst.msk [vmem:[%s3 + $0x8] sm:$0xff] %vm204, %v197
  %207 = vst.msk [vmem:[%s3 + $0x10] sm:$0xff] %vm204, %v198
  %208 = vst.msk [vmem:[%s3 + $0x18] sm:$0xff] %vm204, %v199
  %209 = vst.msk [vmem:[%s3 + $0x20] sm:$0xff] %vm204, %v200
  %210 = vst.msk [vmem:[%s3 + $0x28] sm:$0xff] %vm204, %v201
  %211 = vst.msk [vmem:[%s3 + $0x30] sm:$0xff] %vm204, %v202
  %212 = vst.msk [vmem:[%s3 + $0x38] sm:$0xff] %vm204, %v203
  // Predicated region
  $region14: #{sesame_forward.5} parent=0 // pred_check
    _
  $region15: #{sesame_forward.5} parent=0 // pred_check_branch
    %214 = sbr.rel (0) target = $region17
  $region16: #{sesame_forward.5} parent=0 // pred_region
    _
  $region17: #{sesame_forward.5} parent=0 // pred_fallthru
    _
  // Predicated region
  $region18: #{sesame_forward.5} parent=0 // pred_check
    _
  $region19: #{sesame_forward.5} parent=0 // pred_check_branch
    %216 = sbr.rel (0) target = $region21
  $region20: #{sesame_forward.5} parent=0 // pred_region
    _
  $region21: #{sesame_forward.5} parent=0 // pred_fallthru
    _

// kernel: sesame_forward.7
$region0: #{sesame_forward.7}
  #allocation0 [shape = 'u32[]', space=smem, size = 0x4, offset = 0x4, fixed_abs, tag = 'smem constant byte address 0x4 - core index']
  #allocation1 [shape = 'u32[144,128]{1,0:T(1,128)}', space=vmem, size = 0x12000, scoped, tag = 'internal scratch']
  %s0 = inlined_call_operand.vmem [shape: f32[16,4], index: 0, kind: input, shape index: {}]
  %s1 = inlined_call_operand.vmem [shape: f32[16,8], index: 1, kind: input, shape index: {}]
  %s2 = inlined_call_operand.vmem [shape: f32[4,8], index: 2, kind: input, shape index: {}]
  %s3 = inlined_call_operand.vmem [shape: f32[1,8], index: 3, kind: input, shape index: {}]
  %s4 = inlined_call_operand.vmem [shape: f32[16,8], index: 4, kind: output, shape index: {}]
  %s5 = sld [smem:[#allocation0]]
  $region26: #{sesame_forward.7} parent=0
    _
  %s7 = ssub.s32 1, %s5
  %s8 = scalar_select 0, %s7, %s5
  // Predicated region
  $region2: #{sesame_forward.7} parent=0 // pred_check
    _
  $region3: #{sesame_forward.7} parent=0 // pred_check_branch
    %10 = sbr.rel (0) target = $region5
  $region4: #{sesame_forward.7} parent=0 // pred_region
    _
  $region5: #{sesame_forward.7} parent=0 // pred_fallthru
    _
  // Predicated region
  $region6: #{sesame_forward.7} parent=0 // pred_check
    _
  $region7: #{sesame_forward.7} parent=0 // pred_check_branch
    %12 = sbr.rel (0) target = $region9
  $region8: #{sesame_forward.7} parent=0 // pred_region
    _
  $region9: #{sesame_forward.7} parent=0 // pred_fallthru
    _
  // Predicated region
  $region10: #{sesame_forward.7} parent=0 // pred_check
    _
  $region11: #{sesame_forward.7} parent=0 // pred_check_branch
    %14 = sbr.rel (0) target = $region13
  $region12: #{sesame_forward.7} parent=0 // pred_region
    _
  $region13: #{sesame_forward.7} parent=0 // pred_fallthru
    _
  // Predicated region
  $region14: #{sesame_forward.7} parent=0 // pred_check
    _
  $region15: #{sesame_forward.7} parent=0 // pred_check_branch
    %16 = sbr.rel (0) target = $region17
  $region16: #{sesame_forward.7} parent=0 // pred_region
    _
  $region17: #{sesame_forward.7} parent=0 // pred_fallthru
    _
  %v17 = vld [vmem:[%s0] sm:$0xff]
  %v18 = vld [vmem:[%s0 + $0x8] sm:$0xff]
  %v19 = vld [vmem:[%s2] sm:$0xf]
  %v20 = vld [vmem:[%s3] sm:$0x1]
  %v22 = vlaneseq
  %v23 = vshrl.u32 %v22, 7
  %v24 = vsub.s32 0, %v23
  %v25 = vrot.slane %v20, %v24
  %vm27 = vcmask 31744
  %v29 = vsel %vm27, %v17, 0
  %v32 = vsel %vm27, %v18, 0
  %vm34 = vcmask 1043456
  %v36 = vsel %vm34, %v19, 0
  %38 = vmatprep.subr.mxu0 0.0
  %39 = vmatpush1.msra.mxu0 0.0
  %40 = vmatprep.subr.mxu0 0.0
  %41 = vmatpush1.msra.mxu0 0.0
  %42 = vmatprep.subr.mxu0 0.0
  %43 = vmatpush1.msra.mxu0 0.0
  %44 = vmatprep.subr.mxu0 0.0
  %45 = vmatpush1.msra.mxu0 0.0
  %46 = vmatprep.subr.mxu0 0.0
  %47 = vmatpush1.msra.mxu0 0.0
  %48 = vmatprep.subr.mxu0 0.0
  %49 = vmatpush1.msra.mxu0 0.0
  %50 = vmatprep.subr.mxu0 0.0
  %51 = vmatpush1.msra.mxu0 0.0
  %52 = vmatprep.subr.mxu0 0.0
  %53 = vmatpush1.msra.mxu0 0.0
  %54 = vmatprep.subr.mxu0 0.0
  %55 = vmatpush1.msra.mxu0 0.0
  %56 = vmatprep.subr.mxu0 0.0
  %57 = vmatpush1.msra.mxu0 0.0
  %58 = vmatprep.subr.mxu0 0.0
  %59 = vmatpush1.msra.mxu0 0.0
  %60 = vmatprep.subr.mxu0 0.0
  %61 = vmatpush1.msra.mxu0 0.0
  %62 = vmatprep.subr.mxu0 0.0
  %63 = vmatpush1.msra.mxu0 0.0
  %64 = vmatprep.subr.mxu0 0.0
  %65 = vmatpush1.msra.mxu0 0.0
  %66 = vmatprep.subr.mxu0 0.0
  %67 = vmatpush1.msra.mxu0 0.0
  %68 = vmatprep.subr.mxu0 0.0
  %69 = vmatpush1.msra.mxu0 %v36
  %70 = vmatprep.subr.mxu0 0.0
  %71 = vmatpush2.msra.mxu0 0.0
  %72 = vmatprep.subr.mxu0 0.0
  %73 = vmatpush2.msra.mxu0 0.0
  %74 = vmatprep.subr.mxu0 0.0
  %75 = vmatpush2.msra.mxu0 0.0
  %76 = vmatprep.subr.mxu0 0.0
  %77 = vmatpush2.msra.mxu0 0.0
  %78 = vmatprep.subr.mxu0 0.0
  %79 = vmatpush2.msra.mxu0 0.0
  %80 = vmatprep.subr.mxu0 0.0
  %81 = vmatpush2.msra.mxu0 0.0
  %82 = vmatprep.subr.mxu0 0.0
  %83 = vmatpush2.msra.mxu0 0.0
  %84 = vmatprep.subr.mxu0 0.0
  %85 = vmatpush2.msra.mxu0 0.0
  %86 = vmatprep.subr.mxu0 0.0
  %87 = vmatpush2.msra.mxu0 0.0
  %88 = vmatprep.subr.mxu0 0.0
  %89 = vmatpush2.msra.mxu0 0.0
  %90 = vmatprep.subr.mxu0 0.0
  %91 = vmatpush2.msra.mxu0 0.0
  %92 = vmatprep.subr.mxu0 0.0
  %93 = vmatpush2.msra.mxu0 0.0
  %94 = vmatprep.subr.mxu0 0.0
  %95 = vmatpush2.msra.mxu0 0.0
  %96 = vmatprep.subr.mxu0 0.0
  %97 = vmatpush2.msra.mxu0 0.0
  %98 = vmatprep.subr.mxu0 0.0
  %99 = vmatpush2.msra.mxu0 0.0
  %100 = vmatprep.subr.mxu0 0.0
  %101 = vmatpush2.msra.mxu0 0.0
  %102 = vmatprep.mubr.f32.mxu0 0.0
  %103 = vmatmul.mubr.f32.gmra.mxu0 %v29
  %v104 = vpop.f32.mrf.mxu0
  %v105 = vadd.f32 %v25, %v104
  %v106 = vpop.f32.mrf.mxu0
  %107 = vmatprep.mubr.f32.mxu0 0.0
  %108 = vmatmul.mubr.f32.gmra.mxu0 %v32
  %v109 = vpop.f32.mrf.mxu0
  %v110 = vadd.f32 %v25, %v109
  %v111 = vpop.f32.mrf.mxu0
  %112 = vdwg.mxu0
  %v113 = vmul.f32 %v105, 0.5
  %v114 = vmul.f32 %v110, 0.5
  %v115 = vmul.f32 %v105, 0.70710677
  %v116 = vmul.f32 %v110, 0.70710677
  %v117 = verf.f32.pop %v115
  %v118 = verf.f32.pop %v116
  %v119 = vadd.f32 %v117, 1.0
  %v120 = vadd.f32 %v118, 1.0
  %v121 = vmul.f32 %v113, %v119
  %v122 = vmul.f32 %v114, %v120
  %v123 = vld [vmem:[%s1] sm:$0xff]
  %v124 = vld [vmem:[%s1 + $0x8] sm:$0xff]
  %v125 = vadd.f32 %v121, %v123
  %v126 = vadd.f32 %v122, %v124
  %vm127 = vcmask 64512
  %128 = vst.msk [vmem:[%s4] sm:$0xff] %vm127, %v125
  %129 = vst.msk [vmem:[%s4 + $0x8] sm:$0xff] %vm127, %v126
  // Predicated region
  $region18: #{sesame_forward.7} parent=0 // pred_check
    _
  $region19: #{sesame_forward.7} parent=0 // pred_check_branch
    %131 = sbr.rel (0) target = $region21
  $region20: #{sesame_forward.7} parent=0 // pred_region
    _
  $region21: #{sesame_forward.7} parent=0 // pred_fallthru
    _
  // Predicated region
  $region22: #{sesame_forward.7} parent=0 // pred_check
    _
  $region23: #{sesame_forward.7} parent=0 // pred_check_branch
    %133 = sbr.rel (0) target = $region25
  $region24: #{sesame_forward.7} parent=0 // pred_region
    _
  $region25: #{sesame_forward.7} parent=0 // pred_fallthru
    _

// kernel: sesame_forward.6
$region0: #{sesame_forward.6}
  #allocation0 [shape = 'u32[]', space=smem, size = 0x4, offset = 0x4, fixed_abs, tag = 'smem constant byte address 0x4 - core index']
  #allocation1 [shape = 'u32[144,128]{1,0:T(1,128)}', space=vmem, size = 0x12000, scoped, tag = 'internal scratch']
  #allocation2 [shape = 'f32[16,8]{1,0:T(8,128)}', space=vmem, size = 0x2000, scoped, tag = 'scratch operand']
  #allocation3 [shape = 'f32[8,8]{1,0:T(8,128)}', space=vmem, size = 0x1000, scoped, tag = 'scratch operand']
  #allocation4 [shape = 'f32[8,8]{1,0:T(8,128)}', space=vmem, size = 0x1000, scoped, tag = 'scratch operand']
  #allocation5 [shape = 'f32[8,16]{1,0:T(8,128)}', space=vmem, size = 0x1000, scoped, tag = 'scratch operand']
  #allocation6 [shape = 'f32[8,16]{1,0:T(8,128)}', space=vmem, size = 0x1000, scoped, tag = 'scratch operand']
  #allocation7 [shape = 'f32[8,8]{1,0:T(8,128)}', space=vmem, size = 0x1000, scoped, tag = 'scratch operand']
  %s0 = inlined_call_operand.vmem [shape: f32[2,8,8], index: 0, kind: input, shape index: {}]
  %s1 = inlined_call_operand.vmem [shape: f32[8,4], index: 1, kind: input, shape index: {}]
  %s2 = inlined_call_operand.vmem [shape: f32[1,4], index: 2, kind: input, shape index: {}]
  %s3 = inlined_call_operand.vmem [shape: f32[4,16], index: 3, kind: input, shape index: {}]
  %s4 = inlined_call_operand.vmem [shape: f32[4,8], index: 4, kind: input, shape index: {}]
  %s5 = inlined_call_operand.vmem [shape: f32[1,8], index: 5, kind: input, shape index: {}]
  %s6 = inlined_call_operand.vmem [shape: f32[8,40], index: 6, kind: input, shape index: {}]
  %s7 = inlined_call_operand.vmem [shape: f32[1,8], index: 7, kind: input, shape index: {}]
  %s8 = inlined_call_operand.vmem [shape: f32[8,16], index: 8, kind: input, shape index: {}]
  %s9 = inlined_call_operand.vmem [shape: f32[1,8], index: 9, kind: input, shape index: {}]
  %s10 = inlined_call_operand.vmem [shape: f32[8,4], index: 10, kind: input, shape index: {}]
  %s11 = inlined_call_operand.vmem [shape: f32[2,8,4], index: 11, kind: output, shape index: {}]
  %s12 = sld [smem:[#allocation0]]
  $region77: #{sesame_forward.6} parent=0
    _
  %s14 = ssub.s32 1, %s12
  %s15 = scalar_select 0, %s14, %s12
  loop: start=0, step=1, limit=4
  $region2: #{sesame_forward.6} parent=0 // loop_pre_header
    _
  $region3: #{sesame_forward.6} parent=0 // loop_header
    %s17 = sphi 0, %s21
    %p18 = scmp.ge.s32.totalorder %s17, 4
    %s27 = sphi 0, %s29
    %s30 = sphi 0, %s27
    %s31 = sphi 0, %s30
    %s47 = sphi 0, %s31
    %s51 = sphi 0, %s51
    %s53 = sphi 0, %s51
    %s54 = sphi 0, %s53
    %s68 = sphi 0, %s54
    %s72 = sphi 0, %s72
    %s74 = sphi 0, %s72
    %s75 = sphi 0, %s74
    %s89 = sphi 0, %s75
    %s93 = sphi 0, %s93
    %s95 = sphi 0, %s93
    %s96 = sphi 0, %s95
    %s110 = sphi 0, %s96
    %s114 = sphi 0, %s114
    %s116 = sphi 0, %s114
    %s117 = sphi 0, %s116
    %s131 = sphi 0, %s117
    %s135 = sphi 0, %s135
    %s137 = sphi 0, %s135
    %s138 = sphi 0, %s137
    %s152 = sphi 0, %s138
    %s156 = sphi 0, %s156
    %s158 = sphi 0, %s156
    %s159 = sphi 0, %s158
    %s173 = sphi 0, %s159
    %s177 = sphi 0, %s177
    %s179 = sphi 0, %s177
    %s180 = sphi 0, %s179
    %s194 = sphi 0, %s180
    %s198 = sphi 0, %s198
    %s200 = sphi 0, %s198
    %s201 = sphi 0, %s200
    %s215 = sphi 0, %s201
    %s219 = sphi 0, %s219
    %s221 = sphi 0, %s219
    %s222 = sphi 0, %s221
    %s236 = sphi 0, %s222
    %s240 = sphi 0, %s240
    %s242 = sphi 0, %s240
    %s243 = sphi 0, %s242
    %s257 = sphi 0, %s243
    %s263 = sphi 0, %s265
    %s266 = sphi 0, %s263
    %s267 = sphi 0, %s266
    %s283 = sphi 0, %s267
  $region4: #{sesame_forward.6} parent=0 // loop_header_branch
    %20 = sbr.rel (%p18) target = $region8
  $region5: #{sesame_forward.6} parent=0 // loop_body
    %s22 = ssub.s32 %s17, 1
    %s23 = ssub.s32 %s17, 2
    %s24 = sadd.s32 %s17, 1
    %s25 = ssub.s32 %s17, %s24
    %p26 = scmp.eq.s32.totalorder %s25, 0
    %s28 = sadd.s32 %s27, 1
    %s29 = scalar_select %p26, %s27, %s28
    %p32 = pneg %p26
    %p33 = scmp.eq.s32.totalorder %s17, 1
    %p34 = por %p32, %p33
    %p35 = scmp.ne.s32.totalorder %s27, %s30
    %p36 = scmp.eq.s32.totalorder %s17, 0
    %p37 = por %p35, %p36
    %p38 = scmp.ne.s32.totalorder %s27, %s30
    %p39 = scmp.eq.s32.totalorder %s22, 1
    %p40 = por %p38, %p39
    %p41 = scmp.ne.s32.totalorder %s30, %s31
    %p42 = scmp.eq.s32.totalorder %s22, 0
    %p43 = por %p41, %p42
    %p44 = scmp.ne.s32.totalorder %s30, %s31
    %p45 = scmp.eq.s32.totalorder %s23, 1
    %p46 = por %p44, %p45
    %p48 = scmp.ne.s32.totalorder %s31, %s47
    %p49 = scmp.eq.s32.totalorder %s23, 0
    %p50 = por %p48, %p49
    %s52 = sadd.s32 %s51, 1
    %p55 = scmp.eq.s32.totalorder %s17, 1
    %p56 = scmp.ne.s32.totalorder %s51, %s53
    %p57 = scmp.eq.s32.totalorder %s17, 0
    %p58 = por %p56, %p57
    %p59 = scmp.ne.s32.totalorder %s51, %s53
    %p60 = scmp.eq.s32.totalorder %s22, 1
    %p61 = por %p59, %p60
    %p62 = scmp.ne.s32.totalorder %s53, %s54
    %p63 = scmp.eq.s32.totalorder %s22, 0
    %p64 = por %p62, %p63
    %p65 = scmp.ne.s32.totalorder %s53, %s54
    %p66 = scmp.eq.s32.totalorder %s23, 1
    %p67 = por %p65, %p66
    %p69 = scmp.ne.s32.totalorder %s54, %s68
    %p70 = scmp.eq.s32.totalorder %s23, 0
    %p71 = por %p69, %p70
    %s73 = sadd.s32 %s72, 1
    %p76 = scmp.eq.s32.totalorder %s17, 1
    %p77 = scmp.ne.s32.totalorder %s72, %s74
    %p78 = scmp.eq.s32.totalorder %s17, 0
    %p79 = por %p77, %p78
    %p80 = scmp.ne.s32.totalorder %s72, %s74
    %p81 = scmp.eq.s32.totalorder %s22, 1
    %p82 = por %p80, %p81
    %p83 = scmp.ne.s32.totalorder %s74, %s75
    %p84 = scmp.eq.s32.totalorder %s22, 0
    %p85 = por %p83, %p84
    %p86 = scmp.ne.s32.totalorder %s74, %s75
    %p87 = scmp.eq.s32.totalorder %s23, 1
    %p88 = por %p86, %p87
    %p90 = scmp.ne.s32.totalorder %s75, %s89
    %p91 = scmp.eq.s32.totalorder %s23, 0
    %p92 = por %p90, %p91
    %s94 = sadd.s32 %s93, 1
    %p97 = scmp.eq.s32.totalorder %s17, 1
    %p98 = scmp.ne.s32.totalorder %s93, %s95
    %p99 = scmp.eq.s32.totalorder %s17, 0
    %p100 = por %p98, %p99
    %p101 = scmp.ne.s32.totalorder %s93, %s95
    %p102 = scmp.eq.s32.totalorder %s22, 1
    %p103 = por %p101, %p102
    %p104 = scmp.ne.s32.totalorder %s95, %s96
    %p105 = scmp.eq.s32.totalorder %s22, 0
    %p106 = por %p104, %p105
    %p107 = scmp.ne.s32.totalorder %s95, %s96
    %p108 = scmp.eq.s32.totalorder %s23, 1
    %p109 = por %p107, %p108
    %p111 = scmp.ne.s32.totalorder %s96, %s110
    %p112 = scmp.eq.s32.totalorder %s23, 0
    %p113 = por %p111, %p112
    %s115 = sadd.s32 %s114, 1
    %p118 = scmp.eq.s32.totalorder %s17, 1
    %p119 = scmp.ne.s32.totalorder %s114, %s116
    %p120 = scmp.eq.s32.totalorder %s17, 0
    %p121 = por %p119, %p120
    %p122 = scmp.ne.s32.totalorder %s114, %s116
    %p123 = scmp.eq.s32.totalorder %s22, 1
    %p124 = por %p122, %p123
    %p125 = scmp.ne.s32.totalorder %s116, %s117
    %p126 = scmp.eq.s32.totalorder %s22, 0
    %p127 = por %p125, %p126
    %p128 = scmp.ne.s32.totalorder %s116, %s117
    %p129 = scmp.eq.s32.totalorder %s23, 1
    %p130 = por %p128, %p129
    %p132 = scmp.ne.s32.totalorder %s117, %s131
    %p133 = scmp.eq.s32.totalorder %s23, 0
    %p134 = por %p132, %p133
    %s136 = sadd.s32 %s135, 1
    %p139 = scmp.eq.s32.totalorder %s17, 1
    %p140 = scmp.ne.s32.totalorder %s135, %s137
    %p141 = scmp.eq.s32.totalorder %s17, 0
    %p142 = por %p140, %p141
    %p143 = scmp.ne.s32.totalorder %s135, %s137
    %p144 = scmp.eq.s32.totalorder %s22, 1
    %p145 = por %p143, %p144
    %p146 = scmp.ne.s32.totalorder %s137, %s138
    %p147 = scmp.eq.s32.totalorder %s22, 0
    %p148 = por %p146, %p147
    %p149 = scmp.ne.s32.totalorder %s137, %s138
    %p150 = scmp.eq.s32.totalorder %s23, 1
    %p151 = por %p149, %p150
    %p153 = scmp.ne.s32.totalorder %s138, %s152
    %p154 = scmp.eq.s32.totalorder %s23, 0
    %p155 = por %p153, %p154
    %s157 = sadd.s32 %s156, 1
    %p160 = scmp.eq.s32.totalorder %s17, 1
    %p161 = scmp.ne.s32.totalorder %s156, %s158
    %p162 = scmp.eq.s32.totalorder %s17, 0
    %p163 = por %p161, %p162
    %p164 = scmp.ne.s32.totalorder %s156, %s158
    %p165 = scmp.eq.s32.totalorder %s22, 1
    %p166 = por %p164, %p165
    %p167 = scmp.ne.s32.totalorder %s158, %s159
    %p168 = scmp.eq.s32.totalorder %s22, 0
    %p169 = por %p167, %p168
    %p170 = scmp.ne.s32.totalorder %s158, %s159
    %p171 = scmp.eq.s32.totalorder %s23, 1
    %p172 = por %p170, %p171
    %p174 = scmp.ne.s32.totalorder %s159, %s173
    %p175 = scmp.eq.s32.totalorder %s23, 0
    %p176 = por %p174, %p175
    %s178 = sadd.s32 %s177, 1
    %p181 = scmp.eq.s32.totalorder %s17, 1
    %p182 = scmp.ne.s32.totalorder %s177, %s179
    %p183 = scmp.eq.s32.totalorder %s17, 0
    %p184 = por %p182, %p183
    %p185 = scmp.ne.s32.totalorder %s177, %s179
    %p186 = scmp.eq.s32.totalorder %s22, 1
    %p187 = por %p185, %p186
    %p188 = scmp.ne.s32.totalorder %s179, %s180
    %p189 = scmp.eq.s32.totalorder %s22, 0
    %p190 = por %p188, %p189
    %p191 = scmp.ne.s32.totalorder %s179, %s180
    %p192 = scmp.eq.s32.totalorder %s23, 1
    %p193 = por %p191, %p192
    %p195 = scmp.ne.s32.totalorder %s180, %s194
    %p196 = scmp.eq.s32.totalorder %s23, 0
    %p197 = por %p195, %p196
    %s199 = sadd.s32 %s198, 1
    %p202 = scmp.eq.s32.totalorder %s17, 1
    %p203 = scmp.ne.s32.totalorder %s198, %s200
    %p204 = scmp.eq.s32.totalorder %s17, 0
    %p205 = por %p203, %p204
    %p206 = scmp.ne.s32.totalorder %s198, %s200
    %p207 = scmp.eq.s32.totalorder %s22, 1
    %p208 = por %p206, %p207
    %p209 = scmp.ne.s32.totalorder %s200, %s201
    %p210 = scmp.eq.s32.totalorder %s22, 0
    %p211 = por %p209, %p210
    %p212 = scmp.ne.s32.totalorder %s200, %s201
    %p213 = scmp.eq.s32.totalorder %s23, 1
    %p214 = por %p212, %p213
    %p216 = scmp.ne.s32.totalorder %s201, %s215
    %p217 = scmp.eq.s32.totalorder %s23, 0
    %p218 = por %p216, %p217
    %s220 = sadd.s32 %s219, 1
    %p223 = scmp.eq.s32.totalorder %s17, 1
    %p224 = scmp.ne.s32.totalorder %s219, %s221
    %p225 = scmp.eq.s32.totalorder %s17, 0
    %p226 = por %p224, %p225
    %p227 = scmp.ne.s32.totalorder %s219, %s221
    %p228 = scmp.eq.s32.totalorder %s22, 1
    %p229 = por %p227, %p228
    %p230 = scmp.ne.s32.totalorder %s221, %s222
    %p231 = scmp.eq.s32.totalorder %s22, 0
    %p232 = por %p230, %p231
    %p233 = scmp.ne.s32.totalorder %s221, %s222
    %p234 = scmp.eq.s32.totalorder %s23, 1
    %p235 = por %p233, %p234
    %p237 = scmp.ne.s32.totalorder %s222, %s236
    %p238 = scmp.eq.s32.totalorder %s23, 0
    %p239 = por %p237, %p238
    %s241 = sadd.s32 %s240, 1
    %p244 = scmp.eq.s32.totalorder %s17, 1
    %p245 = scmp.ne.s32.totalorder %s240, %s242
    %p246 = scmp.eq.s32.totalorder %s17, 0
    %p247 = por %p245, %p246
    %p248 = scmp.ne.s32.totalorder %s240, %s242
    %p249 = scmp.eq.s32.totalorder %s22, 1
    %p250 = por %p248, %p249
    %p251 = scmp.ne.s32.totalorder %s242, %s243
    %p252 = scmp.eq.s32.totalorder %s22, 0
    %p253 = por %p251, %p252
    %p254 = scmp.ne.s32.totalorder %s242, %s243
    %p255 = scmp.eq.s32.totalorder %s23, 1
    %p256 = por %p254, %p255
    %p258 = scmp.ne.s32.totalorder %s243, %s257
    %p259 = scmp.eq.s32.totalorder %s23, 0
    %p260 = por %p258, %p259
    %s261 = ssub.s32 %s17, %s24
    %p262 = scmp.eq.s32.totalorder %s261, 0
    %s264 = sadd.s32 %s263, 1
    %s265 = scalar_select %p262, %s263, %s264
    %p268 = pneg %p262
    %p269 = scmp.eq.s32.totalorder %s17, 1
    %p270 = por %p268, %p269
    %p271 = scmp.ne.s32.totalorder %s263, %s266
    %p272 = scmp.eq.s32.totalorder %s17, 0
    %p273 = por %p271, %p272
    %p274 = scmp.ne.s32.totalorder %s263, %s266
    %p275 = scmp.eq.s32.totalorder %s22, 1
    %p276 = por %p274, %p275
    %p277 = scmp.ne.s32.totalorder %s266, %s267
    %p278 = scmp.eq.s32.totalorder %s22, 0
    %p279 = por %p277, %p278
    %p280 = scmp.ne.s32.totalorder %s266, %s267
    %p281 = scmp.eq.s32.totalorder %s23, 1
    %p282 = por %p280, %p281
    %p284 = scmp.ne.s32.totalorder %s267, %s283
    %p285 = scmp.eq.s32.totalorder %s23, 0
    %p286 = por %p284, %p285
    %p287 = scmp.le.s32.totalorder 1, %s17
    %p288 = scmp.lt.s32.totalorder %s17, 3
    %p289 = pnand %p287, %p288
    %p290 = pneg %p289
    // Predicated region
    $region9: #{sesame_forward.6} parent=5 // pred_check
      _
    $region10: #{sesame_forward.6} parent=5 // pred_check_branch
      %292 = sbr.rel (%p289) target = $region12
    $region11: #{sesame_forward.6} parent=5 // pred_region
      %s293 = ssub.s32 %s17, 1
      // Predicated region
      $region13: #{sesame_forward.6} parent=11 // pred_check
        %p294 = pneg %p64
      $region14: #{sesame_forward.6} parent=11 // pred_check_branch
        %296 = sbr.rel (%p294) target = $region16
      $region15: #{sesame_forward.6} parent=11 // pred_region
        _
      $region16: #{sesame_forward.6} parent=11 // pred_fallthru
        _
      // Predicated region
      $region17: #{sesame_forward.6} parent=11 // pred_check
        %p297 = pneg %p85
      $region18: #{sesame_forward.6} parent=11 // pred_check_branch
        %299 = sbr.rel (%p297) target = $region20
      $region19: #{sesame_forward.6} parent=11 // pred_region
        _
      $region20: #{sesame_forward.6} parent=11 // pred_fallthru
        _
      // Predicated region
      $region21: #{sesame_forward.6} parent=11 // pred_check
        %p300 = pneg %p106
      $region22: #{sesame_forward.6} parent=11 // pred_check_branch
        %302 = sbr.rel (%p300) target = $region24
      $region23: #{sesame_forward.6} parent=11 // pred_region
        _
      $region24: #{sesame_forward.6} parent=11 // pred_fallthru
        _
      // Predicated region
      $region25: #{sesame_forward.6} parent=11 // pred_check
        %p303 = pneg %p127
      $region26: #{sesame_forward.6} parent=11 // pred_check_branch
        %305 = sbr.rel (%p303) target = $region28
      $region27: #{sesame_forward.6} parent=11 // pred_region
        _
      $region28: #{sesame_forward.6} parent=11 // pred_fallthru
        _
      // Predicated region
      $region29: #{sesame_forward.6} parent=11 // pred_check
        %p306 = pneg %p148
      $region30: #{sesame_forward.6} parent=11 // pred_check_branch
        %308 = sbr.rel (%p306) target = $region32
      $region31: #{sesame_forward.6} parent=11 // pred_region
        _
      $region32: #{sesame_forward.6} parent=11 // pred_fallthru
        _
      // Predicated region
      $region33: #{sesame_forward.6} parent=11 // pred_check
        %p309 = pneg %p169
      $region34: #{sesame_forward.6} parent=11 // pred_check_branch
        %311 = sbr.rel (%p309) target = $region36
      $region35: #{sesame_forward.6} parent=11 // pred_region
        _
      $region36: #{sesame_forward.6} parent=11 // pred_fallthru
        _
      // Predicated region
      $region37: #{sesame_forward.6} parent=11 // pred_check
        %p312 = pneg %p190
      $region38: #{sesame_forward.6} parent=11 // pred_check_branch
        %314 = sbr.rel (%p312) target = $region40
      $region39: #{sesame_forward.6} parent=11 // pred_region
        _
      $region40: #{sesame_forward.6} parent=11 // pred_fallthru
        _
      // Predicated region
      $region41: #{sesame_forward.6} parent=11 // pred_check
        %p315 = pneg %p211
      $region42: #{sesame_forward.6} parent=11 // pred_check_branch
        %317 = sbr.rel (%p315) target = $region44
      $region43: #{sesame_forward.6} parent=11 // pred_region
        _
      $region44: #{sesame_forward.6} parent=11 // pred_fallthru
        _
      // Predicated region
      $region45: #{sesame_forward.6} parent=11 // pred_check
        %p318 = pneg %p232
      $region46: #{sesame_forward.6} parent=11 // pred_check_branch
        %320 = sbr.rel (%p318) target = $region48
      $region47: #{sesame_forward.6} parent=11 // pred_region
        _
      $region48: #{sesame_forward.6} parent=11 // pred_fallthru
        _
      // Predicated region
      $region49: #{sesame_forward.6} parent=11 // pred_check
        %p321 = pneg %p253
      $region50: #{sesame_forward.6} parent=11 // pred_check_branch
        %323 = sbr.rel (%p321) target = $region52
      $region51: #{sesame_forward.6} parent=11 // pred_region
        _
      $region52: #{sesame_forward.6} parent=11 // pred_fallthru
        _
    $region12: #{sesame_forward.6} parent=5 // pred_fallthru
      _
    %p324 = scmp.lt.s32.totalorder %s17, 2
    // Predicated region
    $region53: #{sesame_forward.6} parent=5 // pred_check
      %p325 = pneg %p324
    $region54: #{sesame_forward.6} parent=5 // pred_check_branch
      %327 = sbr.rel (%p325) target = $region56
    $region55: #{sesame_forward.6} parent=5 // pred_region
      // Predicated region
      $region57: #{sesame_forward.6} parent=55 // pred_check
        %p328 = pneg %p37
      $region58: #{sesame_forward.6} parent=55 // pred_check_branch
        %330 = sbr.rel (%p328) target = $region60
      $region59: #{sesame_forward.6} parent=55 // pred_region
        %p331 = scmp.lt.s32.totalorder %s17, 1
        %s332 = scalar_select %p331, %s17, 1
        %s333 = smul.addr %s332, 8
        %s334 = scalar_lea.vmem %s0, %s333
      $region60: #{sesame_forward.6} parent=55 // pred_fallthru
        _
    $region56: #{sesame_forward.6} parent=5 // pred_fallthru
      _
    %p335 = scmp.le.s32.totalorder 1, %s17
    %p336 = scmp.lt.s32.totalorder %s17, 3
    %p337 = pnand %p335, %p336
    %p338 = pneg %p337
    // Predicated region
    $region61: #{sesame_forward.6} parent=5 // pred_check
      _
    $region62: #{sesame_forward.6} parent=5 // pred_check_branch
      %340 = sbr.rel (%p337) target = $region64
    $region63: #{sesame_forward.6} parent=5 // pred_region
      %s341 = ssub.s32 %s17, 1
      %p342 = scmp.lt.s32.totalorder %s22, 1
      %s343 = scalar_select %p342, %s22, 1
      %s344 = smul.addr %s343, 8
      %s345 = scalar_lea.vmem %s0, %s344
      %p346 = pneg %p43
      %p347 = pneg %p40
      %p348 = pneg %p64
      %p349 = pneg %p61
      %p350 = pneg %p85
      %p351 = pneg %p82
      %p352 = pneg %p106
      %p353 = pneg %p103
      %p354 = pneg %p127
      %p355 = pneg %p124
      %p356 = pneg %p148
      %p357 = pneg %p145
      %p358 = pneg %p169
      %p359 = pneg %p166
      %p360 = pneg %p190
      %p361 = pneg %p187
      %p362 = pneg %p211
      %p363 = pneg %p208
      %p364 = pneg %p232
      %p365 = pneg %p229
      %p366 = pneg %p253
      %p367 = pneg %p250
      %p368 = pneg %p279
      %p369 = pneg %p276
      %p370 = scmp.lt.s32.totalorder %s22, 1
      %s371 = scalar_select %p370, %s22, 1
      %s372 = smul.addr %s371, 8
      %s373 = scalar_lea.vmem %s11, %s372
      %p374 = scmp.lt.s32.totalorder %s22, 1
      %s375 = scalar_select %p374, %s22, 1
      %s376 = smul.addr %s375, 8
      %s377 = scalar_lea.vmem %s0, %s376
      %p378 = scmp.lt.s32.totalorder %s22, 1
      %s379 = scalar_select %p378, %s22, 1
      %s380 = smul.addr %s379, 8
      %s381 = scalar_lea.vmem %s11, %s380
      %v382 = vld [vmem:[%s377] sm:$0xff]
      %v383 = vld [vmem:[%s1] sm:$0xff]
      %v384 = vld [vmem:[%s2] sm:$0x1]
      %v386 = vlaneseq
      %v387 = vshrl.u32 %v386, 7
      %v388 = vsub.s32 0, %v387
      %v389 = vrot.slane %v384, %v388
      %vm391 = vcmask 64512
      %v393 = vsel %vm391, %v382, 0
      %395 = vmatprep.subr.mxu0 0.0
      %396 = vmatpush1.msra.mxu0 0.0
      %397 = vmatprep.subr.mxu0 0.0
      %398 = vmatpush1.msra.mxu0 0.0
      %399 = vmatprep.subr.mxu0 0.0
      %400 = vmatpush1.msra.mxu0 0.0
      %401 = vmatprep.subr.mxu0 0.0
      %402 = vmatpush1.msra.mxu0 0.0
      %403 = vmatprep.subr.mxu0 0.0
      %404 = vmatpush1.msra.mxu0 0.0
      %405 = vmatprep.subr.mxu0 0.0
      %406 = vmatpush1.msra.mxu0 0.0
      %407 = vmatprep.subr.mxu0 0.0
      %408 = vmatpush1.msra.mxu0 0.0
      %409 = vmatprep.subr.mxu0 0.0
      %410 = vmatpush1.msra.mxu0 0.0
      %411 = vmatprep.subr.mxu0 0.0
      %412 = vmatpush1.msra.mxu0 0.0
      %413 = vmatprep.subr.mxu0 0.0
      %414 = vmatpush1.msra.mxu0 0.0
      %415 = vmatprep.subr.mxu0 0.0
      %416 = vmatpush1.msra.mxu0 0.0
      %417 = vmatprep.subr.mxu0 0.0
      %418 = vmatpush1.msra.mxu0 0.0
      %419 = vmatprep.subr.mxu0 0.0
      %420 = vmatpush1.msra.mxu0 0.0
      %421 = vmatprep.subr.mxu0 0.0
      %422 = vmatpush1.msra.mxu0 0.0
      %423 = vmatprep.subr.mxu0 0.0
      %424 = vmatpush1.msra.mxu0 0.0
      %425 = vmatprep.subr.mxu0 0.0
      %426 = vmatpush1.msra.mxu0 %v383
      %427 = vmatprep.subr.mxu0 0.0
      %428 = vmatpush2.msra.mxu0 0.0
      %429 = vmatprep.subr.mxu0 0.0
      %430 = vmatpush2.msra.mxu0 0.0
      %431 = vmatprep.subr.mxu0 0.0
      %432 = vmatpush2.msra.mxu0 0.0
      %433 = vmatprep.subr.mxu0 0.0
      %434 = vmatpush2.msra.mxu0 0.0
      %435 = vmatprep.subr.mxu0 0.0
      %436 = vmatpush2.msra.mxu0 0.0
      %437 = vmatprep.subr.mxu0 0.0
      %438 = vmatpush2.msra.mxu0 0.0
      %439 = vmatprep.subr.mxu0 0.0
      %440 = vmatpush2.msra.mxu0 0.0
      %441 = vmatprep.subr.mxu0 0.0
      %442 = vmatpush2.msra.mxu0 0.0
      %443 = vmatprep.subr.mxu0 0.0
      %444 = vmatpush2.msra.mxu0 0.0
      %445 = vmatprep.subr.mxu0 0.0
      %446 = vmatpush2.msra.mxu0 0.0
      %447 = vmatprep.subr.mxu0 0.0
      %448 = vmatpush2.msra.mxu0 0.0
      %449 = vmatprep.subr.mxu0 0.0
      %450 = vmatpush2.msra.mxu0 0.0
      %451 = vmatprep.subr.mxu0 0.0
      %452 = vmatpush2.msra.mxu0 0.0
      %453 = vmatprep.subr.mxu0 0.0
      %454 = vmatpush2.msra.mxu0 0.0
      %455 = vmatprep.subr.mxu0 0.0
      %456 = vmatpush2.msra.mxu0 0.0
      %457 = vmatprep.subr.mxu0 0.0
      %458 = vmatpush2.msra.mxu0 0.0
      %459 = vmatprep.mubr.f32.mxu0 0.0
      %460 = vmatmul.mubr.f32.gmra.mxu0 %v393
      %v461 = vpop.f32.mrf.mxu0
      %v462 = vadd.f32 %v389, %v461
      %v463 = vpop.f32.mrf.mxu0
      %464 = vdwg.mxu0
      %v465 = vmul.f32 %v462, 0.5
      %v466 = vmul.f32 %v462, 0.70710677
      %v467 = verf.f32.pop %v466
      %v468 = vadd.f32 %v467, 1.0
      %v469 = vmul.f32 %v465, %v468
      %v470 = vld [vmem:[%s3] sm:$0xf]
      %v471 = vld [vmem:[%s4] sm:$0xf]
      %v472 = vld [vmem:[%s5] sm:$0x1]
      %v473 = vld [vmem:[%s6] sm:$0xff]
      %v474 = vld [vmem:[%s7] sm:$0x1]
      %v475 = vld [vmem:[%s8] sm:$0xff]
      %v476 = vld [vmem:[%s9] sm:$0x1]
      %vm477 = vcmask 31744
      %v479 = vsel %vm477, %v469, 0
      %vm481 = vcmask 1043456
      %v483 = vsel %vm481, %v470, 0
      %485 = vmatprep.subr.mxu0 0.0
      %486 = vmatpush1.msra.mxu0 0.0
      %487 = vmatprep.subr.mxu0 0.0
      %488 = vmatpush1.msra.mxu0 0.0
      %489 = vmatprep.subr.mxu0 0.0
      %490 = vmatpush1.msra.mxu0 0.0
      %491 = vmatprep.subr.mxu0 0.0
      %492 = vmatpush1.msra.mxu0 0.0
      %493 = vmatprep.subr.mxu0 0.0
      %494 = vmatpush1.msra.mxu0 0.0
      %495 = vmatprep.subr.mxu0 0.0
      %496 = vmatpush1.msra.mxu0 0.0
      %497 = vmatprep.subr.mxu0 0.0
      %498 = vmatpush1.msra.mxu0 0.0
      %499 = vmatprep.subr.mxu0 0.0
      %500 = vmatpush1.msra.mxu0 0.0
      %501 = vmatprep.subr.mxu0 0.0
      %502 = vmatpush1.msra.mxu0 0.0
      %503 = vmatprep.subr.mxu0 0.0
      %504 = vmatpush1.msra.mxu0 0.0
      %505 = vmatprep.subr.mxu0 0.0
      %506 = vmatpush1.msra.mxu0 0.0
      %507 = vmatprep.subr.mxu0 0.0
      %508 = vmatpush1.msra.mxu0 0.0
      %509 = vmatprep.subr.mxu0 0.0
      %510 = vmatpush1.msra.mxu0 0.0
      %511 = vmatprep.subr.mxu0 0.0
      %512 = vmatpush1.msra.mxu0 0.0
      %513 = vmatprep.subr.mxu0 0.0
      %514 = vmatpush1.msra.mxu0 0.0
      %515 = vmatprep.subr.mxu0 0.0
      %516 = vmatpush1.msra.mxu0 %v483
      %517 = vmatprep.subr.mxu0 0.0
      %518 = vmatpush2.msra.mxu0 0.0
      %519 = vmatprep.subr.mxu0 0.0
      %520 = vmatpush2.msra.mxu0 0.0
      %521 = vmatprep.subr.mxu0 0.0
      %522 = vmatpush2.msra.mxu0 0.0
      %523 = vmatprep.subr.mxu0 0.0
      %524 = vmatpush2.msra.mxu0 0.0
      %525 = vmatprep.subr.mxu0 0.0
      %526 = vmatpush2.msra.mxu0 0.0
      %527 = vmatprep.subr.mxu0 0.0
      %528 = vmatpush2.msra.mxu0 0.0
      %529 = vmatprep.subr.mxu0 0.0
      %530 = vmatpush2.msra.mxu0 0.0
      %531 = vmatprep.subr.mxu0 0.0
      %532 = vmatpush2.msra.mxu0 0.0
      %533 = vmatprep.subr.mxu0 0.0
      %534 = vmatpush2.msra.mxu0 0.0
      %535 = vmatprep.subr.mxu0 0.0
      %536 = vmatpush2.msra.mxu0 0.0
      %537 = vmatprep.subr.mxu0 0.0
      %538 = vmatpush2.msra.mxu0 0.0
      %539 = vmatprep.subr.mxu0 0.0
      %540 = vmatpush2.msra.mxu0 0.0
      %541 = vmatprep.subr.mxu0 0.0
      %542 = vmatpush2.msra.mxu0 0.0
      %543 = vmatprep.subr.mxu0 0.0
      %544 = vmatpush2.msra.mxu0 0.0
      %545 = vmatprep.subr.mxu0 0.0
      %546 = vmatpush2.msra.mxu0 0.0
      %547 = vmatprep.subr.mxu0 0.0
      %548 = vmatpush2.msra.mxu0 0.0
      %549 = vmatprep.mubr.f32.mxu0 0.0
      %550 = vmatmul.mubr.f32.gmra.mxu0 %v479
      %v551 = vpop.f32.mrf.mxu0
      %v552 = vadd.f32 0.0, %v551
      %v553 = vpop.f32.mrf.mxu0
      %554 = vdwg.mxu0
      %555 = vst.msk [vmem:[#allocation2] sm:$0xff] %vm391, 0.0
      %556 = vst.msk [vmem:[#allocation2 + $0x8] sm:$0xff] %vm391, %v552
      %v557 = vlaneseq
      %v558 = vshrl.u32 %v557, 7
      %v559 = vsub.s32 3, %v558
      %v560 = vrot.slane %v471, %v559
      %v561 = vmul.f32 %v552, %v560
      %v562 = vld [vmem:[#allocation2 + $0x7] sm:$0xff]
      %v563 = vlaneseq
      %v564 = vshrl.u32 %v563, 7
      %v565 = vsub.s32 2, %v564
      %v566 = vrot.slane %v471, %v565
      %v567 = vmul.f32 %v562, %v566
      %v568 = vadd.f32 %v561, %v567
      %v569 = vld [vmem:[#allocation2 + $0x6] sm:$0xff]
      %v570 = vlaneseq
      %v571 = vshrl.u32 %v570, 7
      %v572 = vsub.s32 1, %v571
      %v573 = vrot.slane %v471, %v572
      %v574 = vmul.f32 %v569, %v573
      %v575 = vadd.f32 %v568, %v574
      %v576 = vld [vmem:[#allocation2 + $0x5] sm:$0xff]
      %v577 = vlaneseq
      %v578 = vshrl.u32 %v577, 7
      %v579 = vsub.s32 0, %v578
      %v580 = vrot.slane %v471, %v579
      %v581 = vmul.f32 %v576, %v580
      %v582 = vadd.f32 %v575, %v581
      %v584 = vlaneseq
      %v585 = vshrl.u32 %v584, 7
      %v586 = vsub.s32 0, %v585
      %v587 = vrot.slane %v472, %v586
      %v589 = vadd.f32 %v582, %v587
      %v590 = vxor.u32 %v589, 2147483648
      %v591 = vmul.f32 %v590, 1.442695
      %v592 = vpow.pop %v591
      %v593 = vadd.f32 %v592, 1.0
      %v594 = vrcp.pop %v593
      %v595 = vmul.f32 1.0, %v594
      %v596 = vmul.f32 %v589, %v595
      %v598 = vsel %vm391, %v596, 0
      %600 = vmatprep.subr.mxu0 0.0
      %601 = vmatpush1.msra.mxu0 0.0
      %602 = vmatprep.subr.mxu0 0.0
      %603 = vmatpush1.msra.mxu0 0.0
      %604 = vmatprep.subr.mxu0 0.0
      %605 = vmatpush1.msra.mxu0 0.0
      %606 = vmatprep.subr.mxu0 0.0
      %607 = vmatpush1.msra.mxu0 0.0
      %608 = vmatprep.subr.mxu0 0.0
      %609 = vmatpush1.msra.mxu0 0.0
      %610 = vmatprep.subr.mxu0 0.0
      %611 = vmatpush1.msra.mxu0 0.0
      %612 = vmatprep.subr.mxu0 0.0
      %613 = vmatpush1.msra.mxu0 0.0
      %614 = vmatprep.subr.mxu0 0.0
      %615 = vmatpush1.msra.mxu0 0.0
      %616 = vmatprep.subr.mxu0 0.0
      %617 = vmatpush1.msra.mxu0 0.0
      %618 = vmatprep.subr.mxu0 0.0
      %619 = vmatpush1.msra.mxu0 0.0
      %620 = vmatprep.subr.mxu0 0.0
      %621 = vmatpush1.msra.mxu0 0.0
      %622 = vmatprep.subr.mxu0 0.0
      %623 = vmatpush1.msra.mxu0 0.0
      %624 = vmatprep.subr.mxu0 0.0
      %625 = vmatpush1.msra.mxu0 0.0
      %626 = vmatprep.subr.mxu0 0.0
      %627 = vmatpush1.msra.mxu0 0.0
      %628 = vmatprep.subr.mxu0 0.0
      %629 = vmatpush1.msra.mxu0 0.0
      %630 = vmatprep.subr.mxu0 0.0
      %631 = vmatpush1.msra.mxu0 %v473
      %632 = vmatprep.subr.mxu0 0.0
      %633 = vmatpush2.msra.mxu0 0.0
      %634 = vmatprep.subr.mxu0 0.0
      %635 = vmatpush2.msra.mxu0 0.0
      %636 = vmatprep.subr.mxu0 0.0
      %637 = vmatpush2.msra.mxu0 0.0
      %638 = vmatprep.subr.mxu0 0.0
      %639 = vmatpush2.msra.mxu0 0.0
      %640 = vmatprep.subr.mxu0 0.0
      %641 = vmatpush2.msra.mxu0 0.0
      %642 = vmatprep.subr.mxu0 0.0
      %643 = vmatpush2.msra.mxu0 0.0
      %644 = vmatprep.subr.mxu0 0.0
      %645 = vmatpush2.msra.mxu0 0.0
      %646 = vmatprep.subr.mxu0 0.0
      %647 = vmatpush2.msra.mxu0 0.0
      %648 = vmatprep.subr.mxu0 0.0
      %649 = vmatpush2.msra.mxu0 0.0
      %650 = vmatprep.subr.mxu0 0.0
      %651 = vmatpush2.msra.mxu0 0.0
      %652 = vmatprep.subr.mxu0 0.0
      %653 = vmatpush2.msra.mxu0 0.0
      %654 = vmatprep.subr.mxu0 0.0
      %655 = vmatpush2.msra.mxu0 0.0
      %656 = vmatprep.subr.mxu0 0.0
      %657 = vmatpush2.msra.mxu0 0.0
      %658 = vmatprep.subr.mxu0 0.0
      %659 = vmatpush2.msra.mxu0 0.0
      %660 = vmatprep.subr.mxu0 0.0
      %661 = vmatpush2.msra.mxu0 0.0
      %662 = vmatprep.subr.mxu0 0.0
      %663 = vmatpush2.msra.mxu0 0.0
      %664 = vmatprep.mubr.f32.mxu0 0.0
      %665 = vmatmul.mubr.f32.gmra.mxu0 %v598
      %v666 = vpop.f32.mrf.mxu0
      %v667 = vadd.f32 0.0, %v666
      %v668 = vpop.f32.mrf.mxu0
      %669 = vdwg.mxu0
      %v671 = vlaneseq
      %v672 = vshrl.u32 %v671, 7
      %v673 = vsub.s32 0, %v672
      %v674 = vrot.slane %v474, %v673
      %v676 = vadd.f32 %v667, %v674
      %vm677 = vcmp.gt.f32.partialorder %v676, 20.0
      %v678 = vmin.f32 %v676, 20.0
      %v679 = vmul.f32 %v678, 1.442695
      %v680 = vpow.pop %v679
      %v681 = vadd.f32 %v680, 1.0
      %v682 = vlog2.pop %v681
      %v683 = vmul.f32 %v682, 0.6931472
      %v684 = vsel %vm677, %v676, %v683
      %685 = vst.msk [vmem:[#allocation3] sm:$0xff] %vm391, %v684
      %v686 = vmul.f32 %v684, %v596
      %687 = vst.msk [vmem:[#allocation4] sm:$0xff] %vm391, %v686
      %689 = vrot.lane.b32.xlu0 %v667, 120
      %v690 = vpop.permute.xlu0 %689
      %vm692 = vcmask 130048
      %693 = vst.msk [vmem:[#allocation5] sm:$0xff] %vm692, %v690
      %694 = vrot.lane.b32.xlu0 %v667, 104
      %v695 = vpop.permute.xlu0 %694
      %697 = vst.msk [vmem:[#allocation6] sm:$0xff] %vm692, %v695
      %v698 = vld [vmem:[#allocation3] sm:$0xff]
      %v699 = vld [vmem:[#allocation4] sm:$0xff]
      %v700 = vld [vmem:[#allocation5] sm:$0xff]
      %v701 = vld [vmem:[#allocation6] sm:$0xff]
      %v702 = vlaneseq
      %v703 = vshrl.u32 %v702, 7
      %v704 = vsub.s32 0, %v703
      %v705 = vrot.slane %v698, %v704
      %707 = vbcast.lane.b32.xlu0 %v705, 256
      %v708 = vpop.permute.xlu0 %707
      %v709 = vlaneseq
      %v710 = vshrl.u32 %v709, 7
      %v711 = vsub.s32 1, %v710
      %v712 = vrot.slane %v698, %v711
      %714 = vbcast.lane.b32.xlu0 %v712, 256
      %v715 = vpop.permute.xlu0 %714
      %v716 = vlaneseq
      %v717 = vshrl.u32 %v716, 7
      %v718 = vsub.s32 2, %v717
      %v719 = vrot.slane %v698, %v718
      %721 = vbcast.lane.b32.xlu0 %v719, 256
      %v722 = vpop.permute.xlu0 %721
      %v723 = vlaneseq
      %v724 = vshrl.u32 %v723, 7
      %v725 = vsub.s32 3, %v724
      %v726 = vrot.slane %v698, %v725
      %728 = vbcast.lane.b32.xlu0 %v726, 256
      %v729 = vpop.permute.xlu0 %728
      %v730 = vlaneseq
      %v731 = vshrl.u32 %v730, 7
      %v732 = vsub.s32 4, %v731
      %v733 = vrot.slane %v698, %v732
      %735 = vbcast.lane.b32.xlu0 %v733, 256
      %v736 = vpop.permute.xlu0 %735
      %v737 = vlaneseq
      %v738 = vshrl.u32 %v737, 7
      %v739 = vsub.s32 5, %v738
      %v740 = vrot.slane %v698, %v739
      %742 = vbcast.lane.b32.xlu0 %v740, 256
      %v743 = vpop.permute.xlu0 %742
      %v744 = vlaneseq
      %v745 = vshrl.u32 %v744, 7
      %v746 = vsub.s32 6, %v745
      %v747 = vrot.slane %v698, %v746
      %749 = vbcast.lane.b32.xlu0 %v747, 256
      %v750 = vpop.permute.xlu0 %749
      %v751 = vlaneseq
      %v752 = vshrl.u32 %v751, 7
      %v753 = vsub.s32 7, %v752
      %v754 = vrot.slane %v698, %v753
      %756 = vbcast.lane.b32.xlu0 %v754, 256
      %v757 = vpop.permute.xlu0 %756
      %v758 = vmul.f32 %v708, %v475
      %v759 = vmul.f32 %v715, %v475
      %v760 = vmul.f32 %v722, %v475
      %v761 = vmul.f32 %v729, %v475
      %v762 = vmul.f32 %v736, %v475
      %v763 = vmul.f32 %v743, %v475
      %v764 = vmul.f32 %v750, %v475
      %v765 = vmul.f32 %v757, %v475
      %v766 = vmul.f32 %v758, 1.442695
      %v767 = vpow.pop %v766
      %v768 = vmul.f32 %v759, 1.442695
      %v769 = vpow.pop %v768
      %v770 = vmul.f32 %v760, 1.442695
      %v771 = vpow.pop %v770
      %v772 = vmul.f32 %v761, 1.442695
      %v773 = vpow.pop %v772
      %v774 = vmul.f32 %v762, 1.442695
      %v775 = vpow.pop %v774
      %v776 = vmul.f32 %v763, 1.442695
      %v777 = vpow.pop %v776
      %v778 = vmul.f32 %v764, 1.442695
      %v779 = vpow.pop %v778
      %v780 = vmul.f32 %v765, 1.442695
      %v781 = vpow.pop %v780
      %v782 = vlaneseq
      %v783 = vshrl.u32 %v782, 7
      %v784 = vsub.s32 0, %v783
      %v785 = vrot.slane %v699, %v784
      %787 = vbcast.lane.b32.xlu0 %v785, 256
      %v788 = vpop.permute.xlu0 %787
      %v789 = vlaneseq
      %v790 = vshrl.u32 %v789, 7
      %v791 = vsub.s32 1, %v790
      %v792 = vrot.slane %v699, %v791
      %794 = vbcast.lane.b32.xlu0 %v792, 256
      %v795 = vpop.permute.xlu0 %794
      %v796 = vlaneseq
      %v797 = vshrl.u32 %v796, 7
      %v798 = vsub.s32 2, %v797
      %v799 = vrot.slane %v699, %v798
      %801 = vbcast.lane.b32.xlu0 %v799, 256
      %v802 = vpop.permute.xlu0 %801
      %v803 = vlaneseq
      %v804 = vshrl.u32 %v803, 7
      %v805 = vsub.s32 3, %v804
      %v806 = vrot.slane %v699, %v805
      %808 = vbcast.lane.b32.xlu0 %v806, 256
      %v809 = vpop.permute.xlu0 %808
      %v810 = vlaneseq
      %v811 = vshrl.u32 %v810, 7
      %v812 = vsub.s32 4, %v811
      %v813 = vrot.slane %v699, %v812
      %815 = vbcast.lane.b32.xlu0 %v813, 256
      %v816 = vpop.permute.xlu0 %815
      %v817 = vlaneseq
      %v818 = vshrl.u32 %v817, 7
      %v819 = vsub.s32 5, %v818
      %v820 = vrot.slane %v699, %v819
      %822 = vbcast.lane.b32.xlu0 %v820, 256
      %v823 = vpop.permute.xlu0 %822
      %v824 = vlaneseq
      %v825 = vshrl.u32 %v824, 7
      %v826 = vsub.s32 6, %v825
      %v827 = vrot.slane %v699, %v826
      %829 = vbcast.lane.b32.xlu0 %v827, 256
      %v830 = vpop.permute.xlu0 %829
      %v831 = vlaneseq
      %v832 = vshrl.u32 %v831, 7
      %v833 = vsub.s32 7, %v832
      %v834 = vrot.slane %v699, %v833
      %836 = vbcast.lane.b32.xlu0 %v834, 256
      %v837 = vpop.permute.xlu0 %836
      %v839 = vcombine.high %v700, %v700
      %v841 = vunpack.c.l.s4 1966171168
      %v842 = vunpack.c.0.s8 %v841
      %v843 = vlaneseq
      %v844 = vshrl.u32 %v843, 7
      %v845 = vsub.s32 %v842, %v844
      %v846 = vrot.slane %v700, %v845
      %v848 = vunpack.c.l.s4 1966171168
      %v849 = vunpack.c.0.s8 %v848
      %v850 = vlaneseq
      %v851 = vshrl.u32 %v850, 7
      %v852 = vsub.s32 %v849, %v851
      %v853 = vrot.slane %v839, %v852
      %v854 = vcombine.high %v846, %v846
      %v855 = vcombine.high %v853, %v853
      %v857 = vunpack.c.l.s4 1966171168
      %v858 = vunpack.c.0.s8 %v857
      %v859 = vlaneseq
      %v860 = vshrl.u32 %v859, 7
      %v861 = vsub.s32 %v858, %v860
      %v862 = vrot.slane %v846, %v861
      %v864 = vunpack.c.l.s4 1966171168
      %v865 = vunpack.c.0.s8 %v864
      %v866 = vlaneseq
      %v867 = vshrl.u32 %v866, 7
      %v868 = vsub.s32 %v865, %v867
      %v869 = vrot.slane %v853, %v868
      %v871 = vunpack.c.l.s4 1966171168
      %v872 = vunpack.c.0.s8 %v871
      %v873 = vlaneseq
      %v874 = vshrl.u32 %v873, 7
      %v875 = vsub.s32 %v872, %v874
      %v876 = vrot.slane %v854, %v875
      %v878 = vunpack.c.l.s4 1966171168
      %v879 = vunpack.c.0.s8 %v878
      %v880 = vlaneseq
      %v881 = vshrl.u32 %v880, 7
      %v882 = vsub.s32 %v879, %v881
      %v883 = vrot.slane %v855, %v882
      %v884 = vcombine.high %v862, %v862
      %v885 = vcombine.high %v869, %v869
      %v886 = vcombine.high %v876, %v876
      %v887 = vcombine.high %v883, %v883
      %v888 = vlaneseq
      %v889 = vshrl.u32 %v888, 7
      %v890 = vsub.s32 0, %v889
      %v891 = vrot.slane %v862, %v890
      %v892 = vlaneseq
      %v893 = vshrl.u32 %v892, 7
      %v894 = vsub.s32 0, %v893
      %v895 = vrot.slane %v876, %v894
      %v896 = vlaneseq
      %v897 = vshrl.u32 %v896, 7
      %v898 = vsub.s32 0, %v897
      %v899 = vrot.slane %v884, %v898
      %v900 = vlaneseq
      %v901 = vshrl.u32 %v900, 7
      %v902 = vsub.s32 0, %v901
      %v903 = vrot.slane %v886, %v902
      %v904 = vlaneseq
      %v905 = vshrl.u32 %v904, 7
      %v906 = vsub.s32 0, %v905
      %v907 = vrot.slane %v869, %v906
      %v908 = vlaneseq
      %v909 = vshrl.u32 %v908, 7
      %v910 = vsub.s32 0, %v909
      %v911 = vrot.slane %v883, %v910
      %v912 = vlaneseq
      %v913 = vshrl.u32 %v912, 7
      %v914 = vsub.s32 0, %v913
      %v915 = vrot.slane %v885, %v914
      %v916 = vlaneseq
      %v917 = vshrl.u32 %v916, 7
      %v918 = vsub.s32 0, %v917
      %v919 = vrot.slane %v887, %v918
      %v928 = vmul.f32 %v788, %v891
      %v929 = vmul.f32 %v795, %v895
      %v930 = vmul.f32 %v802, %v899
      %v931 = vmul.f32 %v809, %v903
      %v932 = vmul.f32 %v816, %v907
      %v933 = vmul.f32 %v823, %v911
      %v934 = vmul.f32 %v830, %v915
      %v935 = vmul.f32 %v837, %v919
      %v936 = vmul.f32 %v767, 0.0
      %v937 = vadd.f32 %v936, %v928
      %v938 = vmul.f32 %v769, %v937
      %v939 = vadd.f32 %v938, %v929
      %v940 = vmul.f32 %v771, %v939
      %v941 = vadd.f32 %v940, %v930
      %v942 = vmul.f32 %v773, %v941
      %v943 = vadd.f32 %v942, %v931
      %v944 = vmul.f32 %v775, %v943
      %v945 = vadd.f32 %v944, %v932
      %v946 = vmul.f32 %v777, %v945
      %v947 = vadd.f32 %v946, %v933
      %v948 = vmul.f32 %v779, %v947
      %v949 = vadd.f32 %v948, %v934
      %v950 = vmul.f32 %v781, %v949
      %v951 = vadd.f32 %v950, %v935
      %v953 = vcombine.high %v701, %v701
      %v955 = vunpack.c.l.s4 1966171168
      %v956 = vunpack.c.0.s8 %v955
      %v957 = vlaneseq
      %v958 = vshrl.u32 %v957, 7
      %v959 = vsub.s32 %v956, %v958
      %v960 = vrot.slane %v701, %v959
      %v962 = vunpack.c.l.s4 1966171168
      %v963 = vunpack.c.0.s8 %v962
      %v964 = vlaneseq
      %v965 = vshrl.u32 %v964, 7
      %v966 = vsub.s32 %v963, %v965
      %v967 = vrot.slane %v953, %v966
      %v968 = vcombine.high %v960, %v960
      %v969 = vcombine.high %v967, %v967
      %v971 = vunpack.c.l.s4 1966171168
      %v972 = vunpack.c.0.s8 %v971
      %v973 = vlaneseq
      %v974 = vshrl.u32 %v973, 7
      %v975 = vsub.s32 %v972, %v974
      %v976 = vrot.slane %v960, %v975
      %v978 = vunpack.c.l.s4 1966171168
      %v979 = vunpack.c.0.s8 %v978
      %v980 = vlaneseq
      %v981 = vshrl.u32 %v980, 7
      %v982 = vsub.s32 %v979, %v981
      %v983 = vrot.slane %v967, %v982
      %v985 = vunpack.c.l.s4 1966171168
      %v986 = vunpack.c.0.s8 %v985
      %v987 = vlaneseq
      %v988 = vshrl.u32 %v987, 7
      %v989 = vsub.s32 %v986, %v988
      %v990 = vrot.slane %v968, %v989
      %v992 = vunpack.c.l.s4 1966171168
      %v993 = vunpack.c.0.s8 %v992
      %v994 = vlaneseq
      %v995 = vshrl.u32 %v994, 7
      %v996 = vsub.s32 %v993, %v995
      %v997 = vrot.slane %v969, %v996
      %v998 = vcombine.high %v976, %v976
      %v999 = vcombine.high %v983, %v983
      %v1000 = vcombine.high %v990, %v990
      %v1001 = vcombine.high %v997, %v997
      %v1002 = vlaneseq
      %v1003 = vshrl.u32 %v1002, 7
      %v1004 = vsub.s32 0, %v1003
      %v1005 = vrot.slane %v976, %v1004
      %v1006 = vlaneseq
      %v1007 = vshrl.u32 %v1006, 7
      %v1008 = vsub.s32 0, %v1007
      %v1009 = vrot.slane %v990, %v1008
      %v1010 = vlaneseq
      %v1011 = vshrl.u32 %v1010, 7
      %v1012 = vsub.s32 0, %v1011
      %v1013 = vrot.slane %v998, %v1012
      %v1014 = vlaneseq
      %v1015 = vshrl.u32 %v1014, 7
      %v1016 = vsub.s32 0, %v1015
      %v1017 = vrot.slane %v1000, %v1016
      %v1018 = vlaneseq
      %v1019 = vshrl.u32 %v1018, 7
      %v1020 = vsub.s32 0, %v1019
      %v1021 = vrot.slane %v983, %v1020
      %v1022 = vlaneseq
      %v1023 = vshrl.u32 %v1022, 7
      %v1024 = vsub.s32 0, %v1023
      %v1025 = vrot.slane %v997, %v1024
      %v1026 = vlaneseq
      %v1027 = vshrl.u32 %v1026, 7
      %v1028 = vsub.s32 0, %v1027
      %v1029 = vrot.slane %v999, %v1028
      %v1030 = vlaneseq
      %v1031 = vshrl.u32 %v1030, 7
      %v1032 = vsub.s32 0, %v1031
      %v1033 = vrot.slane %v1001, %v1032
      %v1042 = vmul.f32 %v937, %v1005
      %v1043 = vmul.f32 %v939, %v1009
      %v1044 = vmul.f32 %v941, %v1013
      %v1045 = vmul.f32 %v943, %v1017
      %v1046 = vmul.f32 %v945, %v1021
      %v1047 = vmul.f32 %v947, %v1025
      %v1048 = vmul.f32 %v949, %v1029
      %v1049 = vmul.f32 %v951, %v1033
      %v1050 = vsel %vm692, %v1042, 0.0
      %1051 = vadd.xlane.f32.xlu0 %v1050
      %v1052 = vpop.xlane.xlu0 %1051
      %v1053 = vsel %vm692, %v1043, 0.0
      %1054 = vadd.xlane.f32.xlu0 %v1053
      %v1055 = vpop.xlane.xlu0 %1054
      %v1056 = vsel %vm692, %v1044, 0.0
      %1057 = vadd.xlane.f32.xlu0 %v1056
      %v1058 = vpop.xlane.xlu0 %1057
      %v1059 = vsel %vm692, %v1045, 0.0
      %1060 = vadd.xlane.f32.xlu0 %v1059
      %v1061 = vpop.xlane.xlu0 %1060
      %v1062 = vsel %vm692, %v1046, 0.0
      %1063 = vadd.xlane.f32.xlu0 %v1062
      %v1064 = vpop.xlane.xlu0 %1063
      %v1065 = vsel %vm692, %v1047, 0.0
      %1066 = vadd.xlane.f32.xlu0 %v1065
      %v1067 = vpop.xlane.xlu0 %1066
      %v1068 = vsel %vm692, %v1048, 0.0
      %1069 = vadd.xlane.f32.xlu0 %v1068
      %v1070 = vpop.xlane.xlu0 %1069
      %v1071 = vsel %vm692, %v1049, 0.0
      %1072 = vadd.xlane.f32.xlu0 %v1071
      %v1073 = vpop.xlane.xlu0 %1072
      %v1082 = vlaneseq
      %v1083 = vand.u32 %v1082, 127
      %v1084 = vlaneseq
      %v1085 = vshrl.u32 %v1084, 7
      %v1086 = vsub.s32 %v1083, %v1085
      %v1087 = vrot.slane %v1052, %v1086
      %v1088 = vlaneseq
      %v1089 = vshrl.u32 %v1088, 7
      %v1090 = vsub.s32 %v1083, %v1089
      %v1091 = vrot.slane %v1055, %v1090
      %v1092 = vlaneseq
      %v1093 = vshrl.u32 %v1092, 7
      %v1094 = vsub.s32 %v1083, %v1093
      %v1095 = vrot.slane %v1058, %v1094
      %v1096 = vlaneseq
      %v1097 = vshrl.u32 %v1096, 7
      %v1098 = vsub.s32 %v1083, %v1097
      %v1099 = vrot.slane %v1061, %v1098
      %v1100 = vlaneseq
      %v1101 = vshrl.u32 %v1100, 7
      %v1102 = vsub.s32 %v1083, %v1101
      %v1103 = vrot.slane %v1064, %v1102
      %v1104 = vlaneseq
      %v1105 = vshrl.u32 %v1104, 7
      %v1106 = vsub.s32 %v1083, %v1105
      %v1107 = vrot.slane %v1067, %v1106
      %v1108 = vlaneseq
      %v1109 = vshrl.u32 %v1108, 7
      %v1110 = vsub.s32 %v1083, %v1109
      %v1111 = vrot.slane %v1070, %v1110
      %v1112 = vlaneseq
      %v1113 = vshrl.u32 %v1112, 7
      %v1114 = vsub.s32 %v1083, %v1113
      %v1115 = vrot.slane %v1073, %v1114
      %vm1116 = vcmask 1041409
      %v1117 = vsel %vm1116, %v1091, %v1087
      %vm1118 = vcmask 1042434
      %v1119 = vsel %vm1118, %v1095, %v1117
      %vm1120 = vcmask 1043459
      %v1121 = vsel %vm1120, %v1099, %v1119
      %vm1122 = vcmask 1044484
      %v1123 = vsel %vm1122, %v1103, %v1121
      %vm1124 = vcmask 1045509
      %v1125 = vsel %vm1124, %v1107, %v1123
      %vm1126 = vcmask 1046534
      %v1127 = vsel %vm1126, %v1111, %v1125
      %vm1128 = vcmask 1047559
      %v1129 = vsel %vm1128, %v1115, %v1127
      %1131 = vst.msk [vmem:[#allocation7] sm:$0xff] %vm391, %v1129
      %v1132 = vld [vmem:[#allocation7] sm:$0xff]
      %v1134 = vlaneseq
      %v1135 = vshrl.u32 %v1134, 7
      %v1136 = vsub.s32 0, %v1135
      %v1137 = vrot.slane %v476, %v1136
      %v1139 = vmul.f32 %v596, %v1137
      %v1140 = vadd.f32 %v1132, %v1139
      %v1141 = vxor.u32 %v552, 2147483648
      %v1142 = vmul.f32 %v1141, 1.442695
      %v1143 = vpow.pop %v1142
      %v1144 = vadd.f32 %v1143, 1.0
      %v1145 = vrcp.pop %v1144
      %v1146 = vmul.f32 1.0, %v1145
      %v1147 = vmul.f32 %v552, %v1146
      %1149 = vrot.lane.b32.xlu0 %v1147, 120
      %v1150 = vpop.permute.xlu0 %1149
      %v1152 = vmul.f32 %v1140, %v1150
      %v1153 = vld [vmem:[%s10] sm:$0xff]
      %v1155 = vsel %vm391, %v1152, 0
      %1157 = vmatprep.subr.mxu0 0.0
      %1158 = vmatpush1.msra.mxu0 0.0
      %1159 = vmatprep.subr.mxu0 0.0
      %1160 = vmatpush1.msra.mxu0 0.0
      %1161 = vmatprep.subr.mxu0 0.0
      %1162 = vmatpush1.msra.mxu0 0.0
      %1163 = vmatprep.subr.mxu0 0.0
      %1164 = vmatpush1.msra.mxu0 0.0
      %1165 = vmatprep.subr.mxu0 0.0
      %1166 = vmatpush1.msra.mxu0 0.0
      %1167 = vmatprep.subr.mxu0 0.0
      %1168 = vmatpush1.msra.mxu0 0.0
      %1169 = vmatprep.subr.mxu0 0.0
      %1170 = vmatpush1.msra.mxu0 0.0
      %1171 = vmatprep.subr.mxu0 0.0
      %1172 = vmatpush1.msra.mxu0 0.0
      %1173 = vmatprep.subr.mxu0 0.0
      %1174 = vmatpush1.msra.mxu0 0.0
      %1175 = vmatprep.subr.mxu0 0.0
      %1176 = vmatpush1.msra.mxu0 0.0
      %1177 = vmatprep.subr.mxu0 0.0
      %1178 = vmatpush1.msra.mxu0 0.0
      %1179 = vmatprep.subr.mxu0 0.0
      %1180 = vmatpush1.msra.mxu0 0.0
      %1181 = vmatprep.subr.mxu0 0.0
      %1182 = vmatpush1.msra.mxu0 0.0
      %1183 = vmatprep.subr.mxu0 0.0
      %1184 = vmatpush1.msra.mxu0 0.0
      %1185 = vmatprep.subr.mxu0 0.0
      %1186 = vmatpush1.msra.mxu0 0.0
      %1187 = vmatprep.subr.mxu0 0.0
      %1188 = vmatpush1.msra.mxu0 %v1153
      %1189 = vmatprep.subr.mxu0 0.0
      %1190 = vmatpush2.msra.mxu0 0.0
      %1191 = vmatprep.subr.mxu0 0.0
      %1192 = vmatpush2.msra.mxu0 0.0
      %1193 = vmatprep.subr.mxu0 0.0
      %1194 = vmatpush2.msra.mxu0 0.0
      %1195 = vmatprep.subr.mxu0 0.0
      %1196 = vmatpush2.msra.mxu0 0.0
      %1197 = vmatprep.subr.mxu0 0.0
      %1198 = vmatpush2.msra.mxu0 0.0
      %1199 = vmatprep.subr.mxu0 0.0
      %1200 = vmatpush2.msra.mxu0 0.0
      %1201 = vmatprep.subr.mxu0 0.0
      %1202 = vmatpush2.msra.mxu0 0.0
      %1203 = vmatprep.subr.mxu0 0.0
      %1204 = vmatpush2.msra.mxu0 0.0
      %1205 = vmatprep.subr.mxu0 0.0
      %1206 = vmatpush2.msra.mxu0 0.0
      %1207 = vmatprep.subr.mxu0 0.0
      %1208 = vmatpush2.msra.mxu0 0.0
      %1209 = vmatprep.subr.mxu0 0.0
      %1210 = vmatpush2.msra.mxu0 0.0
      %1211 = vmatprep.subr.mxu0 0.0
      %1212 = vmatpush2.msra.mxu0 0.0
      %1213 = vmatprep.subr.mxu0 0.0
      %1214 = vmatpush2.msra.mxu0 0.0
      %1215 = vmatprep.subr.mxu0 0.0
      %1216 = vmatpush2.msra.mxu0 0.0
      %1217 = vmatprep.subr.mxu0 0.0
      %1218 = vmatpush2.msra.mxu0 0.0
      %1219 = vmatprep.subr.mxu0 0.0
      %1220 = vmatpush2.msra.mxu0 0.0
      %1221 = vmatprep.mubr.f32.mxu0 0.0
      %1222 = vmatmul.mubr.f32.gmra.mxu0 %v1155
      %v1223 = vpop.f32.mrf.mxu0
      %v1224 = vadd.f32 0.0, %v1223
      %v1225 = vpop.f32.mrf.mxu0
      %1226 = vdwg.mxu0
      %v1227 = vmul.f32 %v1224, 0.5
      %v1228 = vmul.f32 %v1224, 0.70710677
      %v1229 = verf.f32.pop %v1228
      %v1230 = vadd.f32 %v1229, 1.0
      %v1231 = vmul.f32 %v1227, %v1230
      %v1232 = vadd.f32 %v469, %v1231
      %1233 = vst.msk [vmem:[%s381] sm:$0xff] %vm477, %v1232
      %p1234 = scmp.lt.s32.totalorder %s22, 1
      %s1235 = scalar_select %p1234, %s22, 1
      %s1236 = smul.addr %s1235, 8
      %s1237 = scalar_lea.vmem %s11, %s1236
      // Predicated region
      $region65: #{sesame_forward.6} parent=63 // pred_check
        %p1238 = pneg %p276
      $region66: #{sesame_forward.6} parent=63 // pred_check_branch
        %1240 = sbr.rel (%p1238) target = $region68
      $region67: #{sesame_forward.6} parent=63 // pred_region
        _
      $region68: #{sesame_forward.6} parent=63 // pred_fallthru
        _
    $region64: #{sesame_forward.6} parent=5 // pred_fallthru
      _
    %p1241 = scmp.le.s32.totalorder 2, %s17
    // Predicated region
    $region69: #{sesame_forward.6} parent=5 // pred_check
      %p1242 = pneg %p1241
    $region70: #{sesame_forward.6} parent=5 // pred_check_branch
      %1244 = sbr.rel (%p1242) target = $region72
    $region71: #{sesame_forward.6} parent=5 // pred_region
      %s1245 = ssub.s32 %s17, 2
      // Predicated region
      $region73: #{sesame_forward.6} parent=71 // pred_check
        %p1246 = pneg %p282
      $region74: #{sesame_forward.6} parent=71 // pred_check_branch
        %1248 = sbr.rel (%p1246) target = $region76
      $region75: #{sesame_forward.6} parent=71 // pred_region
        %p1249 = scmp.lt.s32.totalorder %s23, 1
        %s1250 = scalar_select %p1249, %s23, 1
        %s1251 = smul.addr %s1250, 8
        %s1252 = scalar_lea.vmem %s11, %s1251
      $region76: #{sesame_forward.6} parent=71 // pred_fallthru
        _
    $region72: #{sesame_forward.6} parent=5 // pred_fallthru
      _
  $region6: #{sesame_forward.6} parent=0 // loop_footer
    %s21 = sadd.s32 1, %s17
  $region7: #{sesame_forward.6} parent=0 // loop_footer_branch
    %16 = sbr.rel target = $region3
  $region8: #{sesame_forward.6} parent=0 // loop_exit
    _

// kernel: sesame_forward.8
$region0: #{sesame_forward.8}
  #allocation0 [shape = 'u32[]', space=smem, size = 0x4, offset = 0x4, fixed_abs, tag = 'smem constant byte address 0x4 - core index']
  #allocation1 [shape = 'u32[144,128]{1,0:T(1,128)}', space=vmem, size = 0x12000, scoped, tag = 'internal scratch']
  #allocation2 [shape = 'f32[40,4]{1,0:T(8,128)}', space=vmem, size = 0x5000, scoped, tag = 'scratch operand']
  #allocation3 [shape = 'f32[32,4]{1,0:T(8,128)}', space=vmem, size = 0x4000, scoped, tag = 'scratch operand']
  #allocation4 [shape = 'f32[32,4]{1,0:T(8,128)}', space=vmem, size = 0x4000, scoped, tag = 'scratch operand']
  #allocation5 [shape = 'f32[32,16]{1,0:T(8,128)}', space=vmem, size = 0x4000, scoped, tag = 'scratch operand']
  #allocation6 [shape = 'f32[32,16]{1,0:T(8,128)}', space=vmem, size = 0x4000, scoped, tag = 'scratch operand']
  #allocation7 [shape = 'f32[32,4]{1,0:T(8,128)}', space=vmem, size = 0x4000, scoped, tag = 'scratch operand']
  %s0 = inlined_call_operand.vmem [shape: f32[2,32,2], index: 0, kind: input, shape index: {}]
  %s1 = inlined_call_operand.vmem [shape: f32[2,32,4], index: 1, kind: input, shape index: {}]
  %s2 = inlined_call_operand.vmem [shape: f32[2,8], index: 2, kind: input, shape index: {}]
  %s3 = inlined_call_operand.vmem [shape: f32[4,4], index: 3, kind: input, shape index: {}]
  %s4 = inlined_call_operand.vmem [shape: f32[1,4], index: 4, kind: input, shape index: {}]
  %s5 = inlined_call_operand.vmem [shape: f32[4,36], index: 5, kind: input, shape index: {}]
  %s6 = inlined_call_operand.vmem [shape: f32[1,4], index: 6, kind: input, shape index: {}]
  %s7 = inlined_call_operand.vmem [shape: f32[4,16], index: 7, kind: input, shape index: {}]
  %s8 = inlined_call_operand.vmem [shape: f32[1,4], index: 8, kind: input, shape index: {}]
  %s9 = inlined_call_operand.vmem [shape: f32[4,2], index: 9, kind: input, shape index: {}]
  %s10 = inlined_call_operand.vmem [shape: f32[2,4], index: 10, kind: input, shape index: {}]
  %s11 = inlined_call_operand.vmem [shape: f32[1,4], index: 11, kind: input, shape index: {}]
  %s12 = inlined_call_operand.vmem [shape: f32[2,32,4], index: 12, kind: output, shape index: {}]
  %s13 = sld [smem:[#allocation0]]
  $region88: #{sesame_forward.8} parent=0
    _
  %s15 = ssub.s32 1, %s13
  %s16 = scalar_select 0, %s15, %s13
  loop: start=0, step=1, limit=4
  $region2: #{sesame_forward.8} parent=0 // loop_pre_header
    _
  $region3: #{sesame_forward.8} parent=0 // loop_header
    %s18 = sphi 0, %s22
    %p19 = scmp.ge.s32.totalorder %s18, 4
    %s28 = sphi 0, %s30
    %s31 = sphi 0, %s28
    %s32 = sphi 0, %s31
    %s48 = sphi 0, %s32
    %s54 = sphi 0, %s56
    %s57 = sphi 0, %s54
    %s58 = sphi 0, %s57
    %s74 = sphi 0, %s58
    %s78 = sphi 0, %s78
    %s80 = sphi 0, %s78
    %s81 = sphi 0, %s80
    %s95 = sphi 0, %s81
    %s99 = sphi 0, %s99
    %s101 = sphi 0, %s99
    %s102 = sphi 0, %s101
    %s116 = sphi 0, %s102
    %s120 = sphi 0, %s120
    %s122 = sphi 0, %s120
    %s123 = sphi 0, %s122
    %s137 = sphi 0, %s123
    %s141 = sphi 0, %s141
    %s143 = sphi 0, %s141
    %s144 = sphi 0, %s143
    %s158 = sphi 0, %s144
    %s162 = sphi 0, %s162
    %s164 = sphi 0, %s162
    %s165 = sphi 0, %s164
    %s179 = sphi 0, %s165
    %s183 = sphi 0, %s183
    %s185 = sphi 0, %s183
    %s186 = sphi 0, %s185
    %s200 = sphi 0, %s186
    %s204 = sphi 0, %s204
    %s206 = sphi 0, %s204
    %s207 = sphi 0, %s206
    %s221 = sphi 0, %s207
    %s225 = sphi 0, %s225
    %s227 = sphi 0, %s225
    %s228 = sphi 0, %s227
    %s242 = sphi 0, %s228
    %s246 = sphi 0, %s246
    %s248 = sphi 0, %s246
    %s249 = sphi 0, %s248
    %s263 = sphi 0, %s249
    %s267 = sphi 0, %s267
    %s269 = sphi 0, %s267
    %s270 = sphi 0, %s269
    %s284 = sphi 0, %s270
    %s290 = sphi 0, %s292
    %s293 = sphi 0, %s290
    %s294 = sphi 0, %s293
    %s310 = sphi 0, %s294
  $region4: #{sesame_forward.8} parent=0 // loop_header_branch
    %21 = sbr.rel (%p19) target = $region8
  $region5: #{sesame_forward.8} parent=0 // loop_body
    %s23 = ssub.s32 %s18, 1
    %s24 = ssub.s32 %s18, 2
    %s25 = sadd.s32 %s18, 1
    %s26 = ssub.s32 %s18, %s25
    %p27 = scmp.eq.s32.totalorder %s26, 0
    %s29 = sadd.s32 %s28, 1
    %s30 = scalar_select %p27, %s28, %s29
    %p33 = pneg %p27
    %p34 = scmp.eq.s32.totalorder %s18, 1
    %p35 = por %p33, %p34
    %p36 = scmp.ne.s32.totalorder %s28, %s31
    %p37 = scmp.eq.s32.totalorder %s18, 0
    %p38 = por %p36, %p37
    %p39 = scmp.ne.s32.totalorder %s28, %s31
    %p40 = scmp.eq.s32.totalorder %s23, 1
    %p41 = por %p39, %p40
    %p42 = scmp.ne.s32.totalorder %s31, %s32
    %p43 = scmp.eq.s32.totalorder %s23, 0
    %p44 = por %p42, %p43
    %p45 = scmp.ne.s32.totalorder %s31, %s32
    %p46 = scmp.eq.s32.totalorder %s24, 1
    %p47 = por %p45, %p46
    %p49 = scmp.ne.s32.totalorder %s32, %s48
    %p50 = scmp.eq.s32.totalorder %s24, 0
    %p51 = por %p49, %p50
    %s52 = ssub.s32 %s18, %s25
    %p53 = scmp.eq.s32.totalorder %s52, 0
    %s55 = sadd.s32 %s54, 1
    %s56 = scalar_select %p53, %s54, %s55
    %p59 = pneg %p53
    %p60 = scmp.eq.s32.totalorder %s18, 1
    %p61 = por %p59, %p60
    %p62 = scmp.ne.s32.totalorder %s54, %s57
    %p63 = scmp.eq.s32.totalorder %s18, 0
    %p64 = por %p62, %p63
    %p65 = scmp.ne.s32.totalorder %s54, %s57
    %p66 = scmp.eq.s32.totalorder %s23, 1
    %p67 = por %p65, %p66
    %p68 = scmp.ne.s32.totalorder %s57, %s58
    %p69 = scmp.eq.s32.totalorder %s23, 0
    %p70 = por %p68, %p69
    %p71 = scmp.ne.s32.totalorder %s57, %s58
    %p72 = scmp.eq.s32.totalorder %s24, 1
    %p73 = por %p71, %p72
    %p75 = scmp.ne.s32.totalorder %s58, %s74
    %p76 = scmp.eq.s32.totalorder %s24, 0
    %p77 = por %p75, %p76
    %s79 = sadd.s32 %s78, 1
    %p82 = scmp.eq.s32.totalorder %s18, 1
    %p83 = scmp.ne.s32.totalorder %s78, %s80
    %p84 = scmp.eq.s32.totalorder %s18, 0
    %p85 = por %p83, %p84
    %p86 = scmp.ne.s32.totalorder %s78, %s80
    %p87 = scmp.eq.s32.totalorder %s23, 1
    %p88 = por %p86, %p87
    %p89 = scmp.ne.s32.totalorder %s80, %s81
    %p90 = scmp.eq.s32.totalorder %s23, 0
    %p91 = por %p89, %p90
    %p92 = scmp.ne.s32.totalorder %s80, %s81
    %p93 = scmp.eq.s32.totalorder %s24, 1
    %p94 = por %p92, %p93
    %p96 = scmp.ne.s32.totalorder %s81, %s95
    %p97 = scmp.eq.s32.totalorder %s24, 0
    %p98 = por %p96, %p97
    %s100 = sadd.s32 %s99, 1
    %p103 = scmp.eq.s32.totalorder %s18, 1
    %p104 = scmp.ne.s32.totalorder %s99, %s101
    %p105 = scmp.eq.s32.totalorder %s18, 0
    %p106 = por %p104, %p105
    %p107 = scmp.ne.s32.totalorder %s99, %s101
    %p108 = scmp.eq.s32.totalorder %s23, 1
    %p109 = por %p107, %p108
    %p110 = scmp.ne.s32.totalorder %s101, %s102
    %p111 = scmp.eq.s32.totalorder %s23, 0
    %p112 = por %p110, %p111
    %p113 = scmp.ne.s32.totalorder %s101, %s102
    %p114 = scmp.eq.s32.totalorder %s24, 1
    %p115 = por %p113, %p114
    %p117 = scmp.ne.s32.totalorder %s102, %s116
    %p118 = scmp.eq.s32.totalorder %s24, 0
    %p119 = por %p117, %p118
    %s121 = sadd.s32 %s120, 1
    %p124 = scmp.eq.s32.totalorder %s18, 1
    %p125 = scmp.ne.s32.totalorder %s120, %s122
    %p126 = scmp.eq.s32.totalorder %s18, 0
    %p127 = por %p125, %p126
    %p128 = scmp.ne.s32.totalorder %s120, %s122
    %p129 = scmp.eq.s32.totalorder %s23, 1
    %p130 = por %p128, %p129
    %p131 = scmp.ne.s32.totalorder %s122, %s123
    %p132 = scmp.eq.s32.totalorder %s23, 0
    %p133 = por %p131, %p132
    %p134 = scmp.ne.s32.totalorder %s122, %s123
    %p135 = scmp.eq.s32.totalorder %s24, 1
    %p136 = por %p134, %p135
    %p138 = scmp.ne.s32.totalorder %s123, %s137
    %p139 = scmp.eq.s32.totalorder %s24, 0
    %p140 = por %p138, %p139
    %s142 = sadd.s32 %s141, 1
    %p145 = scmp.eq.s32.totalorder %s18, 1
    %p146 = scmp.ne.s32.totalorder %s141, %s143
    %p147 = scmp.eq.s32.totalorder %s18, 0
    %p148 = por %p146, %p147
    %p149 = scmp.ne.s32.totalorder %s141, %s143
    %p150 = scmp.eq.s32.totalorder %s23, 1
    %p151 = por %p149, %p150
    %p152 = scmp.ne.s32.totalorder %s143, %s144
    %p153 = scmp.eq.s32.totalorder %s23, 0
    %p154 = por %p152, %p153
    %p155 = scmp.ne.s32.totalorder %s143, %s144
    %p156 = scmp.eq.s32.totalorder %s24, 1
    %p157 = por %p155, %p156
    %p159 = scmp.ne.s32.totalorder %s144, %s158
    %p160 = scmp.eq.s32.totalorder %s24, 0
    %p161 = por %p159, %p160
    %s163 = sadd.s32 %s162, 1
    %p166 = scmp.eq.s32.totalorder %s18, 1
    %p167 = scmp.ne.s32.totalorder %s162, %s164
    %p168 = scmp.eq.s32.totalorder %s18, 0
    %p169 = por %p167, %p168
    %p170 = scmp.ne.s32.totalorder %s162, %s164
    %p171 = scmp.eq.s32.totalorder %s23, 1
    %p172 = por %p170, %p171
    %p173 = scmp.ne.s32.totalorder %s164, %s165
    %p174 = scmp.eq.s32.totalorder %s23, 0
    %p175 = por %p173, %p174
    %p176 = scmp.ne.s32.totalorder %s164, %s165
    %p177 = scmp.eq.s32.totalorder %s24, 1
    %p178 = por %p176, %p177
    %p180 = scmp.ne.s32.totalorder %s165, %s179
    %p181 = scmp.eq.s32.totalorder %s24, 0
    %p182 = por %p180, %p181
    %s184 = sadd.s32 %s183, 1
    %p187 = scmp.eq.s32.totalorder %s18, 1
    %p188 = scmp.ne.s32.totalorder %s183, %s185
    %p189 = scmp.eq.s32.totalorder %s18, 0
    %p190 = por %p188, %p189
    %p191 = scmp.ne.s32.totalorder %s183, %s185
    %p192 = scmp.eq.s32.totalorder %s23, 1
    %p193 = por %p191, %p192
    %p194 = scmp.ne.s32.totalorder %s185, %s186
    %p195 = scmp.eq.s32.totalorder %s23, 0
    %p196 = por %p194, %p195
    %p197 = scmp.ne.s32.totalorder %s185, %s186
    %p198 = scmp.eq.s32.totalorder %s24, 1
    %p199 = por %p197, %p198
    %p201 = scmp.ne.s32.totalorder %s186, %s200
    %p202 = scmp.eq.s32.totalorder %s24, 0
    %p203 = por %p201, %p202
    %s205 = sadd.s32 %s204, 1
    %p208 = scmp.eq.s32.totalorder %s18, 1
    %p209 = scmp.ne.s32.totalorder %s204, %s206
    %p210 = scmp.eq.s32.totalorder %s18, 0
    %p211 = por %p209, %p210
    %p212 = scmp.ne.s32.totalorder %s204, %s206
    %p213 = scmp.eq.s32.totalorder %s23, 1
    %p214 = por %p212, %p213
    %p215 = scmp.ne.s32.totalorder %s206, %s207
    %p216 = scmp.eq.s32.totalorder %s23, 0
    %p217 = por %p215, %p216
    %p218 = scmp.ne.s32.totalorder %s206, %s207
    %p219 = scmp.eq.s32.totalorder %s24, 1
    %p220 = por %p218, %p219
    %p222 = scmp.ne.s32.totalorder %s207, %s221
    %p223 = scmp.eq.s32.totalorder %s24, 0
    %p224 = por %p222, %p223
    %s226 = sadd.s32 %s225, 1
    %p229 = scmp.eq.s32.totalorder %s18, 1
    %p230 = scmp.ne.s32.totalorder %s225, %s227
    %p231 = scmp.eq.s32.totalorder %s18, 0
    %p232 = por %p230, %p231
    %p233 = scmp.ne.s32.totalorder %s225, %s227
    %p234 = scmp.eq.s32.totalorder %s23, 1
    %p235 = por %p233, %p234
    %p236 = scmp.ne.s32.totalorder %s227, %s228
    %p237 = scmp.eq.s32.totalorder %s23, 0
    %p238 = por %p236, %p237
    %p239 = scmp.ne.s32.totalorder %s227, %s228
    %p240 = scmp.eq.s32.totalorder %s24, 1
    %p241 = por %p239, %p240
    %p243 = scmp.ne.s32.totalorder %s228, %s242
    %p244 = scmp.eq.s32.totalorder %s24, 0
    %p245 = por %p243, %p244
    %s247 = sadd.s32 %s246, 1
    %p250 = scmp.eq.s32.totalorder %s18, 1
    %p251 = scmp.ne.s32.totalorder %s246, %s248
    %p252 = scmp.eq.s32.totalorder %s18, 0
    %p253 = por %p251, %p252
    %p254 = scmp.ne.s32.totalorder %s246, %s248
    %p255 = scmp.eq.s32.totalorder %s23, 1
    %p256 = por %p254, %p255
    %p257 = scmp.ne.s32.totalorder %s248, %s249
    %p258 = scmp.eq.s32.totalorder %s23, 0
    %p259 = por %p257, %p258
    %p260 = scmp.ne.s32.totalorder %s248, %s249
    %p261 = scmp.eq.s32.totalorder %s24, 1
    %p262 = por %p260, %p261
    %p264 = scmp.ne.s32.totalorder %s249, %s263
    %p265 = scmp.eq.s32.totalorder %s24, 0
    %p266 = por %p264, %p265
    %s268 = sadd.s32 %s267, 1
    %p271 = scmp.eq.s32.totalorder %s18, 1
    %p272 = scmp.ne.s32.totalorder %s267, %s269
    %p273 = scmp.eq.s32.totalorder %s18, 0
    %p274 = por %p272, %p273
    %p275 = scmp.ne.s32.totalorder %s267, %s269
    %p276 = scmp.eq.s32.totalorder %s23, 1
    %p277 = por %p275, %p276
    %p278 = scmp.ne.s32.totalorder %s269, %s270
    %p279 = scmp.eq.s32.totalorder %s23, 0
    %p280 = por %p278, %p279
    %p281 = scmp.ne.s32.totalorder %s269, %s270
    %p282 = scmp.eq.s32.totalorder %s24, 1
    %p283 = por %p281, %p282
    %p285 = scmp.ne.s32.totalorder %s270, %s284
    %p286 = scmp.eq.s32.totalorder %s24, 0
    %p287 = por %p285, %p286
    %s288 = ssub.s32 %s18, %s25
    %p289 = scmp.eq.s32.totalorder %s288, 0
    %s291 = sadd.s32 %s290, 1
    %s292 = scalar_select %p289, %s290, %s291
    %p295 = pneg %p289
    %p296 = scmp.eq.s32.totalorder %s18, 1
    %p297 = por %p295, %p296
    %p298 = scmp.ne.s32.totalorder %s290, %s293
    %p299 = scmp.eq.s32.totalorder %s18, 0
    %p300 = por %p298, %p299
    %p301 = scmp.ne.s32.totalorder %s290, %s293
    %p302 = scmp.eq.s32.totalorder %s23, 1
    %p303 = por %p301, %p302
    %p304 = scmp.ne.s32.totalorder %s293, %s294
    %p305 = scmp.eq.s32.totalorder %s23, 0
    %p306 = por %p304, %p305
    %p307 = scmp.ne.s32.totalorder %s293, %s294
    %p308 = scmp.eq.s32.totalorder %s24, 1
    %p309 = por %p307, %p308
    %p311 = scmp.ne.s32.totalorder %s294, %s310
    %p312 = scmp.eq.s32.totalorder %s24, 0
    %p313 = por %p311, %p312
    %p314 = scmp.le.s32.totalorder 1, %s18
    %p315 = scmp.lt.s32.totalorder %s18, 3
    %p316 = pnand %p314, %p315
    %p317 = pneg %p316
    // Predicated region
    $region9: #{sesame_forward.8} parent=5 // pred_check
      _
    $region10: #{sesame_forward.8} parent=5 // pred_check_branch
      %319 = sbr.rel (%p316) target = $region12
    $region11: #{sesame_forward.8} parent=5 // pred_region
      %s320 = ssub.s32 %s18, 1
      // Predicated region
      $region13: #{sesame_forward.8} parent=11 // pred_check
        %p321 = pneg %p91
      $region14: #{sesame_forward.8} parent=11 // pred_check_branch
        %323 = sbr.rel (%p321) target = $region16
      $region15: #{sesame_forward.8} parent=11 // pred_region
        _
      $region16: #{sesame_forward.8} parent=11 // pred_fallthru
        _
      // Predicated region
      $region17: #{sesame_forward.8} parent=11 // pred_check
        %p324 = pneg %p112
      $region18: #{sesame_forward.8} parent=11 // pred_check_branch
        %326 = sbr.rel (%p324) target = $region20
      $region19: #{sesame_forward.8} parent=11 // pred_region
        _
      $region20: #{sesame_forward.8} parent=11 // pred_fallthru
        _
      // Predicated region
      $region21: #{sesame_forward.8} parent=11 // pred_check
        %p327 = pneg %p133
      $region22: #{sesame_forward.8} parent=11 // pred_check_branch
        %329 = sbr.rel (%p327) target = $region24
      $region23: #{sesame_forward.8} parent=11 // pred_region
        _
      $region24: #{sesame_forward.8} parent=11 // pred_fallthru
        _
      // Predicated region
      $region25: #{sesame_forward.8} parent=11 // pred_check
        %p330 = pneg %p154
      $region26: #{sesame_forward.8} parent=11 // pred_check_branch
        %332 = sbr.rel (%p330) target = $region28
      $region27: #{sesame_forward.8} parent=11 // pred_region
        _
      $region28: #{sesame_forward.8} parent=11 // pred_fallthru
        _
      // Predicated region
      $region29: #{sesame_forward.8} parent=11 // pred_check
        %p333 = pneg %p175
      $region30: #{sesame_forward.8} parent=11 // pred_check_branch
        %335 = sbr.rel (%p333) target = $region32
      $region31: #{sesame_forward.8} parent=11 // pred_region
        _
      $region32: #{sesame_forward.8} parent=11 // pred_fallthru
        _
      // Predicated region
      $region33: #{sesame_forward.8} parent=11 // pred_check
        %p336 = pneg %p196
      $region34: #{sesame_forward.8} parent=11 // pred_check_branch
        %338 = sbr.rel (%p336) target = $region36
      $region35: #{sesame_forward.8} parent=11 // pred_region
        _
      $region36: #{sesame_forward.8} parent=11 // pred_fallthru
        _
      // Predicated region
      $region37: #{sesame_forward.8} parent=11 // pred_check
        %p339 = pneg %p217
      $region38: #{sesame_forward.8} parent=11 // pred_check_branch
        %341 = sbr.rel (%p339) target = $region40
      $region39: #{sesame_forward.8} parent=11 // pred_region
        _
      $region40: #{sesame_forward.8} parent=11 // pred_fallthru
        _
      // Predicated region
      $region41: #{sesame_forward.8} parent=11 // pred_check
        %p342 = pneg %p238
      $region42: #{sesame_forward.8} parent=11 // pred_check_branch
        %344 = sbr.rel (%p342) target = $region44
      $region43: #{sesame_forward.8} parent=11 // pred_region
        _
      $region44: #{sesame_forward.8} parent=11 // pred_fallthru
        _
      // Predicated region
      $region45: #{sesame_forward.8} parent=11 // pred_check
        %p345 = pneg %p259
      $region46: #{sesame_forward.8} parent=11 // pred_check_branch
        %347 = sbr.rel (%p345) target = $region48
      $region47: #{sesame_forward.8} parent=11 // pred_region
        _
      $region48: #{sesame_forward.8} parent=11 // pred_fallthru
        _
      // Predicated region
      $region49: #{sesame_forward.8} parent=11 // pred_check
        %p348 = pneg %p280
      $region50: #{sesame_forward.8} parent=11 // pred_check_branch
        %350 = sbr.rel (%p348) target = $region52
      $region51: #{sesame_forward.8} parent=11 // pred_region
        _
      $region52: #{sesame_forward.8} parent=11 // pred_fallthru
        _
    $region12: #{sesame_forward.8} parent=5 // pred_fallthru
      _
    %p351 = scmp.lt.s32.totalorder %s18, 2
    // Predicated region
    $region53: #{sesame_forward.8} parent=5 // pred_check
      %p352 = pneg %p351
    $region54: #{sesame_forward.8} parent=5 // pred_check_branch
      %354 = sbr.rel (%p352) target = $region56
    $region55: #{sesame_forward.8} parent=5 // pred_region
      // Predicated region
      $region57: #{sesame_forward.8} parent=55 // pred_check
        %p355 = pneg %p38
      $region58: #{sesame_forward.8} parent=55 // pred_check_branch
        %357 = sbr.rel (%p355) target = $region60
      $region59: #{sesame_forward.8} parent=55 // pred_region
        %p358 = scmp.lt.s32.totalorder %s18, 1
        %s359 = scalar_select %p358, %s18, 1
        %s360 = smul.addr %s359, 4
        %s361 = smul.addr %s360, 8
        %s362 = scalar_lea.vmem %s0, %s361
      $region60: #{sesame_forward.8} parent=55 // pred_fallthru
        _
      // Predicated region
      $region61: #{sesame_forward.8} parent=55 // pred_check
        %p363 = pneg %p64
      $region62: #{sesame_forward.8} parent=55 // pred_check_branch
        %365 = sbr.rel (%p363) target = $region64
      $region63: #{sesame_forward.8} parent=55 // pred_region
        %p366 = scmp.lt.s32.totalorder %s18, 1
        %s367 = scalar_select %p366, %s18, 1
        %s368 = smul.addr %s367, 4
        %s369 = smul.addr %s368, 8
        %s370 = scalar_lea.vmem %s1, %s369
      $region64: #{sesame_forward.8} parent=55 // pred_fallthru
        _
    $region56: #{sesame_forward.8} parent=5 // pred_fallthru
      _
    %p371 = scmp.le.s32.totalorder 1, %s18
    %p372 = scmp.lt.s32.totalorder %s18, 3
    %p373 = pnand %p371, %p372
    %p374 = pneg %p373
    // Predicated region
    $region65: #{sesame_forward.8} parent=5 // pred_check
      _
    $region66: #{sesame_forward.8} parent=5 // pred_check_branch
      %376 = sbr.rel (%p373) target = $region68
    $region67: #{sesame_forward.8} parent=5 // pred_region
      %s377 = ssub.s32 %s18, 1
      %p378 = scmp.lt.s32.totalorder %s23, 1
      %s379 = scalar_select %p378, %s23, 1
      %s380 = smul.addr %s379, 4
      %s381 = smul.addr %s380, 8
      %s382 = scalar_lea.vmem %s0, %s381
      %p383 = pneg %p44
      %p384 = pneg %p41
      %p385 = scmp.lt.s32.totalorder %s23, 1
      %s386 = scalar_select %p385, %s23, 1
      %s387 = smul.addr %s386, 4
      %s388 = smul.addr %s387, 8
      %s389 = scalar_lea.vmem %s1, %s388
      %p390 = pneg %p70
      %p391 = pneg %p67
      %p392 = pneg %p91
      %p393 = pneg %p88
      %p394 = pneg %p112
      %p395 = pneg %p109
      %p396 = pneg %p133
      %p397 = pneg %p130
      %p398 = pneg %p154
      %p399 = pneg %p151
      %p400 = pneg %p175
      %p401 = pneg %p172
      %p402 = pneg %p196
      %p403 = pneg %p193
      %p404 = pneg %p217
      %p405 = pneg %p214
      %p406 = pneg %p238
      %p407 = pneg %p235
      %p408 = pneg %p259
      %p409 = pneg %p256
      %p410 = pneg %p280
      %p411 = pneg %p277
      %p412 = pneg %p306
      %p413 = pneg %p303
      %p414 = scmp.lt.s32.totalorder %s23, 1
      %s415 = scalar_select %p414, %s23, 1
      %s416 = smul.addr %s415, 4
      %s417 = smul.addr %s416, 8
      %s418 = scalar_lea.vmem %s12, %s417
      %p419 = scmp.lt.s32.totalorder %s23, 1
      %s420 = scalar_select %p419, %s23, 1
      %s421 = smul.addr %s420, 4
      %s422 = smul.addr %s421, 8
      %s423 = scalar_lea.vmem %s0, %s422
      %p424 = scmp.lt.s32.totalorder %s23, 1
      %s425 = scalar_select %p424, %s23, 1
      %s426 = smul.addr %s425, 4
      %s427 = smul.addr %s426, 8
      %s428 = scalar_lea.vmem %s1, %s427
      %p429 = scmp.lt.s32.totalorder %s23, 1
      %s430 = scalar_select %p429, %s23, 1
      %s431 = smul.addr %s430, 4
      %s432 = smul.addr %s431, 8
      %s433 = scalar_lea.vmem %s12, %s432
      %v434 = vld [vmem:[%s423] sm:$0xff]
      %v435 = vld [vmem:[%s423 + $0x8] sm:$0xff]
      %v436 = vld [vmem:[%s423 + $0x10] sm:$0xff]
      %v437 = vld [vmem:[%s423 + $0x18] sm:$0xff]
      %v438 = vld [vmem:[%s2] sm:$0x3]
      %v439 = vld [vmem:[%s3] sm:$0xf]
      %v440 = vld [vmem:[%s4] sm:$0x1]
      %v441 = vld [vmem:[%s5] sm:$0xf]
      %v442 = vld [vmem:[%s6] sm:$0x1]
      %v443 = vld [vmem:[%s7] sm:$0xf]
      %v444 = vld [vmem:[%s8] sm:$0x1]
      %vm445 = vcmask 15360
      %v447 = vsel %vm445, %v434, 0
      %v450 = vsel %vm445, %v435, 0
      %v453 = vsel %vm445, %v436, 0
      %v456 = vsel %vm445, %v437, 0
      %vm458 = vcmask 1041408
      %v460 = vsel %vm458, %v438, 0
      %462 = vmatprep.subr.mxu0 0.0
      %463 = vmatpush1.msra.mxu0 0.0
      %464 = vmatprep.subr.mxu0 0.0
      %465 = vmatpush1.msra.mxu0 0.0
      %466 = vmatprep.subr.mxu0 0.0
      %467 = vmatpush1.msra.mxu0 0.0
      %468 = vmatprep.subr.mxu0 0.0
      %469 = vmatpush1.msra.mxu0 0.0
      %470 = vmatprep.subr.mxu0 0.0
      %471 = vmatpush1.msra.mxu0 0.0
      %472 = vmatprep.subr.mxu0 0.0
      %473 = vmatpush1.msra.mxu0 0.0
      %474 = vmatprep.subr.mxu0 0.0
      %475 = vmatpush1.msra.mxu0 0.0
      %476 = vmatprep.subr.mxu0 0.0
      %477 = vmatpush1.msra.mxu0 0.0
      %478 = vmatprep.subr.mxu0 0.0
      %479 = vmatpush1.msra.mxu0 0.0
      %480 = vmatprep.subr.mxu0 0.0
      %481 = vmatpush1.msra.mxu0 0.0
      %482 = vmatprep.subr.mxu0 0.0
      %483 = vmatpush1.msra.mxu0 0.0
      %484 = vmatprep.subr.mxu0 0.0
      %485 = vmatpush1.msra.mxu0 0.0
      %486 = vmatprep.subr.mxu0 0.0
      %487 = vmatpush1.msra.mxu0 0.0
      %488 = vmatprep.subr.mxu0 0.0
      %489 = vmatpush1.msra.mxu0 0.0
      %490 = vmatprep.subr.mxu0 0.0
      %491 = vmatpush1.msra.mxu0 0.0
      %492 = vmatprep.subr.mxu0 0.0
      %493 = vmatpush1.msra.mxu0 %v460
      %494 = vmatprep.subr.mxu0 0.0
      %495 = vmatpush2.msra.mxu0 0.0
      %496 = vmatprep.subr.mxu0 0.0
      %497 = vmatpush2.msra.mxu0 0.0
      %498 = vmatprep.subr.mxu0 0.0
      %499 = vmatpush2.msra.mxu0 0.0
      %500 = vmatprep.subr.mxu0 0.0
      %501 = vmatpush2.msra.mxu0 0.0
      %502 = vmatprep.subr.mxu0 0.0
      %503 = vmatpush2.msra.mxu0 0.0
      %504 = vmatprep.subr.mxu0 0.0
      %505 = vmatpush2.msra.mxu0 0.0
      %506 = vmatprep.subr.mxu0 0.0
      %507 = vmatpush2.msra.mxu0 0.0
      %508 = vmatprep.subr.mxu0 0.0
      %509 = vmatpush2.msra.mxu0 0.0
      %510 = vmatprep.subr.mxu0 0.0
      %511 = vmatpush2.msra.mxu0 0.0
      %512 = vmatprep.subr.mxu0 0.0
      %513 = vmatpush2.msra.mxu0 0.0
      %514 = vmatprep.subr.mxu0 0.0
      %515 = vmatpush2.msra.mxu0 0.0
      %516 = vmatprep.subr.mxu0 0.0
      %517 = vmatpush2.msra.mxu0 0.0
      %518 = vmatprep.subr.mxu0 0.0
      %519 = vmatpush2.msra.mxu0 0.0
      %520 = vmatprep.subr.mxu0 0.0
      %521 = vmatpush2.msra.mxu0 0.0
      %522 = vmatprep.subr.mxu0 0.0
      %523 = vmatpush2.msra.mxu0 0.0
      %524 = vmatprep.subr.mxu0 0.0
      %525 = vmatpush2.msra.mxu0 0.0
      %526 = vmatprep.mubr.f32.mxu0 0.0
      %527 = vmatmul.mubr.f32.gmra.mxu0 %v447
      %v528 = vpop.f32.mrf.mxu0
      %v529 = vadd.f32 0.0, %v528
      %v530 = vpop.f32.mrf.mxu0
      %531 = vmatprep.mubr.f32.mxu0 0.0
      %532 = vmatmul.mubr.f32.gmra.mxu0 %v450
      %v533 = vpop.f32.mrf.mxu0
      %v534 = vadd.f32 0.0, %v533
      %v535 = vpop.f32.mrf.mxu0
      %536 = vmatprep.mubr.f32.mxu0 0.0
      %537 = vmatmul.mubr.f32.gmra.mxu0 %v453
      %v538 = vpop.f32.mrf.mxu0
      %v539 = vadd.f32 0.0, %v538
      %v540 = vpop.f32.mrf.mxu0
      %541 = vmatprep.mubr.f32.mxu0 0.0
      %542 = vmatmul.mubr.f32.gmra.mxu0 %v456
      %v543 = vpop.f32.mrf.mxu0
      %v544 = vadd.f32 0.0, %v543
      %v545 = vpop.f32.mrf.mxu0
      %546 = vdwg.mxu0
      %vm547 = vcmask 31744
      %548 = vst.msk [vmem:[#allocation2] sm:$0xff] %vm547, 0.0
      %549 = vst.msk [vmem:[#allocation2 + $0x8] sm:$0xff] %vm547, %v529
      %550 = vst.msk [vmem:[#allocation2 + $0x10] sm:$0xff] %vm547, %v534
      %551 = vst.msk [vmem:[#allocation2 + $0x18] sm:$0xff] %vm547, %v539
      %552 = vst.msk [vmem:[#allocation2 + $0x20] sm:$0xff] %vm547, %v544
      %v553 = vlaneseq
      %v554 = vshrl.u32 %v553, 7
      %v555 = vsub.s32 3, %v554
      %v556 = vrot.slane %v439, %v555
      %v557 = vmul.f32 %v529, %v556
      %v558 = vmul.f32 %v534, %v556
      %v559 = vmul.f32 %v539, %v556
      %v560 = vmul.f32 %v544, %v556
      %v561 = vld [vmem:[#allocation2 + $0x7] sm:$0xff]
      %v562 = vld [vmem:[#allocation2 + $0xf] sm:$0xff]
      %v563 = vld [vmem:[#allocation2 + $0x17] sm:$0xff]
      %v564 = vld [vmem:[#allocation2 + $0x1f] sm:$0xff]
      %v565 = vlaneseq
      %v566 = vshrl.u32 %v565, 7
      %v567 = vsub.s32 2, %v566
      %v568 = vrot.slane %v439, %v567
      %v569 = vmul.f32 %v561, %v568
      %v570 = vmul.f32 %v562, %v568
      %v571 = vmul.f32 %v563, %v568
      %v572 = vmul.f32 %v564, %v568
      %v573 = vadd.f32 %v557, %v569
      %v574 = vadd.f32 %v558, %v570
      %v575 = vadd.f32 %v559, %v571
      %v576 = vadd.f32 %v560, %v572
      %v577 = vld [vmem:[#allocation2 + $0x6] sm:$0xff]
      %v578 = vld [vmem:[#allocation2 + $0xe] sm:$0xff]
      %v579 = vld [vmem:[#allocation2 + $0x16] sm:$0xff]
      %v580 = vld [vmem:[#allocation2 + $0x1e] sm:$0xff]
      %v581 = vlaneseq
      %v582 = vshrl.u32 %v581, 7
      %v583 = vsub.s32 1, %v582
      %v584 = vrot.slane %v439, %v583
      %v585 = vmul.f32 %v577, %v584
      %v586 = vmul.f32 %v578, %v584
      %v587 = vmul.f32 %v579, %v584
      %v588 = vmul.f32 %v580, %v584
      %v589 = vadd.f32 %v573, %v585
      %v590 = vadd.f32 %v574, %v586
      %v591 = vadd.f32 %v575, %v587
      %v592 = vadd.f32 %v576, %v588
      %v593 = vld [vmem:[#allocation2 + $0x5] sm:$0xff]
      %v594 = vld [vmem:[#allocation2 + $0xd] sm:$0xff]
      %v595 = vld [vmem:[#allocation2 + $0x15] sm:$0xff]
      %v596 = vld [vmem:[#allocation2 + $0x1d] sm:$0xff]
      %v597 = vlaneseq
      %v598 = vshrl.u32 %v597, 7
      %v599 = vsub.s32 0, %v598
      %v600 = vrot.slane %v439, %v599
      %v601 = vmul.f32 %v593, %v600
      %v602 = vmul.f32 %v594, %v600
      %v603 = vmul.f32 %v595, %v600
      %v604 = vmul.f32 %v596, %v600
      %v605 = vadd.f32 %v589, %v601
      %v606 = vadd.f32 %v590, %v602
      %v607 = vadd.f32 %v591, %v603
      %v608 = vadd.f32 %v592, %v604
      %v610 = vlaneseq
      %v611 = vshrl.u32 %v610, 7
      %v612 = vsub.s32 0, %v611
      %v613 = vrot.slane %v440, %v612
      %v615 = vadd.f32 %v605, %v613
      %v616 = vadd.f32 %v606, %v613
      %v617 = vadd.f32 %v607, %v613
      %v618 = vadd.f32 %v608, %v613
      %v619 = vxor.u32 %v615, 2147483648
      %v620 = vxor.u32 %v616, 2147483648
      %v621 = vxor.u32 %v617, 2147483648
      %v622 = vxor.u32 %v618, 2147483648
      %v623 = vmul.f32 %v619, 1.442695
      %v624 = vpow.pop %v623
      %v625 = vmul.f32 %v620, 1.442695
      %v626 = vpow.pop %v625
      %v627 = vmul.f32 %v621, 1.442695
      %v628 = vpow.pop %v627
      %v629 = vmul.f32 %v622, 1.442695
      %v630 = vpow.pop %v629
      %v631 = vadd.f32 %v624, 1.0
      %v632 = vadd.f32 %v626, 1.0
      %v633 = vadd.f32 %v628, 1.0
      %v634 = vadd.f32 %v630, 1.0
      %v635 = vrcp.pop %v631
      %v636 = vmul.f32 1.0, %v635
      %v637 = vrcp.pop %v632
      %v638 = vmul.f32 1.0, %v637
      %v639 = vrcp.pop %v633
      %v640 = vmul.f32 1.0, %v639
      %v641 = vrcp.pop %v634
      %v642 = vmul.f32 1.0, %v641
      %v643 = vmul.f32 %v615, %v636
      %v644 = vmul.f32 %v616, %v638
      %v645 = vmul.f32 %v617, %v640
      %v646 = vmul.f32 %v618, %v642
      %v648 = vsel %vm547, %v643, 0
      %v651 = vsel %vm547, %v644, 0
      %v654 = vsel %vm547, %v645, 0
      %v657 = vsel %vm547, %v646, 0
      %vm659 = vcmask 1043456
      %v661 = vsel %vm659, %v441, 0
      %663 = vmatprep.subr.mxu0 0.0
      %664 = vmatpush1.msra.mxu0 0.0
      %665 = vmatprep.subr.mxu0 0.0
      %666 = vmatpush1.msra.mxu0 0.0
      %667 = vmatprep.subr.mxu0 0.0
      %668 = vmatpush1.msra.mxu0 0.0
      %669 = vmatprep.subr.mxu0 0.0
      %670 = vmatpush1.msra.mxu0 0.0
      %671 = vmatprep.subr.mxu0 0.0
      %672 = vmatpush1.msra.mxu0 0.0
      %673 = vmatprep.subr.mxu0 0.0
      %674 = vmatpush1.msra.mxu0 0.0
      %675 = vmatprep.subr.mxu0 0.0
      %676 = vmatpush1.msra.mxu0 0.0
      %677 = vmatprep.subr.mxu0 0.0
      %678 = vmatpush1.msra.mxu0 0.0
      %679 = vmatprep.subr.mxu0 0.0
      %680 = vmatpush1.msra.mxu0 0.0
      %681 = vmatprep.subr.mxu0 0.0
      %682 = vmatpush1.msra.mxu0 0.0
      %683 = vmatprep.subr.mxu0 0.0
      %684 = vmatpush1.msra.mxu0 0.0
      %685 = vmatprep.subr.mxu0 0.0
      %686 = vmatpush1.msra.mxu0 0.0
      %687 = vmatprep.subr.mxu0 0.0
      %688 = vmatpush1.msra.mxu0 0.0
      %689 = vmatprep.subr.mxu0 0.0
      %690 = vmatpush1.msra.mxu0 0.0
      %691 = vmatprep.subr.mxu0 0.0
      %692 = vmatpush1.msra.mxu0 0.0
      %693 = vmatprep.subr.mxu0 0.0
      %694 = vmatpush1.msra.mxu0 %v661
      %695 = vmatprep.subr.mxu0 0.0
      %696 = vmatpush2.msra.mxu0 0.0
      %697 = vmatprep.subr.mxu0 0.0
      %698 = vmatpush2.msra.mxu0 0.0
      %699 = vmatprep.subr.mxu0 0.0
      %700 = vmatpush2.msra.mxu0 0.0
      %701 = vmatprep.subr.mxu0 0.0
      %702 = vmatpush2.msra.mxu0 0.0
      %703 = vmatprep.subr.mxu0 0.0
      %704 = vmatpush2.msra.mxu0 0.0
      %705 = vmatprep.subr.mxu0 0.0
      %706 = vmatpush2.msra.mxu0 0.0
      %707 = vmatprep.subr.mxu0 0.0
      %708 = vmatpush2.msra.mxu0 0.0
      %709 = vmatprep.subr.mxu0 0.0
      %710 = vmatpush2.msra.mxu0 0.0
      %711 = vmatprep.subr.mxu0 0.0
      %712 = vmatpush2.msra.mxu0 0.0
      %713 = vmatprep.subr.mxu0 0.0
      %714 = vmatpush2.msra.mxu0 0.0
      %715 = vmatprep.subr.mxu0 0.0
      %716 = vmatpush2.msra.mxu0 0.0
      %717 = vmatprep.subr.mxu0 0.0
      %718 = vmatpush2.msra.mxu0 0.0
      %719 = vmatprep.subr.mxu0 0.0
      %720 = vmatpush2.msra.mxu0 0.0
      %721 = vmatprep.subr.mxu0 0.0
      %722 = vmatpush2.msra.mxu0 0.0
      %723 = vmatprep.subr.mxu0 0.0
      %724 = vmatpush2.msra.mxu0 0.0
      %725 = vmatprep.subr.mxu0 0.0
      %726 = vmatpush2.msra.mxu0 0.0
      %727 = vmatprep.mubr.f32.mxu0 0.0
      %728 = vmatmul.mubr.f32.gmra.mxu0 %v648
      %v729 = vpop.f32.mrf.mxu0
      %v730 = vadd.f32 0.0, %v729
      %v731 = vpop.f32.mrf.mxu0
      %732 = vmatprep.mubr.f32.mxu0 0.0
      %733 = vmatmul.mubr.f32.gmra.mxu0 %v651
      %v734 = vpop.f32.mrf.mxu0
      %v735 = vadd.f32 0.0, %v734
      %v736 = vpop.f32.mrf.mxu0
      %737 = vmatprep.mubr.f32.mxu0 0.0
      %738 = vmatmul.mubr.f32.gmra.mxu0 %v654
      %v739 = vpop.f32.mrf.mxu0
      %v740 = vadd.f32 0.0, %v739
      %v741 = vpop.f32.mrf.mxu0
      %742 = vmatprep.mubr.f32.mxu0 0.0
      %743 = vmatmul.mubr.f32.gmra.mxu0 %v657
      %v744 = vpop.f32.mrf.mxu0
      %v745 = vadd.f32 0.0, %v744
      %v746 = vpop.f32.mrf.mxu0
      %747 = vdwg.mxu0
      %v749 = vlaneseq
      %v750 = vshrl.u32 %v749, 7
      %v751 = vsub.s32 0, %v750
      %v752 = vrot.slane %v442, %v751
      %v754 = vadd.f32 %v730, %v752
      %v755 = vadd.f32 %v735, %v752
      %v756 = vadd.f32 %v740, %v752
      %v757 = vadd.f32 %v745, %v752
      %vm758 = vcmp.gt.f32.partialorder %v754, 20.0
      %vm759 = vcmp.gt.f32.partialorder %v755, 20.0
      %vm760 = vcmp.gt.f32.partialorder %v756, 20.0
      %vm761 = vcmp.gt.f32.partialorder %v757, 20.0
      %v762 = vmin.f32 %v754, 20.0
      %v763 = vmin.f32 %v755, 20.0
      %v764 = vmin.f32 %v756, 20.0
      %v765 = vmin.f32 %v757, 20.0
      %v766 = vmul.f32 %v762, 1.442695
      %v767 = vpow.pop %v766
      %v768 = vmul.f32 %v763, 1.442695
      %v769 = vpow.pop %v768
      %v770 = vmul.f32 %v764, 1.442695
      %v771 = vpow.pop %v770
      %v772 = vmul.f32 %v765, 1.442695
      %v773 = vpow.pop %v772
      %v774 = vadd.f32 %v767, 1.0
      %v775 = vadd.f32 %v769, 1.0
      %v776 = vadd.f32 %v771, 1.0
      %v777 = vadd.f32 %v773, 1.0
      %v778 = vlog2.pop %v774
      %v779 = vmul.f32 %v778, 0.6931472
      %v780 = vlog2.pop %v775
      %v781 = vmul.f32 %v780, 0.6931472
      %v782 = vlog2.pop %v776
      %v783 = vmul.f32 %v782, 0.6931472
      %v784 = vlog2.pop %v777
      %v785 = vmul.f32 %v784, 0.6931472
      %v786 = vsel %vm758, %v754, %v779
      %v787 = vsel %vm759, %v755, %v781
      %v788 = vsel %vm760, %v756, %v783
      %v789 = vsel %vm761, %v757, %v785
      %790 = vst.msk [vmem:[#allocation3] sm:$0xff] %vm547, %v786
      %791 = vst.msk [vmem:[#allocation3 + $0x8] sm:$0xff] %vm547, %v787
      %792 = vst.msk [vmem:[#allocation3 + $0x10] sm:$0xff] %vm547, %v788
      %793 = vst.msk [vmem:[#allocation3 + $0x18] sm:$0xff] %vm547, %v789
      %v794 = vmul.f32 %v786, %v643
      %v795 = vmul.f32 %v787, %v644
      %v796 = vmul.f32 %v788, %v645
      %v797 = vmul.f32 %v789, %v646
      %798 = vst.msk [vmem:[#allocation4] sm:$0xff] %vm547, %v794
      %799 = vst.msk [vmem:[#allocation4 + $0x8] sm:$0xff] %vm547, %v795
      %800 = vst.msk [vmem:[#allocation4 + $0x10] sm:$0xff] %vm547, %v796
      %801 = vst.msk [vmem:[#allocation4 + $0x18] sm:$0xff] %vm547, %v797
      %806 = vrot.lane.b32.xlu0 %v730, 124
      %v807 = vpop.permute.xlu0 %806
      %808 = vrot.lane.b32.xlu0 %v735, 124
      %v809 = vpop.permute.xlu0 %808
      %810 = vrot.lane.b32.xlu0 %v740, 124
      %v811 = vpop.permute.xlu0 %810
      %812 = vrot.lane.b32.xlu0 %v745, 124
      %v813 = vpop.permute.xlu0 %812
      %vm818 = vcmask 130048
      %819 = vst.msk [vmem:[#allocation5] sm:$0xff] %vm818, %v807
      %820 = vst.msk [vmem:[#allocation5 + $0x8] sm:$0xff] %vm818, %v809
      %821 = vst.msk [vmem:[#allocation5 + $0x10] sm:$0xff] %vm818, %v811
      %822 = vst.msk [vmem:[#allocation5 + $0x18] sm:$0xff] %vm818, %v813
      %823 = vrot.lane.b32.xlu0 %v730, 108
      %v824 = vpop.permute.xlu0 %823
      %825 = vrot.lane.b32.xlu0 %v735, 108
      %v826 = vpop.permute.xlu0 %825
      %827 = vrot.lane.b32.xlu0 %v740, 108
      %v828 = vpop.permute.xlu0 %827
      %829 = vrot.lane.b32.xlu0 %v745, 108
      %v830 = vpop.permute.xlu0 %829
      %835 = vst.msk [vmem:[#allocation6] sm:$0xff] %vm818, %v824
      %836 = vst.msk [vmem:[#allocation6 + $0x8] sm:$0xff] %vm818, %v826
      %837 = vst.msk [vmem:[#allocation6 + $0x10] sm:$0xff] %vm818, %v828
      %838 = vst.msk [vmem:[#allocation6 + $0x18] sm:$0xff] %vm818, %v830
      loop: start=0, step=1, limit=4
      $region69: #{sesame_forward.8} parent=67 // loop_pre_header
        _
      $region70: #{sesame_forward.8} parent=67 // loop_header
        %s840 = sphi 0, %s844
        %p841 = scmp.ge.s32.totalorder %s840, 4
        %v845 = vphi 0.0, %v1104
      $region71: #{sesame_forward.8} parent=67 // loop_header_branch
        %843 = sbr.rel (%p841) target = $region75
      $region72: #{sesame_forward.8} parent=67 // loop_body
        %s846 = smul.u32 %s840, 8
        %s847 = scalar_lea.vmem [#allocation3], %s846
        %v848 = vld [vmem:[%s847] sm:$0xff]
        %s849 = scalar_lea.vmem [#allocation4], %s846
        %v850 = vld [vmem:[%s849] sm:$0xff]
        %s851 = scalar_lea.vmem [#allocation5], %s846
        %v852 = vld [vmem:[%s851] sm:$0xff]
        %s853 = scalar_lea.vmem [#allocation6], %s846
        %v854 = vld [vmem:[%s853] sm:$0xff]
        %v855 = vlaneseq
        %v856 = vshrl.u32 %v855, 7
        %v857 = vsub.s32 0, %v856
        %v858 = vrot.slane %v848, %v857
        %860 = vbcast.lane.b32.xlu0 %v858, 256
        %v861 = vpop.permute.xlu0 %860
        %v862 = vlaneseq
        %v863 = vshrl.u32 %v862, 7
        %v864 = vsub.s32 1, %v863
        %v865 = vrot.slane %v848, %v864
        %867 = vbcast.lane.b32.xlu0 %v865, 256
        %v868 = vpop.permute.xlu0 %867
        %v869 = vlaneseq
        %v870 = vshrl.u32 %v869, 7
        %v871 = vsub.s32 2, %v870
        %v872 = vrot.slane %v848, %v871
        %874 = vbcast.lane.b32.xlu0 %v872, 256
        %v875 = vpop.permute.xlu0 %874
        %v876 = vlaneseq
        %v877 = vshrl.u32 %v876, 7
        %v878 = vsub.s32 3, %v877
        %v879 = vrot.slane %v848, %v878
        %881 = vbcast.lane.b32.xlu0 %v879, 256
        %v882 = vpop.permute.xlu0 %881
        %v883 = vlaneseq
        %v884 = vshrl.u32 %v883, 7
        %v885 = vsub.s32 4, %v884
        %v886 = vrot.slane %v848, %v885
        %888 = vbcast.lane.b32.xlu0 %v886, 256
        %v889 = vpop.permute.xlu0 %888
        %v890 = vlaneseq
        %v891 = vshrl.u32 %v890, 7
        %v892 = vsub.s32 5, %v891
        %v893 = vrot.slane %v848, %v892
        %895 = vbcast.lane.b32.xlu0 %v893, 256
        %v896 = vpop.permute.xlu0 %895
        %v897 = vlaneseq
        %v898 = vshrl.u32 %v897, 7
        %v899 = vsub.s32 6, %v898
        %v900 = vrot.slane %v848, %v899
        %902 = vbcast.lane.b32.xlu0 %v900, 256
        %v903 = vpop.permute.xlu0 %902
        %v904 = vlaneseq
        %v905 = vshrl.u32 %v904, 7
        %v906 = vsub.s32 7, %v905
        %v907 = vrot.slane %v848, %v906
        %909 = vbcast.lane.b32.xlu0 %v907, 256
        %v910 = vpop.permute.xlu0 %909
        %v911 = vmul.f32 %v861, %v443
        %v912 = vmul.f32 %v868, %v443
        %v913 = vmul.f32 %v875, %v443
        %v914 = vmul.f32 %v882, %v443
        %v915 = vmul.f32 %v889, %v443
        %v916 = vmul.f32 %v896, %v443
        %v917 = vmul.f32 %v903, %v443
        %v918 = vmul.f32 %v910, %v443
        %v919 = vmul.f32 %v911, 1.442695
        %v920 = vpow.pop %v919
        %v921 = vmul.f32 %v912, 1.442695
        %v922 = vpow.pop %v921
        %v923 = vmul.f32 %v913, 1.442695
        %v924 = vpow.pop %v923
        %v925 = vmul.f32 %v914, 1.442695
        %v926 = vpow.pop %v925
        %v927 = vmul.f32 %v915, 1.442695
        %v928 = vpow.pop %v927
        %v929 = vmul.f32 %v916, 1.442695
        %v930 = vpow.pop %v929
        %v931 = vmul.f32 %v917, 1.442695
        %v932 = vpow.pop %v931
        %v933 = vmul.f32 %v918, 1.442695
        %v934 = vpow.pop %v933
        %v935 = vlaneseq
        %v936 = vshrl.u32 %v935, 7
        %v937 = vsub.s32 0, %v936
        %v938 = vrot.slane %v850, %v937
        %940 = vbcast.lane.b32.xlu0 %v938, 256
        %v941 = vpop.permute.xlu0 %940
        %v942 = vlaneseq
        %v943 = vshrl.u32 %v942, 7
        %v944 = vsub.s32 1, %v943
        %v945 = vrot.slane %v850, %v944
        %947 = vbcast.lane.b32.xlu0 %v945, 256
        %v948 = vpop.permute.xlu0 %947
        %v949 = vlaneseq
        %v950 = vshrl.u32 %v949, 7
        %v951 = vsub.s32 2, %v950
        %v952 = vrot.slane %v850, %v951
        %954 = vbcast.lane.b32.xlu0 %v952, 256
        %v955 = vpop.permute.xlu0 %954
        %v956 = vlaneseq
        %v957 = vshrl.u32 %v956, 7
        %v958 = vsub.s32 3, %v957
        %v959 = vrot.slane %v850, %v958
        %961 = vbcast.lane.b32.xlu0 %v959, 256
        %v962 = vpop.permute.xlu0 %961
        %v963 = vlaneseq
        %v964 = vshrl.u32 %v963, 7
        %v965 = vsub.s32 4, %v964
        %v966 = vrot.slane %v850, %v965
        %968 = vbcast.lane.b32.xlu0 %v966, 256
        %v969 = vpop.permute.xlu0 %968
        %v970 = vlaneseq
        %v971 = vshrl.u32 %v970, 7
        %v972 = vsub.s32 5, %v971
        %v973 = vrot.slane %v850, %v972
        %975 = vbcast.lane.b32.xlu0 %v973, 256
        %v976 = vpop.permute.xlu0 %975
        %v977 = vlaneseq
        %v978 = vshrl.u32 %v977, 7
        %v979 = vsub.s32 6, %v978
        %v980 = vrot.slane %v850, %v979
        %982 = vbcast.lane.b32.xlu0 %v980, 256
        %v983 = vpop.permute.xlu0 %982
        %v984 = vlaneseq
        %v985 = vshrl.u32 %v984, 7
        %v986 = vsub.s32 7, %v985
        %v987 = vrot.slane %v850, %v986
        %989 = vbcast.lane.b32.xlu0 %v987, 256
        %v990 = vpop.permute.xlu0 %989
        %v992 = vcombine.high %v852, %v852
        %v994 = vunpack.c.l.s4 1966171168
        %v995 = vunpack.c.0.s8 %v994
        %v996 = vlaneseq
        %v997 = vshrl.u32 %v996, 7
        %v998 = vsub.s32 %v995, %v997
        %v999 = vrot.slane %v852, %v998
        %v1001 = vunpack.c.l.s4 1966171168
        %v1002 = vunpack.c.0.s8 %v1001
        %v1003 = vlaneseq
        %v1004 = vshrl.u32 %v1003, 7
        %v1005 = vsub.s32 %v1002, %v1004
        %v1006 = vrot.slane %v992, %v1005
        %v1007 = vcombine.high %v999, %v999
        %v1008 = vcombine.high %v1006, %v1006
        %v1010 = vunpack.c.l.s4 1966171168
        %v1011 = vunpack.c.0.s8 %v1010
        %v1012 = vlaneseq
        %v1013 = vshrl.u32 %v1012, 7
        %v1014 = vsub.s32 %v1011, %v1013
        %v1015 = vrot.slane %v999, %v1014
        %v1017 = vunpack.c.l.s4 1966171168
        %v1018 = vunpack.c.0.s8 %v1017
        %v1019 = vlaneseq
        %v1020 = vshrl.u32 %v1019, 7
        %v1021 = vsub.s32 %v1018, %v1020
        %v1022 = vrot.slane %v1006, %v1021
        %v1024 = vunpack.c.l.s4 1966171168
        %v1025 = vunpack.c.0.s8 %v1024
        %v1026 = vlaneseq
        %v1027 = vshrl.u32 %v1026, 7
        %v1028 = vsub.s32 %v1025, %v1027
        %v1029 = vrot.slane %v1007, %v1028
        %v1031 = vunpack.c.l.s4 1966171168
        %v1032 = vunpack.c.0.s8 %v1031
        %v1033 = vlaneseq
        %v1034 = vshrl.u32 %v1033, 7
        %v1035 = vsub.s32 %v1032, %v1034
        %v1036 = vrot.slane %v1008, %v1035
        %v1037 = vcombine.high %v1015, %v1015
        %v1038 = vcombine.high %v1022, %v1022
        %v1039 = vcombine.high %v1029, %v1029
        %v1040 = vcombine.high %v1036, %v1036
        %v1041 = vlaneseq
        %v1042 = vshrl.u32 %v1041, 7
        %v1043 = vsub.s32 0, %v1042
        %v1044 = vrot.slane %v1015, %v1043
        %v1045 = vlaneseq
        %v1046 = vshrl.u32 %v1045, 7
        %v1047 = vsub.s32 0, %v1046
        %v1048 = vrot.slane %v1029, %v1047
        %v1049 = vlaneseq
        %v1050 = vshrl.u32 %v1049, 7
        %v1051 = vsub.s32 0, %v1050
        %v1052 = vrot.slane %v1037, %v1051
        %v1053 = vlaneseq
        %v1054 = vshrl.u32 %v1053, 7
        %v1055 = vsub.s32 0, %v1054
        %v1056 = vrot.slane %v1039, %v1055
        %v1057 = vlaneseq
        %v1058 = vshrl.u32 %v1057, 7
        %v1059 = vsub.s32 0, %v1058
        %v1060 = vrot.slane %v1022, %v1059
        %v1061 = vlaneseq
        %v1062 = vshrl.u32 %v1061, 7
        %v1063 = vsub.s32 0, %v1062
        %v1064 = vrot.slane %v1036, %v1063
        %v1065 = vlaneseq
        %v1066 = vshrl.u32 %v1065, 7
        %v1067 = vsub.s32 0, %v1066
        %v1068 = vrot.slane %v1038, %v1067
        %v1069 = vlaneseq
        %v1070 = vshrl.u32 %v1069, 7
        %v1071 = vsub.s32 0, %v1070
        %v1072 = vrot.slane %v1040, %v1071
        %v1081 = vmul.f32 %v941, %v1044
        %v1082 = vmul.f32 %v948, %v1048
        %v1083 = vmul.f32 %v955, %v1052
        %v1084 = vmul.f32 %v962, %v1056
        %v1085 = vmul.f32 %v969, %v1060
        %v1086 = vmul.f32 %v976, %v1064
        %v1087 = vmul.f32 %v983, %v1068
        %v1088 = vmul.f32 %v990, %v1072
        %v1089 = vmul.f32 %v920, %v845
        %v1090 = vadd.f32 %v1089, %v1081
        %v1091 = vmul.f32 %v922, %v1090
        %v1092 = vadd.f32 %v1091, %v1082
        %v1093 = vmul.f32 %v924, %v1092
        %v1094 = vadd.f32 %v1093, %v1083
        %v1095 = vmul.f32 %v926, %v1094
        %v1096 = vadd.f32 %v1095, %v1084
        %v1097 = vmul.f32 %v928, %v1096
        %v1098 = vadd.f32 %v1097, %v1085
        %v1099 = vmul.f32 %v930, %v1098
        %v1100 = vadd.f32 %v1099, %v1086
        %v1101 = vmul.f32 %v932, %v1100
        %v1102 = vadd.f32 %v1101, %v1087
        %v1103 = vmul.f32 %v934, %v1102
        %v1104 = vadd.f32 %v1103, %v1088
        %v1106 = vcombine.high %v854, %v854
        %v1108 = vunpack.c.l.s4 1966171168
        %v1109 = vunpack.c.0.s8 %v1108
        %v1110 = vlaneseq
        %v1111 = vshrl.u32 %v1110, 7
        %v1112 = vsub.s32 %v1109, %v1111
        %v1113 = vrot.slane %v854, %v1112
        %v1115 = vunpack.c.l.s4 1966171168
        %v1116 = vunpack.c.0.s8 %v1115
        %v1117 = vlaneseq
        %v1118 = vshrl.u32 %v1117, 7
        %v1119 = vsub.s32 %v1116, %v1118
        %v1120 = vrot.slane %v1106, %v1119
        %v1121 = vcombine.high %v1113, %v1113
        %v1122 = vcombine.high %v1120, %v1120
        %v1124 = vunpack.c.l.s4 1966171168
        %v1125 = vunpack.c.0.s8 %v1124
        %v1126 = vlaneseq
        %v1127 = vshrl.u32 %v1126, 7
        %v1128 = vsub.s32 %v1125, %v1127
        %v1129 = vrot.slane %v1113, %v1128
        %v1131 = vunpack.c.l.s4 1966171168
        %v1132 = vunpack.c.0.s8 %v1131
        %v1133 = vlaneseq
        %v1134 = vshrl.u32 %v1133, 7
        %v1135 = vsub.s32 %v1132, %v1134
        %v1136 = vrot.slane %v1120, %v1135
        %v1138 = vunpack.c.l.s4 1966171168
        %v1139 = vunpack.c.0.s8 %v1138
        %v1140 = vlaneseq
        %v1141 = vshrl.u32 %v1140, 7
        %v1142 = vsub.s32 %v1139, %v1141
        %v1143 = vrot.slane %v1121, %v1142
        %v1145 = vunpack.c.l.s4 1966171168
        %v1146 = vunpack.c.0.s8 %v1145
        %v1147 = vlaneseq
        %v1148 = vshrl.u32 %v1147, 7
        %v1149 = vsub.s32 %v1146, %v1148
        %v1150 = vrot.slane %v1122, %v1149
        %v1151 = vcombine.high %v1129, %v1129
        %v1152 = vcombine.high %v1136, %v1136
        %v1153 = vcombine.high %v1143, %v1143
        %v1154 = vcombine.high %v1150, %v1150
        %v1155 = vlaneseq
        %v1156 = vshrl.u32 %v1155, 7
        %v1157 = vsub.s32 0, %v1156
        %v1158 = vrot.slane %v1129, %v1157
        %v1159 = vlaneseq
        %v1160 = vshrl.u32 %v1159, 7
        %v1161 = vsub.s32 0, %v1160
        %v1162 = vrot.slane %v1143, %v1161
        %v1163 = vlaneseq
        %v1164 = vshrl.u32 %v1163, 7
        %v1165 = vsub.s32 0, %v1164
        %v1166 = vrot.slane %v1151, %v1165
        %v1167 = vlaneseq
        %v1168 = vshrl.u32 %v1167, 7
        %v1169 = vsub.s32 0, %v1168
        %v1170 = vrot.slane %v1153, %v1169
        %v1171 = vlaneseq
        %v1172 = vshrl.u32 %v1171, 7
        %v1173 = vsub.s32 0, %v1172
        %v1174 = vrot.slane %v1136, %v1173
        %v1175 = vlaneseq
        %v1176 = vshrl.u32 %v1175, 7
        %v1177 = vsub.s32 0, %v1176
        %v1178 = vrot.slane %v1150, %v1177
        %v1179 = vlaneseq
        %v1180 = vshrl.u32 %v1179, 7
        %v1181 = vsub.s32 0, %v1180
        %v1182 = vrot.slane %v1152, %v1181
        %v1183 = vlaneseq
        %v1184 = vshrl.u32 %v1183, 7
        %v1185 = vsub.s32 0, %v1184
        %v1186 = vrot.slane %v1154, %v1185
        %v1195 = vmul.f32 %v1090, %v1158
        %v1196 = vmul.f32 %v1092, %v1162
        %v1197 = vmul.f32 %v1094, %v1166
        %v1198 = vmul.f32 %v1096, %v1170
        %v1199 = vmul.f32 %v1098, %v1174
        %v1200 = vmul.f32 %v1100, %v1178
        %v1201 = vmul.f32 %v1102, %v1182
        %v1202 = vmul.f32 %v1104, %v1186
        %vm1203 = vcmask 125952
        %v1204 = vsel %vm1203, %v1195, 0.0
        %1205 = vadd.xlane.f32.xlu0 %v1204
        %v1206 = vpop.xlane.xlu0 %1205
        %v1207 = vsel %vm1203, %v1196, 0.0
        %1208 = vadd.xlane.f32.xlu0 %v1207
        %v1209 = vpop.xlane.xlu0 %1208
        %v1210 = vsel %vm1203, %v1197, 0.0
        %1211 = vadd.xlane.f32.xlu0 %v1210
        %v1212 = vpop.xlane.xlu0 %1211
        %v1213 = vsel %vm1203, %v1198, 0.0
        %1214 = vadd.xlane.f32.xlu0 %v1213
        %v1215 = vpop.xlane.xlu0 %1214
        %v1216 = vsel %vm1203, %v1199, 0.0
        %1217 = vadd.xlane.f32.xlu0 %v1216
        %v1218 = vpop.xlane.xlu0 %1217
        %v1219 = vsel %vm1203, %v1200, 0.0
        %1220 = vadd.xlane.f32.xlu0 %v1219
        %v1221 = vpop.xlane.xlu0 %1220
        %v1222 = vsel %vm1203, %v1201, 0.0
        %1223 = vadd.xlane.f32.xlu0 %v1222
        %v1224 = vpop.xlane.xlu0 %1223
        %v1225 = vsel %vm1203, %v1202, 0.0
        %1226 = vadd.xlane.f32.xlu0 %v1225
        %v1227 = vpop.xlane.xlu0 %1226
        %v1236 = vlaneseq
        %v1237 = vand.u32 %v1236, 127
        %v1238 = vlaneseq
        %v1239 = vshrl.u32 %v1238, 7
        %v1240 = vsub.s32 %v1237, %v1239
        %v1241 = vrot.slane %v1206, %v1240
        %v1242 = vlaneseq
        %v1243 = vshrl.u32 %v1242, 7
        %v1244 = vsub.s32 %v1237, %v1243
        %v1245 = vrot.slane %v1209, %v1244
        %v1246 = vlaneseq
        %v1247 = vshrl.u32 %v1246, 7
        %v1248 = vsub.s32 %v1237, %v1247
        %v1249 = vrot.slane %v1212, %v1248
        %v1250 = vlaneseq
        %v1251 = vshrl.u32 %v1250, 7
        %v1252 = vsub.s32 %v1237, %v1251
        %v1253 = vrot.slane %v1215, %v1252
        %v1254 = vlaneseq
        %v1255 = vshrl.u32 %v1254, 7
        %v1256 = vsub.s32 %v1237, %v1255
        %v1257 = vrot.slane %v1218, %v1256
        %v1258 = vlaneseq
        %v1259 = vshrl.u32 %v1258, 7
        %v1260 = vsub.s32 %v1237, %v1259
        %v1261 = vrot.slane %v1221, %v1260
        %v1262 = vlaneseq
        %v1263 = vshrl.u32 %v1262, 7
        %v1264 = vsub.s32 %v1237, %v1263
        %v1265 = vrot.slane %v1224, %v1264
        %v1266 = vlaneseq
        %v1267 = vshrl.u32 %v1266, 7
        %v1268 = vsub.s32 %v1237, %v1267
        %v1269 = vrot.slane %v1227, %v1268
        %vm1270 = vcmask 1041409
        %v1271 = vsel %vm1270, %v1245, %v1241
        %vm1272 = vcmask 1042434
        %v1273 = vsel %vm1272, %v1249, %v1271
        %vm1274 = vcmask 1043459
        %v1275 = vsel %vm1274, %v1253, %v1273
        %vm1276 = vcmask 1044484
        %v1277 = vsel %vm1276, %v1257, %v1275
        %vm1278 = vcmask 1045509
        %v1279 = vsel %vm1278, %v1261, %v1277
        %vm1280 = vcmask 1046534
        %v1281 = vsel %vm1280, %v1265, %v1279
        %vm1282 = vcmask 1047559
        %v1283 = vsel %vm1282, %v1269, %v1281
        %s1285 = scalar_lea.vmem [#allocation7], %s846
        %1286 = vst.msk [vmem:[%s1285] sm:$0xff] %vm547, %v1283
      $region73: #{sesame_forward.8} parent=67 // loop_footer
        %s844 = sadd.s32 1, %s840
      $region74: #{sesame_forward.8} parent=67 // loop_footer_branch
        %839 = sbr.rel target = $region70
      $region75: #{sesame_forward.8} parent=67 // loop_exit
        _
      %v1287 = vld [vmem:[#allocation7] sm:$0xff]
      %v1288 = vld [vmem:[#allocation7 + $0x8] sm:$0xff]
      %v1289 = vld [vmem:[#allocation7 + $0x10] sm:$0xff]
      %v1290 = vld [vmem:[#allocation7 + $0x18] sm:$0xff]
      %v1292 = vlaneseq
      %v1293 = vshrl.u32 %v1292, 7
      %v1294 = vsub.s32 0, %v1293
      %v1295 = vrot.slane %v444, %v1294
      %v1297 = vmul.f32 %v643, %v1295
      %v1298 = vmul.f32 %v644, %v1295
      %v1299 = vmul.f32 %v645, %v1295
      %v1300 = vmul.f32 %v646, %v1295
      %v1301 = vadd.f32 %v1287, %v1297
      %v1302 = vadd.f32 %v1288, %v1298
      %v1303 = vadd.f32 %v1289, %v1299
      %v1304 = vadd.f32 %v1290, %v1300
      %v1305 = vxor.u32 %v529, 2147483648
      %v1306 = vxor.u32 %v534, 2147483648
      %v1307 = vxor.u32 %v539, 2147483648
      %v1308 = vxor.u32 %v544, 2147483648
      %v1309 = vmul.f32 %v1305, 1.442695
      %v1310 = vpow.pop %v1309
      %v1311 = vmul.f32 %v1306, 1.442695
      %v1312 = vpow.pop %v1311
      %v1313 = vmul.f32 %v1307, 1.442695
      %v1314 = vpow.pop %v1313
      %v1315 = vmul.f32 %v1308, 1.442695
      %v1316 = vpow.pop %v1315
      %v1317 = vadd.f32 %v1310, 1.0
      %v1318 = vadd.f32 %v1312, 1.0
      %v1319 = vadd.f32 %v1314, 1.0
      %v1320 = vadd.f32 %v1316, 1.0
      %v1321 = vrcp.pop %v1317
      %v1322 = vmul.f32 1.0, %v1321
      %v1323 = vrcp.pop %v1318
      %v1324 = vmul.f32 1.0, %v1323
      %v1325 = vrcp.pop %v1319
      %v1326 = vmul.f32 1.0, %v1325
      %v1327 = vrcp.pop %v1320
      %v1328 = vmul.f32 1.0, %v1327
      %v1329 = vmul.f32 %v529, %v1322
      %v1330 = vmul.f32 %v534, %v1324
      %v1331 = vmul.f32 %v539, %v1326
      %v1332 = vmul.f32 %v544, %v1328
      %1337 = vrot.lane.b32.xlu0 %v1329, 124
      %v1338 = vpop.permute.xlu0 %1337
      %1339 = vrot.lane.b32.xlu0 %v1330, 124
      %v1340 = vpop.permute.xlu0 %1339
      %1341 = vrot.lane.b32.xlu0 %v1331, 124
      %v1342 = vpop.permute.xlu0 %1341
      %1343 = vrot.lane.b32.xlu0 %v1332, 124
      %v1344 = vpop.permute.xlu0 %1343
      %v1349 = vmul.f32 %v1301, %v1338
      %v1350 = vmul.f32 %v1302, %v1340
      %v1351 = vmul.f32 %v1303, %v1342
      %v1352 = vmul.f32 %v1304, %v1344
      %v1353 = vld [vmem:[%s9] sm:$0xf]
      %v1355 = vsel %vm547, %v1349, 0
      %v1358 = vsel %vm547, %v1350, 0
      %v1361 = vsel %vm547, %v1351, 0
      %v1364 = vsel %vm547, %v1352, 0
      %v1367 = vsel %vm659, %v1353, 0
      %1369 = vmatprep.subr.mxu0 0.0
      %1370 = vmatpush1.msra.mxu0 0.0
      %1371 = vmatprep.subr.mxu0 0.0
      %1372 = vmatpush1.msra.mxu0 0.0
      %1373 = vmatprep.subr.mxu0 0.0
      %1374 = vmatpush1.msra.mxu0 0.0
      %1375 = vmatprep.subr.mxu0 0.0
      %1376 = vmatpush1.msra.mxu0 0.0
      %1377 = vmatprep.subr.mxu0 0.0
      %1378 = vmatpush1.msra.mxu0 0.0
      %1379 = vmatprep.subr.mxu0 0.0
      %1380 = vmatpush1.msra.mxu0 0.0
      %1381 = vmatprep.subr.mxu0 0.0
      %1382 = vmatpush1.msra.mxu0 0.0
      %1383 = vmatprep.subr.mxu0 0.0
      %1384 = vmatpush1.msra.mxu0 0.0
      %1385 = vmatprep.subr.mxu0 0.0
      %1386 = vmatpush1.msra.mxu0 0.0
      %1387 = vmatprep.subr.mxu0 0.0
      %1388 = vmatpush1.msra.mxu0 0.0
      %1389 = vmatprep.subr.mxu0 0.0
      %1390 = vmatpush1.msra.mxu0 0.0
      %1391 = vmatprep.subr.mxu0 0.0
      %1392 = vmatpush1.msra.mxu0 0.0
      %1393 = vmatprep.subr.mxu0 0.0
      %1394 = vmatpush1.msra.mxu0 0.0
      %1395 = vmatprep.subr.mxu0 0.0
      %1396 = vmatpush1.msra.mxu0 0.0
      %1397 = vmatprep.subr.mxu0 0.0
      %1398 = vmatpush1.msra.mxu0 0.0
      %1399 = vmatprep.subr.mxu0 0.0
      %1400 = vmatpush1.msra.mxu0 %v1367
      %1401 = vmatprep.subr.mxu0 0.0
      %1402 = vmatpush2.msra.mxu0 0.0
      %1403 = vmatprep.subr.mxu0 0.0
      %1404 = vmatpush2.msra.mxu0 0.0
      %1405 = vmatprep.subr.mxu0 0.0
      %1406 = vmatpush2.msra.mxu0 0.0
      %1407 = vmatprep.subr.mxu0 0.0
      %1408 = vmatpush2.msra.mxu0 0.0
      %1409 = vmatprep.subr.mxu0 0.0
      %1410 = vmatpush2.msra.mxu0 0.0
      %1411 = vmatprep.subr.mxu0 0.0
      %1412 = vmatpush2.msra.mxu0 0.0
      %1413 = vmatprep.subr.mxu0 0.0
      %1414 = vmatpush2.msra.mxu0 0.0
      %1415 = vmatprep.subr.mxu0 0.0
      %1416 = vmatpush2.msra.mxu0 0.0
      %1417 = vmatprep.subr.mxu0 0.0
      %1418 = vmatpush2.msra.mxu0 0.0
      %1419 = vmatprep.subr.mxu0 0.0
      %1420 = vmatpush2.msra.mxu0 0.0
      %1421 = vmatprep.subr.mxu0 0.0
      %1422 = vmatpush2.msra.mxu0 0.0
      %1423 = vmatprep.subr.mxu0 0.0
      %1424 = vmatpush2.msra.mxu0 0.0
      %1425 = vmatprep.subr.mxu0 0.0
      %1426 = vmatpush2.msra.mxu0 0.0
      %1427 = vmatprep.subr.mxu0 0.0
      %1428 = vmatpush2.msra.mxu0 0.0
      %1429 = vmatprep.subr.mxu0 0.0
      %1430 = vmatpush2.msra.mxu0 0.0
      %1431 = vmatprep.subr.mxu0 0.0
      %1432 = vmatpush2.msra.mxu0 0.0
      %1433 = vmatprep.mubr.f32.mxu0 0.0
      %1434 = vmatmul.mubr.f32.gmra.mxu0 %v1355
      %v1435 = vpop.f32.mrf.mxu0
      %v1436 = vadd.f32 0.0, %v1435
      %v1437 = vpop.f32.mrf.mxu0
      %1438 = vmatprep.mubr.f32.mxu0 0.0
      %1439 = vmatmul.mubr.f32.gmra.mxu0 %v1358
      %v1440 = vpop.f32.mrf.mxu0
      %v1441 = vadd.f32 0.0, %v1440
      %v1442 = vpop.f32.mrf.mxu0
      %1443 = vmatprep.mubr.f32.mxu0 0.0
      %1444 = vmatmul.mubr.f32.gmra.mxu0 %v1361
      %v1445 = vpop.f32.mrf.mxu0
      %v1446 = vadd.f32 0.0, %v1445
      %v1447 = vpop.f32.mrf.mxu0
      %1448 = vmatprep.mubr.f32.mxu0 0.0
      %1449 = vmatmul.mubr.f32.gmra.mxu0 %v1364
      %v1450 = vpop.f32.mrf.mxu0
      %v1451 = vadd.f32 0.0, %v1450
      %v1452 = vpop.f32.mrf.mxu0
      %1453 = vdwg.mxu0
      %v1454 = vmul.f32 %v1436, 0.5
      %v1455 = vmul.f32 %v1441, 0.5
      %v1456 = vmul.f32 %v1446, 0.5
      %v1457 = vmul.f32 %v1451, 0.5
      %v1458 = vmul.f32 %v1436, 0.70710677
      %v1459 = vmul.f32 %v1441, 0.70710677
      %v1460 = vmul.f32 %v1446, 0.70710677
      %v1461 = vmul.f32 %v1451, 0.70710677
      %v1462 = verf.f32.pop %v1458
      %v1463 = verf.f32.pop %v1459
      %v1464 = verf.f32.pop %v1460
      %v1465 = verf.f32.pop %v1461
      %v1466 = vadd.f32 %v1462, 1.0
      %v1467 = vadd.f32 %v1463, 1.0
      %v1468 = vadd.f32 %v1464, 1.0
      %v1469 = vadd.f32 %v1465, 1.0
      %v1470 = vmul.f32 %v1454, %v1466
      %v1471 = vmul.f32 %v1455, %v1467
      %v1472 = vmul.f32 %v1456, %v1468
      %v1473 = vmul.f32 %v1457, %v1469
      %v1474 = vld [vmem:[%s10] sm:$0x3]
      %v1475 = vld [vmem:[%s11] sm:$0x1]
      %v1477 = vlaneseq
      %v1478 = vshrl.u32 %v1477, 7
      %v1479 = vsub.s32 0, %v1478
      %v1480 = vrot.slane %v1475, %v1479
      %v1483 = vsel %vm445, %v1470, 0
      %v1486 = vsel %vm445, %v1471, 0
      %v1489 = vsel %vm445, %v1472, 0
      %v1492 = vsel %vm445, %v1473, 0
      %v1495 = vsel %vm458, %v1474, 0
      %1497 = vmatprep.subr.mxu0 0.0
      %1498 = vmatpush1.msra.mxu0 0.0
      %1499 = vmatprep.subr.mxu0 0.0
      %1500 = vmatpush1.msra.mxu0 0.0
      %1501 = vmatprep.subr.mxu0 0.0
      %1502 = vmatpush1.msra.mxu0 0.0
      %1503 = vmatprep.subr.mxu0 0.0
      %1504 = vmatpush1.msra.mxu0 0.0
      %1505 = vmatprep.subr.mxu0 0.0
      %1506 = vmatpush1.msra.mxu0 0.0
      %1507 = vmatprep.subr.mxu0 0.0
      %1508 = vmatpush1.msra.mxu0 0.0
      %1509 = vmatprep.subr.mxu0 0.0
      %1510 = vmatpush1.msra.mxu0 0.0
      %1511 = vmatprep.subr.mxu0 0.0
      %1512 = vmatpush1.msra.mxu0 0.0
      %1513 = vmatprep.subr.mxu0 0.0
      %1514 = vmatpush1.msra.mxu0 0.0
      %1515 = vmatprep.subr.mxu0 0.0
      %1516 = vmatpush1.msra.mxu0 0.0
      %1517 = vmatprep.subr.mxu0 0.0
      %1518 = vmatpush1.msra.mxu0 0.0
      %1519 = vmatprep.subr.mxu0 0.0
      %1520 = vmatpush1.msra.mxu0 0.0
      %1521 = vmatprep.subr.mxu0 0.0
      %1522 = vmatpush1.msra.mxu0 0.0
      %1523 = vmatprep.subr.mxu0 0.0
      %1524 = vmatpush1.msra.mxu0 0.0
      %1525 = vmatprep.subr.mxu0 0.0
      %1526 = vmatpush1.msra.mxu0 0.0
      %1527 = vmatprep.subr.mxu0 0.0
      %1528 = vmatpush1.msra.mxu0 %v1495
      %1529 = vmatprep.subr.mxu0 0.0
      %1530 = vmatpush2.msra.mxu0 0.0
      %1531 = vmatprep.subr.mxu0 0.0
      %1532 = vmatpush2.msra.mxu0 0.0
      %1533 = vmatprep.subr.mxu0 0.0
      %1534 = vmatpush2.msra.mxu0 0.0
      %1535 = vmatprep.subr.mxu0 0.0
      %1536 = vmatpush2.msra.mxu0 0.0
      %1537 = vmatprep.subr.mxu0 0.0
      %1538 = vmatpush2.msra.mxu0 0.0
      %1539 = vmatprep.subr.mxu0 0.0
      %1540 = vmatpush2.msra.mxu0 0.0
      %1541 = vmatprep.subr.mxu0 0.0
      %1542 = vmatpush2.msra.mxu0 0.0
      %1543 = vmatprep.subr.mxu0 0.0
      %1544 = vmatpush2.msra.mxu0 0.0
      %1545 = vmatprep.subr.mxu0 0.0
      %1546 = vmatpush2.msra.mxu0 0.0
      %1547 = vmatprep.subr.mxu0 0.0
      %1548 = vmatpush2.msra.mxu0 0.0
      %1549 = vmatprep.subr.mxu0 0.0
      %1550 = vmatpush2.msra.mxu0 0.0
      %1551 = vmatprep.subr.mxu0 0.0
      %1552 = vmatpush2.msra.mxu0 0.0
      %1553 = vmatprep.subr.mxu0 0.0
      %1554 = vmatpush2.msra.mxu0 0.0
      %1555 = vmatprep.subr.mxu0 0.0
      %1556 = vmatpush2.msra.mxu0 0.0
      %1557 = vmatprep.subr.mxu0 0.0
      %1558 = vmatpush2.msra.mxu0 0.0
      %1559 = vmatprep.subr.mxu0 0.0
      %1560 = vmatpush2.msra.mxu0 0.0
      %1561 = vmatprep.mubr.f32.mxu0 0.0
      %1562 = vmatmul.mubr.f32.gmra.mxu0 %v1483
      %v1563 = vpop.f32.mrf.mxu0
      %v1564 = vadd.f32 %v1480, %v1563
      %v1565 = vpop.f32.mrf.mxu0
      %1566 = vmatprep.mubr.f32.mxu0 0.0
      %1567 = vmatmul.mubr.f32.gmra.mxu0 %v1486
      %v1568 = vpop.f32.mrf.mxu0
      %v1569 = vadd.f32 %v1480, %v1568
      %v1570 = vpop.f32.mrf.mxu0
      %1571 = vmatprep.mubr.f32.mxu0 0.0
      %1572 = vmatmul.mubr.f32.gmra.mxu0 %v1489
      %v1573 = vpop.f32.mrf.mxu0
      %v1574 = vadd.f32 %v1480, %v1573
      %v1575 = vpop.f32.mrf.mxu0
      %1576 = vmatprep.mubr.f32.mxu0 0.0
      %1577 = vmatmul.mubr.f32.gmra.mxu0 %v1492
      %v1578 = vpop.f32.mrf.mxu0
      %v1579 = vadd.f32 %v1480, %v1578
      %v1580 = vpop.f32.mrf.mxu0
      %1581 = vdwg.mxu0
      %v1582 = vmul.f32 %v1564, 0.5
      %v1583 = vmul.f32 %v1569, 0.5
      %v1584 = vmul.f32 %v1574, 0.5
      %v1585 = vmul.f32 %v1579, 0.5
      %v1586 = vmul.f32 %v1564, 0.70710677
      %v1587 = vmul.f32 %v1569, 0.70710677
      %v1588 = vmul.f32 %v1574, 0.70710677
      %v1589 = vmul.f32 %v1579, 0.70710677
      %v1590 = verf.f32.pop %v1586
      %v1591 = verf.f32.pop %v1587
      %v1592 = verf.f32.pop %v1588
      %v1593 = verf.f32.pop %v1589
      %v1594 = vadd.f32 %v1590, 1.0
      %v1595 = vadd.f32 %v1591, 1.0
      %v1596 = vadd.f32 %v1592, 1.0
      %v1597 = vadd.f32 %v1593, 1.0
      %v1598 = vmul.f32 %v1582, %v1594
      %v1599 = vmul.f32 %v1583, %v1595
      %v1600 = vmul.f32 %v1584, %v1596
      %v1601 = vmul.f32 %v1585, %v1597
      %v1602 = vld [vmem:[%s428] sm:$0xff]
      %v1603 = vld [vmem:[%s428 + $0x8] sm:$0xff]
      %v1604 = vld [vmem:[%s428 + $0x10] sm:$0xff]
      %v1605 = vld [vmem:[%s428 + $0x18] sm:$0xff]
      %v1606 = vadd.f32 %v1598, %v1602
      %v1607 = vadd.f32 %v1599, %v1603
      %v1608 = vadd.f32 %v1600, %v1604
      %v1609 = vadd.f32 %v1601, %v1605
      %1610 = vst.msk [vmem:[%s433] sm:$0xff] %vm547, %v1606
      %1611 = vst.msk [vmem:[%s433 + $0x8] sm:$0xff] %vm547, %v1607
      %1612 = vst.msk [vmem:[%s433 + $0x10] sm:$0xff] %vm547, %v1608
      %1613 = vst.msk [vmem:[%s433 + $0x18] sm:$0xff] %vm547, %v1609
      %p1614 = scmp.lt.s32.totalorder %s23, 1
      %s1615 = scalar_select %p1614, %s23, 1
      %s1616 = smul.addr %s1615, 4
      %s1617 = smul.addr %s1616, 8
      %s1618 = scalar_lea.vmem %s12, %s1617
      // Predicated region
      $region76: #{sesame_forward.8} parent=67 // pred_check
        %p1619 = pneg %p303
      $region77: #{sesame_forward.8} parent=67 // pred_check_branch
        %1621 = sbr.rel (%p1619) target = $region79
      $region78: #{sesame_forward.8} parent=67 // pred_region
        _
      $region79: #{sesame_forward.8} parent=67 // pred_fallthru
        _
    $region68: #{sesame_forward.8} parent=5 // pred_fallthru
      _
    %p1622 = scmp.le.s32.totalorder 2, %s18
    // Predicated region
    $region80: #{sesame_forward.8} parent=5 // pred_check
      %p1623 = pneg %p1622
    $region81: #{sesame_forward.8} parent=5 // pred_check_branch
      %1625 = sbr.rel (%p1623) target = $region83
    $region82: #{sesame_forward.8} parent=5 // pred_region
      %s1626 = ssub.s32 %s18, 2
      // Predicated region
      $region84: #{sesame_forward.8} parent=82 // pred_check
        %p1627 = pneg %p309
      $region85: #{sesame_forward.8} parent=82 // pred_check_branch
        %1629 = sbr.rel (%p1627) target = $region87
      $region86: #{sesame_forward.8} parent=82 // pred_region
        %p1630 = scmp.lt.s32.totalorder %s24, 1
        %s1631 = scalar_select %p1630, %s24, 1
        %s1632 = smul.addr %s1631, 4
        %s1633 = smul.addr %s1632, 8
        %s1634 = scalar_lea.vmem %s12, %s1633
      $region87: #{sesame_forward.8} parent=82 // pred_fallthru
        _
    $region83: #{sesame_forward.8} parent=5 // pred_fallthru
      _
  $region6: #{sesame_forward.8} parent=0 // loop_footer
    %s22 = sadd.s32 1, %s18
  $region7: #{sesame_forward.8} parent=0 // loop_footer_branch
    %17 = sbr.rel target = $region3
  $region8: #{sesame_forward.8} parent=0 // loop_exit
    _

// kernel: sesame_forward.9
$region0: #{sesame_forward.9}
  #allocation0 [shape = 'u32[]', space=smem, size = 0x4, offset = 0x4, fixed_abs, tag = 'smem constant byte address 0x4 - core index']
  #allocation1 [shape = 'u32[144,128]{1,0:T(1,128)}', space=vmem, size = 0x12000, scoped, tag = 'internal scratch']
  #allocation2 [shape = 'f32[136,2]{1,0:T(8,128)}', space=vmem, size = 0x11000, scoped, tag = 'scratch operand']
  #allocation3 [shape = 'f32[128,2]{1,0:T(8,128)}', space=vmem, size = 0x10000, scoped, tag = 'scratch operand']
  #allocation4 [shape = 'f32[128,2]{1,0:T(8,128)}', space=vmem, size = 0x10000, scoped, tag = 'scratch operand']
  #allocation5 [shape = 'f32[128,16]{1,0:T(8,128)}', space=vmem, size = 0x10000, scoped, tag = 'scratch operand']
  #allocation6 [shape = 'f32[128,16]{1,0:T(8,128)}', space=vmem, size = 0x10000, scoped, tag = 'scratch operand']
  #allocation7 [shape = 'f32[128,2]{1,0:T(8,128)}', space=vmem, size = 0x10000, scoped, tag = 'scratch operand']
  %s0 = inlined_call_operand.vmem [shape: f32[2,128,1], index: 0, kind: input, shape index: {}]
  %s1 = inlined_call_operand.vmem [shape: f32[1,4], index: 1, kind: input, shape index: {}]
  %s2 = inlined_call_operand.vmem [shape: f32[4,2], index: 2, kind: input, shape index: {}]
  %s3 = inlined_call_operand.vmem [shape: f32[1,2], index: 3, kind: input, shape index: {}]
  %s4 = inlined_call_operand.vmem [shape: f32[2,34], index: 4, kind: input, shape index: {}]
  %s5 = inlined_call_operand.vmem [shape: f32[1,2], index: 5, kind: input, shape index: {}]
  %s6 = inlined_call_operand.vmem [shape: f32[2,16], index: 6, kind: input, shape index: {}]
  %s7 = inlined_call_operand.vmem [shape: f32[1,2], index: 7, kind: input, shape index: {}]
  %s8 = inlined_call_operand.vmem [shape: f32[2,1], index: 8, kind: input, shape index: {}]
  %s9 = inlined_call_operand.vmem [shape: f32[2,128,1], index: 9, kind: output, shape index: {}]
  %s10 = sld [smem:[#allocation0]]
  $region76: #{sesame_forward.9} parent=0
    _
  %s12 = ssub.s32 1, %s10
  %s13 = scalar_select 0, %s12, %s10
  loop: start=0, step=1, limit=4
  $region2: #{sesame_forward.9} parent=0 // loop_pre_header
    _
  $region3: #{sesame_forward.9} parent=0 // loop_header
    %s15 = sphi 0, %s19
    %p16 = scmp.ge.s32.totalorder %s15, 4
    %s25 = sphi 0, %s27
    %s28 = sphi 0, %s25
    %s29 = sphi 0, %s28
    %s45 = sphi 0, %s29
    %s49 = sphi 0, %s49
    %s51 = sphi 0, %s49
    %s52 = sphi 0, %s51
    %s66 = sphi 0, %s52
    %s70 = sphi 0, %s70
    %s72 = sphi 0, %s70
    %s73 = sphi 0, %s72
    %s87 = sphi 0, %s73
    %s91 = sphi 0, %s91
    %s93 = sphi 0, %s91
    %s94 = sphi 0, %s93
    %s108 = sphi 0, %s94
    %s112 = sphi 0, %s112
    %s114 = sphi 0, %s112
    %s115 = sphi 0, %s114
    %s129 = sphi 0, %s115
    %s133 = sphi 0, %s133
    %s135 = sphi 0, %s133
    %s136 = sphi 0, %s135
    %s150 = sphi 0, %s136
    %s154 = sphi 0, %s154
    %s156 = sphi 0, %s154
    %s157 = sphi 0, %s156
    %s171 = sphi 0, %s157
    %s175 = sphi 0, %s175
    %s177 = sphi 0, %s175
    %s178 = sphi 0, %s177
    %s192 = sphi 0, %s178
    %s196 = sphi 0, %s196
    %s198 = sphi 0, %s196
    %s199 = sphi 0, %s198
    %s213 = sphi 0, %s199
    %s219 = sphi 0, %s221
    %s222 = sphi 0, %s219
    %s223 = sphi 0, %s222
    %s239 = sphi 0, %s223
  $region4: #{sesame_forward.9} parent=0 // loop_header_branch
    %18 = sbr.rel (%p16) target = $region8
  $region5: #{sesame_forward.9} parent=0 // loop_body
    %s20 = ssub.s32 %s15, 1
    %s21 = ssub.s32 %s15, 2
    %s22 = sadd.s32 %s15, 1
    %s23 = ssub.s32 %s15, %s22
    %p24 = scmp.eq.s32.totalorder %s23, 0
    %s26 = sadd.s32 %s25, 1
    %s27 = scalar_select %p24, %s25, %s26
    %p30 = pneg %p24
    %p31 = scmp.eq.s32.totalorder %s15, 1
    %p32 = por %p30, %p31
    %p33 = scmp.ne.s32.totalorder %s25, %s28
    %p34 = scmp.eq.s32.totalorder %s15, 0
    %p35 = por %p33, %p34
    %p36 = scmp.ne.s32.totalorder %s25, %s28
    %p37 = scmp.eq.s32.totalorder %s20, 1
    %p38 = por %p36, %p37
    %p39 = scmp.ne.s32.totalorder %s28, %s29
    %p40 = scmp.eq.s32.totalorder %s20, 0
    %p41 = por %p39, %p40
    %p42 = scmp.ne.s32.totalorder %s28, %s29
    %p43 = scmp.eq.s32.totalorder %s21, 1
    %p44 = por %p42, %p43
    %p46 = scmp.ne.s32.totalorder %s29, %s45
    %p47 = scmp.eq.s32.totalorder %s21, 0
    %p48 = por %p46, %p47
    %s50 = sadd.s32 %s49, 1
    %p53 = scmp.eq.s32.totalorder %s15, 1
    %p54 = scmp.ne.s32.totalorder %s49, %s51
    %p55 = scmp.eq.s32.totalorder %s15, 0
    %p56 = por %p54, %p55
    %p57 = scmp.ne.s32.totalorder %s49, %s51
    %p58 = scmp.eq.s32.totalorder %s20, 1
    %p59 = por %p57, %p58
    %p60 = scmp.ne.s32.totalorder %s51, %s52
    %p61 = scmp.eq.s32.totalorder %s20, 0
    %p62 = por %p60, %p61
    %p63 = scmp.ne.s32.totalorder %s51, %s52
    %p64 = scmp.eq.s32.totalorder %s21, 1
    %p65 = por %p63, %p64
    %p67 = scmp.ne.s32.totalorder %s52, %s66
    %p68 = scmp.eq.s32.totalorder %s21, 0
    %p69 = por %p67, %p68
    %s71 = sadd.s32 %s70, 1
    %p74 = scmp.eq.s32.totalorder %s15, 1
    %p75 = scmp.ne.s32.totalorder %s70, %s72
    %p76 = scmp.eq.s32.totalorder %s15, 0
    %p77 = por %p75, %p76
    %p78 = scmp.ne.s32.totalorder %s70, %s72
    %p79 = scmp.eq.s32.totalorder %s20, 1
    %p80 = por %p78, %p79
    %p81 = scmp.ne.s32.totalorder %s72, %s73
    %p82 = scmp.eq.s32.totalorder %s20, 0
    %p83 = por %p81, %p82
    %p84 = scmp.ne.s32.totalorder %s72, %s73
    %p85 = scmp.eq.s32.totalorder %s21, 1
    %p86 = por %p84, %p85
    %p88 = scmp.ne.s32.totalorder %s73, %s87
    %p89 = scmp.eq.s32.totalorder %s21, 0
    %p90 = por %p88, %p89
    %s92 = sadd.s32 %s91, 1
    %p95 = scmp.eq.s32.totalorder %s15, 1
    %p96 = scmp.ne.s32.totalorder %s91, %s93
    %p97 = scmp.eq.s32.totalorder %s15, 0
    %p98 = por %p96, %p97
    %p99 = scmp.ne.s32.totalorder %s91, %s93
    %p100 = scmp.eq.s32.totalorder %s20, 1
    %p101 = por %p99, %p100
    %p102 = scmp.ne.s32.totalorder %s93, %s94
    %p103 = scmp.eq.s32.totalorder %s20, 0
    %p104 = por %p102, %p103
    %p105 = scmp.ne.s32.totalorder %s93, %s94
    %p106 = scmp.eq.s32.totalorder %s21, 1
    %p107 = por %p105, %p106
    %p109 = scmp.ne.s32.totalorder %s94, %s108
    %p110 = scmp.eq.s32.totalorder %s21, 0
    %p111 = por %p109, %p110
    %s113 = sadd.s32 %s112, 1
    %p116 = scmp.eq.s32.totalorder %s15, 1
    %p117 = scmp.ne.s32.totalorder %s112, %s114
    %p118 = scmp.eq.s32.totalorder %s15, 0
    %p119 = por %p117, %p118
    %p120 = scmp.ne.s32.totalorder %s112, %s114
    %p121 = scmp.eq.s32.totalorder %s20, 1
    %p122 = por %p120, %p121
    %p123 = scmp.ne.s32.totalorder %s114, %s115
    %p124 = scmp.eq.s32.totalorder %s20, 0
    %p125 = por %p123, %p124
    %p126 = scmp.ne.s32.totalorder %s114, %s115
    %p127 = scmp.eq.s32.totalorder %s21, 1
    %p128 = por %p126, %p127
    %p130 = scmp.ne.s32.totalorder %s115, %s129
    %p131 = scmp.eq.s32.totalorder %s21, 0
    %p132 = por %p130, %p131
    %s134 = sadd.s32 %s133, 1
    %p137 = scmp.eq.s32.totalorder %s15, 1
    %p138 = scmp.ne.s32.totalorder %s133, %s135
    %p139 = scmp.eq.s32.totalorder %s15, 0
    %p140 = por %p138, %p139
    %p141 = scmp.ne.s32.totalorder %s133, %s135
    %p142 = scmp.eq.s32.totalorder %s20, 1
    %p143 = por %p141, %p142
    %p144 = scmp.ne.s32.totalorder %s135, %s136
    %p145 = scmp.eq.s32.totalorder %s20, 0
    %p146 = por %p144, %p145
    %p147 = scmp.ne.s32.totalorder %s135, %s136
    %p148 = scmp.eq.s32.totalorder %s21, 1
    %p149 = por %p147, %p148
    %p151 = scmp.ne.s32.totalorder %s136, %s150
    %p152 = scmp.eq.s32.totalorder %s21, 0
    %p153 = por %p151, %p152
    %s155 = sadd.s32 %s154, 1
    %p158 = scmp.eq.s32.totalorder %s15, 1
    %p159 = scmp.ne.s32.totalorder %s154, %s156
    %p160 = scmp.eq.s32.totalorder %s15, 0
    %p161 = por %p159, %p160
    %p162 = scmp.ne.s32.totalorder %s154, %s156
    %p163 = scmp.eq.s32.totalorder %s20, 1
    %p164 = por %p162, %p163
    %p165 = scmp.ne.s32.totalorder %s156, %s157
    %p166 = scmp.eq.s32.totalorder %s20, 0
    %p167 = por %p165, %p166
    %p168 = scmp.ne.s32.totalorder %s156, %s157
    %p169 = scmp.eq.s32.totalorder %s21, 1
    %p170 = por %p168, %p169
    %p172 = scmp.ne.s32.totalorder %s157, %s171
    %p173 = scmp.eq.s32.totalorder %s21, 0
    %p174 = por %p172, %p173
    %s176 = sadd.s32 %s175, 1
    %p179 = scmp.eq.s32.totalorder %s15, 1
    %p180 = scmp.ne.s32.totalorder %s175, %s177
    %p181 = scmp.eq.s32.totalorder %s15, 0
    %p182 = por %p180, %p181
    %p183 = scmp.ne.s32.totalorder %s175, %s177
    %p184 = scmp.eq.s32.totalorder %s20, 1
    %p185 = por %p183, %p184
    %p186 = scmp.ne.s32.totalorder %s177, %s178
    %p187 = scmp.eq.s32.totalorder %s20, 0
    %p188 = por %p186, %p187
    %p189 = scmp.ne.s32.totalorder %s177, %s178
    %p190 = scmp.eq.s32.totalorder %s21, 1
    %p191 = por %p189, %p190
    %p193 = scmp.ne.s32.totalorder %s178, %s192
    %p194 = scmp.eq.s32.totalorder %s21, 0
    %p195 = por %p193, %p194
    %s197 = sadd.s32 %s196, 1
    %p200 = scmp.eq.s32.totalorder %s15, 1
    %p201 = scmp.ne.s32.totalorder %s196, %s198
    %p202 = scmp.eq.s32.totalorder %s15, 0
    %p203 = por %p201, %p202
    %p204 = scmp.ne.s32.totalorder %s196, %s198
    %p205 = scmp.eq.s32.totalorder %s20, 1
    %p206 = por %p204, %p205
    %p207 = scmp.ne.s32.totalorder %s198, %s199
    %p208 = scmp.eq.s32.totalorder %s20, 0
    %p209 = por %p207, %p208
    %p210 = scmp.ne.s32.totalorder %s198, %s199
    %p211 = scmp.eq.s32.totalorder %s21, 1
    %p212 = por %p210, %p211
    %p214 = scmp.ne.s32.totalorder %s199, %s213
    %p215 = scmp.eq.s32.totalorder %s21, 0
    %p216 = por %p214, %p215
    %s217 = ssub.s32 %s15, %s22
    %p218 = scmp.eq.s32.totalorder %s217, 0
    %s220 = sadd.s32 %s219, 1
    %s221 = scalar_select %p218, %s219, %s220
    %p224 = pneg %p218
    %p225 = scmp.eq.s32.totalorder %s15, 1
    %p226 = por %p224, %p225
    %p227 = scmp.ne.s32.totalorder %s219, %s222
    %p228 = scmp.eq.s32.totalorder %s15, 0
    %p229 = por %p227, %p228
    %p230 = scmp.ne.s32.totalorder %s219, %s222
    %p231 = scmp.eq.s32.totalorder %s20, 1
    %p232 = por %p230, %p231
    %p233 = scmp.ne.s32.totalorder %s222, %s223
    %p234 = scmp.eq.s32.totalorder %s20, 0
    %p235 = por %p233, %p234
    %p236 = scmp.ne.s32.totalorder %s222, %s223
    %p237 = scmp.eq.s32.totalorder %s21, 1
    %p238 = por %p236, %p237
    %p240 = scmp.ne.s32.totalorder %s223, %s239
    %p241 = scmp.eq.s32.totalorder %s21, 0
    %p242 = por %p240, %p241
    %p243 = scmp.le.s32.totalorder 1, %s15
    %p244 = scmp.lt.s32.totalorder %s15, 3
    %p245 = pnand %p243, %p244
    %p246 = pneg %p245
    // Predicated region
    $region9: #{sesame_forward.9} parent=5 // pred_check
      _
    $region10: #{sesame_forward.9} parent=5 // pred_check_branch
      %248 = sbr.rel (%p245) target = $region12
    $region11: #{sesame_forward.9} parent=5 // pred_region
      %s249 = ssub.s32 %s15, 1
      // Predicated region
      $region13: #{sesame_forward.9} parent=11 // pred_check
        %p250 = pneg %p62
      $region14: #{sesame_forward.9} parent=11 // pred_check_branch
        %252 = sbr.rel (%p250) target = $region16
      $region15: #{sesame_forward.9} parent=11 // pred_region
        _
      $region16: #{sesame_forward.9} parent=11 // pred_fallthru
        _
      // Predicated region
      $region17: #{sesame_forward.9} parent=11 // pred_check
        %p253 = pneg %p83
      $region18: #{sesame_forward.9} parent=11 // pred_check_branch
        %255 = sbr.rel (%p253) target = $region20
      $region19: #{sesame_forward.9} parent=11 // pred_region
        _
      $region20: #{sesame_forward.9} parent=11 // pred_fallthru
        _
      // Predicated region
      $region21: #{sesame_forward.9} parent=11 // pred_check
        %p256 = pneg %p104
      $region22: #{sesame_forward.9} parent=11 // pred_check_branch
        %258 = sbr.rel (%p256) target = $region24
      $region23: #{sesame_forward.9} parent=11 // pred_region
        _
      $region24: #{sesame_forward.9} parent=11 // pred_fallthru
        _
      // Predicated region
      $region25: #{sesame_forward.9} parent=11 // pred_check
        %p259 = pneg %p125
      $region26: #{sesame_forward.9} parent=11 // pred_check_branch
        %261 = sbr.rel (%p259) target = $region28
      $region27: #{sesame_forward.9} parent=11 // pred_region
        _
      $region28: #{sesame_forward.9} parent=11 // pred_fallthru
        _
      // Predicated region
      $region29: #{sesame_forward.9} parent=11 // pred_check
        %p262 = pneg %p146
      $region30: #{sesame_forward.9} parent=11 // pred_check_branch
        %264 = sbr.rel (%p262) target = $region32
      $region31: #{sesame_forward.9} parent=11 // pred_region
        _
      $region32: #{sesame_forward.9} parent=11 // pred_fallthru
        _
      // Predicated region
      $region33: #{sesame_forward.9} parent=11 // pred_check
        %p265 = pneg %p167
      $region34: #{sesame_forward.9} parent=11 // pred_check_branch
        %267 = sbr.rel (%p265) target = $region36
      $region35: #{sesame_forward.9} parent=11 // pred_region
        _
      $region36: #{sesame_forward.9} parent=11 // pred_fallthru
        _
      // Predicated region
      $region37: #{sesame_forward.9} parent=11 // pred_check
        %p268 = pneg %p188
      $region38: #{sesame_forward.9} parent=11 // pred_check_branch
        %270 = sbr.rel (%p268) target = $region40
      $region39: #{sesame_forward.9} parent=11 // pred_region
        _
      $region40: #{sesame_forward.9} parent=11 // pred_fallthru
        _
      // Predicated region
      $region41: #{sesame_forward.9} parent=11 // pred_check
        %p271 = pneg %p209
      $region42: #{sesame_forward.9} parent=11 // pred_check_branch
        %273 = sbr.rel (%p271) target = $region44
      $region43: #{sesame_forward.9} parent=11 // pred_region
        _
      $region44: #{sesame_forward.9} parent=11 // pred_fallthru
        _
    $region12: #{sesame_forward.9} parent=5 // pred_fallthru
      _
    %p274 = scmp.lt.s32.totalorder %s15, 2
    // Predicated region
    $region45: #{sesame_forward.9} parent=5 // pred_check
      %p275 = pneg %p274
    $region46: #{sesame_forward.9} parent=5 // pred_check_branch
      %277 = sbr.rel (%p275) target = $region48
    $region47: #{sesame_forward.9} parent=5 // pred_region
      // Predicated region
      $region49: #{sesame_forward.9} parent=47 // pred_check
        %p278 = pneg %p35
      $region50: #{sesame_forward.9} parent=47 // pred_check_branch
        %280 = sbr.rel (%p278) target = $region52
      $region51: #{sesame_forward.9} parent=47 // pred_region
        %p281 = scmp.lt.s32.totalorder %s15, 1
        %s282 = scalar_select %p281, %s15, 1
        %s283 = smul.addr %s282, 16
        %s284 = smul.addr %s283, 8
        %s285 = scalar_lea.vmem %s0, %s284
      $region52: #{sesame_forward.9} parent=47 // pred_fallthru
        _
    $region48: #{sesame_forward.9} parent=5 // pred_fallthru
      _
    %p286 = scmp.le.s32.totalorder 1, %s15
    %p287 = scmp.lt.s32.totalorder %s15, 3
    %p288 = pnand %p286, %p287
    %p289 = pneg %p288
    // Predicated region
    $region53: #{sesame_forward.9} parent=5 // pred_check
      _
    $region54: #{sesame_forward.9} parent=5 // pred_check_branch
      %291 = sbr.rel (%p288) target = $region56
    $region55: #{sesame_forward.9} parent=5 // pred_region
      %s292 = ssub.s32 %s15, 1
      %p293 = scmp.lt.s32.totalorder %s20, 1
      %s294 = scalar_select %p293, %s20, 1
      %s295 = smul.addr %s294, 16
      %s296 = smul.addr %s295, 8
      %s297 = scalar_lea.vmem %s0, %s296
      %p298 = pneg %p41
      %p299 = pneg %p38
      %p300 = pneg %p62
      %p301 = pneg %p59
      %p302 = pneg %p83
      %p303 = pneg %p80
      %p304 = pneg %p104
      %p305 = pneg %p101
      %p306 = pneg %p125
      %p307 = pneg %p122
      %p308 = pneg %p146
      %p309 = pneg %p143
      %p310 = pneg %p167
      %p311 = pneg %p164
      %p312 = pneg %p188
      %p313 = pneg %p185
      %p314 = pneg %p209
      %p315 = pneg %p206
      %p316 = pneg %p235
      %p317 = pneg %p232
      %p318 = scmp.lt.s32.totalorder %s20, 1
      %s319 = scalar_select %p318, %s20, 1
      %s320 = smul.addr %s319, 16
      %s321 = smul.addr %s320, 8
      %s322 = scalar_lea.vmem %s9, %s321
      %p323 = scmp.lt.s32.totalorder %s20, 1
      %s324 = scalar_select %p323, %s20, 1
      %s325 = smul.addr %s324, 16
      %s326 = smul.addr %s325, 8
      %s327 = scalar_lea.vmem %s0, %s326
      %p328 = scmp.lt.s32.totalorder %s20, 1
      %s329 = scalar_select %p328, %s20, 1
      %s330 = smul.addr %s329, 16
      %s331 = smul.addr %s330, 8
      %s332 = scalar_lea.vmem %s9, %s331
      %v333 = vld [vmem:[%s327] sm:$0xff]
      %v334 = vld [vmem:[%s327 + $0x8] sm:$0xff]
      %v335 = vld [vmem:[%s327 + $0x10] sm:$0xff]
      %v336 = vld [vmem:[%s327 + $0x18] sm:$0xff]
      %v337 = vld [vmem:[%s327 + $0x20] sm:$0xff]
      %v338 = vld [vmem:[%s327 + $0x28] sm:$0xff]
      %v339 = vld [vmem:[%s327 + $0x30] sm:$0xff]
      %v340 = vld [vmem:[%s327 + $0x38] sm:$0xff]
      %v341 = vld [vmem:[%s327 + $0x40] sm:$0xff]
      %v342 = vld [vmem:[%s327 + $0x48] sm:$0xff]
      %v343 = vld [vmem:[%s327 + $0x50] sm:$0xff]
      %v344 = vld [vmem:[%s327 + $0x58] sm:$0xff]
      %v345 = vld [vmem:[%s327 + $0x60] sm:$0xff]
      %v346 = vld [vmem:[%s327 + $0x68] sm:$0xff]
      %v347 = vld [vmem:[%s327 + $0x70] sm:$0xff]
      %v348 = vld [vmem:[%s327 + $0x78] sm:$0xff]
      %v349 = vld [vmem:[%s1] sm:$0x1]
      %v350 = vld [vmem:[%s2] sm:$0xf]
      %v351 = vld [vmem:[%s3] sm:$0x1]
      %v352 = vld [vmem:[%s4] sm:$0x3]
      %v353 = vld [vmem:[%s5] sm:$0x1]
      %v354 = vld [vmem:[%s6] sm:$0x3]
      %v355 = vld [vmem:[%s7] sm:$0x1]
      %357 = vset.pattern.permute.xlu0 0
      %358 = vperm.xlu0 %357, %v333
      %v359 = vpop.permute.xlu0 %358
      %362 = vset.pattern.permute.xlu0 0
      %363 = vperm.xlu0 %362, %v334
      %v364 = vpop.permute.xlu0 %363
      %367 = vset.pattern.permute.xlu0 0
      %368 = vperm.xlu0 %367, %v335
      %v369 = vpop.permute.xlu0 %368
      %372 = vset.pattern.permute.xlu0 0
      %373 = vperm.xlu0 %372, %v336
      %v374 = vpop.permute.xlu0 %373
      %377 = vset.pattern.permute.xlu0 0
      %378 = vperm.xlu0 %377, %v337
      %v379 = vpop.permute.xlu0 %378
      %382 = vset.pattern.permute.xlu0 0
      %383 = vperm.xlu0 %382, %v338
      %v384 = vpop.permute.xlu0 %383
      %387 = vset.pattern.permute.xlu0 0
      %388 = vperm.xlu0 %387, %v339
      %v389 = vpop.permute.xlu0 %388
      %392 = vset.pattern.permute.xlu0 0
      %393 = vperm.xlu0 %392, %v340
      %v394 = vpop.permute.xlu0 %393
      %397 = vset.pattern.permute.xlu0 0
      %398 = vperm.xlu0 %397, %v341
      %v399 = vpop.permute.xlu0 %398
      %402 = vset.pattern.permute.xlu0 0
      %403 = vperm.xlu0 %402, %v342
      %v404 = vpop.permute.xlu0 %403
      %407 = vset.pattern.permute.xlu0 0
      %408 = vperm.xlu0 %407, %v343
      %v409 = vpop.permute.xlu0 %408
      %412 = vset.pattern.permute.xlu0 0
      %413 = vperm.xlu0 %412, %v344
      %v414 = vpop.permute.xlu0 %413
      %417 = vset.pattern.permute.xlu0 0
      %418 = vperm.xlu0 %417, %v345
      %v419 = vpop.permute.xlu0 %418
      %422 = vset.pattern.permute.xlu0 0
      %423 = vperm.xlu0 %422, %v346
      %v424 = vpop.permute.xlu0 %423
      %427 = vset.pattern.permute.xlu0 0
      %428 = vperm.xlu0 %427, %v347
      %v429 = vpop.permute.xlu0 %428
      %432 = vset.pattern.permute.xlu0 0
      %433 = vperm.xlu0 %432, %v348
      %v434 = vpop.permute.xlu0 %433
      %v437 = vlaneseq
      %v438 = vshrl.u32 %v437, 7
      %v439 = vsub.s32 0, %v438
      %v440 = vrot.slane %v349, %v439
      %v442 = vmul.f32 %v359, %v440
      %v443 = vmul.f32 %v364, %v440
      %v444 = vmul.f32 %v369, %v440
      %v445 = vmul.f32 %v374, %v440
      %v446 = vmul.f32 %v379, %v440
      %v447 = vmul.f32 %v384, %v440
      %v448 = vmul.f32 %v389, %v440
      %v449 = vmul.f32 %v394, %v440
      %v450 = vmul.f32 %v399, %v440
      %v451 = vmul.f32 %v404, %v440
      %v452 = vmul.f32 %v409, %v440
      %v453 = vmul.f32 %v414, %v440
      %v454 = vmul.f32 %v419, %v440
      %v455 = vmul.f32 %v424, %v440
      %v456 = vmul.f32 %v429, %v440
      %v457 = vmul.f32 %v434, %v440
      %vm458 = vcmask 15360
      %459 = vst.msk [vmem:[#allocation2] sm:$0xff] %vm458, 0.0
      %460 = vst.msk [vmem:[#allocation2 + $0x8] sm:$0xff] %vm458, %v442
      %461 = vst.msk [vmem:[#allocation2 + $0x10] sm:$0xff] %vm458, %v443
      %462 = vst.msk [vmem:[#allocation2 + $0x18] sm:$0xff] %vm458, %v444
      %463 = vst.msk [vmem:[#allocation2 + $0x20] sm:$0xff] %vm458, %v445
      %464 = vst.msk [vmem:[#allocation2 + $0x28] sm:$0xff] %vm458, %v446
      %465 = vst.msk [vmem:[#allocation2 + $0x30] sm:$0xff] %vm458, %v447
      %466 = vst.msk [vmem:[#allocation2 + $0x38] sm:$0xff] %vm458, %v448
      %467 = vst.msk [vmem:[#allocation2 + $0x40] sm:$0xff] %vm458, %v449
      %468 = vst.msk [vmem:[#allocation2 + $0x48] sm:$0xff] %vm458, %v450
      %469 = vst.msk [vmem:[#allocation2 + $0x50] sm:$0xff] %vm458, %v451
      %470 = vst.msk [vmem:[#allocation2 + $0x58] sm:$0xff] %vm458, %v452
      %471 = vst.msk [vmem:[#allocation2 + $0x60] sm:$0xff] %vm458, %v453
      %472 = vst.msk [vmem:[#allocation2 + $0x68] sm:$0xff] %vm458, %v454
      %473 = vst.msk [vmem:[#allocation2 + $0x70] sm:$0xff] %vm458, %v455
      %474 = vst.msk [vmem:[#allocation2 + $0x78] sm:$0xff] %vm458, %v456
      %475 = vst.msk [vmem:[#allocation2 + $0x80] sm:$0xff] %vm458, %v457
      %v476 = vlaneseq
      %v477 = vshrl.u32 %v476, 7
      %v478 = vsub.s32 3, %v477
      %v479 = vrot.slane %v350, %v478
      %v480 = vmul.f32 %v442, %v479
      %v481 = vmul.f32 %v443, %v479
      %v482 = vmul.f32 %v444, %v479
      %v483 = vmul.f32 %v445, %v479
      %v484 = vmul.f32 %v446, %v479
      %v485 = vmul.f32 %v447, %v479
      %v486 = vmul.f32 %v448, %v479
      %v487 = vmul.f32 %v449, %v479
      %v488 = vmul.f32 %v450, %v479
      %v489 = vmul.f32 %v451, %v479
      %v490 = vmul.f32 %v452, %v479
      %v491 = vmul.f32 %v453, %v479
      %v492 = vmul.f32 %v454, %v479
      %v493 = vmul.f32 %v455, %v479
      %v494 = vmul.f32 %v456, %v479
      %v495 = vmul.f32 %v457, %v479
      %v496 = vld [vmem:[#allocation2 + $0x7] sm:$0xff]
      %v497 = vld [vmem:[#allocation2 + $0xf] sm:$0xff]
      %v498 = vld [vmem:[#allocation2 + $0x17] sm:$0xff]
      %v499 = vld [vmem:[#allocation2 + $0x1f] sm:$0xff]
      %v500 = vld [vmem:[#allocation2 + $0x27] sm:$0xff]
      %v501 = vld [vmem:[#allocation2 + $0x2f] sm:$0xff]
      %v502 = vld [vmem:[#allocation2 + $0x37] sm:$0xff]
      %v503 = vld [vmem:[#allocation2 + $0x3f] sm:$0xff]
      %v504 = vld [vmem:[#allocation2 + $0x47] sm:$0xff]
      %v505 = vld [vmem:[#allocation2 + $0x4f] sm:$0xff]
      %v506 = vld [vmem:[#allocation2 + $0x57] sm:$0xff]
      %v507 = vld [vmem:[#allocation2 + $0x5f] sm:$0xff]
      %v508 = vld [vmem:[#allocation2 + $0x67] sm:$0xff]
      %v509 = vld [vmem:[#allocation2 + $0x6f] sm:$0xff]
      %v510 = vld [vmem:[#allocation2 + $0x77] sm:$0xff]
      %v511 = vld [vmem:[#allocation2 + $0x7f] sm:$0xff]
      %v512 = vlaneseq
      %v513 = vshrl.u32 %v512, 7
      %v514 = vsub.s32 2, %v513
      %v515 = vrot.slane %v350, %v514
      %v516 = vmul.f32 %v496, %v515
      %v517 = vmul.f32 %v497, %v515
      %v518 = vmul.f32 %v498, %v515
      %v519 = vmul.f32 %v499, %v515
      %v520 = vmul.f32 %v500, %v515
      %v521 = vmul.f32 %v501, %v515
      %v522 = vmul.f32 %v502, %v515
      %v523 = vmul.f32 %v503, %v515
      %v524 = vmul.f32 %v504, %v515
      %v525 = vmul.f32 %v505, %v515
      %v526 = vmul.f32 %v506, %v515
      %v527 = vmul.f32 %v507, %v515
      %v528 = vmul.f32 %v508, %v515
      %v529 = vmul.f32 %v509, %v515
      %v530 = vmul.f32 %v510, %v515
      %v531 = vmul.f32 %v511, %v515
      %v532 = vadd.f32 %v480, %v516
      %v533 = vadd.f32 %v481, %v517
      %v534 = vadd.f32 %v482, %v518
      %v535 = vadd.f32 %v483, %v519
      %v536 = vadd.f32 %v484, %v520
      %v537 = vadd.f32 %v485, %v521
      %v538 = vadd.f32 %v486, %v522
      %v539 = vadd.f32 %v487, %v523
      %v540 = vadd.f32 %v488, %v524
      %v541 = vadd.f32 %v489, %v525
      %v542 = vadd.f32 %v490, %v526
      %v543 = vadd.f32 %v491, %v527
      %v544 = vadd.f32 %v492, %v528
      %v545 = vadd.f32 %v493, %v529
      %v546 = vadd.f32 %v494, %v530
      %v547 = vadd.f32 %v495, %v531
      %v548 = vld [vmem:[#allocation2 + $0x6] sm:$0xff]
      %v549 = vld [vmem:[#allocation2 + $0xe] sm:$0xff]
      %v550 = vld [vmem:[#allocation2 + $0x16] sm:$0xff]
      %v551 = vld [vmem:[#allocation2 + $0x1e] sm:$0xff]
      %v552 = vld [vmem:[#allocation2 + $0x26] sm:$0xff]
      %v553 = vld [vmem:[#allocation2 + $0x2e] sm:$0xff]
      %v554 = vld [vmem:[#allocation2 + $0x36] sm:$0xff]
      %v555 = vld [vmem:[#allocation2 + $0x3e] sm:$0xff]
      %v556 = vld [vmem:[#allocation2 + $0x46] sm:$0xff]
      %v557 = vld [vmem:[#allocation2 + $0x4e] sm:$0xff]
      %v558 = vld [vmem:[#allocation2 + $0x56] sm:$0xff]
      %v559 = vld [vmem:[#allocation2 + $0x5e] sm:$0xff]
      %v560 = vld [vmem:[#allocation2 + $0x66] sm:$0xff]
      %v561 = vld [vmem:[#allocation2 + $0x6e] sm:$0xff]
      %v562 = vld [vmem:[#allocation2 + $0x76] sm:$0xff]
      %v563 = vld [vmem:[#allocation2 + $0x7e] sm:$0xff]
      %v564 = vlaneseq
      %v565 = vshrl.u32 %v564, 7
      %v566 = vsub.s32 1, %v565
      %v567 = vrot.slane %v350, %v566
      %v568 = vmul.f32 %v548, %v567
      %v569 = vmul.f32 %v549, %v567
      %v570 = vmul.f32 %v550, %v567
      %v571 = vmul.f32 %v551, %v567
      %v572 = vmul.f32 %v552, %v567
      %v573 = vmul.f32 %v553, %v567
      %v574 = vmul.f32 %v554, %v567
      %v575 = vmul.f32 %v555, %v567
      %v576 = vmul.f32 %v556, %v567
      %v577 = vmul.f32 %v557, %v567
      %v578 = vmul.f32 %v558, %v567
      %v579 = vmul.f32 %v559, %v567
      %v580 = vmul.f32 %v560, %v567
      %v581 = vmul.f32 %v561, %v567
      %v582 = vmul.f32 %v562, %v567
      %v583 = vmul.f32 %v563, %v567
      %v584 = vadd.f32 %v532, %v568
      %v585 = vadd.f32 %v533, %v569
      %v586 = vadd.f32 %v534, %v570
      %v587 = vadd.f32 %v535, %v571
      %v588 = vadd.f32 %v536, %v572
      %v589 = vadd.f32 %v537, %v573
      %v590 = vadd.f32 %v538, %v574
      %v591 = vadd.f32 %v539, %v575
      %v592 = vadd.f32 %v540, %v576
      %v593 = vadd.f32 %v541, %v577
      %v594 = vadd.f32 %v542, %v578
      %v595 = vadd.f32 %v543, %v579
      %v596 = vadd.f32 %v544, %v580
      %v597 = vadd.f32 %v545, %v581
      %v598 = vadd.f32 %v546, %v582
      %v599 = vadd.f32 %v547, %v583
      %v600 = vld [vmem:[#allocation2 + $0x5] sm:$0xff]
      %v601 = vld [vmem:[#allocation2 + $0xd] sm:$0xff]
      %v602 = vld [vmem:[#allocation2 + $0x15] sm:$0xff]
      %v603 = vld [vmem:[#allocation2 + $0x1d] sm:$0xff]
      %v604 = vld [vmem:[#allocation2 + $0x25] sm:$0xff]
      %v605 = vld [vmem:[#allocation2 + $0x2d] sm:$0xff]
      %v606 = vld [vmem:[#allocation2 + $0x35] sm:$0xff]
      %v607 = vld [vmem:[#allocation2 + $0x3d] sm:$0xff]
      %v608 = vld [vmem:[#allocation2 + $0x45] sm:$0xff]
      %v609 = vld [vmem:[#allocation2 + $0x4d] sm:$0xff]
      %v610 = vld [vmem:[#allocation2 + $0x55] sm:$0xff]
      %v611 = vld [vmem:[#allocation2 + $0x5d] sm:$0xff]
      %v612 = vld [vmem:[#allocation2 + $0x65] sm:$0xff]
      %v613 = vld [vmem:[#allocation2 + $0x6d] sm:$0xff]
      %v614 = vld [vmem:[#allocation2 + $0x75] sm:$0xff]
      %v615 = vld [vmem:[#allocation2 + $0x7d] sm:$0xff]
      %v616 = vlaneseq
      %v617 = vshrl.u32 %v616, 7
      %v618 = vsub.s32 0, %v617
      %v619 = vrot.slane %v350, %v618
      %v620 = vmul.f32 %v600, %v619
      %v621 = vmul.f32 %v601, %v619
      %v622 = vmul.f32 %v602, %v619
      %v623 = vmul.f32 %v603, %v619
      %v624 = vmul.f32 %v604, %v619
      %v625 = vmul.f32 %v605, %v619
      %v626 = vmul.f32 %v606, %v619
      %v627 = vmul.f32 %v607, %v619
      %v628 = vmul.f32 %v608, %v619
      %v629 = vmul.f32 %v609, %v619
      %v630 = vmul.f32 %v610, %v619
      %v631 = vmul.f32 %v611, %v619
      %v632 = vmul.f32 %v612, %v619
      %v633 = vmul.f32 %v613, %v619
      %v634 = vmul.f32 %v614, %v619
      %v635 = vmul.f32 %v615, %v619
      %v636 = vadd.f32 %v584, %v620
      %v637 = vadd.f32 %v585, %v621
      %v638 = vadd.f32 %v586, %v622
      %v639 = vadd.f32 %v587, %v623
      %v640 = vadd.f32 %v588, %v624
      %v641 = vadd.f32 %v589, %v625
      %v642 = vadd.f32 %v590, %v626
      %v643 = vadd.f32 %v591, %v627
      %v644 = vadd.f32 %v592, %v628
      %v645 = vadd.f32 %v593, %v629
      %v646 = vadd.f32 %v594, %v630
      %v647 = vadd.f32 %v595, %v631
      %v648 = vadd.f32 %v596, %v632
      %v649 = vadd.f32 %v597, %v633
      %v650 = vadd.f32 %v598, %v634
      %v651 = vadd.f32 %v599, %v635
      %v653 = vlaneseq
      %v654 = vshrl.u32 %v653, 7
      %v655 = vsub.s32 0, %v654
      %v656 = vrot.slane %v351, %v655
      %v658 = vadd.f32 %v636, %v656
      %v659 = vadd.f32 %v637, %v656
      %v660 = vadd.f32 %v638, %v656
      %v661 = vadd.f32 %v639, %v656
      %v662 = vadd.f32 %v640, %v656
      %v663 = vadd.f32 %v641, %v656
      %v664 = vadd.f32 %v642, %v656
      %v665 = vadd.f32 %v643, %v656
      %v666 = vadd.f32 %v644, %v656
      %v667 = vadd.f32 %v645, %v656
      %v668 = vadd.f32 %v646, %v656
      %v669 = vadd.f32 %v647, %v656
      %v670 = vadd.f32 %v648, %v656
      %v671 = vadd.f32 %v649, %v656
      %v672 = vadd.f32 %v650, %v656
      %v673 = vadd.f32 %v651, %v656
      %v674 = vxor.u32 %v658, 2147483648
      %v675 = vxor.u32 %v659, 2147483648
      %v676 = vxor.u32 %v660, 2147483648
      %v677 = vxor.u32 %v661, 2147483648
      %v678 = vxor.u32 %v662, 2147483648
      %v679 = vxor.u32 %v663, 2147483648
      %v680 = vxor.u32 %v664, 2147483648
      %v681 = vxor.u32 %v665, 2147483648
      %v682 = vxor.u32 %v666, 2147483648
      %v683 = vxor.u32 %v667, 2147483648
      %v684 = vxor.u32 %v668, 2147483648
      %v685 = vxor.u32 %v669, 2147483648
      %v686 = vxor.u32 %v670, 2147483648
      %v687 = vxor.u32 %v671, 2147483648
      %v688 = vxor.u32 %v672, 2147483648
      %v689 = vxor.u32 %v673, 2147483648
      %v690 = vmul.f32 %v674, 1.442695
      %v691 = vpow.pop %v690
      %v692 = vmul.f32 %v675, 1.442695
      %v693 = vpow.pop %v692
      %v694 = vmul.f32 %v676, 1.442695
      %v695 = vpow.pop %v694
      %v696 = vmul.f32 %v677, 1.442695
      %v697 = vpow.pop %v696
      %v698 = vmul.f32 %v678, 1.442695
      %v699 = vpow.pop %v698
      %v700 = vmul.f32 %v679, 1.442695
      %v701 = vpow.pop %v700
      %v702 = vmul.f32 %v680, 1.442695
      %v703 = vpow.pop %v702
      %v704 = vmul.f32 %v681, 1.442695
      %v705 = vpow.pop %v704
      %v706 = vmul.f32 %v682, 1.442695
      %v707 = vpow.pop %v706
      %v708 = vmul.f32 %v683, 1.442695
      %v709 = vpow.pop %v708
      %v710 = vmul.f32 %v684, 1.442695
      %v711 = vpow.pop %v710
      %v712 = vmul.f32 %v685, 1.442695
      %v713 = vpow.pop %v712
      %v714 = vmul.f32 %v686, 1.442695
      %v715 = vpow.pop %v714
      %v716 = vmul.f32 %v687, 1.442695
      %v717 = vpow.pop %v716
      %v718 = vmul.f32 %v688, 1.442695
      %v719 = vpow.pop %v718
      %v720 = vmul.f32 %v689, 1.442695
      %v721 = vpow.pop %v720
      %v722 = vadd.f32 %v691, 1.0
      %v723 = vadd.f32 %v693, 1.0
      %v724 = vadd.f32 %v695, 1.0
      %v725 = vadd.f32 %v697, 1.0
      %v726 = vadd.f32 %v699, 1.0
      %v727 = vadd.f32 %v701, 1.0
      %v728 = vadd.f32 %v703, 1.0
      %v729 = vadd.f32 %v705, 1.0
      %v730 = vadd.f32 %v707, 1.0
      %v731 = vadd.f32 %v709, 1.0
      %v732 = vadd.f32 %v711, 1.0
      %v733 = vadd.f32 %v713, 1.0
      %v734 = vadd.f32 %v715, 1.0
      %v735 = vadd.f32 %v717, 1.0
      %v736 = vadd.f32 %v719, 1.0
      %v737 = vadd.f32 %v721, 1.0
      %v738 = vrcp.pop %v722
      %v739 = vmul.f32 1.0, %v738
      %v740 = vrcp.pop %v723
      %v741 = vmul.f32 1.0, %v740
      %v742 = vrcp.pop %v724
      %v743 = vmul.f32 1.0, %v742
      %v744 = vrcp.pop %v725
      %v745 = vmul.f32 1.0, %v744
      %v746 = vrcp.pop %v726
      %v747 = vmul.f32 1.0, %v746
      %v748 = vrcp.pop %v727
      %v749 = vmul.f32 1.0, %v748
      %v750 = vrcp.pop %v728
      %v751 = vmul.f32 1.0, %v750
      %v752 = vrcp.pop %v729
      %v753 = vmul.f32 1.0, %v752
      %v754 = vrcp.pop %v730
      %v755 = vmul.f32 1.0, %v754
      %v756 = vrcp.pop %v731
      %v757 = vmul.f32 1.0, %v756
      %v758 = vrcp.pop %v732
      %v759 = vmul.f32 1.0, %v758
      %v760 = vrcp.pop %v733
      %v761 = vmul.f32 1.0, %v760
      %v762 = vrcp.pop %v734
      %v763 = vmul.f32 1.0, %v762
      %v764 = vrcp.pop %v735
      %v765 = vmul.f32 1.0, %v764
      %v766 = vrcp.pop %v736
      %v767 = vmul.f32 1.0, %v766
      %v768 = vrcp.pop %v737
      %v769 = vmul.f32 1.0, %v768
      %v770 = vmul.f32 %v658, %v739
      %v771 = vmul.f32 %v659, %v741
      %v772 = vmul.f32 %v660, %v743
      %v773 = vmul.f32 %v661, %v745
      %v774 = vmul.f32 %v662, %v747
      %v775 = vmul.f32 %v663, %v749
      %v776 = vmul.f32 %v664, %v751
      %v777 = vmul.f32 %v665, %v753
      %v778 = vmul.f32 %v666, %v755
      %v779 = vmul.f32 %v667, %v757
      %v780 = vmul.f32 %v668, %v759
      %v781 = vmul.f32 %v669, %v761
      %v782 = vmul.f32 %v670, %v763
      %v783 = vmul.f32 %v671, %v765
      %v784 = vmul.f32 %v672, %v767
      %v785 = vmul.f32 %v673, %v769
      %v787 = vsel %vm458, %v770, 0
      %v790 = vsel %vm458, %v771, 0
      %v793 = vsel %vm458, %v772, 0
      %v796 = vsel %vm458, %v773, 0
      %v799 = vsel %vm458, %v774, 0
      %v802 = vsel %vm458, %v775, 0
      %v805 = vsel %vm458, %v776, 0
      %v808 = vsel %vm458, %v777, 0
      %v811 = vsel %vm458, %v778, 0
      %v814 = vsel %vm458, %v779, 0
      %v817 = vsel %vm458, %v780, 0
      %v820 = vsel %vm458, %v781, 0
      %v823 = vsel %vm458, %v782, 0
      %v826 = vsel %vm458, %v783, 0
      %v829 = vsel %vm458, %v784, 0
      %v832 = vsel %vm458, %v785, 0
      %vm834 = vcmask 1041408
      %v836 = vsel %vm834, %v352, 0
      %838 = vmatprep.subr.mxu0 0.0
      %839 = vmatpush1.msra.mxu0 0.0
      %840 = vmatprep.subr.mxu0 0.0
      %841 = vmatpush1.msra.mxu0 0.0
      %842 = vmatprep.subr.mxu0 0.0
      %843 = vmatpush1.msra.mxu0 0.0
      %844 = vmatprep.subr.mxu0 0.0
      %845 = vmatpush1.msra.mxu0 0.0
      %846 = vmatprep.subr.mxu0 0.0
      %847 = vmatpush1.msra.mxu0 0.0
      %848 = vmatprep.subr.mxu0 0.0
      %849 = vmatpush1.msra.mxu0 0.0
      %850 = vmatprep.subr.mxu0 0.0
      %851 = vmatpush1.msra.mxu0 0.0
      %852 = vmatprep.subr.mxu0 0.0
      %853 = vmatpush1.msra.mxu0 0.0
      %854 = vmatprep.subr.mxu0 0.0
      %855 = vmatpush1.msra.mxu0 0.0
      %856 = vmatprep.subr.mxu0 0.0
      %857 = vmatpush1.msra.mxu0 0.0
      %858 = vmatprep.subr.mxu0 0.0
      %859 = vmatpush1.msra.mxu0 0.0
      %860 = vmatprep.subr.mxu0 0.0
      %861 = vmatpush1.msra.mxu0 0.0
      %862 = vmatprep.subr.mxu0 0.0
      %863 = vmatpush1.msra.mxu0 0.0
      %864 = vmatprep.subr.mxu0 0.0
      %865 = vmatpush1.msra.mxu0 0.0
      %866 = vmatprep.subr.mxu0 0.0
      %867 = vmatpush1.msra.mxu0 0.0
      %868 = vmatprep.subr.mxu0 0.0
      %869 = vmatpush1.msra.mxu0 %v836
      %870 = vmatprep.subr.mxu0 0.0
      %871 = vmatpush2.msra.mxu0 0.0
      %872 = vmatprep.subr.mxu0 0.0
      %873 = vmatpush2.msra.mxu0 0.0
      %874 = vmatprep.subr.mxu0 0.0
      %875 = vmatpush2.msra.mxu0 0.0
      %876 = vmatprep.subr.mxu0 0.0
      %877 = vmatpush2.msra.mxu0 0.0
      %878 = vmatprep.subr.mxu0 0.0
      %879 = vmatpush2.msra.mxu0 0.0
      %880 = vmatprep.subr.mxu0 0.0
      %881 = vmatpush2.msra.mxu0 0.0
      %882 = vmatprep.subr.mxu0 0.0
      %883 = vmatpush2.msra.mxu0 0.0
      %884 = vmatprep.subr.mxu0 0.0
      %885 = vmatpush2.msra.mxu0 0.0
      %886 = vmatprep.subr.mxu0 0.0
      %887 = vmatpush2.msra.mxu0 0.0
      %888 = vmatprep.subr.mxu0 0.0
      %889 = vmatpush2.msra.mxu0 0.0
      %890 = vmatprep.subr.mxu0 0.0
      %891 = vmatpush2.msra.mxu0 0.0
      %892 = vmatprep.subr.mxu0 0.0
      %893 = vmatpush2.msra.mxu0 0.0
      %894 = vmatprep.subr.mxu0 0.0
      %895 = vmatpush2.msra.mxu0 0.0
      %896 = vmatprep.subr.mxu0 0.0
      %897 = vmatpush2.msra.mxu0 0.0
      %898 = vmatprep.subr.mxu0 0.0
      %899 = vmatpush2.msra.mxu0 0.0
      %900 = vmatprep.subr.mxu0 0.0
      %901 = vmatpush2.msra.mxu0 0.0
      %902 = vmatprep.mubr.f32.mxu0 0.0
      %903 = vmatmul.mubr.f32.gmra.mxu0 %v787
      %v904 = vpop.f32.mrf.mxu0
      %v905 = vadd.f32 0.0, %v904
      %v906 = vpop.f32.mrf.mxu0
      %907 = vmatprep.mubr.f32.mxu0 0.0
      %908 = vmatmul.mubr.f32.gmra.mxu0 %v790
      %v909 = vpop.f32.mrf.mxu0
      %v910 = vadd.f32 0.0, %v909
      %v911 = vpop.f32.mrf.mxu0
      %912 = vmatprep.mubr.f32.mxu0 0.0
      %913 = vmatmul.mubr.f32.gmra.mxu0 %v793
      %v914 = vpop.f32.mrf.mxu0
      %v915 = vadd.f32 0.0, %v914
      %v916 = vpop.f32.mrf.mxu0
      %917 = vmatprep.mubr.f32.mxu0 0.0
      %918 = vmatmul.mubr.f32.gmra.mxu0 %v796
      %v919 = vpop.f32.mrf.mxu0
      %v920 = vadd.f32 0.0, %v919
      %v921 = vpop.f32.mrf.mxu0
      %922 = vmatprep.mubr.f32.mxu0 0.0
      %923 = vmatmul.mubr.f32.gmra.mxu0 %v799
      %v924 = vpop.f32.mrf.mxu0
      %v925 = vadd.f32 0.0, %v924
      %v926 = vpop.f32.mrf.mxu0
      %927 = vmatprep.mubr.f32.mxu0 0.0
      %928 = vmatmul.mubr.f32.gmra.mxu0 %v802
      %v929 = vpop.f32.mrf.mxu0
      %v930 = vadd.f32 0.0, %v929
      %v931 = vpop.f32.mrf.mxu0
      %932 = vmatprep.mubr.f32.mxu0 0.0
      %933 = vmatmul.mubr.f32.gmra.mxu0 %v805
      %v934 = vpop.f32.mrf.mxu0
      %v935 = vadd.f32 0.0, %v934
      %v936 = vpop.f32.mrf.mxu0
      %937 = vmatprep.mubr.f32.mxu0 0.0
      %938 = vmatmul.mubr.f32.gmra.mxu0 %v808
      %v939 = vpop.f32.mrf.mxu0
      %v940 = vadd.f32 0.0, %v939
      %v941 = vpop.f32.mrf.mxu0
      %942 = vmatprep.mubr.f32.mxu0 0.0
      %943 = vmatmul.mubr.f32.gmra.mxu0 %v811
      %v944 = vpop.f32.mrf.mxu0
      %v945 = vadd.f32 0.0, %v944
      %v946 = vpop.f32.mrf.mxu0
      %947 = vmatprep.mubr.f32.mxu0 0.0
      %948 = vmatmul.mubr.f32.gmra.mxu0 %v814
      %v949 = vpop.f32.mrf.mxu0
      %v950 = vadd.f32 0.0, %v949
      %v951 = vpop.f32.mrf.mxu0
      %952 = vmatprep.mubr.f32.mxu0 0.0
      %953 = vmatmul.mubr.f32.gmra.mxu0 %v817
      %v954 = vpop.f32.mrf.mxu0
      %v955 = vadd.f32 0.0, %v954
      %v956 = vpop.f32.mrf.mxu0
      %957 = vmatprep.mubr.f32.mxu0 0.0
      %958 = vmatmul.mubr.f32.gmra.mxu0 %v820
      %v959 = vpop.f32.mrf.mxu0
      %v960 = vadd.f32 0.0, %v959
      %v961 = vpop.f32.mrf.mxu0
      %962 = vmatprep.mubr.f32.mxu0 0.0
      %963 = vmatmul.mubr.f32.gmra.mxu0 %v823
      %v964 = vpop.f32.mrf.mxu0
      %v965 = vadd.f32 0.0, %v964
      %v966 = vpop.f32.mrf.mxu0
      %967 = vmatprep.mubr.f32.mxu0 0.0
      %968 = vmatmul.mubr.f32.gmra.mxu0 %v826
      %v969 = vpop.f32.mrf.mxu0
      %v970 = vadd.f32 0.0, %v969
      %v971 = vpop.f32.mrf.mxu0
      %972 = vmatprep.mubr.f32.mxu0 0.0
      %973 = vmatmul.mubr.f32.gmra.mxu0 %v829
      %v974 = vpop.f32.mrf.mxu0
      %v975 = vadd.f32 0.0, %v974
      %v976 = vpop.f32.mrf.mxu0
      %977 = vmatprep.mubr.f32.mxu0 0.0
      %978 = vmatmul.mubr.f32.gmra.mxu0 %v832
      %v979 = vpop.f32.mrf.mxu0
      %v980 = vadd.f32 0.0, %v979
      %v981 = vpop.f32.mrf.mxu0
      %982 = vdwg.mxu0
      %v984 = vlaneseq
      %v985 = vshrl.u32 %v984, 7
      %v986 = vsub.s32 0, %v985
      %v987 = vrot.slane %v353, %v986
      %v989 = vadd.f32 %v905, %v987
      %v990 = vadd.f32 %v910, %v987
      %v991 = vadd.f32 %v915, %v987
      %v992 = vadd.f32 %v920, %v987
      %v993 = vadd.f32 %v925, %v987
      %v994 = vadd.f32 %v930, %v987
      %v995 = vadd.f32 %v935, %v987
      %v996 = vadd.f32 %v940, %v987
      %v997 = vadd.f32 %v945, %v987
      %v998 = vadd.f32 %v950, %v987
      %v999 = vadd.f32 %v955, %v987
      %v1000 = vadd.f32 %v960, %v987
      %v1001 = vadd.f32 %v965, %v987
      %v1002 = vadd.f32 %v970, %v987
      %v1003 = vadd.f32 %v975, %v987
      %v1004 = vadd.f32 %v980, %v987
      %vm1005 = vcmp.gt.f32.partialorder %v989, 20.0
      %vm1006 = vcmp.gt.f32.partialorder %v990, 20.0
      %vm1007 = vcmp.gt.f32.partialorder %v991, 20.0
      %vm1008 = vcmp.gt.f32.partialorder %v992, 20.0
      %vm1009 = vcmp.gt.f32.partialorder %v993, 20.0
      %vm1010 = vcmp.gt.f32.partialorder %v994, 20.0
      %vm1011 = vcmp.gt.f32.partialorder %v995, 20.0
      %vm1012 = vcmp.gt.f32.partialorder %v996, 20.0
      %vm1013 = vcmp.gt.f32.partialorder %v997, 20.0
      %vm1014 = vcmp.gt.f32.partialorder %v998, 20.0
      %vm1015 = vcmp.gt.f32.partialorder %v999, 20.0
      %vm1016 = vcmp.gt.f32.partialorder %v1000, 20.0
      %vm1017 = vcmp.gt.f32.partialorder %v1001, 20.0
      %vm1018 = vcmp.gt.f32.partialorder %v1002, 20.0
      %vm1019 = vcmp.gt.f32.partialorder %v1003, 20.0
      %vm1020 = vcmp.gt.f32.partialorder %v1004, 20.0
      %v1021 = vmin.f32 %v989, 20.0
      %v1022 = vmin.f32 %v990, 20.0
      %v1023 = vmin.f32 %v991, 20.0
      %v1024 = vmin.f32 %v992, 20.0
      %v1025 = vmin.f32 %v993, 20.0
      %v1026 = vmin.f32 %v994, 20.0
      %v1027 = vmin.f32 %v995, 20.0
      %v1028 = vmin.f32 %v996, 20.0
      %v1029 = vmin.f32 %v997, 20.0
      %v1030 = vmin.f32 %v998, 20.0
      %v1031 = vmin.f32 %v999, 20.0
      %v1032 = vmin.f32 %v1000, 20.0
      %v1033 = vmin.f32 %v1001, 20.0
      %v1034 = vmin.f32 %v1002, 20.0
      %v1035 = vmin.f32 %v1003, 20.0
      %v1036 = vmin.f32 %v1004, 20.0
      %v1037 = vmul.f32 %v1021, 1.442695
      %v1038 = vpow.pop %v1037
      %v1039 = vmul.f32 %v1022, 1.442695
      %v1040 = vpow.pop %v1039
      %v1041 = vmul.f32 %v1023, 1.442695
      %v1042 = vpow.pop %v1041
      %v1043 = vmul.f32 %v1024, 1.442695
      %v1044 = vpow.pop %v1043
      %v1045 = vmul.f32 %v1025, 1.442695
      %v1046 = vpow.pop %v1045
      %v1047 = vmul.f32 %v1026, 1.442695
      %v1048 = vpow.pop %v1047
      %v1049 = vmul.f32 %v1027, 1.442695
      %v1050 = vpow.pop %v1049
      %v1051 = vmul.f32 %v1028, 1.442695
      %v1052 = vpow.pop %v1051
      %v1053 = vmul.f32 %v1029, 1.442695
      %v1054 = vpow.pop %v1053
      %v1055 = vmul.f32 %v1030, 1.442695
      %v1056 = vpow.pop %v1055
      %v1057 = vmul.f32 %v1031, 1.442695
      %v1058 = vpow.pop %v1057
      %v1059 = vmul.f32 %v1032, 1.442695
      %v1060 = vpow.pop %v1059
      %v1061 = vmul.f32 %v1033, 1.442695
      %v1062 = vpow.pop %v1061
      %v1063 = vmul.f32 %v1034, 1.442695
      %v1064 = vpow.pop %v1063
      %v1065 = vmul.f32 %v1035, 1.442695
      %v1066 = vpow.pop %v1065
      %v1067 = vmul.f32 %v1036, 1.442695
      %v1068 = vpow.pop %v1067
      %v1069 = vadd.f32 %v1038, 1.0
      %v1070 = vadd.f32 %v1040, 1.0
      %v1071 = vadd.f32 %v1042, 1.0
      %v1072 = vadd.f32 %v1044, 1.0
      %v1073 = vadd.f32 %v1046, 1.0
      %v1074 = vadd.f32 %v1048, 1.0
      %v1075 = vadd.f32 %v1050, 1.0
      %v1076 = vadd.f32 %v1052, 1.0
      %v1077 = vadd.f32 %v1054, 1.0
      %v1078 = vadd.f32 %v1056, 1.0
      %v1079 = vadd.f32 %v1058, 1.0
      %v1080 = vadd.f32 %v1060, 1.0
      %v1081 = vadd.f32 %v1062, 1.0
      %v1082 = vadd.f32 %v1064, 1.0
      %v1083 = vadd.f32 %v1066, 1.0
      %v1084 = vadd.f32 %v1068, 1.0
      %v1085 = vlog2.pop %v1069
      %v1086 = vmul.f32 %v1085, 0.6931472
      %v1087 = vlog2.pop %v1070
      %v1088 = vmul.f32 %v1087, 0.6931472
      %v1089 = vlog2.pop %v1071
      %v1090 = vmul.f32 %v1089, 0.6931472
      %v1091 = vlog2.pop %v1072
      %v1092 = vmul.f32 %v1091, 0.6931472
      %v1093 = vlog2.pop %v1073
      %v1094 = vmul.f32 %v1093, 0.6931472
      %v1095 = vlog2.pop %v1074
      %v1096 = vmul.f32 %v1095, 0.6931472
      %v1097 = vlog2.pop %v1075
      %v1098 = vmul.f32 %v1097, 0.6931472
      %v1099 = vlog2.pop %v1076
      %v1100 = vmul.f32 %v1099, 0.6931472
      %v1101 = vlog2.pop %v1077
      %v1102 = vmul.f32 %v1101, 0.6931472
      %v1103 = vlog2.pop %v1078
      %v1104 = vmul.f32 %v1103, 0.6931472
      %v1105 = vlog2.pop %v1079
      %v1106 = vmul.f32 %v1105, 0.6931472
      %v1107 = vlog2.pop %v1080
      %v1108 = vmul.f32 %v1107, 0.6931472
      %v1109 = vlog2.pop %v1081
      %v1110 = vmul.f32 %v1109, 0.6931472
      %v1111 = vlog2.pop %v1082
      %v1112 = vmul.f32 %v1111, 0.6931472
      %v1113 = vlog2.pop %v1083
      %v1114 = vmul.f32 %v1113, 0.6931472
      %v1115 = vlog2.pop %v1084
      %v1116 = vmul.f32 %v1115, 0.6931472
      %v1117 = vsel %vm1005, %v989, %v1086
      %v1118 = vsel %vm1006, %v990, %v1088
      %v1119 = vsel %vm1007, %v991, %v1090
      %v1120 = vsel %vm1008, %v992, %v1092
      %v1121 = vsel %vm1009, %v993, %v1094
      %v1122 = vsel %vm1010, %v994, %v1096
      %v1123 = vsel %vm1011, %v995, %v1098
      %v1124 = vsel %vm1012, %v996, %v1100
      %v1125 = vsel %vm1013, %v997, %v1102
      %v1126 = vsel %vm1014, %v998, %v1104
      %v1127 = vsel %vm1015, %v999, %v1106
      %v1128 = vsel %vm1016, %v1000, %v1108
      %v1129 = vsel %vm1017, %v1001, %v1110
      %v1130 = vsel %vm1018, %v1002, %v1112
      %v1131 = vsel %vm1019, %v1003, %v1114
      %v1132 = vsel %vm1020, %v1004, %v1116
      %1133 = vst.msk [vmem:[#allocation3] sm:$0xff] %vm458, %v1117
      %1134 = vst.msk [vmem:[#allocation3 + $0x8] sm:$0xff] %vm458, %v1118
      %1135 = vst.msk [vmem:[#allocation3 + $0x10] sm:$0xff] %vm458, %v1119
      %1136 = vst.msk [vmem:[#allocation3 + $0x18] sm:$0xff] %vm458, %v1120
      %1137 = vst.msk [vmem:[#allocation3 + $0x20] sm:$0xff] %vm458, %v1121
      %1138 = vst.msk [vmem:[#allocation3 + $0x28] sm:$0xff] %vm458, %v1122
      %1139 = vst.msk [vmem:[#allocation3 + $0x30] sm:$0xff] %vm458, %v1123
      %1140 = vst.msk [vmem:[#allocation3 + $0x38] sm:$0xff] %vm458, %v1124
      %1141 = vst.msk [vmem:[#allocation3 + $0x40] sm:$0xff] %vm458, %v1125
      %1142 = vst.msk [vmem:[#allocation3 + $0x48] sm:$0xff] %vm458, %v1126
      %1143 = vst.msk [vmem:[#allocation3 + $0x50] sm:$0xff] %vm458, %v1127
      %1144 = vst.msk [vmem:[#allocation3 + $0x58] sm:$0xff] %vm458, %v1128
      %1145 = vst.msk [vmem:[#allocation3 + $0x60] sm:$0xff] %vm458, %v1129
      %1146 = vst.msk [vmem:[#allocation3 + $0x68] sm:$0xff] %vm458, %v1130
      %1147 = vst.msk [vmem:[#allocation3 + $0x70] sm:$0xff] %vm458, %v1131
      %1148 = vst.msk [vmem:[#allocation3 + $0x78] sm:$0xff] %vm458, %v1132
      %v1149 = vmul.f32 %v1117, %v770
      %v1150 = vmul.f32 %v1118, %v771
      %v1151 = vmul.f32 %v1119, %v772
      %v1152 = vmul.f32 %v1120, %v773
      %v1153 = vmul.f32 %v1121, %v774
      %v1154 = vmul.f32 %v1122, %v775
      %v1155 = vmul.f32 %v1123, %v776
      %v1156 = vmul.f32 %v1124, %v777
      %v1157 = vmul.f32 %v1125, %v778
      %v1158 = vmul.f32 %v1126, %v779
      %v1159 = vmul.f32 %v1127, %v780
      %v1160 = vmul.f32 %v1128, %v781
      %v1161 = vmul.f32 %v1129, %v782
      %v1162 = vmul.f32 %v1130, %v783
      %v1163 = vmul.f32 %v1131, %v784
      %v1164 = vmul.f32 %v1132, %v785
      %1165 = vst.msk [vmem:[#allocation4] sm:$0xff] %vm458, %v1149
      %1166 = vst.msk [vmem:[#allocation4 + $0x8] sm:$0xff] %vm458, %v1150
      %1167 = vst.msk [vmem:[#allocation4 + $0x10] sm:$0xff] %vm458, %v1151
      %1168 = vst.msk [vmem:[#allocation4 + $0x18] sm:$0xff] %vm458, %v1152
      %1169 = vst.msk [vmem:[#allocation4 + $0x20] sm:$0xff] %vm458, %v1153
      %1170 = vst.msk [vmem:[#allocation4 + $0x28] sm:$0xff] %vm458, %v1154
      %1171 = vst.msk [vmem:[#allocation4 + $0x30] sm:$0xff] %vm458, %v1155
      %1172 = vst.msk [vmem:[#allocation4 + $0x38] sm:$0xff] %vm458, %v1156
      %1173 = vst.msk [vmem:[#allocation4 + $0x40] sm:$0xff] %vm458, %v1157
      %1174 = vst.msk [vmem:[#allocation4 + $0x48] sm:$0xff] %vm458, %v1158
      %1175 = vst.msk [vmem:[#allocation4 + $0x50] sm:$0xff] %vm458, %v1159
      %1176 = vst.msk [vmem:[#allocation4 + $0x58] sm:$0xff] %vm458, %v1160
      %1177 = vst.msk [vmem:[#allocation4 + $0x60] sm:$0xff] %vm458, %v1161
      %1178 = vst.msk [vmem:[#allocation4 + $0x68] sm:$0xff] %vm458, %v1162
      %1179 = vst.msk [vmem:[#allocation4 + $0x70] sm:$0xff] %vm458, %v1163
      %1180 = vst.msk [vmem:[#allocation4 + $0x78] sm:$0xff] %vm458, %v1164
      %1197 = vrot.lane.b32.xlu0 %v905, 126
      %v1198 = vpop.permute.xlu0 %1197
      %1199 = vrot.lane.b32.xlu0 %v910, 126
      %v1200 = vpop.permute.xlu0 %1199
      %1201 = vrot.lane.b32.xlu0 %v915, 126
      %v1202 = vpop.permute.xlu0 %1201
      %1203 = vrot.lane.b32.xlu0 %v920, 126
      %v1204 = vpop.permute.xlu0 %1203
      %1205 = vrot.lane.b32.xlu0 %v925, 126
      %v1206 = vpop.permute.xlu0 %1205
      %1207 = vrot.lane.b32.xlu0 %v930, 126
      %v1208 = vpop.permute.xlu0 %1207
      %1209 = vrot.lane.b32.xlu0 %v935, 126
      %v1210 = vpop.permute.xlu0 %1209
      %1211 = vrot.lane.b32.xlu0 %v940, 126
      %v1212 = vpop.permute.xlu0 %1211
      %1213 = vrot.lane.b32.xlu0 %v945, 126
      %v1214 = vpop.permute.xlu0 %1213
      %1215 = vrot.lane.b32.xlu0 %v950, 126
      %v1216 = vpop.permute.xlu0 %1215
      %1217 = vrot.lane.b32.xlu0 %v955, 126
      %v1218 = vpop.permute.xlu0 %1217
      %1219 = vrot.lane.b32.xlu0 %v960, 126
      %v1220 = vpop.permute.xlu0 %1219
      %1221 = vrot.lane.b32.xlu0 %v965, 126
      %v1222 = vpop.permute.xlu0 %1221
      %1223 = vrot.lane.b32.xlu0 %v970, 126
      %v1224 = vpop.permute.xlu0 %1223
      %1225 = vrot.lane.b32.xlu0 %v975, 126
      %v1226 = vpop.permute.xlu0 %1225
      %1227 = vrot.lane.b32.xlu0 %v980, 126
      %v1228 = vpop.permute.xlu0 %1227
      %vm1245 = vcmask 130048
      %1246 = vst.msk [vmem:[#allocation5] sm:$0xff] %vm1245, %v1198
      %1247 = vst.msk [vmem:[#allocation5 + $0x8] sm:$0xff] %vm1245, %v1200
      %1248 = vst.msk [vmem:[#allocation5 + $0x10] sm:$0xff] %vm1245, %v1202
      %1249 = vst.msk [vmem:[#allocation5 + $0x18] sm:$0xff] %vm1245, %v1204
      %1250 = vst.msk [vmem:[#allocation5 + $0x20] sm:$0xff] %vm1245, %v1206
      %1251 = vst.msk [vmem:[#allocation5 + $0x28] sm:$0xff] %vm1245, %v1208
      %1252 = vst.msk [vmem:[#allocation5 + $0x30] sm:$0xff] %vm1245, %v1210
      %1253 = vst.msk [vmem:[#allocation5 + $0x38] sm:$0xff] %vm1245, %v1212
      %1254 = vst.msk [vmem:[#allocation5 + $0x40] sm:$0xff] %vm1245, %v1214
      %1255 = vst.msk [vmem:[#allocation5 + $0x48] sm:$0xff] %vm1245, %v1216
      %1256 = vst.msk [vmem:[#allocation5 + $0x50] sm:$0xff] %vm1245, %v1218
      %1257 = vst.msk [vmem:[#allocation5 + $0x58] sm:$0xff] %vm1245, %v1220
      %1258 = vst.msk [vmem:[#allocation5 + $0x60] sm:$0xff] %vm1245, %v1222
      %1259 = vst.msk [vmem:[#allocation5 + $0x68] sm:$0xff] %vm1245, %v1224
      %1260 = vst.msk [vmem:[#allocation5 + $0x70] sm:$0xff] %vm1245, %v1226
      %1261 = vst.msk [vmem:[#allocation5 + $0x78] sm:$0xff] %vm1245, %v1228
      %1262 = vrot.lane.b32.xlu0 %v905, 110
      %v1263 = vpop.permute.xlu0 %1262
      %1264 = vrot.lane.b32.xlu0 %v910, 110
      %v1265 = vpop.permute.xlu0 %1264
      %1266 = vrot.lane.b32.xlu0 %v915, 110
      %v1267 = vpop.permute.xlu0 %1266
      %1268 = vrot.lane.b32.xlu0 %v920, 110
      %v1269 = vpop.permute.xlu0 %1268
      %1270 = vrot.lane.b32.xlu0 %v925, 110
      %v1271 = vpop.permute.xlu0 %1270
      %1272 = vrot.lane.b32.xlu0 %v930, 110
      %v1273 = vpop.permute.xlu0 %1272
      %1274 = vrot.lane.b32.xlu0 %v935, 110
      %v1275 = vpop.permute.xlu0 %1274
      %1276 = vrot.lane.b32.xlu0 %v940, 110
      %v1277 = vpop.permute.xlu0 %1276
      %1278 = vrot.lane.b32.xlu0 %v945, 110
      %v1279 = vpop.permute.xlu0 %1278
      %1280 = vrot.lane.b32.xlu0 %v950, 110
      %v1281 = vpop.permute.xlu0 %1280
      %1282 = vrot.lane.b32.xlu0 %v955, 110
      %v1283 = vpop.permute.xlu0 %1282
      %1284 = vrot.lane.b32.xlu0 %v960, 110
      %v1285 = vpop.permute.xlu0 %1284
      %1286 = vrot.lane.b32.xlu0 %v965, 110
      %v1287 = vpop.permute.xlu0 %1286
      %1288 = vrot.lane.b32.xlu0 %v970, 110
      %v1289 = vpop.permute.xlu0 %1288
      %1290 = vrot.lane.b32.xlu0 %v975, 110
      %v1291 = vpop.permute.xlu0 %1290
      %1292 = vrot.lane.b32.xlu0 %v980, 110
      %v1293 = vpop.permute.xlu0 %1292
      %1310 = vst.msk [vmem:[#allocation6] sm:$0xff] %vm1245, %v1263
      %1311 = vst.msk [vmem:[#allocation6 + $0x8] sm:$0xff] %vm1245, %v1265
      %1312 = vst.msk [vmem:[#allocation6 + $0x10] sm:$0xff] %vm1245, %v1267
      %1313 = vst.msk [vmem:[#allocation6 + $0x18] sm:$0xff] %vm1245, %v1269
      %1314 = vst.msk [vmem:[#allocation6 + $0x20] sm:$0xff] %vm1245, %v1271
      %1315 = vst.msk [vmem:[#allocation6 + $0x28] sm:$0xff] %vm1245, %v1273
      %1316 = vst.msk [vmem:[#allocation6 + $0x30] sm:$0xff] %vm1245, %v1275
      %1317 = vst.msk [vmem:[#allocation6 + $0x38] sm:$0xff] %vm1245, %v1277
      %1318 = vst.msk [vmem:[#allocation6 + $0x40] sm:$0xff] %vm1245, %v1279
      %1319 = vst.msk [vmem:[#allocation6 + $0x48] sm:$0xff] %vm1245, %v1281
      %1320 = vst.msk [vmem:[#allocation6 + $0x50] sm:$0xff] %vm1245, %v1283
      %1321 = vst.msk [vmem:[#allocation6 + $0x58] sm:$0xff] %vm1245, %v1285
      %1322 = vst.msk [vmem:[#allocation6 + $0x60] sm:$0xff] %vm1245, %v1287
      %1323 = vst.msk [vmem:[#allocation6 + $0x68] sm:$0xff] %vm1245, %v1289
      %1324 = vst.msk [vmem:[#allocation6 + $0x70] sm:$0xff] %vm1245, %v1291
      %1325 = vst.msk [vmem:[#allocation6 + $0x78] sm:$0xff] %vm1245, %v1293
      loop: start=0, step=1, limit=16
      $region57: #{sesame_forward.9} parent=55 // loop_pre_header
        _
      $region58: #{sesame_forward.9} parent=55 // loop_header
        %s1327 = sphi 0, %s1331
        %p1328 = scmp.ge.s32.totalorder %s1327, 16
        %v1332 = vphi 0.0, %v1591
      $region59: #{sesame_forward.9} parent=55 // loop_header_branch
        %1330 = sbr.rel (%p1328) target = $region63
      $region60: #{sesame_forward.9} parent=55 // loop_body
        %s1333 = smul.u32 %s1327, 8
        %s1334 = scalar_lea.vmem [#allocation3], %s1333
        %v1335 = vld [vmem:[%s1334] sm:$0xff]
        %s1336 = scalar_lea.vmem [#allocation4], %s1333
        %v1337 = vld [vmem:[%s1336] sm:$0xff]
        %s1338 = scalar_lea.vmem [#allocation5], %s1333
        %v1339 = vld [vmem:[%s1338] sm:$0xff]
        %s1340 = scalar_lea.vmem [#allocation6], %s1333
        %v1341 = vld [vmem:[%s1340] sm:$0xff]
        %v1342 = vlaneseq
        %v1343 = vshrl.u32 %v1342, 7
        %v1344 = vsub.s32 0, %v1343
        %v1345 = vrot.slane %v1335, %v1344
        %1347 = vbcast.lane.b32.xlu0 %v1345, 256
        %v1348 = vpop.permute.xlu0 %1347
        %v1349 = vlaneseq
        %v1350 = vshrl.u32 %v1349, 7
        %v1351 = vsub.s32 1, %v1350
        %v1352 = vrot.slane %v1335, %v1351
        %1354 = vbcast.lane.b32.xlu0 %v1352, 256
        %v1355 = vpop.permute.xlu0 %1354
        %v1356 = vlaneseq
        %v1357 = vshrl.u32 %v1356, 7
        %v1358 = vsub.s32 2, %v1357
        %v1359 = vrot.slane %v1335, %v1358
        %1361 = vbcast.lane.b32.xlu0 %v1359, 256
        %v1362 = vpop.permute.xlu0 %1361
        %v1363 = vlaneseq
        %v1364 = vshrl.u32 %v1363, 7
        %v1365 = vsub.s32 3, %v1364
        %v1366 = vrot.slane %v1335, %v1365
        %1368 = vbcast.lane.b32.xlu0 %v1366, 256
        %v1369 = vpop.permute.xlu0 %1368
        %v1370 = vlaneseq
        %v1371 = vshrl.u32 %v1370, 7
        %v1372 = vsub.s32 4, %v1371
        %v1373 = vrot.slane %v1335, %v1372
        %1375 = vbcast.lane.b32.xlu0 %v1373, 256
        %v1376 = vpop.permute.xlu0 %1375
        %v1377 = vlaneseq
        %v1378 = vshrl.u32 %v1377, 7
        %v1379 = vsub.s32 5, %v1378
        %v1380 = vrot.slane %v1335, %v1379
        %1382 = vbcast.lane.b32.xlu0 %v1380, 256
        %v1383 = vpop.permute.xlu0 %1382
        %v1384 = vlaneseq
        %v1385 = vshrl.u32 %v1384, 7
        %v1386 = vsub.s32 6, %v1385
        %v1387 = vrot.slane %v1335, %v1386
        %1389 = vbcast.lane.b32.xlu0 %v1387, 256
        %v1390 = vpop.permute.xlu0 %1389
        %v1391 = vlaneseq
        %v1392 = vshrl.u32 %v1391, 7
        %v1393 = vsub.s32 7, %v1392
        %v1394 = vrot.slane %v1335, %v1393
        %1396 = vbcast.lane.b32.xlu0 %v1394, 256
        %v1397 = vpop.permute.xlu0 %1396
        %v1398 = vmul.f32 %v1348, %v354
        %v1399 = vmul.f32 %v1355, %v354
        %v1400 = vmul.f32 %v1362, %v354
        %v1401 = vmul.f32 %v1369, %v354
        %v1402 = vmul.f32 %v1376, %v354
        %v1403 = vmul.f32 %v1383, %v354
        %v1404 = vmul.f32 %v1390, %v354
        %v1405 = vmul.f32 %v1397, %v354
        %v1406 = vmul.f32 %v1398, 1.442695
        %v1407 = vpow.pop %v1406
        %v1408 = vmul.f32 %v1399, 1.442695
        %v1409 = vpow.pop %v1408
        %v1410 = vmul.f32 %v1400, 1.442695
        %v1411 = vpow.pop %v1410
        %v1412 = vmul.f32 %v1401, 1.442695
        %v1413 = vpow.pop %v1412
        %v1414 = vmul.f32 %v1402, 1.442695
        %v1415 = vpow.pop %v1414
        %v1416 = vmul.f32 %v1403, 1.442695
        %v1417 = vpow.pop %v1416
        %v1418 = vmul.f32 %v1404, 1.442695
        %v1419 = vpow.pop %v1418
        %v1420 = vmul.f32 %v1405, 1.442695
        %v1421 = vpow.pop %v1420
        %v1422 = vlaneseq
        %v1423 = vshrl.u32 %v1422, 7
        %v1424 = vsub.s32 0, %v1423
        %v1425 = vrot.slane %v1337, %v1424
        %1427 = vbcast.lane.b32.xlu0 %v1425, 256
        %v1428 = vpop.permute.xlu0 %1427
        %v1429 = vlaneseq
        %v1430 = vshrl.u32 %v1429, 7
        %v1431 = vsub.s32 1, %v1430
        %v1432 = vrot.slane %v1337, %v1431
        %1434 = vbcast.lane.b32.xlu0 %v1432, 256
        %v1435 = vpop.permute.xlu0 %1434
        %v1436 = vlaneseq
        %v1437 = vshrl.u32 %v1436, 7
        %v1438 = vsub.s32 2, %v1437
        %v1439 = vrot.slane %v1337, %v1438
        %1441 = vbcast.lane.b32.xlu0 %v1439, 256
        %v1442 = vpop.permute.xlu0 %1441
        %v1443 = vlaneseq
        %v1444 = vshrl.u32 %v1443, 7
        %v1445 = vsub.s32 3, %v1444
        %v1446 = vrot.slane %v1337, %v1445
        %1448 = vbcast.lane.b32.xlu0 %v1446, 256
        %v1449 = vpop.permute.xlu0 %1448
        %v1450 = vlaneseq
        %v1451 = vshrl.u32 %v1450, 7
        %v1452 = vsub.s32 4, %v1451
        %v1453 = vrot.slane %v1337, %v1452
        %1455 = vbcast.lane.b32.xlu0 %v1453, 256
        %v1456 = vpop.permute.xlu0 %1455
        %v1457 = vlaneseq
        %v1458 = vshrl.u32 %v1457, 7
        %v1459 = vsub.s32 5, %v1458
        %v1460 = vrot.slane %v1337, %v1459
        %1462 = vbcast.lane.b32.xlu0 %v1460, 256
        %v1463 = vpop.permute.xlu0 %1462
        %v1464 = vlaneseq
        %v1465 = vshrl.u32 %v1464, 7
        %v1466 = vsub.s32 6, %v1465
        %v1467 = vrot.slane %v1337, %v1466
        %1469 = vbcast.lane.b32.xlu0 %v1467, 256
        %v1470 = vpop.permute.xlu0 %1469
        %v1471 = vlaneseq
        %v1472 = vshrl.u32 %v1471, 7
        %v1473 = vsub.s32 7, %v1472
        %v1474 = vrot.slane %v1337, %v1473
        %1476 = vbcast.lane.b32.xlu0 %v1474, 256
        %v1477 = vpop.permute.xlu0 %1476
        %v1479 = vcombine.high %v1339, %v1339
        %v1481 = vunpack.c.l.s4 1966171168
        %v1482 = vunpack.c.0.s8 %v1481
        %v1483 = vlaneseq
        %v1484 = vshrl.u32 %v1483, 7
        %v1485 = vsub.s32 %v1482, %v1484
        %v1486 = vrot.slane %v1339, %v1485
        %v1488 = vunpack.c.l.s4 1966171168
        %v1489 = vunpack.c.0.s8 %v1488
        %v1490 = vlaneseq
        %v1491 = vshrl.u32 %v1490, 7
        %v1492 = vsub.s32 %v1489, %v1491
        %v1493 = vrot.slane %v1479, %v1492
        %v1494 = vcombine.high %v1486, %v1486
        %v1495 = vcombine.high %v1493, %v1493
        %v1497 = vunpack.c.l.s4 1966171168
        %v1498 = vunpack.c.0.s8 %v1497
        %v1499 = vlaneseq
        %v1500 = vshrl.u32 %v1499, 7
        %v1501 = vsub.s32 %v1498, %v1500
        %v1502 = vrot.slane %v1486, %v1501
        %v1504 = vunpack.c.l.s4 1966171168
        %v1505 = vunpack.c.0.s8 %v1504
        %v1506 = vlaneseq
        %v1507 = vshrl.u32 %v1506, 7
        %v1508 = vsub.s32 %v1505, %v1507
        %v1509 = vrot.slane %v1493, %v1508
        %v1511 = vunpack.c.l.s4 1966171168
        %v1512 = vunpack.c.0.s8 %v1511
        %v1513 = vlaneseq
        %v1514 = vshrl.u32 %v1513, 7
        %v1515 = vsub.s32 %v1512, %v1514
        %v1516 = vrot.slane %v1494, %v1515
        %v1518 = vunpack.c.l.s4 1966171168
        %v1519 = vunpack.c.0.s8 %v1518
        %v1520 = vlaneseq
        %v1521 = vshrl.u32 %v1520, 7
        %v1522 = vsub.s32 %v1519, %v1521
        %v1523 = vrot.slane %v1495, %v1522
        %v1524 = vcombine.high %v1502, %v1502
        %v1525 = vcombine.high %v1509, %v1509
        %v1526 = vcombine.high %v1516, %v1516
        %v1527 = vcombine.high %v1523, %v1523
        %v1528 = vlaneseq
        %v1529 = vshrl.u32 %v1528, 7
        %v1530 = vsub.s32 0, %v1529
        %v1531 = vrot.slane %v1502, %v1530
        %v1532 = vlaneseq
        %v1533 = vshrl.u32 %v1532, 7
        %v1534 = vsub.s32 0, %v1533
        %v1535 = vrot.slane %v1516, %v1534
        %v1536 = vlaneseq
        %v1537 = vshrl.u32 %v1536, 7
        %v1538 = vsub.s32 0, %v1537
        %v1539 = vrot.slane %v1524, %v1538
        %v1540 = vlaneseq
        %v1541 = vshrl.u32 %v1540, 7
        %v1542 = vsub.s32 0, %v1541
        %v1543 = vrot.slane %v1526, %v1542
        %v1544 = vlaneseq
        %v1545 = vshrl.u32 %v1544, 7
        %v1546 = vsub.s32 0, %v1545
        %v1547 = vrot.slane %v1509, %v1546
        %v1548 = vlaneseq
        %v1549 = vshrl.u32 %v1548, 7
        %v1550 = vsub.s32 0, %v1549
        %v1551 = vrot.slane %v1523, %v1550
        %v1552 = vlaneseq
        %v1553 = vshrl.u32 %v1552, 7
        %v1554 = vsub.s32 0, %v1553
        %v1555 = vrot.slane %v1525, %v1554
        %v1556 = vlaneseq
        %v1557 = vshrl.u32 %v1556, 7
        %v1558 = vsub.s32 0, %v1557
        %v1559 = vrot.slane %v1527, %v1558
        %v1568 = vmul.f32 %v1428, %v1531
        %v1569 = vmul.f32 %v1435, %v1535
        %v1570 = vmul.f32 %v1442, %v1539
        %v1571 = vmul.f32 %v1449, %v1543
        %v1572 = vmul.f32 %v1456, %v1547
        %v1573 = vmul.f32 %v1463, %v1551
        %v1574 = vmul.f32 %v1470, %v1555
        %v1575 = vmul.f32 %v1477, %v1559
        %v1576 = vmul.f32 %v1407, %v1332
        %v1577 = vadd.f32 %v1576, %v1568
        %v1578 = vmul.f32 %v1409, %v1577
        %v1579 = vadd.f32 %v1578, %v1569
        %v1580 = vmul.f32 %v1411, %v1579
        %v1581 = vadd.f32 %v1580, %v1570
        %v1582 = vmul.f32 %v1413, %v1581
        %v1583 = vadd.f32 %v1582, %v1571
        %v1584 = vmul.f32 %v1415, %v1583
        %v1585 = vadd.f32 %v1584, %v1572
        %v1586 = vmul.f32 %v1417, %v1585
        %v1587 = vadd.f32 %v1586, %v1573
        %v1588 = vmul.f32 %v1419, %v1587
        %v1589 = vadd.f32 %v1588, %v1574
        %v1590 = vmul.f32 %v1421, %v1589
        %v1591 = vadd.f32 %v1590, %v1575
        %v1593 = vcombine.high %v1341, %v1341
        %v1595 = vunpack.c.l.s4 1966171168
        %v1596 = vunpack.c.0.s8 %v1595
        %v1597 = vlaneseq
        %v1598 = vshrl.u32 %v1597, 7
        %v1599 = vsub.s32 %v1596, %v1598
        %v1600 = vrot.slane %v1341, %v1599
        %v1602 = vunpack.c.l.s4 1966171168
        %v1603 = vunpack.c.0.s8 %v1602
        %v1604 = vlaneseq
        %v1605 = vshrl.u32 %v1604, 7
        %v1606 = vsub.s32 %v1603, %v1605
        %v1607 = vrot.slane %v1593, %v1606
        %v1608 = vcombine.high %v1600, %v1600
        %v1609 = vcombine.high %v1607, %v1607
        %v1611 = vunpack.c.l.s4 1966171168
        %v1612 = vunpack.c.0.s8 %v1611
        %v1613 = vlaneseq
        %v1614 = vshrl.u32 %v1613, 7
        %v1615 = vsub.s32 %v1612, %v1614
        %v1616 = vrot.slane %v1600, %v1615
        %v1618 = vunpack.c.l.s4 1966171168
        %v1619 = vunpack.c.0.s8 %v1618
        %v1620 = vlaneseq
        %v1621 = vshrl.u32 %v1620, 7
        %v1622 = vsub.s32 %v1619, %v1621
        %v1623 = vrot.slane %v1607, %v1622
        %v1625 = vunpack.c.l.s4 1966171168
        %v1626 = vunpack.c.0.s8 %v1625
        %v1627 = vlaneseq
        %v1628 = vshrl.u32 %v1627, 7
        %v1629 = vsub.s32 %v1626, %v1628
        %v1630 = vrot.slane %v1608, %v1629
        %v1632 = vunpack.c.l.s4 1966171168
        %v1633 = vunpack.c.0.s8 %v1632
        %v1634 = vlaneseq
        %v1635 = vshrl.u32 %v1634, 7
        %v1636 = vsub.s32 %v1633, %v1635
        %v1637 = vrot.slane %v1609, %v1636
        %v1638 = vcombine.high %v1616, %v1616
        %v1639 = vcombine.high %v1623, %v1623
        %v1640 = vcombine.high %v1630, %v1630
        %v1641 = vcombine.high %v1637, %v1637
        %v1642 = vlaneseq
        %v1643 = vshrl.u32 %v1642, 7
        %v1644 = vsub.s32 0, %v1643
        %v1645 = vrot.slane %v1616, %v1644
        %v1646 = vlaneseq
        %v1647 = vshrl.u32 %v1646, 7
        %v1648 = vsub.s32 0, %v1647
        %v1649 = vrot.slane %v1630, %v1648
        %v1650 = vlaneseq
        %v1651 = vshrl.u32 %v1650, 7
        %v1652 = vsub.s32 0, %v1651
        %v1653 = vrot.slane %v1638, %v1652
        %v1654 = vlaneseq
        %v1655 = vshrl.u32 %v1654, 7
        %v1656 = vsub.s32 0, %v1655
        %v1657 = vrot.slane %v1640, %v1656
        %v1658 = vlaneseq
        %v1659 = vshrl.u32 %v1658, 7
        %v1660 = vsub.s32 0, %v1659
        %v1661 = vrot.slane %v1623, %v1660
        %v1662 = vlaneseq
        %v1663 = vshrl.u32 %v1662, 7
        %v1664 = vsub.s32 0, %v1663
        %v1665 = vrot.slane %v1637, %v1664
        %v1666 = vlaneseq
        %v1667 = vshrl.u32 %v1666, 7
        %v1668 = vsub.s32 0, %v1667
        %v1669 = vrot.slane %v1639, %v1668
        %v1670 = vlaneseq
        %v1671 = vshrl.u32 %v1670, 7
        %v1672 = vsub.s32 0, %v1671
        %v1673 = vrot.slane %v1641, %v1672
        %v1682 = vmul.f32 %v1577, %v1645
        %v1683 = vmul.f32 %v1579, %v1649
        %v1684 = vmul.f32 %v1581, %v1653
        %v1685 = vmul.f32 %v1583, %v1657
        %v1686 = vmul.f32 %v1585, %v1661
        %v1687 = vmul.f32 %v1587, %v1665
        %v1688 = vmul.f32 %v1589, %v1669
        %v1689 = vmul.f32 %v1591, %v1673
        %vm1690 = vcmask 123904
        %v1691 = vsel %vm1690, %v1682, 0.0
        %1692 = vadd.xlane.f32.xlu0 %v1691
        %v1693 = vpop.xlane.xlu0 %1692
        %v1694 = vsel %vm1690, %v1683, 0.0
        %1695 = vadd.xlane.f32.xlu0 %v1694
        %v1696 = vpop.xlane.xlu0 %1695
        %v1697 = vsel %vm1690, %v1684, 0.0
        %1698 = vadd.xlane.f32.xlu0 %v1697
        %v1699 = vpop.xlane.xlu0 %1698
        %v1700 = vsel %vm1690, %v1685, 0.0
        %1701 = vadd.xlane.f32.xlu0 %v1700
        %v1702 = vpop.xlane.xlu0 %1701
        %v1703 = vsel %vm1690, %v1686, 0.0
        %1704 = vadd.xlane.f32.xlu0 %v1703
        %v1705 = vpop.xlane.xlu0 %1704
        %v1706 = vsel %vm1690, %v1687, 0.0
        %1707 = vadd.xlane.f32.xlu0 %v1706
        %v1708 = vpop.xlane.xlu0 %1707
        %v1709 = vsel %vm1690, %v1688, 0.0
        %1710 = vadd.xlane.f32.xlu0 %v1709
        %v1711 = vpop.xlane.xlu0 %1710
        %v1712 = vsel %vm1690, %v1689, 0.0
        %1713 = vadd.xlane.f32.xlu0 %v1712
        %v1714 = vpop.xlane.xlu0 %1713
        %v1723 = vlaneseq
        %v1724 = vand.u32 %v1723, 127
        %v1725 = vlaneseq
        %v1726 = vshrl.u32 %v1725, 7
        %v1727 = vsub.s32 %v1724, %v1726
        %v1728 = vrot.slane %v1693, %v1727
        %v1729 = vlaneseq
        %v1730 = vshrl.u32 %v1729, 7
        %v1731 = vsub.s32 %v1724, %v1730
        %v1732 = vrot.slane %v1696, %v1731
        %v1733 = vlaneseq
        %v1734 = vshrl.u32 %v1733, 7
        %v1735 = vsub.s32 %v1724, %v1734
        %v1736 = vrot.slane %v1699, %v1735
        %v1737 = vlaneseq
        %v1738 = vshrl.u32 %v1737, 7
        %v1739 = vsub.s32 %v1724, %v1738
        %v1740 = vrot.slane %v1702, %v1739
        %v1741 = vlaneseq
        %v1742 = vshrl.u32 %v1741, 7
        %v1743 = vsub.s32 %v1724, %v1742
        %v1744 = vrot.slane %v1705, %v1743
        %v1745 = vlaneseq
        %v1746 = vshrl.u32 %v1745, 7
        %v1747 = vsub.s32 %v1724, %v1746
        %v1748 = vrot.slane %v1708, %v1747
        %v1749 = vlaneseq
        %v1750 = vshrl.u32 %v1749, 7
        %v1751 = vsub.s32 %v1724, %v1750
        %v1752 = vrot.slane %v1711, %v1751
        %v1753 = vlaneseq
        %v1754 = vshrl.u32 %v1753, 7
        %v1755 = vsub.s32 %v1724, %v1754
        %v1756 = vrot.slane %v1714, %v1755
        %vm1757 = vcmask 1041409
        %v1758 = vsel %vm1757, %v1732, %v1728
        %vm1759 = vcmask 1042434
        %v1760 = vsel %vm1759, %v1736, %v1758
        %vm1761 = vcmask 1043459
        %v1762 = vsel %vm1761, %v1740, %v1760
        %vm1763 = vcmask 1044484
        %v1764 = vsel %vm1763, %v1744, %v1762
        %vm1765 = vcmask 1045509
        %v1766 = vsel %vm1765, %v1748, %v1764
        %vm1767 = vcmask 1046534
        %v1768 = vsel %vm1767, %v1752, %v1766
        %vm1769 = vcmask 1047559
        %v1770 = vsel %vm1769, %v1756, %v1768
        %s1772 = scalar_lea.vmem [#allocation7], %s1333
        %1773 = vst.msk [vmem:[%s1772] sm:$0xff] %vm458, %v1770
      $region61: #{sesame_forward.9} parent=55 // loop_footer
        %s1331 = sadd.s32 1, %s1327
      $region62: #{sesame_forward.9} parent=55 // loop_footer_branch
        %1326 = sbr.rel target = $region58
      $region63: #{sesame_forward.9} parent=55 // loop_exit
        _
      %v1774 = vld [vmem:[#allocation7] sm:$0xff]
      %v1775 = vld [vmem:[#allocation7 + $0x8] sm:$0xff]
      %v1776 = vld [vmem:[#allocation7 + $0x10] sm:$0xff]
      %v1777 = vld [vmem:[#allocation7 + $0x18] sm:$0xff]
      %v1778 = vld [vmem:[#allocation7 + $0x20] sm:$0xff]
      %v1779 = vld [vmem:[#allocation7 + $0x28] sm:$0xff]
      %v1780 = vld [vmem:[#allocation7 + $0x30] sm:$0xff]
      %v1781 = vld [vmem:[#allocation7 + $0x38] sm:$0xff]
      %v1782 = vld [vmem:[#allocation7 + $0x40] sm:$0xff]
      %v1783 = vld [vmem:[#allocation7 + $0x48] sm:$0xff]
      %v1784 = vld [vmem:[#allocation7 + $0x50] sm:$0xff]
      %v1785 = vld [vmem:[#allocation7 + $0x58] sm:$0xff]
      %v1786 = vld [vmem:[#allocation7 + $0x60] sm:$0xff]
      %v1787 = vld [vmem:[#allocation7 + $0x68] sm:$0xff]
      %v1788 = vld [vmem:[#allocation7 + $0x70] sm:$0xff]
      %v1789 = vld [vmem:[#allocation7 + $0x78] sm:$0xff]
      %v1791 = vlaneseq
      %v1792 = vshrl.u32 %v1791, 7
      %v1793 = vsub.s32 0, %v1792
      %v1794 = vrot.slane %v355, %v1793
      %v1796 = vmul.f32 %v770, %v1794
      %v1797 = vmul.f32 %v771, %v1794
      %v1798 = vmul.f32 %v772, %v1794
      %v1799 = vmul.f32 %v773, %v1794
      %v1800 = vmul.f32 %v774, %v1794
      %v1801 = vmul.f32 %v775, %v1794
      %v1802 = vmul.f32 %v776, %v1794
      %v1803 = vmul.f32 %v777, %v1794
      %v1804 = vmul.f32 %v778, %v1794
      %v1805 = vmul.f32 %v779, %v1794
      %v1806 = vmul.f32 %v780, %v1794
      %v1807 = vmul.f32 %v781, %v1794
      %v1808 = vmul.f32 %v782, %v1794
      %v1809 = vmul.f32 %v783, %v1794
      %v1810 = vmul.f32 %v784, %v1794
      %v1811 = vmul.f32 %v785, %v1794
      %v1812 = vadd.f32 %v1774, %v1796
      %v1813 = vadd.f32 %v1775, %v1797
      %v1814 = vadd.f32 %v1776, %v1798
      %v1815 = vadd.f32 %v1777, %v1799
      %v1816 = vadd.f32 %v1778, %v1800
      %v1817 = vadd.f32 %v1779, %v1801
      %v1818 = vadd.f32 %v1780, %v1802
      %v1819 = vadd.f32 %v1781, %v1803
      %v1820 = vadd.f32 %v1782, %v1804
      %v1821 = vadd.f32 %v1783, %v1805
      %v1822 = vadd.f32 %v1784, %v1806
      %v1823 = vadd.f32 %v1785, %v1807
      %v1824 = vadd.f32 %v1786, %v1808
      %v1825 = vadd.f32 %v1787, %v1809
      %v1826 = vadd.f32 %v1788, %v1810
      %v1827 = vadd.f32 %v1789, %v1811
      %v1828 = vxor.u32 %v442, 2147483648
      %v1829 = vxor.u32 %v443, 2147483648
      %v1830 = vxor.u32 %v444, 2147483648
      %v1831 = vxor.u32 %v445, 2147483648
      %v1832 = vxor.u32 %v446, 2147483648
      %v1833 = vxor.u32 %v447, 2147483648
      %v1834 = vxor.u32 %v448, 2147483648
      %v1835 = vxor.u32 %v449, 2147483648
      %v1836 = vxor.u32 %v450, 2147483648
      %v1837 = vxor.u32 %v451, 2147483648
      %v1838 = vxor.u32 %v452, 2147483648
      %v1839 = vxor.u32 %v453, 2147483648
      %v1840 = vxor.u32 %v454, 2147483648
      %v1841 = vxor.u32 %v455, 2147483648
      %v1842 = vxor.u32 %v456, 2147483648
      %v1843 = vxor.u32 %v457, 2147483648
      %v1844 = vmul.f32 %v1828, 1.442695
      %v1845 = vpow.pop %v1844
      %v1846 = vmul.f32 %v1829, 1.442695
      %v1847 = vpow.pop %v1846
      %v1848 = vmul.f32 %v1830, 1.442695
      %v1849 = vpow.pop %v1848
      %v1850 = vmul.f32 %v1831, 1.442695
      %v1851 = vpow.pop %v1850
      %v1852 = vmul.f32 %v1832, 1.442695
      %v1853 = vpow.pop %v1852
      %v1854 = vmul.f32 %v1833, 1.442695
      %v1855 = vpow.pop %v1854
      %v1856 = vmul.f32 %v1834, 1.442695
      %v1857 = vpow.pop %v1856
      %v1858 = vmul.f32 %v1835, 1.442695
      %v1859 = vpow.pop %v1858
      %v1860 = vmul.f32 %v1836, 1.442695
      %v1861 = vpow.pop %v1860
      %v1862 = vmul.f32 %v1837, 1.442695
      %v1863 = vpow.pop %v1862
      %v1864 = vmul.f32 %v1838, 1.442695
      %v1865 = vpow.pop %v1864
      %v1866 = vmul.f32 %v1839, 1.442695
      %v1867 = vpow.pop %v1866
      %v1868 = vmul.f32 %v1840, 1.442695
      %v1869 = vpow.pop %v1868
      %v1870 = vmul.f32 %v1841, 1.442695
      %v1871 = vpow.pop %v1870
      %v1872 = vmul.f32 %v1842, 1.442695
      %v1873 = vpow.pop %v1872
      %v1874 = vmul.f32 %v1843, 1.442695
      %v1875 = vpow.pop %v1874
      %v1876 = vadd.f32 %v1845, 1.0
      %v1877 = vadd.f32 %v1847, 1.0
      %v1878 = vadd.f32 %v1849, 1.0
      %v1879 = vadd.f32 %v1851, 1.0
      %v1880 = vadd.f32 %v1853, 1.0
      %v1881 = vadd.f32 %v1855, 1.0
      %v1882 = vadd.f32 %v1857, 1.0
      %v1883 = vadd.f32 %v1859, 1.0
      %v1884 = vadd.f32 %v1861, 1.0
      %v1885 = vadd.f32 %v1863, 1.0
      %v1886 = vadd.f32 %v1865, 1.0
      %v1887 = vadd.f32 %v1867, 1.0
      %v1888 = vadd.f32 %v1869, 1.0
      %v1889 = vadd.f32 %v1871, 1.0
      %v1890 = vadd.f32 %v1873, 1.0
      %v1891 = vadd.f32 %v1875, 1.0
      %v1892 = vrcp.pop %v1876
      %v1893 = vmul.f32 1.0, %v1892
      %v1894 = vrcp.pop %v1877
      %v1895 = vmul.f32 1.0, %v1894
      %v1896 = vrcp.pop %v1878
      %v1897 = vmul.f32 1.0, %v1896
      %v1898 = vrcp.pop %v1879
      %v1899 = vmul.f32 1.0, %v1898
      %v1900 = vrcp.pop %v1880
      %v1901 = vmul.f32 1.0, %v1900
      %v1902 = vrcp.pop %v1881
      %v1903 = vmul.f32 1.0, %v1902
      %v1904 = vrcp.pop %v1882
      %v1905 = vmul.f32 1.0, %v1904
      %v1906 = vrcp.pop %v1883
      %v1907 = vmul.f32 1.0, %v1906
      %v1908 = vrcp.pop %v1884
      %v1909 = vmul.f32 1.0, %v1908
      %v1910 = vrcp.pop %v1885
      %v1911 = vmul.f32 1.0, %v1910
      %v1912 = vrcp.pop %v1886
      %v1913 = vmul.f32 1.0, %v1912
      %v1914 = vrcp.pop %v1887
      %v1915 = vmul.f32 1.0, %v1914
      %v1916 = vrcp.pop %v1888
      %v1917 = vmul.f32 1.0, %v1916
      %v1918 = vrcp.pop %v1889
      %v1919 = vmul.f32 1.0, %v1918
      %v1920 = vrcp.pop %v1890
      %v1921 = vmul.f32 1.0, %v1920
      %v1922 = vrcp.pop %v1891
      %v1923 = vmul.f32 1.0, %v1922
      %v1924 = vmul.f32 %v442, %v1893
      %v1925 = vmul.f32 %v443, %v1895
      %v1926 = vmul.f32 %v444, %v1897
      %v1927 = vmul.f32 %v445, %v1899
      %v1928 = vmul.f32 %v446, %v1901
      %v1929 = vmul.f32 %v447, %v1903
      %v1930 = vmul.f32 %v448, %v1905
      %v1931 = vmul.f32 %v449, %v1907
      %v1932 = vmul.f32 %v450, %v1909
      %v1933 = vmul.f32 %v451, %v1911
      %v1934 = vmul.f32 %v452, %v1913
      %v1935 = vmul.f32 %v453, %v1915
      %v1936 = vmul.f32 %v454, %v1917
      %v1937 = vmul.f32 %v455, %v1919
      %v1938 = vmul.f32 %v456, %v1921
      %v1939 = vmul.f32 %v457, %v1923
      %1956 = vrot.lane.b32.xlu0 %v1924, 126
      %v1957 = vpop.permute.xlu0 %1956
      %1958 = vrot.lane.b32.xlu0 %v1925, 126
      %v1959 = vpop.permute.xlu0 %1958
      %1960 = vrot.lane.b32.xlu0 %v1926, 126
      %v1961 = vpop.permute.xlu0 %1960
      %1962 = vrot.lane.b32.xlu0 %v1927, 126
      %v1963 = vpop.permute.xlu0 %1962
      %1964 = vrot.lane.b32.xlu0 %v1928, 126
      %v1965 = vpop.permute.xlu0 %1964
      %1966 = vrot.lane.b32.xlu0 %v1929, 126
      %v1967 = vpop.permute.xlu0 %1966
      %1968 = vrot.lane.b32.xlu0 %v1930, 126
      %v1969 = vpop.permute.xlu0 %1968
      %1970 = vrot.lane.b32.xlu0 %v1931, 126
      %v1971 = vpop.permute.xlu0 %1970
      %1972 = vrot.lane.b32.xlu0 %v1932, 126
      %v1973 = vpop.permute.xlu0 %1972
      %1974 = vrot.lane.b32.xlu0 %v1933, 126
      %v1975 = vpop.permute.xlu0 %1974
      %1976 = vrot.lane.b32.xlu0 %v1934, 126
      %v1977 = vpop.permute.xlu0 %1976
      %1978 = vrot.lane.b32.xlu0 %v1935, 126
      %v1979 = vpop.permute.xlu0 %1978
      %1980 = vrot.lane.b32.xlu0 %v1936, 126
      %v1981 = vpop.permute.xlu0 %1980
      %1982 = vrot.lane.b32.xlu0 %v1937, 126
      %v1983 = vpop.permute.xlu0 %1982
      %1984 = vrot.lane.b32.xlu0 %v1938, 126
      %v1985 = vpop.permute.xlu0 %1984
      %1986 = vrot.lane.b32.xlu0 %v1939, 126
      %v1987 = vpop.permute.xlu0 %1986
      %v2004 = vmul.f32 %v1812, %v1957
      %v2005 = vmul.f32 %v1813, %v1959
      %v2006 = vmul.f32 %v1814, %v1961
      %v2007 = vmul.f32 %v1815, %v1963
      %v2008 = vmul.f32 %v1816, %v1965
      %v2009 = vmul.f32 %v1817, %v1967
      %v2010 = vmul.f32 %v1818, %v1969
      %v2011 = vmul.f32 %v1819, %v1971
      %v2012 = vmul.f32 %v1820, %v1973
      %v2013 = vmul.f32 %v1821, %v1975
      %v2014 = vmul.f32 %v1822, %v1977
      %v2015 = vmul.f32 %v1823, %v1979
      %v2016 = vmul.f32 %v1824, %v1981
      %v2017 = vmul.f32 %v1825, %v1983
      %v2018 = vmul.f32 %v1826, %v1985
      %v2019 = vmul.f32 %v1827, %v1987
      %v2020 = vld [vmem:[%s8] sm:$0x3]
      %v2022 = vsel %vm458, %v2004, 0
      %v2025 = vsel %vm458, %v2005, 0
      %v2028 = vsel %vm458, %v2006, 0
      %v2031 = vsel %vm458, %v2007, 0
      %v2034 = vsel %vm458, %v2008, 0
      %v2037 = vsel %vm458, %v2009, 0
      %v2040 = vsel %vm458, %v2010, 0
      %v2043 = vsel %vm458, %v2011, 0
      %v2046 = vsel %vm458, %v2012, 0
      %v2049 = vsel %vm458, %v2013, 0
      %v2052 = vsel %vm458, %v2014, 0
      %v2055 = vsel %vm458, %v2015, 0
      %v2058 = vsel %vm458, %v2016, 0
      %v2061 = vsel %vm458, %v2017, 0
      %v2064 = vsel %vm458, %v2018, 0
      %v2067 = vsel %vm458, %v2019, 0
      %v2070 = vsel %vm834, %v2020, 0
      %2072 = vmatprep.subr.mxu0 0.0
      %2073 = vmatpush1.msra.mxu0 0.0
      %2074 = vmatprep.subr.mxu0 0.0
      %2075 = vmatpush1.msra.mxu0 0.0
      %2076 = vmatprep.subr.mxu0 0.0
      %2077 = vmatpush1.msra.mxu0 0.0
      %2078 = vmatprep.subr.mxu0 0.0
      %2079 = vmatpush1.msra.mxu0 0.0
      %2080 = vmatprep.subr.mxu0 0.0
      %2081 = vmatpush1.msra.mxu0 0.0
      %2082 = vmatprep.subr.mxu0 0.0
      %2083 = vmatpush1.msra.mxu0 0.0
      %2084 = vmatprep.subr.mxu0 0.0
      %2085 = vmatpush1.msra.mxu0 0.0
      %2086 = vmatprep.subr.mxu0 0.0
      %2087 = vmatpush1.msra.mxu0 0.0
      %2088 = vmatprep.subr.mxu0 0.0
      %2089 = vmatpush1.msra.mxu0 0.0
      %2090 = vmatprep.subr.mxu0 0.0
      %2091 = vmatpush1.msra.mxu0 0.0
      %2092 = vmatprep.subr.mxu0 0.0
      %2093 = vmatpush1.msra.mxu0 0.0
      %2094 = vmatprep.subr.mxu0 0.0
      %2095 = vmatpush1.msra.mxu0 0.0
      %2096 = vmatprep.subr.mxu0 0.0
      %2097 = vmatpush1.msra.mxu0 0.0
      %2098 = vmatprep.subr.mxu0 0.0
      %2099 = vmatpush1.msra.mxu0 0.0
      %2100 = vmatprep.subr.mxu0 0.0
      %2101 = vmatpush1.msra.mxu0 0.0
      %2102 = vmatprep.subr.mxu0 0.0
      %2103 = vmatpush1.msra.mxu0 %v2070
      %2104 = vmatprep.subr.mxu0 0.0
      %2105 = vmatpush2.msra.mxu0 0.0
      %2106 = vmatprep.subr.mxu0 0.0
      %2107 = vmatpush2.msra.mxu0 0.0
      %2108 = vmatprep.subr.mxu0 0.0
      %2109 = vmatpush2.msra.mxu0 0.0
      %2110 = vmatprep.subr.mxu0 0.0
      %2111 = vmatpush2.msra.mxu0 0.0
      %2112 = vmatprep.subr.mxu0 0.0
      %2113 = vmatpush2.msra.mxu0 0.0
      %2114 = vmatprep.subr.mxu0 0.0
      %2115 = vmatpush2.msra.mxu0 0.0
      %2116 = vmatprep.subr.mxu0 0.0
      %2117 = vmatpush2.msra.mxu0 0.0
      %2118 = vmatprep.subr.mxu0 0.0
      %2119 = vmatpush2.msra.mxu0 0.0
      %2120 = vmatprep.subr.mxu0 0.0
      %2121 = vmatpush2.msra.mxu0 0.0
      %2122 = vmatprep.subr.mxu0 0.0
      %2123 = vmatpush2.msra.mxu0 0.0
      %2124 = vmatprep.subr.mxu0 0.0
      %2125 = vmatpush2.msra.mxu0 0.0
      %2126 = vmatprep.subr.mxu0 0.0
      %2127 = vmatpush2.msra.mxu0 0.0
      %2128 = vmatprep.subr.mxu0 0.0
      %2129 = vmatpush2.msra.mxu0 0.0
      %2130 = vmatprep.subr.mxu0 0.0
      %2131 = vmatpush2.msra.mxu0 0.0
      %2132 = vmatprep.subr.mxu0 0.0
      %2133 = vmatpush2.msra.mxu0 0.0
      %2134 = vmatprep.subr.mxu0 0.0
      %2135 = vmatpush2.msra.mxu0 0.0
      %2136 = vmatprep.mubr.f32.mxu0 0.0
      %2137 = vmatmul.mubr.f32.gmra.mxu0 %v2022
      %v2138 = vpop.f32.mrf.mxu0
      %v2139 = vadd.f32 0.0, %v2138
      %v2140 = vpop.f32.mrf.mxu0
      %2141 = vmatprep.mubr.f32.mxu0 0.0
      %2142 = vmatmul.mubr.f32.gmra.mxu0 %v2025
      %v2143 = vpop.f32.mrf.mxu0
      %v2144 = vadd.f32 0.0, %v2143
      %v2145 = vpop.f32.mrf.mxu0
      %2146 = vmatprep.mubr.f32.mxu0 0.0
      %2147 = vmatmul.mubr.f32.gmra.mxu0 %v2028
      %v2148 = vpop.f32.mrf.mxu0
      %v2149 = vadd.f32 0.0, %v2148
      %v2150 = vpop.f32.mrf.mxu0
      %2151 = vmatprep.mubr.f32.mxu0 0.0
      %2152 = vmatmul.mubr.f32.gmra.mxu0 %v2031
      %v2153 = vpop.f32.mrf.mxu0
      %v2154 = vadd.f32 0.0, %v2153
      %v2155 = vpop.f32.mrf.mxu0
      %2156 = vmatprep.mubr.f32.mxu0 0.0
      %2157 = vmatmul.mubr.f32.gmra.mxu0 %v2034
      %v2158 = vpop.f32.mrf.mxu0
      %v2159 = vadd.f32 0.0, %v2158
      %v2160 = vpop.f32.mrf.mxu0
      %2161 = vmatprep.mubr.f32.mxu0 0.0
      %2162 = vmatmul.mubr.f32.gmra.mxu0 %v2037
      %v2163 = vpop.f32.mrf.mxu0
      %v2164 = vadd.f32 0.0, %v2163
      %v2165 = vpop.f32.mrf.mxu0
      %2166 = vmatprep.mubr.f32.mxu0 0.0
      %2167 = vmatmul.mubr.f32.gmra.mxu0 %v2040
      %v2168 = vpop.f32.mrf.mxu0
      %v2169 = vadd.f32 0.0, %v2168
      %v2170 = vpop.f32.mrf.mxu0
      %2171 = vmatprep.mubr.f32.mxu0 0.0
      %2172 = vmatmul.mubr.f32.gmra.mxu0 %v2043
      %v2173 = vpop.f32.mrf.mxu0
      %v2174 = vadd.f32 0.0, %v2173
      %v2175 = vpop.f32.mrf.mxu0
      %2176 = vmatprep.mubr.f32.mxu0 0.0
      %2177 = vmatmul.mubr.f32.gmra.mxu0 %v2046
      %v2178 = vpop.f32.mrf.mxu0
      %v2179 = vadd.f32 0.0, %v2178
      %v2180 = vpop.f32.mrf.mxu0
      %2181 = vmatprep.mubr.f32.mxu0 0.0
      %2182 = vmatmul.mubr.f32.gmra.mxu0 %v2049
      %v2183 = vpop.f32.mrf.mxu0
      %v2184 = vadd.f32 0.0, %v2183
      %v2185 = vpop.f32.mrf.mxu0
      %2186 = vmatprep.mubr.f32.mxu0 0.0
      %2187 = vmatmul.mubr.f32.gmra.mxu0 %v2052
      %v2188 = vpop.f32.mrf.mxu0
      %v2189 = vadd.f32 0.0, %v2188
      %v2190 = vpop.f32.mrf.mxu0
      %2191 = vmatprep.mubr.f32.mxu0 0.0
      %2192 = vmatmul.mubr.f32.gmra.mxu0 %v2055
      %v2193 = vpop.f32.mrf.mxu0
      %v2194 = vadd.f32 0.0, %v2193
      %v2195 = vpop.f32.mrf.mxu0
      %2196 = vmatprep.mubr.f32.mxu0 0.0
      %2197 = vmatmul.mubr.f32.gmra.mxu0 %v2058
      %v2198 = vpop.f32.mrf.mxu0
      %v2199 = vadd.f32 0.0, %v2198
      %v2200 = vpop.f32.mrf.mxu0
      %2201 = vmatprep.mubr.f32.mxu0 0.0
      %2202 = vmatmul.mubr.f32.gmra.mxu0 %v2061
      %v2203 = vpop.f32.mrf.mxu0
      %v2204 = vadd.f32 0.0, %v2203
      %v2205 = vpop.f32.mrf.mxu0
      %2206 = vmatprep.mubr.f32.mxu0 0.0
      %2207 = vmatmul.mubr.f32.gmra.mxu0 %v2064
      %v2208 = vpop.f32.mrf.mxu0
      %v2209 = vadd.f32 0.0, %v2208
      %v2210 = vpop.f32.mrf.mxu0
      %2211 = vmatprep.mubr.f32.mxu0 0.0
      %2212 = vmatmul.mubr.f32.gmra.mxu0 %v2067
      %v2213 = vpop.f32.mrf.mxu0
      %v2214 = vadd.f32 0.0, %v2213
      %v2215 = vpop.f32.mrf.mxu0
      %2216 = vdwg.mxu0
      %v2217 = vmul.f32 %v2139, 0.5
      %v2218 = vmul.f32 %v2144, 0.5
      %v2219 = vmul.f32 %v2149, 0.5
      %v2220 = vmul.f32 %v2154, 0.5
      %v2221 = vmul.f32 %v2159, 0.5
      %v2222 = vmul.f32 %v2164, 0.5
      %v2223 = vmul.f32 %v2169, 0.5
      %v2224 = vmul.f32 %v2174, 0.5
      %v2225 = vmul.f32 %v2179, 0.5
      %v2226 = vmul.f32 %v2184, 0.5
      %v2227 = vmul.f32 %v2189, 0.5
      %v2228 = vmul.f32 %v2194, 0.5
      %v2229 = vmul.f32 %v2199, 0.5
      %v2230 = vmul.f32 %v2204, 0.5
      %v2231 = vmul.f32 %v2209, 0.5
      %v2232 = vmul.f32 %v2214, 0.5
      %v2233 = vmul.f32 %v2139, 0.70710677
      %v2234 = vmul.f32 %v2144, 0.70710677
      %v2235 = vmul.f32 %v2149, 0.70710677
      %v2236 = vmul.f32 %v2154, 0.70710677
      %v2237 = vmul.f32 %v2159, 0.70710677
      %v2238 = vmul.f32 %v2164, 0.70710677
      %v2239 = vmul.f32 %v2169, 0.70710677
      %v2240 = vmul.f32 %v2174, 0.70710677
      %v2241 = vmul.f32 %v2179, 0.70710677
      %v2242 = vmul.f32 %v2184, 0.70710677
      %v2243 = vmul.f32 %v2189, 0.70710677
      %v2244 = vmul.f32 %v2194, 0.70710677
      %v2245 = vmul.f32 %v2199, 0.70710677
      %v2246 = vmul.f32 %v2204, 0.70710677
      %v2247 = vmul.f32 %v2209, 0.70710677
      %v2248 = vmul.f32 %v2214, 0.70710677
      %v2249 = verf.f32.pop %v2233
      %v2250 = verf.f32.pop %v2234
      %v2251 = verf.f32.pop %v2235
      %v2252 = verf.f32.pop %v2236
      %v2253 = verf.f32.pop %v2237
      %v2254 = verf.f32.pop %v2238
      %v2255 = verf.f32.pop %v2239
      %v2256 = verf.f32.pop %v2240
      %v2257 = verf.f32.pop %v2241
      %v2258 = verf.f32.pop %v2242
      %v2259 = verf.f32.pop %v2243
      %v2260 = verf.f32.pop %v2244
      %v2261 = verf.f32.pop %v2245
      %v2262 = verf.f32.pop %v2246
      %v2263 = verf.f32.pop %v2247
      %v2264 = verf.f32.pop %v2248
      %v2265 = vadd.f32 %v2249, 1.0
      %v2266 = vadd.f32 %v2250, 1.0
      %v2267 = vadd.f32 %v2251, 1.0
      %v2268 = vadd.f32 %v2252, 1.0
      %v2269 = vadd.f32 %v2253, 1.0
      %v2270 = vadd.f32 %v2254, 1.0
      %v2271 = vadd.f32 %v2255, 1.0
      %v2272 = vadd.f32 %v2256, 1.0
      %v2273 = vadd.f32 %v2257, 1.0
      %v2274 = vadd.f32 %v2258, 1.0
      %v2275 = vadd.f32 %v2259, 1.0
      %v2276 = vadd.f32 %v2260, 1.0
      %v2277 = vadd.f32 %v2261, 1.0
      %v2278 = vadd.f32 %v2262, 1.0
      %v2279 = vadd.f32 %v2263, 1.0
      %v2280 = vadd.f32 %v2264, 1.0
      %v2281 = vmul.f32 %v2217, %v2265
      %v2282 = vmul.f32 %v2218, %v2266
      %v2283 = vmul.f32 %v2219, %v2267
      %v2284 = vmul.f32 %v2220, %v2268
      %v2285 = vmul.f32 %v2221, %v2269
      %v2286 = vmul.f32 %v2222, %v2270
      %v2287 = vmul.f32 %v2223, %v2271
      %v2288 = vmul.f32 %v2224, %v2272
      %v2289 = vmul.f32 %v2225, %v2273
      %v2290 = vmul.f32 %v2226, %v2274
      %v2291 = vmul.f32 %v2227, %v2275
      %v2292 = vmul.f32 %v2228, %v2276
      %v2293 = vmul.f32 %v2229, %v2277
      %v2294 = vmul.f32 %v2230, %v2278
      %v2295 = vmul.f32 %v2231, %v2279
      %v2296 = vmul.f32 %v2232, %v2280
      %vm2297 = vcmask 7168
      %2298 = vst.msk [vmem:[%s332] sm:$0xff] %vm2297, %v2281
      %2299 = vst.msk [vmem:[%s332 + $0x8] sm:$0xff] %vm2297, %v2282
      %2300 = vst.msk [vmem:[%s332 + $0x10] sm:$0xff] %vm2297, %v2283
      %2301 = vst.msk [vmem:[%s332 + $0x18] sm:$0xff] %vm2297, %v2284
      %2302 = vst.msk [vmem:[%s332 + $0x20] sm:$0xff] %vm2297, %v2285
      %2303 = vst.msk [vmem:[%s332 + $0x28] sm:$0xff] %vm2297, %v2286
      %2304 = vst.msk [vmem:[%s332 + $0x30] sm:$0xff] %vm2297, %v2287
      %2305 = vst.msk [vmem:[%s332 + $0x38] sm:$0xff] %vm2297, %v2288
      %2306 = vst.msk [vmem:[%s332 + $0x40] sm:$0xff] %vm2297, %v2289
      %2307 = vst.msk [vmem:[%s332 + $0x48] sm:$0xff] %vm2297, %v2290
      %2308 = vst.msk [vmem:[%s332 + $0x50] sm:$0xff] %vm2297, %v2291
      %2309 = vst.msk [vmem:[%s332 + $0x58] sm:$0xff] %vm2297, %v2292
      %2310 = vst.msk [vmem:[%s332 + $0x60] sm:$0xff] %vm2297, %v2293
      %2311 = vst.msk [vmem:[%s332 + $0x68] sm:$0xff] %vm2297, %v2294
      %2312 = vst.msk [vmem:[%s332 + $0x70] sm:$0xff] %vm2297, %v2295
      %2313 = vst.msk [vmem:[%s332 + $0x78] sm:$0xff] %vm2297, %v2296
      %p2314 = scmp.lt.s32.totalorder %s20, 1
      %s2315 = scalar_select %p2314, %s20, 1
      %s2316 = smul.addr %s2315, 16
      %s2317 = smul.addr %s2316, 8
      %s2318 = scalar_lea.vmem %s9, %s2317
      // Predicated region
      $region64: #{sesame_forward.9} parent=55 // pred_check
        %p2319 = pneg %p232
      $region65: #{sesame_forward.9} parent=55 // pred_check_branch
        %2321 = sbr.rel (%p2319) target = $region67
      $region66: #{sesame_forward.9} parent=55 // pred_region
        _
      $region67: #{sesame_forward.9} parent=55 // pred_fallthru
        _
    $region56: #{sesame_forward.9} parent=5 // pred_fallthru
      _
    %p2322 = scmp.le.s32.totalorder 2, %s15
    // Predicated region
    $region68: #{sesame_forward.9} parent=5 // pred_check
      %p2323 = pneg %p2322
    $region69: #{sesame_forward.9} parent=5 // pred_check_branch
      %2325 = sbr.rel (%p2323) target = $region71
    $region70: #{sesame_forward.9} parent=5 // pred_region
      %s2326 = ssub.s32 %s15, 2
      // Predicated region
      $region72: #{sesame_forward.9} parent=70 // pred_check
        %p2327 = pneg %p238
      $region73: #{sesame_forward.9} parent=70 // pred_check_branch
        %2329 = sbr.rel (%p2327) target = $region75
      $region74: #{sesame_forward.9} parent=70 // pred_region
        %p2330 = scmp.lt.s32.totalorder %s21, 1
        %s2331 = scalar_select %p2330, %s21, 1
        %s2332 = smul.addr %s2331, 16
        %s2333 = smul.addr %s2332, 8
        %s2334 = scalar_lea.vmem %s9, %s2333
      $region75: #{sesame_forward.9} parent=70 // pred_fallthru
        _
    $region71: #{sesame_forward.9} parent=5 // pred_fallthru
      _
  $region6: #{sesame_forward.9} parent=0 // loop_footer
    %s19 = sadd.s32 1, %s15
  $region7: #{sesame_forward.9} parent=0 // loop_footer_branch
    %14 = sbr.rel target = $region3
  $region8: #{sesame_forward.9} parent=0 // loop_exit
    _

</llo_original>
